<compile_context>
chip_gen: v7x
topology: tpu7x:2x2x1
jax: 0.10.0
libtpu: 0.0.40
codegen_flags: <defaults>
</compile_context>

<pallas_src>
import math

import jax
import jax.numpy as jnp
from jax.experimental import pallas as pl
from jax.experimental.pallas import tpu as pltpu

# ----------------------------- model configuration -----------------------------
IMG = 16                 # image_size
NUM_FRAMES = 4           # num_frames
IN_CH = 3                # in_channels
PATCH = (8, 8, 2)        # config.patches['size']
HIDDEN = 32              # config.hidden_size (shared by spatial & temporal)
NUM_HEADS = 4
HEAD_DIM = HIDDEN // NUM_HEADS           # 8
MLP_DIM = 64
NUM_LAYERS_SP = 2
NUM_LAYERS_TP = 2
NUM_LAYERS = NUM_LAYERS_SP + NUM_LAYERS_TP
NUM_CLASSES = 10
BATCH = 2

N_PATCHES = (IMG // PATCH[0]) * (IMG // PATCH[1]) * (NUM_FRAMES // PATCH[2])  # 8
S_SP = N_PATCHES + 1     # spatial sequence length  (cls + patches)        = 9
S_TP = N_PATCHES + 2     # temporal sequence length (cls + spatial tokens) = 10
SEQ_PAD = 16             # both sequences padded to one sublane-aligned length
D_PATCH = IN_CH * PATCH[0] * PATCH[1] * PATCH[2]                              # 384

# --------------------- packed-slab layouts (row offsets) -----------------------
# bf16 "wmat" slab, per layer: (160 rows, 64 lanes)
_W_K, _W_O, _W_1, _W_2 = 0, 32, 64, 96
_WMAT_ROWS, _WMAT_COLS = 160, 64
# f32 "vec" slab, per layer: (16 rows, 64 lanes)
_V_LN1G, _V_LN1B, _V_BK, _V_BO = 0, 1, 2, 3
_V_LN2G, _V_LN2B, _V_B1, _V_B2 = 4, 5, 6, 7
_V_BQ, _V_BV = 8, 12                      # + head index
_VEC_ROWS, _VEC_COLS = 16, 64
# f32 "misc" slab: (88 rows, HIDDEN lanes)
_M_BASE_SP, _M_BASE_TP, _M_SHIFT = 0, 16, 32
_M_SP_NG, _M_SP_NB, _M_TP_NG, _M_TP_NB = 48, 49, 50, 51
_M_HEAD_G, _M_HEAD_B, _M_HEAD_BIAS = 52, 53, 54
_M_HEAD_W = 56
_MISC_ROWS = _M_HEAD_W + HIDDEN           # 88


# ------------------------------- the fused kernel ------------------------------
def _vivit_kernel(patch_ref, conv_w_ref, wqv_ref, wmat_ref, vec_ref, misc_ref,
                  out_ref):
    f32, bf16 = jnp.float32, jnp.bfloat16
    scale = 1.0 / math.sqrt(HEAD_DIM)

    def ln(x, g, b, eps):
        mu = jnp.mean(x, axis=-1, keepdims=True)
        var = jnp.mean(jnp.square(x - mu), axis=-1, keepdims=True)
        return (x - mu) * jax.lax.rsqrt(var + eps) * g + b

    def gelu(x):  # exact (erf) GELU == torch.nn.functional.gelu default
        return 0.5 * x * (1.0 + jax.lax.erf(x * (1.0 / math.sqrt(2.0))))

    def key_mask(n_valid):
        kidx = jax.lax.broadcasted_iota(jnp.int32, (1, SEQ_PAD), 1)
        return jnp.where(kidx < n_valid, 0.0, -1e30).astype(f32)

    def vrow(l, r, n):                     # (1, n) f32 bias / LayerNorm row
        return vec_ref[l, r:r + 1, :n]

    def mrow(r, n=HIDDEN):                 # (1, n) f32 row of the misc slab
        return misc_ref[r:r + 1, :n]

    def w_head(l, qv, h):                  # (HIDDEN, HEAD_DIM) bf16 per-head W
        return wqv_ref[(l * 2 + qv) * NUM_HEADS + h]

    def block(x, l, mask):
        """One pre-LN ViT Block on a (SEQ_PAD, HIDDEN) f32 slab of a clip."""
        # ----- multi-head self-attention -----
        xn = ln(x, vrow(l, _V_LN1G, HIDDEN), vrow(l, _V_LN1B, HIDDEN), 1e-6)
        xn_b = xn.astype(bf16)
        # K for all heads at once, transposed once per layer; per-head K is an
        # aligned 8-row sublane slice (no lane slices / lane concat anywhere).
        k = jnp.dot(xn_b, wmat_ref[l, _W_K:_W_K + HIDDEN, :HIDDEN],
                    preferred_element_type=f32) + vrow(l, _V_BK, HIDDEN)
        kT = jnp.transpose(k)                                  # (HIDDEN, SEQ_PAD) f32
        attn = jnp.zeros((SEQ_PAD, HIDDEN), f32)
        for h in range(NUM_HEADS):
            lo = h * HEAD_DIM
            q = jnp.dot(xn_b, w_head(l, 0, h),
                        preferred_element_type=f32) + vrow(l, _V_BQ + h, HEAD_DIM)
            v = jnp.dot(xn_b, w_head(l, 1, h),
                        preferred_element_type=f32) + vrow(l, _V_BV + h, HEAD_DIM)
            s = jnp.dot(q, kT[lo:lo + HEAD_DIM, :],
                        preferred_element_type=f32) * scale    # (SEQ_PAD, SEQ_PAD)
            s = s + mask                                       # hide padded keys
            s = s - jnp.max(s, axis=-1, keepdims=True)
            e = jnp.exp(s)
            p = e * pl.reciprocal(jnp.sum(e, axis=-1, keepdims=True), approx=False)
            ctx = jnp.dot(p, v, preferred_element_type=f32)    # (SEQ_PAD, HEAD_DIM)
            # fold the head concat into the output projection:
            attn = attn + jnp.dot(
                ctx.astype(bf16),
                wmat_ref[l, _W_O + lo:_W_O + lo + HEAD_DIM, :HIDDEN],
                preferred_element_type=f32)
        x = x + attn + vrow(l, _V_BO, HIDDEN)
        # ----- MLP: Linear -> exact GELU -> Linear -----
        xn = ln(x, vrow(l, _V_LN2G, HIDDEN), vrow(l, _V_LN2B, HIDDEN), 1e-6)
        y = jnp.dot(xn.astype(bf16), wmat_ref[l, _W_1:_W_1 + HIDDEN, :MLP_DIM],
                    preferred_element_type=f32) + vrow(l, _V_B1, MLP_DIM)
        y = gelu(y)
        y = jnp.dot(y.astype(bf16), wmat_ref[l, _W_2:_W_2 + MLP_DIM, :HIDDEN],
                    preferred_element_type=f32) + vrow(l, _V_B2, HIDDEN)
        return x + y

    # ---- tubelet embedding: patches were placed at rows 1..N_PATCHES host-side,
    #      so the cls-prepend shift is free; conv bias is folded into base_sp ----
    x = jnp.dot(patch_ref[0], conv_w_ref[...], preferred_element_type=f32)
    x = x + misc_ref[_M_BASE_SP:_M_BASE_SP + SEQ_PAD, :]       # cls/pos/conv_b

    # NOTE (pad-row invariant): rows >= S_SP (later >= S_TP) are padding.  They
    # start at exactly zero, are masked out as attention keys, are dropped by
    # the temporal shift matrix (zero columns) and are never pooled, so they
    # cannot leak into valid rows or the logits.

    # ---- spatial transformer ----
    m = key_mask(S_SP)
    for l in range(NUM_LAYERS_SP):
        x = block(x, l, m)
    x = ln(x, mrow(_M_SP_NG), mrow(_M_SP_NB), 1e-6)            # encoder_norm

    # ---- temporal embedding: shift tokens down one row (row 0 <- cls_tp),
    #      zero pad rows, add cls/pos (one tiny constant matmul per clip) ----
    shift = misc_ref[_M_SHIFT:_M_SHIFT + SEQ_PAD, :SEQ_PAD]    # (16, 16) 0/1 f32
    x = jnp.dot(shift, x, preferred_element_type=f32) \
        + misc_ref[_M_BASE_TP:_M_BASE_TP + SEQ_PAD, :]

    # ---- temporal transformer ----
    m = key_mask(S_TP)
    for l in range(NUM_LAYERS_TP):
        x = block(x, NUM_LAYERS_SP + l, m)
    x = ln(x, mrow(_M_TP_NG), mrow(_M_TP_NB), 1e-6)            # encoder_norm

    # ---- 'cls' pooling + mlp_head (LayerNorm eps=1e-5 -> Linear) ----
    pooled = ln(x[0:1, :], mrow(_M_HEAD_G), mrow(_M_HEAD_B), 1e-5)
    logits = jnp.dot(pooled, misc_ref[_M_HEAD_W:_M_HEAD_W + HIDDEN, :NUM_CLASSES],
                     preferred_element_type=f32) + mrow(_M_HEAD_BIAS, NUM_CLASSES)
    out_ref[0] = logits.astype(out_ref.dtype)


# ------------------------------ host-side wrapper ------------------------------
def _extract_tubelets(x):
    """(B, T, C, H, W) -> (B, SEQ_PAD, D_PATCH) bf16 tubelet feature rows.

    Row 0 (cls slot) and rows >= 1 + N_PATCHES are zero; the patch ordering and
    per-patch feature order match Conv3d(kernel=stride=patch) -> flatten(2)
    -> transpose(-1, -2) applied to x.permute(0, 2, 3, 4, 1)."""
    B = x.shape[0]
    p1, p2, pt = PATCH
    xp = jnp.transpose(x, (0, 2, 3, 4, 1))                    # (B, C, H, W, T)
    nh, nw, nt = IMG // p1, IMG // p2, NUM_FRAMES // pt
    xr = xp.reshape(B, IN_CH, nh, p1, nw, p2, nt, pt)
    xr = jnp.transpose(xr, (0, 2, 4, 6, 1, 3, 5, 7))          # (B, nh, nw, nt, C, p1, p2, pt)
    flat = xr.reshape(B, N_PATCHES, D_PATCH)
    flat = jnp.pad(flat, ((0, 0), (1, SEQ_PAD - 1 - N_PATCHES), (0, 0)))
    return flat.astype(jnp.bfloat16)


def vivit_forward(x, packed):
    """x: (B, num_frames, 3, H, W) — same input as the PyTorch module."""
    B = x.shape[0]
    patches = _extract_tubelets(x)
    vmem = pltpu.MemorySpace.VMEM
    out = pl.pallas_call(
        _vivit_kernel,
        out_shape=jax.ShapeDtypeStruct((B, 1, NUM_CLASSES), jnp.float32),
        grid=(B,),
        in_specs=[
            pl.BlockSpec((1, SEQ_PAD, D_PATCH), lambda b: (b, 0, 0)),  # patches
            pl.BlockSpec(memory_space=vmem),                           # conv_w
            pl.BlockSpec(memory_space=vmem),                           # wqv (bf16)
            pl.BlockSpec(memory_space=vmem),                           # wmat (bf16)
            pl.BlockSpec(memory_space=vmem),                           # vec (f32)
            pl.BlockSpec(memory_space=vmem),                           # misc (f32)
        ],
        out_specs=pl.BlockSpec((1, 1, NUM_CLASSES), lambda b: (b, 0, 0)),
        compiler_params=pltpu.CompilerParams(
            dimension_semantics=("parallel",)),   # batch sharded over v7x's 2 TCs
    )(patches, packed['conv_w'], packed['wqv'], packed['wmat'],
      packed['vec'], packed['misc'])
    return out.reshape(B, NUM_CLASSES)


# ------------------------------ parameter packing ------------------------------
def pack_params(params):
    """Pack per-module parameters into a handful of lane-aligned slabs (run once)."""
    sp, tp, head = params['sp'], params['tp'], params['head']
    L = NUM_LAYERS

    def cat(key):
        return jnp.concatenate([sp[key], tp[key]], axis=0)    # (L, ...)

    wq, wk, wv, wo = cat('wq'), cat('wk'), cat('wv'), cat('wo')
    w1, w2 = cat('w1'), cat('w2')
    bq, bk, bv, bo = cat('bq'), cat('bk'), cat('bv'), cat('bo')
    b1, b2 = cat('b1'), cat('b2')
    ln1g, ln1b = cat('ln1_g'), cat('ln1_b')
    ln2g, ln2b = cat('ln2_g'), cat('ln2_b')

    # per-head Q/V projection weights: (L*2*NUM_HEADS, HIDDEN, HEAD_DIM) bf16
    wq_h = wq.reshape(L, HIDDEN, NUM_HEADS, HEAD_DIM).transpose(0, 2, 1, 3)
    wv_h = wv.reshape(L, HIDDEN, NUM_HEADS, HEAD_DIM).transpose(0, 2, 1, 3)
    wqv = jnp.stack([wq_h, wv_h], axis=1)                      # (L, 2, NH, H, HD)
    wqv = wqv.reshape(L * 2 * NUM_HEADS, HIDDEN, HEAD_DIM).astype(jnp.bfloat16)

    wmat = jnp.zeros((L, _WMAT_ROWS, _WMAT_COLS), jnp.float32)
    wmat = wmat.at[:, _W_K:_W_K + HIDDEN, :HIDDEN].set(wk)
    wmat = wmat.at[:, _W_O:_W_O + HIDDEN, :HIDDEN].set(wo)
    wmat = wmat.at[:, _W_1:_W_1 + HIDDEN, :MLP_DIM].set(w1)
    wmat = wmat.at[:, _W_2:_W_2 + MLP_DIM, :HIDDEN].set(w2)
    wmat = wmat.astype(jnp.bfloat16)

    vec = jnp.zeros((L, _VEC_ROWS, _VEC_COLS), jnp.float32)
    vec = vec.at[:, _V_LN1G, :HIDDEN].set(ln1g)
    vec = vec.at[:, _V_LN1B, :HIDDEN].set(ln1b)
    vec = vec.at[:, _V_BK, :HIDDEN].set(bk)
    vec = vec.at[:, _V_BO, :HIDDEN].set(bo)
    vec = vec.at[:, _V_LN2G, :HIDDEN].set(ln2g)
    vec = vec.at[:, _V_LN2B, :HIDDEN].set(ln2b)
    vec = vec.at[:, _V_B1, :MLP_DIM].set(b1)
    vec = vec.at[:, _V_B2, :HIDDEN].set(b2)
    vec = vec.at[:, _V_BQ:_V_BQ + NUM_HEADS, :HEAD_DIM].set(
        bq.reshape(L, NUM_HEADS, HEAD_DIM))
    vec = vec.at[:, _V_BV:_V_BV + NUM_HEADS, :HEAD_DIM].set(
        bv.reshape(L, NUM_HEADS, HEAD_DIM))

    # Conv3d(kernel=stride=patch) weight (OIDHW) -> (D_PATCH, HIDDEN) matmul form
    conv_w = sp['conv_w'].reshape(HIDDEN, -1).T.astype(jnp.bfloat16)

    misc = jnp.zeros((_MISC_ROWS, HIDDEN), jnp.float32)
    base_sp = jnp.zeros((SEQ_PAD, HIDDEN), jnp.float32)
    base_sp = base_sp.at[0, :].set(sp['cls'][0, 0] + sp['pos'][0, 0])
    base_sp = base_sp.at[1:S_SP, :].set(sp['pos'][0, 1:] + sp['conv_b'][None, :])
    base_tp = jnp.zeros((SEQ_PAD, HIDDEN), jnp.float32)
    base_tp = base_tp.at[0, :].set(tp['cls'][0, 0] + tp['pos'][0, 0])
    base_tp = base_tp.at[1:S_TP, :].set(tp['pos'][0, 1:])
    # 0/1 shift matrix: rows 1..S_SP pick spatial tokens 0..S_SP-1, pads dropped.
    shift = jnp.zeros((SEQ_PAD, SEQ_PAD), jnp.float32)
    shift = shift.at[jnp.arange(1, S_SP + 1), jnp.arange(S_SP)].set(1.0)

    misc = misc.at[_M_BASE_SP:_M_BASE_SP + SEQ_PAD, :].set(base_sp)
    misc = misc.at[_M_BASE_TP:_M_BASE_TP + SEQ_PAD, :].set(base_tp)
    misc = misc.at[_M_SHIFT:_M_SHIFT + SEQ_PAD, :SEQ_PAD].set(shift)
    misc = misc.at[_M_SP_NG, :].set(sp['norm_g'])
    misc = misc.at[_M_SP_NB, :].set(sp['norm_b'])
    misc = misc.at[_M_TP_NG, :].set(tp['norm_g'])
    misc = misc.at[_M_TP_NB, :].set(tp['norm_b'])
    misc = misc.at[_M_HEAD_G, :].set(head['g'])
    misc = misc.at[_M_HEAD_B, :].set(head['b'])
    misc = misc.at[_M_HEAD_BIAS, :NUM_CLASSES].set(head['bias'])
    misc = misc.at[_M_HEAD_W:_M_HEAD_W + HIDDEN, :NUM_CLASSES].set(head['w'])

    return dict(conv_w=conv_w, wqv=wqv, wmat=wmat, vec=vec, misc=misc)


# ------------------------------- parameter init --------------------------------
def _stage_params(key, num_layers):
    L = num_layers
    ks = jax.random.split(key, 6 * L)

    def lin(k, fi, fo):
        return 0.05 * jax.random.normal(k, (fi, fo), jnp.float32)

    return dict(
        wq=jnp.stack([lin(ks[6 * l + 0], HIDDEN, HIDDEN) for l in range(L)]),
        wk=jnp.stack([lin(ks[6 * l + 1], HIDDEN, HIDDEN) for l in range(L)]),
        wv=jnp.stack([lin(ks[6 * l + 2], HIDDEN, HIDDEN) for l in range(L)]),
        wo=jnp.stack([lin(ks[6 * l + 3], HIDDEN, HIDDEN) for l in range(L)]),
        w1=jnp.stack([lin(ks[6 * l + 4], HIDDEN, MLP_DIM) for l in range(L)]),
        w2=jnp.stack([lin(ks[6 * l + 5], MLP_DIM, HIDDEN) for l in range(L)]),
        bq=jnp.zeros((L, HIDDEN), jnp.float32),
        bk=jnp.zeros((L, HIDDEN), jnp.float32),
        bv=jnp.zeros((L, HIDDEN), jnp.float32),
        bo=jnp.zeros((L, HIDDEN), jnp.float32),
        b1=1e-6 * jnp.ones((L, MLP_DIM), jnp.float32),
        b2=1e-6 * jnp.ones((L, HIDDEN), jnp.float32),
        ln1_g=jnp.ones((L, HIDDEN), jnp.float32),
        ln1_b=jnp.zeros((L, HIDDEN), jnp.float32),
        ln2_g=jnp.ones((L, HIDDEN), jnp.float32),
        ln2_b=jnp.zeros((L, HIDDEN), jnp.float32),
    )


def init_params(key):
    keys = jax.random.split(key, 8)
    return dict(
        sp=dict(
            conv_w=0.05 * jax.random.normal(
                keys[2], (HIDDEN, IN_CH, PATCH[0], PATCH[1], PATCH[2]), jnp.float32),
            conv_b=jnp.zeros((HIDDEN,), jnp.float32),
            cls=0.02 * jax.random.normal(keys[3], (1, 1, HIDDEN), jnp.float32),
            pos=0.02 * jax.random.normal(keys[4], (1, S_SP, HIDDEN), jnp.float32),
            norm_g=jnp.ones((HIDDEN,), jnp.float32),
            norm_b=jnp.zeros((HIDDEN,), jnp.float32),
            **_stage_params(keys[0], NUM_LAYERS_SP)),
        tp=dict(
            cls=0.02 * jax.random.normal(keys[5], (1, 1, HIDDEN), jnp.float32),
            pos=0.02 * jax.random.normal(keys[6], (1, S_TP, HIDDEN), jnp.float32),
            norm_g=jnp.ones((HIDDEN,), jnp.float32),
            norm_b=jnp.zeros((HIDDEN,), jnp.float32),
            **_stage_params(keys[1], NUM_LAYERS_TP)),
        head=dict(
            g=jnp.ones((HIDDEN,), jnp.float32),
            b=jnp.zeros((HIDDEN,), jnp.float32),
            w=0.05 * jax.random.normal(keys[7], (HIDDEN, NUM_CLASSES), jnp.float32),
            bias=jnp.zeros((NUM_CLASSES,), jnp.float32),
        ),
    )


# ----------------------------------- main --------------------------------------
if __name__ == "__main__":
    key = jax.random.PRNGKey(0)
    kx, kp = jax.random.split(key)
    params = init_params(kp)
    packed = pack_params(params)          # host-side slab packing, done once
    # module input: (B, num_frames, 3, H, W)
    x = jax.random.normal(kx, (BATCH, NUM_FRAMES, IN_CH, IMG, IMG), jnp.float32)

    logits = jax.jit(vivit_forward)(x, packed)
    logits = jax.block_until_ready(logits)

    assert logits.shape == (BATCH, NUM_CLASSES), logits.shape
    assert bool(jnp.all(jnp.isfinite(logits)))
    print("KERNEL_OK")
</pallas_src>

<mosaic_0001>
module attributes {stable_mosaic.version = 11 : i64} {
  func.func @_vivit_kernel(%arg0: i32, %arg1: memref<1x16x384xbf16, #tpu.memory_space<vmem>>, %arg2: memref<384x32xbf16, #tpu.memory_space<vmem>>, %arg3: memref<32x32x8xbf16, #tpu.memory_space<vmem>>, %arg4: memref<4x160x64xbf16, #tpu.memory_space<vmem>>, %arg5: memref<4x16x64xf32, #tpu.memory_space<vmem>>, %arg6: memref<88x32xf32, #tpu.memory_space<vmem>>, %arg7: memref<1x1x10xf32, #tpu.memory_space<vmem>>) attributes {dimension_semantics = [#tpu.dimension_semantics<parallel>], iteration_bounds = array<i64: 2>, scalar_prefetch = 0 : i64, scratch_operands = 0 : i64, tpu.core_type = #tpu.core_type<tc>, window_params = [{transform_indices = @transform_0, window_bounds = array<i64: 1, 16, 384>}, {pipeline_mode = #tpu.pipeline_mode<synchronous>, transform_indices = @transform_1, window_bounds = array<i64: 384, 32>}, {pipeline_mode = #tpu.pipeline_mode<synchronous>, transform_indices = @transform_2, window_bounds = array<i64: 32, 32, 8>}, {pipeline_mode = #tpu.pipeline_mode<synchronous>, transform_indices = @transform_3, window_bounds = array<i64: 4, 160, 64>}, {pipeline_mode = #tpu.pipeline_mode<synchronous>, transform_indices = @transform_4, window_bounds = array<i64: 4, 16, 64>}, {pipeline_mode = #tpu.pipeline_mode<synchronous>, transform_indices = @transform_5, window_bounds = array<i64: 88, 32>}, {transform_indices = @transform_6, window_bounds = array<i64: 1, 1, 10>}]} {
    %c0 = arith.constant 0 : index
    %c0_0 = arith.constant 0 : index
    %c0_1 = arith.constant 0 : index
    %0 = vector.load %arg1[%c0, %c0_0, %c0_1] : memref<1x16x384xbf16, #tpu.memory_space<vmem>>, vector<1x16x384xbf16>
    %1 = vector.shape_cast %0 : vector<1x16x384xbf16> to vector<16x384xbf16>
    %c0_2 = arith.constant 0 : index
    %c0_3 = arith.constant 0 : index
    %2 = vector.load %arg2[%c0_2, %c0_3] : memref<384x32xbf16, #tpu.memory_space<vmem>>, vector<384x32xbf16>
    %cst = arith.constant dense<0.000000e+00> : vector<16x32xf32>
    %3 = tpu.matmul %1, %2, %cst {dimension_numbers = #tpu.dot_dimension_numbers<[1], [0], [0], [1], [0, 0, 1, 1], [], []>} : vector<16x384xbf16>, vector<384x32xbf16>, vector<16x32xf32> -> vector<16x32xf32>
    %c0_4 = arith.constant 0 : index
    %c0_5 = arith.constant 0 : index
    %4 = vector.load %arg6[%c0_4, %c0_5] : memref<88x32xf32, #tpu.memory_space<vmem>>, vector<16x32xf32>
    %5 = arith.addf %3, %4 : vector<16x32xf32>
    %6 = tpu.iota {dimensions = array<i32: 1>} : vector<1x16xi32>
    %c9_i32 = arith.constant 9 : i32
    %7 = vector.broadcast %c9_i32 : i32 to vector<1x16xi32>
    %8 = arith.cmpi slt, %6, %7 : vector<1x16xi32>
    %cst_6 = arith.constant 0.000000e+00 : f32
    %cst_7 = arith.constant -1.000000e+30 : f32
    %9 = vector.broadcast %cst_6 : f32 to vector<1x16xf32>
    %10 = vector.broadcast %cst_7 : f32 to vector<1x16xf32>
    %11 = arith.select %8, %9, %10 : vector<1x16xi1>, vector<1x16xf32>
    %c0_8 = arith.constant 0 : index
    %c0_9 = arith.constant 0 : index
    %c0_10 = arith.constant 0 : index
    %12 = vector.load %arg5[%c0_8, %c0_9, %c0_10] : memref<4x16x64xf32, #tpu.memory_space<vmem>>, vector<1x1x32xf32>
    %13 = vector.shape_cast %12 : vector<1x1x32xf32> to vector<1x32xf32>
    %c0_11 = arith.constant 0 : index
    %c1 = arith.constant 1 : index
    %c0_12 = arith.constant 0 : index
    %14 = vector.load %arg5[%c0_11, %c1, %c0_12] : memref<4x16x64xf32, #tpu.memory_space<vmem>>, vector<1x1x32xf32>
    %15 = vector.shape_cast %14 : vector<1x1x32xf32> to vector<1x32xf32>
    %cst_13 = arith.constant dense<0.000000e+00> : vector<16xf32>
    %16 = vector.multi_reduction <add>, %5, %cst_13 [1] : vector<16x32xf32> to vector<16xf32>
    %17 = vector.shape_cast %16 : vector<16xf32> to vector<16x1xf32>
    %cst_14 = arith.constant 3.200000e+01 : f32
    %18 = vector.broadcast %cst_14 : f32 to vector<16x1xf32>
    %19 = arith.divf %17, %18 : vector<16x1xf32>
    %20 = vector.broadcast %19 : vector<16x1xf32> to vector<16x32xf32>
    %21 = arith.subf %5, %20 : vector<16x32xf32>
    %22 = arith.mulf %21, %21 : vector<16x32xf32>
    %cst_15 = arith.constant dense<0.000000e+00> : vector<16xf32>
    %23 = vector.multi_reduction <add>, %22, %cst_15 [1] : vector<16x32xf32> to vector<16xf32>
    %24 = vector.shape_cast %23 : vector<16xf32> to vector<16x1xf32>
    %cst_16 = arith.constant 3.200000e+01 : f32
    %25 = vector.broadcast %cst_16 : f32 to vector<16x1xf32>
    %26 = arith.divf %24, %25 : vector<16x1xf32>
    %27 = vector.broadcast %19 : vector<16x1xf32> to vector<16x32xf32>
    %28 = arith.subf %5, %27 : vector<16x32xf32>
    %cst_17 = arith.constant 9.99999997E-7 : f32
    %29 = vector.broadcast %cst_17 : f32 to vector<16x1xf32>
    %30 = arith.addf %26, %29 : vector<16x1xf32>
    %31 = math.rsqrt %30 : vector<16x1xf32>
    %32 = vector.broadcast %31 : vector<16x1xf32> to vector<16x32xf32>
    %33 = arith.mulf %28, %32 : vector<16x32xf32>
    %34 = vector.broadcast %13 : vector<1x32xf32> to vector<16x32xf32>
    %35 = arith.mulf %33, %34 : vector<16x32xf32>
    %36 = vector.broadcast %15 : vector<1x32xf32> to vector<16x32xf32>
    %37 = arith.addf %35, %36 : vector<16x32xf32>
    %38 = arith.truncf %37 : vector<16x32xf32> to vector<16x32xbf16>
    %c0_18 = arith.constant 0 : index
    %c0_19 = arith.constant 0 : index
    %c0_20 = arith.constant 0 : index
    %39 = vector.load %arg4[%c0_18, %c0_19, %c0_20] : memref<4x160x64xbf16, #tpu.memory_space<vmem>>, vector<1x32x32xbf16>
    %40 = vector.shape_cast %39 : vector<1x32x32xbf16> to vector<32x32xbf16>
    %cst_21 = arith.constant dense<0.000000e+00> : vector<16x32xf32>
    %41 = tpu.matmul %38, %40, %cst_21 {dimension_numbers = #tpu.dot_dimension_numbers<[1], [0], [0], [1], [0, 0, 1, 1], [], []>} : vector<16x32xbf16>, vector<32x32xbf16>, vector<16x32xf32> -> vector<16x32xf32>
    %c0_22 = arith.constant 0 : index
    %c2 = arith.constant 2 : index
    %c0_23 = arith.constant 0 : index
    %42 = vector.load %arg5[%c0_22, %c2, %c0_23] : memref<4x16x64xf32, #tpu.memory_space<vmem>>, vector<1x1x32xf32>
    %43 = vector.shape_cast %42 : vector<1x1x32xf32> to vector<1x32xf32>
    %44 = vector.broadcast %43 : vector<1x32xf32> to vector<16x32xf32>
    %45 = arith.addf %41, %44 : vector<16x32xf32>
    %46 = tpu.transpose %45, [1, 0] : vector<16x32xf32> -> vector<32x16xf32>
    %cst_24 = arith.constant 0.000000e+00 : f32
    %47 = vector.broadcast %cst_24 : f32 to vector<16x32xf32>
    %c0_25 = arith.constant 0 : index
    %c0_26 = arith.constant 0 : index
    %c0_27 = arith.constant 0 : index
    %48 = vector.load %arg3[%c0_25, %c0_26, %c0_27] : memref<32x32x8xbf16, #tpu.memory_space<vmem>>, vector<1x32x8xbf16>
    %49 = vector.shape_cast %48 : vector<1x32x8xbf16> to vector<32x8xbf16>
    %cst_28 = arith.constant dense<0.000000e+00> : vector<16x8xf32>
    %50 = tpu.matmul %38, %49, %cst_28 {dimension_numbers = #tpu.dot_dimension_numbers<[1], [0], [0], [1], [0, 0, 1, 1], [], []>} : vector<16x32xbf16>, vector<32x8xbf16>, vector<16x8xf32> -> vector<16x8xf32>
    %c0_29 = arith.constant 0 : index
    %c8 = arith.constant 8 : index
    %c0_30 = arith.constant 0 : index
    %51 = vector.load %arg5[%c0_29, %c8, %c0_30] : memref<4x16x64xf32, #tpu.memory_space<vmem>>, vector<1x1x8xf32>
    %52 = vector.shape_cast %51 : vector<1x1x8xf32> to vector<1x8xf32>
    %53 = vector.broadcast %52 : vector<1x8xf32> to vector<16x8xf32>
    %54 = arith.addf %50, %53 : vector<16x8xf32>
    %c4 = arith.constant 4 : index
    %c0_31 = arith.constant 0 : index
    %c0_32 = arith.constant 0 : index
    %55 = vector.load %arg3[%c4, %c0_31, %c0_32] : memref<32x32x8xbf16, #tpu.memory_space<vmem>>, vector<1x32x8xbf16>
    %56 = vector.shape_cast %55 : vector<1x32x8xbf16> to vector<32x8xbf16>
    %cst_33 = arith.constant dense<0.000000e+00> : vector<16x8xf32>
    %57 = tpu.matmul %38, %56, %cst_33 {dimension_numbers = #tpu.dot_dimension_numbers<[1], [0], [0], [1], [0, 0, 1, 1], [], []>} : vector<16x32xbf16>, vector<32x8xbf16>, vector<16x8xf32> -> vector<16x8xf32>
    %c0_34 = arith.constant 0 : index
    %c12 = arith.constant 12 : index
    %c0_35 = arith.constant 0 : index
    %58 = vector.load %arg5[%c0_34, %c12, %c0_35] : memref<4x16x64xf32, #tpu.memory_space<vmem>>, vector<1x1x8xf32>
    %59 = vector.shape_cast %58 : vector<1x1x8xf32> to vector<1x8xf32>
    %60 = vector.broadcast %59 : vector<1x8xf32> to vector<16x8xf32>
    %61 = arith.addf %57, %60 : vector<16x8xf32>
    %62 = vector.extract_strided_slice %46 {offsets = [0, 0], sizes = [8, 16], strides = [1, 1]} : vector<32x16xf32> to vector<8x16xf32>
    %cst_36 = arith.constant dense<0.000000e+00> : vector<16x16xf32>
    %63 = tpu.matmul %54, %62, %cst_36 {dimension_numbers = #tpu.dot_dimension_numbers<[1], [0], [0], [1], [0, 0, 1, 1], [], []>} : vector<16x8xf32>, vector<8x16xf32>, vector<16x16xf32> -> vector<16x16xf32>
    %cst_37 = arith.constant 0.353553385 : f32
    %64 = vector.broadcast %cst_37 : f32 to vector<16x16xf32>
    %65 = arith.mulf %63, %64 : vector<16x16xf32>
    %66 = vector.broadcast %11 : vector<1x16xf32> to vector<16x16xf32>
    %67 = arith.addf %65, %66 : vector<16x16xf32>
    %cst_38 = arith.constant dense<0xFF800000> : vector<16xf32>
    %68 = vector.multi_reduction <maximumf>, %67, %cst_38 [1] : vector<16x16xf32> to vector<16xf32>
    %69 = vector.shape_cast %68 : vector<16xf32> to vector<16x1xf32>
    %70 = vector.broadcast %69 : vector<16x1xf32> to vector<16x16xf32>
    %71 = arith.subf %67, %70 : vector<16x16xf32>
    %72 = math.exp %71 : vector<16x16xf32>
    %cst_39 = arith.constant dense<0.000000e+00> : vector<16xf32>
    %73 = vector.multi_reduction <add>, %72, %cst_39 [1] : vector<16x16xf32> to vector<16xf32>
    %74 = vector.shape_cast %73 : vector<16xf32> to vector<16x1xf32>
    %75 = tpu.reciprocal %74 : vector<16x1xf32> -> vector<16x1xf32>
    %76 = vector.broadcast %75 : vector<16x1xf32> to vector<16x16xf32>
    %77 = arith.mulf %72, %76 : vector<16x16xf32>
    %cst_40 = arith.constant dense<0.000000e+00> : vector<16x8xf32>
    %78 = tpu.matmul %77, %61, %cst_40 {dimension_numbers = #tpu.dot_dimension_numbers<[1], [0], [0], [1], [0, 0, 1, 1], [], []>} : vector<16x16xf32>, vector<16x8xf32>, vector<16x8xf32> -> vector<16x8xf32>
    %79 = arith.truncf %78 : vector<16x8xf32> to vector<16x8xbf16>
    %c0_41 = arith.constant 0 : index
    %c32 = arith.constant 32 : index
    %c0_42 = arith.constant 0 : index
    %80 = vector.load %arg4[%c0_41, %c32, %c0_42] : memref<4x160x64xbf16, #tpu.memory_space<vmem>>, vector<1x8x32xbf16>
    %81 = vector.shape_cast %80 : vector<1x8x32xbf16> to vector<8x32xbf16>
    %cst_43 = arith.constant dense<0.000000e+00> : vector<16x32xf32>
    %82 = tpu.matmul %79, %81, %cst_43 {dimension_numbers = #tpu.dot_dimension_numbers<[1], [0], [0], [1], [0, 0, 1, 1], [], []>} : vector<16x8xbf16>, vector<8x32xbf16>, vector<16x32xf32> -> vector<16x32xf32>
    %83 = arith.addf %47, %82 : vector<16x32xf32>
    %c1_44 = arith.constant 1 : index
    %c0_45 = arith.constant 0 : index
    %c0_46 = arith.constant 0 : index
    %84 = vector.load %arg3[%c1_44, %c0_45, %c0_46] : memref<32x32x8xbf16, #tpu.memory_space<vmem>>, vector<1x32x8xbf16>
    %85 = vector.shape_cast %84 : vector<1x32x8xbf16> to vector<32x8xbf16>
    %cst_47 = arith.constant dense<0.000000e+00> : vector<16x8xf32>
    %86 = tpu.matmul %38, %85, %cst_47 {dimension_numbers = #tpu.dot_dimension_numbers<[1], [0], [0], [1], [0, 0, 1, 1], [], []>} : vector<16x32xbf16>, vector<32x8xbf16>, vector<16x8xf32> -> vector<16x8xf32>
    %c0_48 = arith.constant 0 : index
    %c9 = arith.constant 9 : index
    %c0_49 = arith.constant 0 : index
    %87 = vector.load %arg5[%c0_48, %c9, %c0_49] : memref<4x16x64xf32, #tpu.memory_space<vmem>>, vector<1x1x8xf32>
    %88 = vector.shape_cast %87 : vector<1x1x8xf32> to vector<1x8xf32>
    %89 = vector.broadcast %88 : vector<1x8xf32> to vector<16x8xf32>
    %90 = arith.addf %86, %89 : vector<16x8xf32>
    %c5 = arith.constant 5 : index
    %c0_50 = arith.constant 0 : index
    %c0_51 = arith.constant 0 : index
    %91 = vector.load %arg3[%c5, %c0_50, %c0_51] : memref<32x32x8xbf16, #tpu.memory_space<vmem>>, vector<1x32x8xbf16>
    %92 = vector.shape_cast %91 : vector<1x32x8xbf16> to vector<32x8xbf16>
    %cst_52 = arith.constant dense<0.000000e+00> : vector<16x8xf32>
    %93 = tpu.matmul %38, %92, %cst_52 {dimension_numbers = #tpu.dot_dimension_numbers<[1], [0], [0], [1], [0, 0, 1, 1], [], []>} : vector<16x32xbf16>, vector<32x8xbf16>, vector<16x8xf32> -> vector<16x8xf32>
    %c0_53 = arith.constant 0 : index
    %c13 = arith.constant 13 : index
    %c0_54 = arith.constant 0 : index
    %94 = vector.load %arg5[%c0_53, %c13, %c0_54] : memref<4x16x64xf32, #tpu.memory_space<vmem>>, vector<1x1x8xf32>
    %95 = vector.shape_cast %94 : vector<1x1x8xf32> to vector<1x8xf32>
    %96 = vector.broadcast %95 : vector<1x8xf32> to vector<16x8xf32>
    %97 = arith.addf %93, %96 : vector<16x8xf32>
    %98 = vector.extract_strided_slice %46 {offsets = [8, 0], sizes = [8, 16], strides = [1, 1]} : vector<32x16xf32> to vector<8x16xf32>
    %cst_55 = arith.constant dense<0.000000e+00> : vector<16x16xf32>
    %99 = tpu.matmul %90, %98, %cst_55 {dimension_numbers = #tpu.dot_dimension_numbers<[1], [0], [0], [1], [0, 0, 1, 1], [], []>} : vector<16x8xf32>, vector<8x16xf32>, vector<16x16xf32> -> vector<16x16xf32>
    %cst_56 = arith.constant 0.353553385 : f32
    %100 = vector.broadcast %cst_56 : f32 to vector<16x16xf32>
    %101 = arith.mulf %99, %100 : vector<16x16xf32>
    %102 = vector.broadcast %11 : vector<1x16xf32> to vector<16x16xf32>
    %103 = arith.addf %101, %102 : vector<16x16xf32>
    %cst_57 = arith.constant dense<0xFF800000> : vector<16xf32>
    %104 = vector.multi_reduction <maximumf>, %103, %cst_57 [1] : vector<16x16xf32> to vector<16xf32>
    %105 = vector.shape_cast %104 : vector<16xf32> to vector<16x1xf32>
    %106 = vector.broadcast %105 : vector<16x1xf32> to vector<16x16xf32>
    %107 = arith.subf %103, %106 : vector<16x16xf32>
    %108 = math.exp %107 : vector<16x16xf32>
    %cst_58 = arith.constant dense<0.000000e+00> : vector<16xf32>
    %109 = vector.multi_reduction <add>, %108, %cst_58 [1] : vector<16x16xf32> to vector<16xf32>
    %110 = vector.shape_cast %109 : vector<16xf32> to vector<16x1xf32>
    %111 = tpu.reciprocal %110 : vector<16x1xf32> -> vector<16x1xf32>
    %112 = vector.broadcast %111 : vector<16x1xf32> to vector<16x16xf32>
    %113 = arith.mulf %108, %112 : vector<16x16xf32>
    %cst_59 = arith.constant dense<0.000000e+00> : vector<16x8xf32>
    %114 = tpu.matmul %113, %97, %cst_59 {dimension_numbers = #tpu.dot_dimension_numbers<[1], [0], [0], [1], [0, 0, 1, 1], [], []>} : vector<16x16xf32>, vector<16x8xf32>, vector<16x8xf32> -> vector<16x8xf32>
    %115 = arith.truncf %114 : vector<16x8xf32> to vector<16x8xbf16>
    %c0_60 = arith.constant 0 : index
    %c40 = arith.constant 40 : index
    %c0_61 = arith.constant 0 : index
    %116 = vector.load %arg4[%c0_60, %c40, %c0_61] : memref<4x160x64xbf16, #tpu.memory_space<vmem>>, vector<1x8x32xbf16>
    %117 = vector.shape_cast %116 : vector<1x8x32xbf16> to vector<8x32xbf16>
    %cst_62 = arith.constant dense<0.000000e+00> : vector<16x32xf32>
    %118 = tpu.matmul %115, %117, %cst_62 {dimension_numbers = #tpu.dot_dimension_numbers<[1], [0], [0], [1], [0, 0, 1, 1], [], []>} : vector<16x8xbf16>, vector<8x32xbf16>, vector<16x32xf32> -> vector<16x32xf32>
    %119 = arith.addf %83, %118 : vector<16x32xf32>
    %c2_63 = arith.constant 2 : index
    %c0_64 = arith.constant 0 : index
    %c0_65 = arith.constant 0 : index
    %120 = vector.load %arg3[%c2_63, %c0_64, %c0_65] : memref<32x32x8xbf16, #tpu.memory_space<vmem>>, vector<1x32x8xbf16>
    %121 = vector.shape_cast %120 : vector<1x32x8xbf16> to vector<32x8xbf16>
    %cst_66 = arith.constant dense<0.000000e+00> : vector<16x8xf32>
    %122 = tpu.matmul %38, %121, %cst_66 {dimension_numbers = #tpu.dot_dimension_numbers<[1], [0], [0], [1], [0, 0, 1, 1], [], []>} : vector<16x32xbf16>, vector<32x8xbf16>, vector<16x8xf32> -> vector<16x8xf32>
    %c0_67 = arith.constant 0 : index
    %c10 = arith.constant 10 : index
    %c0_68 = arith.constant 0 : index
    %123 = vector.load %arg5[%c0_67, %c10, %c0_68] : memref<4x16x64xf32, #tpu.memory_space<vmem>>, vector<1x1x8xf32>
    %124 = vector.shape_cast %123 : vector<1x1x8xf32> to vector<1x8xf32>
    %125 = vector.broadcast %124 : vector<1x8xf32> to vector<16x8xf32>
    %126 = arith.addf %122, %125 : vector<16x8xf32>
    %c6 = arith.constant 6 : index
    %c0_69 = arith.constant 0 : index
    %c0_70 = arith.constant 0 : index
    %127 = vector.load %arg3[%c6, %c0_69, %c0_70] : memref<32x32x8xbf16, #tpu.memory_space<vmem>>, vector<1x32x8xbf16>
    %128 = vector.shape_cast %127 : vector<1x32x8xbf16> to vector<32x8xbf16>
    %cst_71 = arith.constant dense<0.000000e+00> : vector<16x8xf32>
    %129 = tpu.matmul %38, %128, %cst_71 {dimension_numbers = #tpu.dot_dimension_numbers<[1], [0], [0], [1], [0, 0, 1, 1], [], []>} : vector<16x32xbf16>, vector<32x8xbf16>, vector<16x8xf32> -> vector<16x8xf32>
    %c0_72 = arith.constant 0 : index
    %c14 = arith.constant 14 : index
    %c0_73 = arith.constant 0 : index
    %130 = vector.load %arg5[%c0_72, %c14, %c0_73] : memref<4x16x64xf32, #tpu.memory_space<vmem>>, vector<1x1x8xf32>
    %131 = vector.shape_cast %130 : vector<1x1x8xf32> to vector<1x8xf32>
    %132 = vector.broadcast %131 : vector<1x8xf32> to vector<16x8xf32>
    %133 = arith.addf %129, %132 : vector<16x8xf32>
    %134 = vector.extract_strided_slice %46 {offsets = [16, 0], sizes = [8, 16], strides = [1, 1]} : vector<32x16xf32> to vector<8x16xf32>
    %cst_74 = arith.constant dense<0.000000e+00> : vector<16x16xf32>
    %135 = tpu.matmul %126, %134, %cst_74 {dimension_numbers = #tpu.dot_dimension_numbers<[1], [0], [0], [1], [0, 0, 1, 1], [], []>} : vector<16x8xf32>, vector<8x16xf32>, vector<16x16xf32> -> vector<16x16xf32>
    %cst_75 = arith.constant 0.353553385 : f32
    %136 = vector.broadcast %cst_75 : f32 to vector<16x16xf32>
    %137 = arith.mulf %135, %136 : vector<16x16xf32>
    %138 = vector.broadcast %11 : vector<1x16xf32> to vector<16x16xf32>
    %139 = arith.addf %137, %138 : vector<16x16xf32>
    %cst_76 = arith.constant dense<0xFF800000> : vector<16xf32>
    %140 = vector.multi_reduction <maximumf>, %139, %cst_76 [1] : vector<16x16xf32> to vector<16xf32>
    %141 = vector.shape_cast %140 : vector<16xf32> to vector<16x1xf32>
    %142 = vector.broadcast %141 : vector<16x1xf32> to vector<16x16xf32>
    %143 = arith.subf %139, %142 : vector<16x16xf32>
    %144 = math.exp %143 : vector<16x16xf32>
    %cst_77 = arith.constant dense<0.000000e+00> : vector<16xf32>
    %145 = vector.multi_reduction <add>, %144, %cst_77 [1] : vector<16x16xf32> to vector<16xf32>
    %146 = vector.shape_cast %145 : vector<16xf32> to vector<16x1xf32>
    %147 = tpu.reciprocal %146 : vector<16x1xf32> -> vector<16x1xf32>
    %148 = vector.broadcast %147 : vector<16x1xf32> to vector<16x16xf32>
    %149 = arith.mulf %144, %148 : vector<16x16xf32>
    %cst_78 = arith.constant dense<0.000000e+00> : vector<16x8xf32>
    %150 = tpu.matmul %149, %133, %cst_78 {dimension_numbers = #tpu.dot_dimension_numbers<[1], [0], [0], [1], [0, 0, 1, 1], [], []>} : vector<16x16xf32>, vector<16x8xf32>, vector<16x8xf32> -> vector<16x8xf32>
    %151 = arith.truncf %150 : vector<16x8xf32> to vector<16x8xbf16>
    %c0_79 = arith.constant 0 : index
    %c48 = arith.constant 48 : index
    %c0_80 = arith.constant 0 : index
    %152 = vector.load %arg4[%c0_79, %c48, %c0_80] : memref<4x160x64xbf16, #tpu.memory_space<vmem>>, vector<1x8x32xbf16>
    %153 = vector.shape_cast %152 : vector<1x8x32xbf16> to vector<8x32xbf16>
    %cst_81 = arith.constant dense<0.000000e+00> : vector<16x32xf32>
    %154 = tpu.matmul %151, %153, %cst_81 {dimension_numbers = #tpu.dot_dimension_numbers<[1], [0], [0], [1], [0, 0, 1, 1], [], []>} : vector<16x8xbf16>, vector<8x32xbf16>, vector<16x32xf32> -> vector<16x32xf32>
    %155 = arith.addf %119, %154 : vector<16x32xf32>
    %c3 = arith.constant 3 : index
    %c0_82 = arith.constant 0 : index
    %c0_83 = arith.constant 0 : index
    %156 = vector.load %arg3[%c3, %c0_82, %c0_83] : memref<32x32x8xbf16, #tpu.memory_space<vmem>>, vector<1x32x8xbf16>
    %157 = vector.shape_cast %156 : vector<1x32x8xbf16> to vector<32x8xbf16>
    %cst_84 = arith.constant dense<0.000000e+00> : vector<16x8xf32>
    %158 = tpu.matmul %38, %157, %cst_84 {dimension_numbers = #tpu.dot_dimension_numbers<[1], [0], [0], [1], [0, 0, 1, 1], [], []>} : vector<16x32xbf16>, vector<32x8xbf16>, vector<16x8xf32> -> vector<16x8xf32>
    %c0_85 = arith.constant 0 : index
    %c11 = arith.constant 11 : index
    %c0_86 = arith.constant 0 : index
    %159 = vector.load %arg5[%c0_85, %c11, %c0_86] : memref<4x16x64xf32, #tpu.memory_space<vmem>>, vector<1x1x8xf32>
    %160 = vector.shape_cast %159 : vector<1x1x8xf32> to vector<1x8xf32>
    %161 = vector.broadcast %160 : vector<1x8xf32> to vector<16x8xf32>
    %162 = arith.addf %158, %161 : vector<16x8xf32>
    %c7 = arith.constant 7 : index
    %c0_87 = arith.constant 0 : index
    %c0_88 = arith.constant 0 : index
    %163 = vector.load %arg3[%c7, %c0_87, %c0_88] : memref<32x32x8xbf16, #tpu.memory_space<vmem>>, vector<1x32x8xbf16>
    %164 = vector.shape_cast %163 : vector<1x32x8xbf16> to vector<32x8xbf16>
    %cst_89 = arith.constant dense<0.000000e+00> : vector<16x8xf32>
    %165 = tpu.matmul %38, %164, %cst_89 {dimension_numbers = #tpu.dot_dimension_numbers<[1], [0], [0], [1], [0, 0, 1, 1], [], []>} : vector<16x32xbf16>, vector<32x8xbf16>, vector<16x8xf32> -> vector<16x8xf32>
    %c0_90 = arith.constant 0 : index
    %c15 = arith.constant 15 : index
    %c0_91 = arith.constant 0 : index
    %166 = vector.load %arg5[%c0_90, %c15, %c0_91] : memref<4x16x64xf32, #tpu.memory_space<vmem>>, vector<1x1x8xf32>
    %167 = vector.shape_cast %166 : vector<1x1x8xf32> to vector<1x8xf32>
    %168 = vector.broadcast %167 : vector<1x8xf32> to vector<16x8xf32>
    %169 = arith.addf %165, %168 : vector<16x8xf32>
    %170 = vector.extract_strided_slice %46 {offsets = [24, 0], sizes = [8, 16], strides = [1, 1]} : vector<32x16xf32> to vector<8x16xf32>
    %cst_92 = arith.constant dense<0.000000e+00> : vector<16x16xf32>
    %171 = tpu.matmul %162, %170, %cst_92 {dimension_numbers = #tpu.dot_dimension_numbers<[1], [0], [0], [1], [0, 0, 1, 1], [], []>} : vector<16x8xf32>, vector<8x16xf32>, vector<16x16xf32> -> vector<16x16xf32>
    %cst_93 = arith.constant 0.353553385 : f32
    %172 = vector.broadcast %cst_93 : f32 to vector<16x16xf32>
    %173 = arith.mulf %171, %172 : vector<16x16xf32>
    %174 = vector.broadcast %11 : vector<1x16xf32> to vector<16x16xf32>
    %175 = arith.addf %173, %174 : vector<16x16xf32>
    %cst_94 = arith.constant dense<0xFF800000> : vector<16xf32>
    %176 = vector.multi_reduction <maximumf>, %175, %cst_94 [1] : vector<16x16xf32> to vector<16xf32>
    %177 = vector.shape_cast %176 : vector<16xf32> to vector<16x1xf32>
    %178 = vector.broadcast %177 : vector<16x1xf32> to vector<16x16xf32>
    %179 = arith.subf %175, %178 : vector<16x16xf32>
    %180 = math.exp %179 : vector<16x16xf32>
    %cst_95 = arith.constant dense<0.000000e+00> : vector<16xf32>
    %181 = vector.multi_reduction <add>, %180, %cst_95 [1] : vector<16x16xf32> to vector<16xf32>
    %182 = vector.shape_cast %181 : vector<16xf32> to vector<16x1xf32>
    %183 = tpu.reciprocal %182 : vector<16x1xf32> -> vector<16x1xf32>
    %184 = vector.broadcast %183 : vector<16x1xf32> to vector<16x16xf32>
    %185 = arith.mulf %180, %184 : vector<16x16xf32>
    %cst_96 = arith.constant dense<0.000000e+00> : vector<16x8xf32>
    %186 = tpu.matmul %185, %169, %cst_96 {dimension_numbers = #tpu.dot_dimension_numbers<[1], [0], [0], [1], [0, 0, 1, 1], [], []>} : vector<16x16xf32>, vector<16x8xf32>, vector<16x8xf32> -> vector<16x8xf32>
    %187 = arith.truncf %186 : vector<16x8xf32> to vector<16x8xbf16>
    %c0_97 = arith.constant 0 : index
    %c56 = arith.constant 56 : index
    %c0_98 = arith.constant 0 : index
    %188 = vector.load %arg4[%c0_97, %c56, %c0_98] : memref<4x160x64xbf16, #tpu.memory_space<vmem>>, vector<1x8x32xbf16>
    %189 = vector.shape_cast %188 : vector<1x8x32xbf16> to vector<8x32xbf16>
    %cst_99 = arith.constant dense<0.000000e+00> : vector<16x32xf32>
    %190 = tpu.matmul %187, %189, %cst_99 {dimension_numbers = #tpu.dot_dimension_numbers<[1], [0], [0], [1], [0, 0, 1, 1], [], []>} : vector<16x8xbf16>, vector<8x32xbf16>, vector<16x32xf32> -> vector<16x32xf32>
    %191 = arith.addf %155, %190 : vector<16x32xf32>
    %192 = arith.addf %5, %191 : vector<16x32xf32>
    %c0_100 = arith.constant 0 : index
    %c3_101 = arith.constant 3 : index
    %c0_102 = arith.constant 0 : index
    %193 = vector.load %arg5[%c0_100, %c3_101, %c0_102] : memref<4x16x64xf32, #tpu.memory_space<vmem>>, vector<1x1x32xf32>
    %194 = vector.shape_cast %193 : vector<1x1x32xf32> to vector<1x32xf32>
    %195 = vector.broadcast %194 : vector<1x32xf32> to vector<16x32xf32>
    %196 = arith.addf %192, %195 : vector<16x32xf32>
    %c0_103 = arith.constant 0 : index
    %c4_104 = arith.constant 4 : index
    %c0_105 = arith.constant 0 : index
    %197 = vector.load %arg5[%c0_103, %c4_104, %c0_105] : memref<4x16x64xf32, #tpu.memory_space<vmem>>, vector<1x1x32xf32>
    %198 = vector.shape_cast %197 : vector<1x1x32xf32> to vector<1x32xf32>
    %c0_106 = arith.constant 0 : index
    %c5_107 = arith.constant 5 : index
    %c0_108 = arith.constant 0 : index
    %199 = vector.load %arg5[%c0_106, %c5_107, %c0_108] : memref<4x16x64xf32, #tpu.memory_space<vmem>>, vector<1x1x32xf32>
    %200 = vector.shape_cast %199 : vector<1x1x32xf32> to vector<1x32xf32>
    %cst_109 = arith.constant dense<0.000000e+00> : vector<16xf32>
    %201 = vector.multi_reduction <add>, %196, %cst_109 [1] : vector<16x32xf32> to vector<16xf32>
    %202 = vector.shape_cast %201 : vector<16xf32> to vector<16x1xf32>
    %cst_110 = arith.constant 3.200000e+01 : f32
    %203 = vector.broadcast %cst_110 : f32 to vector<16x1xf32>
    %204 = arith.divf %202, %203 : vector<16x1xf32>
    %205 = vector.broadcast %204 : vector<16x1xf32> to vector<16x32xf32>
    %206 = arith.subf %196, %205 : vector<16x32xf32>
    %207 = arith.mulf %206, %206 : vector<16x32xf32>
    %cst_111 = arith.constant dense<0.000000e+00> : vector<16xf32>
    %208 = vector.multi_reduction <add>, %207, %cst_111 [1] : vector<16x32xf32> to vector<16xf32>
    %209 = vector.shape_cast %208 : vector<16xf32> to vector<16x1xf32>
    %cst_112 = arith.constant 3.200000e+01 : f32
    %210 = vector.broadcast %cst_112 : f32 to vector<16x1xf32>
    %211 = arith.divf %209, %210 : vector<16x1xf32>
    %212 = vector.broadcast %204 : vector<16x1xf32> to vector<16x32xf32>
    %213 = arith.subf %196, %212 : vector<16x32xf32>
    %cst_113 = arith.constant 9.99999997E-7 : f32
    %214 = vector.broadcast %cst_113 : f32 to vector<16x1xf32>
    %215 = arith.addf %211, %214 : vector<16x1xf32>
    %216 = math.rsqrt %215 : vector<16x1xf32>
    %217 = vector.broadcast %216 : vector<16x1xf32> to vector<16x32xf32>
    %218 = arith.mulf %213, %217 : vector<16x32xf32>
    %219 = vector.broadcast %198 : vector<1x32xf32> to vector<16x32xf32>
    %220 = arith.mulf %218, %219 : vector<16x32xf32>
    %221 = vector.broadcast %200 : vector<1x32xf32> to vector<16x32xf32>
    %222 = arith.addf %220, %221 : vector<16x32xf32>
    %223 = arith.truncf %222 : vector<16x32xf32> to vector<16x32xbf16>
    %c0_114 = arith.constant 0 : index
    %c64 = arith.constant 64 : index
    %c0_115 = arith.constant 0 : index
    %224 = vector.load %arg4[%c0_114, %c64, %c0_115] : memref<4x160x64xbf16, #tpu.memory_space<vmem>>, vector<1x32x64xbf16>
    %225 = vector.shape_cast %224 : vector<1x32x64xbf16> to vector<32x64xbf16>
    %cst_116 = arith.constant dense<0.000000e+00> : vector<16x64xf32>
    %226 = tpu.matmul %223, %225, %cst_116 {dimension_numbers = #tpu.dot_dimension_numbers<[1], [0], [0], [1], [0, 0, 1, 1], [], []>} : vector<16x32xbf16>, vector<32x64xbf16>, vector<16x64xf32> -> vector<16x64xf32>
    %c0_117 = arith.constant 0 : index
    %c6_118 = arith.constant 6 : index
    %c0_119 = arith.constant 0 : index
    %227 = vector.load %arg5[%c0_117, %c6_118, %c0_119] : memref<4x16x64xf32, #tpu.memory_space<vmem>>, vector<1x1x64xf32>
    %228 = vector.shape_cast %227 : vector<1x1x64xf32> to vector<1x64xf32>
    %229 = vector.broadcast %228 : vector<1x64xf32> to vector<16x64xf32>
    %230 = arith.addf %226, %229 : vector<16x64xf32>
    %cst_120 = arith.constant 5.000000e-01 : f32
    %231 = vector.broadcast %cst_120 : f32 to vector<16x64xf32>
    %232 = arith.mulf %231, %230 : vector<16x64xf32>
    %cst_121 = arith.constant 0.707106769 : f32
    %233 = vector.broadcast %cst_121 : f32 to vector<16x64xf32>
    %234 = arith.mulf %230, %233 : vector<16x64xf32>
    %235 = math.erf %234 : vector<16x64xf32>
    %cst_122 = arith.constant 1.000000e+00 : f32
    %236 = vector.broadcast %cst_122 : f32 to vector<16x64xf32>
    %237 = arith.addf %236, %235 : vector<16x64xf32>
    %238 = arith.mulf %232, %237 : vector<16x64xf32>
    %239 = arith.truncf %238 : vector<16x64xf32> to vector<16x64xbf16>
    %c0_123 = arith.constant 0 : index
    %c96 = arith.constant 96 : index
    %c0_124 = arith.constant 0 : index
    %240 = vector.load %arg4[%c0_123, %c96, %c0_124] : memref<4x160x64xbf16, #tpu.memory_space<vmem>>, vector<1x64x32xbf16>
    %241 = vector.shape_cast %240 : vector<1x64x32xbf16> to vector<64x32xbf16>
    %cst_125 = arith.constant dense<0.000000e+00> : vector<16x32xf32>
    %242 = tpu.matmul %239, %241, %cst_125 {dimension_numbers = #tpu.dot_dimension_numbers<[1], [0], [0], [1], [0, 0, 1, 1], [], []>} : vector<16x64xbf16>, vector<64x32xbf16>, vector<16x32xf32> -> vector<16x32xf32>
    %c0_126 = arith.constant 0 : index
    %c7_127 = arith.constant 7 : index
    %c0_128 = arith.constant 0 : index
    %243 = vector.load %arg5[%c0_126, %c7_127, %c0_128] : memref<4x16x64xf32, #tpu.memory_space<vmem>>, vector<1x1x32xf32>
    %244 = vector.shape_cast %243 : vector<1x1x32xf32> to vector<1x32xf32>
    %245 = vector.broadcast %244 : vector<1x32xf32> to vector<16x32xf32>
    %246 = arith.addf %242, %245 : vector<16x32xf32>
    %247 = arith.addf %196, %246 : vector<16x32xf32>
    %c1_129 = arith.constant 1 : index
    %c0_130 = arith.constant 0 : index
    %c0_131 = arith.constant 0 : index
    %248 = vector.load %arg5[%c1_129, %c0_130, %c0_131] : memref<4x16x64xf32, #tpu.memory_space<vmem>>, vector<1x1x32xf32>
    %249 = vector.shape_cast %248 : vector<1x1x32xf32> to vector<1x32xf32>
    %c1_132 = arith.constant 1 : index
    %c1_133 = arith.constant 1 : index
    %c0_134 = arith.constant 0 : index
    %250 = vector.load %arg5[%c1_132, %c1_133, %c0_134] : memref<4x16x64xf32, #tpu.memory_space<vmem>>, vector<1x1x32xf32>
    %251 = vector.shape_cast %250 : vector<1x1x32xf32> to vector<1x32xf32>
    %cst_135 = arith.constant dense<0.000000e+00> : vector<16xf32>
    %252 = vector.multi_reduction <add>, %247, %cst_135 [1] : vector<16x32xf32> to vector<16xf32>
    %253 = vector.shape_cast %252 : vector<16xf32> to vector<16x1xf32>
    %cst_136 = arith.constant 3.200000e+01 : f32
    %254 = vector.broadcast %cst_136 : f32 to vector<16x1xf32>
    %255 = arith.divf %253, %254 : vector<16x1xf32>
    %256 = vector.broadcast %255 : vector<16x1xf32> to vector<16x32xf32>
    %257 = arith.subf %247, %256 : vector<16x32xf32>
    %258 = arith.mulf %257, %257 : vector<16x32xf32>
    %cst_137 = arith.constant dense<0.000000e+00> : vector<16xf32>
    %259 = vector.multi_reduction <add>, %258, %cst_137 [1] : vector<16x32xf32> to vector<16xf32>
    %260 = vector.shape_cast %259 : vector<16xf32> to vector<16x1xf32>
    %cst_138 = arith.constant 3.200000e+01 : f32
    %261 = vector.broadcast %cst_138 : f32 to vector<16x1xf32>
    %262 = arith.divf %260, %261 : vector<16x1xf32>
    %263 = vector.broadcast %255 : vector<16x1xf32> to vector<16x32xf32>
    %264 = arith.subf %247, %263 : vector<16x32xf32>
    %cst_139 = arith.constant 9.99999997E-7 : f32
    %265 = vector.broadcast %cst_139 : f32 to vector<16x1xf32>
    %266 = arith.addf %262, %265 : vector<16x1xf32>
    %267 = math.rsqrt %266 : vector<16x1xf32>
    %268 = vector.broadcast %267 : vector<16x1xf32> to vector<16x32xf32>
    %269 = arith.mulf %264, %268 : vector<16x32xf32>
    %270 = vector.broadcast %249 : vector<1x32xf32> to vector<16x32xf32>
    %271 = arith.mulf %269, %270 : vector<16x32xf32>
    %272 = vector.broadcast %251 : vector<1x32xf32> to vector<16x32xf32>
    %273 = arith.addf %271, %272 : vector<16x32xf32>
    %274 = arith.truncf %273 : vector<16x32xf32> to vector<16x32xbf16>
    %c1_140 = arith.constant 1 : index
    %c0_141 = arith.constant 0 : index
    %c0_142 = arith.constant 0 : index
    %275 = vector.load %arg4[%c1_140, %c0_141, %c0_142] : memref<4x160x64xbf16, #tpu.memory_space<vmem>>, vector<1x32x32xbf16>
    %276 = vector.shape_cast %275 : vector<1x32x32xbf16> to vector<32x32xbf16>
    %cst_143 = arith.constant dense<0.000000e+00> : vector<16x32xf32>
    %277 = tpu.matmul %274, %276, %cst_143 {dimension_numbers = #tpu.dot_dimension_numbers<[1], [0], [0], [1], [0, 0, 1, 1], [], []>} : vector<16x32xbf16>, vector<32x32xbf16>, vector<16x32xf32> -> vector<16x32xf32>
    %c1_144 = arith.constant 1 : index
    %c2_145 = arith.constant 2 : index
    %c0_146 = arith.constant 0 : index
    %278 = vector.load %arg5[%c1_144, %c2_145, %c0_146] : memref<4x16x64xf32, #tpu.memory_space<vmem>>, vector<1x1x32xf32>
    %279 = vector.shape_cast %278 : vector<1x1x32xf32> to vector<1x32xf32>
    %280 = vector.broadcast %279 : vector<1x32xf32> to vector<16x32xf32>
    %281 = arith.addf %277, %280 : vector<16x32xf32>
    %282 = tpu.transpose %281, [1, 0] : vector<16x32xf32> -> vector<32x16xf32>
    %cst_147 = arith.constant 0.000000e+00 : f32
    %283 = vector.broadcast %cst_147 : f32 to vector<16x32xf32>
    %c8_148 = arith.constant 8 : index
    %c0_149 = arith.constant 0 : index
    %c0_150 = arith.constant 0 : index
    %284 = vector.load %arg3[%c8_148, %c0_149, %c0_150] : memref<32x32x8xbf16, #tpu.memory_space<vmem>>, vector<1x32x8xbf16>
    %285 = vector.shape_cast %284 : vector<1x32x8xbf16> to vector<32x8xbf16>
    %cst_151 = arith.constant dense<0.000000e+00> : vector<16x8xf32>
    %286 = tpu.matmul %274, %285, %cst_151 {dimension_numbers = #tpu.dot_dimension_numbers<[1], [0], [0], [1], [0, 0, 1, 1], [], []>} : vector<16x32xbf16>, vector<32x8xbf16>, vector<16x8xf32> -> vector<16x8xf32>
    %c1_152 = arith.constant 1 : index
    %c8_153 = arith.constant 8 : index
    %c0_154 = arith.constant 0 : index
    %287 = vector.load %arg5[%c1_152, %c8_153, %c0_154] : memref<4x16x64xf32, #tpu.memory_space<vmem>>, vector<1x1x8xf32>
    %288 = vector.shape_cast %287 : vector<1x1x8xf32> to vector<1x8xf32>
    %289 = vector.broadcast %288 : vector<1x8xf32> to vector<16x8xf32>
    %290 = arith.addf %286, %289 : vector<16x8xf32>
    %c12_155 = arith.constant 12 : index
    %c0_156 = arith.constant 0 : index
    %c0_157 = arith.constant 0 : index
    %291 = vector.load %arg3[%c12_155, %c0_156, %c0_157] : memref<32x32x8xbf16, #tpu.memory_space<vmem>>, vector<1x32x8xbf16>
    %292 = vector.shape_cast %291 : vector<1x32x8xbf16> to vector<32x8xbf16>
    %cst_158 = arith.constant dense<0.000000e+00> : vector<16x8xf32>
    %293 = tpu.matmul %274, %292, %cst_158 {dimension_numbers = #tpu.dot_dimension_numbers<[1], [0], [0], [1], [0, 0, 1, 1], [], []>} : vector<16x32xbf16>, vector<32x8xbf16>, vector<16x8xf32> -> vector<16x8xf32>
    %c1_159 = arith.constant 1 : index
    %c12_160 = arith.constant 12 : index
    %c0_161 = arith.constant 0 : index
    %294 = vector.load %arg5[%c1_159, %c12_160, %c0_161] : memref<4x16x64xf32, #tpu.memory_space<vmem>>, vector<1x1x8xf32>
    %295 = vector.shape_cast %294 : vector<1x1x8xf32> to vector<1x8xf32>
    %296 = vector.broadcast %295 : vector<1x8xf32> to vector<16x8xf32>
    %297 = arith.addf %293, %296 : vector<16x8xf32>
    %298 = vector.extract_strided_slice %282 {offsets = [0, 0], sizes = [8, 16], strides = [1, 1]} : vector<32x16xf32> to vector<8x16xf32>
    %cst_162 = arith.constant dense<0.000000e+00> : vector<16x16xf32>
    %299 = tpu.matmul %290, %298, %cst_162 {dimension_numbers = #tpu.dot_dimension_numbers<[1], [0], [0], [1], [0, 0, 1, 1], [], []>} : vector<16x8xf32>, vector<8x16xf32>, vector<16x16xf32> -> vector<16x16xf32>
    %cst_163 = arith.constant 0.353553385 : f32
    %300 = vector.broadcast %cst_163 : f32 to vector<16x16xf32>
    %301 = arith.mulf %299, %300 : vector<16x16xf32>
    %302 = vector.broadcast %11 : vector<1x16xf32> to vector<16x16xf32>
    %303 = arith.addf %301, %302 : vector<16x16xf32>
    %cst_164 = arith.constant dense<0xFF800000> : vector<16xf32>
    %304 = vector.multi_reduction <maximumf>, %303, %cst_164 [1] : vector<16x16xf32> to vector<16xf32>
    %305 = vector.shape_cast %304 : vector<16xf32> to vector<16x1xf32>
    %306 = vector.broadcast %305 : vector<16x1xf32> to vector<16x16xf32>
    %307 = arith.subf %303, %306 : vector<16x16xf32>
    %308 = math.exp %307 : vector<16x16xf32>
    %cst_165 = arith.constant dense<0.000000e+00> : vector<16xf32>
    %309 = vector.multi_reduction <add>, %308, %cst_165 [1] : vector<16x16xf32> to vector<16xf32>
    %310 = vector.shape_cast %309 : vector<16xf32> to vector<16x1xf32>
    %311 = tpu.reciprocal %310 : vector<16x1xf32> -> vector<16x1xf32>
    %312 = vector.broadcast %311 : vector<16x1xf32> to vector<16x16xf32>
    %313 = arith.mulf %308, %312 : vector<16x16xf32>
    %cst_166 = arith.constant dense<0.000000e+00> : vector<16x8xf32>
    %314 = tpu.matmul %313, %297, %cst_166 {dimension_numbers = #tpu.dot_dimension_numbers<[1], [0], [0], [1], [0, 0, 1, 1], [], []>} : vector<16x16xf32>, vector<16x8xf32>, vector<16x8xf32> -> vector<16x8xf32>
    %315 = arith.truncf %314 : vector<16x8xf32> to vector<16x8xbf16>
    %c1_167 = arith.constant 1 : index
    %c32_168 = arith.constant 32 : index
    %c0_169 = arith.constant 0 : index
    %316 = vector.load %arg4[%c1_167, %c32_168, %c0_169] : memref<4x160x64xbf16, #tpu.memory_space<vmem>>, vector<1x8x32xbf16>
    %317 = vector.shape_cast %316 : vector<1x8x32xbf16> to vector<8x32xbf16>
    %cst_170 = arith.constant dense<0.000000e+00> : vector<16x32xf32>
    %318 = tpu.matmul %315, %317, %cst_170 {dimension_numbers = #tpu.dot_dimension_numbers<[1], [0], [0], [1], [0, 0, 1, 1], [], []>} : vector<16x8xbf16>, vector<8x32xbf16>, vector<16x32xf32> -> vector<16x32xf32>
    %319 = arith.addf %283, %318 : vector<16x32xf32>
    %c9_171 = arith.constant 9 : index
    %c0_172 = arith.constant 0 : index
    %c0_173 = arith.constant 0 : index
    %320 = vector.load %arg3[%c9_171, %c0_172, %c0_173] : memref<32x32x8xbf16, #tpu.memory_space<vmem>>, vector<1x32x8xbf16>
    %321 = vector.shape_cast %320 : vector<1x32x8xbf16> to vector<32x8xbf16>
    %cst_174 = arith.constant dense<0.000000e+00> : vector<16x8xf32>
    %322 = tpu.matmul %274, %321, %cst_174 {dimension_numbers = #tpu.dot_dimension_numbers<[1], [0], [0], [1], [0, 0, 1, 1], [], []>} : vector<16x32xbf16>, vector<32x8xbf16>, vector<16x8xf32> -> vector<16x8xf32>
    %c1_175 = arith.constant 1 : index
    %c9_176 = arith.constant 9 : index
    %c0_177 = arith.constant 0 : index
    %323 = vector.load %arg5[%c1_175, %c9_176, %c0_177] : memref<4x16x64xf32, #tpu.memory_space<vmem>>, vector<1x1x8xf32>
    %324 = vector.shape_cast %323 : vector<1x1x8xf32> to vector<1x8xf32>
    %325 = vector.broadcast %324 : vector<1x8xf32> to vector<16x8xf32>
    %326 = arith.addf %322, %325 : vector<16x8xf32>
    %c13_178 = arith.constant 13 : index
    %c0_179 = arith.constant 0 : index
    %c0_180 = arith.constant 0 : index
    %327 = vector.load %arg3[%c13_178, %c0_179, %c0_180] : memref<32x32x8xbf16, #tpu.memory_space<vmem>>, vector<1x32x8xbf16>
    %328 = vector.shape_cast %327 : vector<1x32x8xbf16> to vector<32x8xbf16>
    %cst_181 = arith.constant dense<0.000000e+00> : vector<16x8xf32>
    %329 = tpu.matmul %274, %328, %cst_181 {dimension_numbers = #tpu.dot_dimension_numbers<[1], [0], [0], [1], [0, 0, 1, 1], [], []>} : vector<16x32xbf16>, vector<32x8xbf16>, vector<16x8xf32> -> vector<16x8xf32>
    %c1_182 = arith.constant 1 : index
    %c13_183 = arith.constant 13 : index
    %c0_184 = arith.constant 0 : index
    %330 = vector.load %arg5[%c1_182, %c13_183, %c0_184] : memref<4x16x64xf32, #tpu.memory_space<vmem>>, vector<1x1x8xf32>
    %331 = vector.shape_cast %330 : vector<1x1x8xf32> to vector<1x8xf32>
    %332 = vector.broadcast %331 : vector<1x8xf32> to vector<16x8xf32>
    %333 = arith.addf %329, %332 : vector<16x8xf32>
    %334 = vector.extract_strided_slice %282 {offsets = [8, 0], sizes = [8, 16], strides = [1, 1]} : vector<32x16xf32> to vector<8x16xf32>
    %cst_185 = arith.constant dense<0.000000e+00> : vector<16x16xf32>
    %335 = tpu.matmul %326, %334, %cst_185 {dimension_numbers = #tpu.dot_dimension_numbers<[1], [0], [0], [1], [0, 0, 1, 1], [], []>} : vector<16x8xf32>, vector<8x16xf32>, vector<16x16xf32> -> vector<16x16xf32>
    %cst_186 = arith.constant 0.353553385 : f32
    %336 = vector.broadcast %cst_186 : f32 to vector<16x16xf32>
    %337 = arith.mulf %335, %336 : vector<16x16xf32>
    %338 = vector.broadcast %11 : vector<1x16xf32> to vector<16x16xf32>
    %339 = arith.addf %337, %338 : vector<16x16xf32>
    %cst_187 = arith.constant dense<0xFF800000> : vector<16xf32>
    %340 = vector.multi_reduction <maximumf>, %339, %cst_187 [1] : vector<16x16xf32> to vector<16xf32>
    %341 = vector.shape_cast %340 : vector<16xf32> to vector<16x1xf32>
    %342 = vector.broadcast %341 : vector<16x1xf32> to vector<16x16xf32>
    %343 = arith.subf %339, %342 : vector<16x16xf32>
    %344 = math.exp %343 : vector<16x16xf32>
    %cst_188 = arith.constant dense<0.000000e+00> : vector<16xf32>
    %345 = vector.multi_reduction <add>, %344, %cst_188 [1] : vector<16x16xf32> to vector<16xf32>
    %346 = vector.shape_cast %345 : vector<16xf32> to vector<16x1xf32>
    %347 = tpu.reciprocal %346 : vector<16x1xf32> -> vector<16x1xf32>
    %348 = vector.broadcast %347 : vector<16x1xf32> to vector<16x16xf32>
    %349 = arith.mulf %344, %348 : vector<16x16xf32>
    %cst_189 = arith.constant dense<0.000000e+00> : vector<16x8xf32>
    %350 = tpu.matmul %349, %333, %cst_189 {dimension_numbers = #tpu.dot_dimension_numbers<[1], [0], [0], [1], [0, 0, 1, 1], [], []>} : vector<16x16xf32>, vector<16x8xf32>, vector<16x8xf32> -> vector<16x8xf32>
    %351 = arith.truncf %350 : vector<16x8xf32> to vector<16x8xbf16>
    %c1_190 = arith.constant 1 : index
    %c40_191 = arith.constant 40 : index
    %c0_192 = arith.constant 0 : index
    %352 = vector.load %arg4[%c1_190, %c40_191, %c0_192] : memref<4x160x64xbf16, #tpu.memory_space<vmem>>, vector<1x8x32xbf16>
    %353 = vector.shape_cast %352 : vector<1x8x32xbf16> to vector<8x32xbf16>
    %cst_193 = arith.constant dense<0.000000e+00> : vector<16x32xf32>
    %354 = tpu.matmul %351, %353, %cst_193 {dimension_numbers = #tpu.dot_dimension_numbers<[1], [0], [0], [1], [0, 0, 1, 1], [], []>} : vector<16x8xbf16>, vector<8x32xbf16>, vector<16x32xf32> -> vector<16x32xf32>
    %355 = arith.addf %319, %354 : vector<16x32xf32>
    %c10_194 = arith.constant 10 : index
    %c0_195 = arith.constant 0 : index
    %c0_196 = arith.constant 0 : index
    %356 = vector.load %arg3[%c10_194, %c0_195, %c0_196] : memref<32x32x8xbf16, #tpu.memory_space<vmem>>, vector<1x32x8xbf16>
    %357 = vector.shape_cast %356 : vector<1x32x8xbf16> to vector<32x8xbf16>
    %cst_197 = arith.constant dense<0.000000e+00> : vector<16x8xf32>
    %358 = tpu.matmul %274, %357, %cst_197 {dimension_numbers = #tpu.dot_dimension_numbers<[1], [0], [0], [1], [0, 0, 1, 1], [], []>} : vector<16x32xbf16>, vector<32x8xbf16>, vector<16x8xf32> -> vector<16x8xf32>
    %c1_198 = arith.constant 1 : index
    %c10_199 = arith.constant 10 : index
    %c0_200 = arith.constant 0 : index
    %359 = vector.load %arg5[%c1_198, %c10_199, %c0_200] : memref<4x16x64xf32, #tpu.memory_space<vmem>>, vector<1x1x8xf32>
    %360 = vector.shape_cast %359 : vector<1x1x8xf32> to vector<1x8xf32>
    %361 = vector.broadcast %360 : vector<1x8xf32> to vector<16x8xf32>
    %362 = arith.addf %358, %361 : vector<16x8xf32>
    %c14_201 = arith.constant 14 : index
    %c0_202 = arith.constant 0 : index
    %c0_203 = arith.constant 0 : index
    %363 = vector.load %arg3[%c14_201, %c0_202, %c0_203] : memref<32x32x8xbf16, #tpu.memory_space<vmem>>, vector<1x32x8xbf16>
    %364 = vector.shape_cast %363 : vector<1x32x8xbf16> to vector<32x8xbf16>
    %cst_204 = arith.constant dense<0.000000e+00> : vector<16x8xf32>
    %365 = tpu.matmul %274, %364, %cst_204 {dimension_numbers = #tpu.dot_dimension_numbers<[1], [0], [0], [1], [0, 0, 1, 1], [], []>} : vector<16x32xbf16>, vector<32x8xbf16>, vector<16x8xf32> -> vector<16x8xf32>
    %c1_205 = arith.constant 1 : index
    %c14_206 = arith.constant 14 : index
    %c0_207 = arith.constant 0 : index
    %366 = vector.load %arg5[%c1_205, %c14_206, %c0_207] : memref<4x16x64xf32, #tpu.memory_space<vmem>>, vector<1x1x8xf32>
    %367 = vector.shape_cast %366 : vector<1x1x8xf32> to vector<1x8xf32>
    %368 = vector.broadcast %367 : vector<1x8xf32> to vector<16x8xf32>
    %369 = arith.addf %365, %368 : vector<16x8xf32>
    %370 = vector.extract_strided_slice %282 {offsets = [16, 0], sizes = [8, 16], strides = [1, 1]} : vector<32x16xf32> to vector<8x16xf32>
    %cst_208 = arith.constant dense<0.000000e+00> : vector<16x16xf32>
    %371 = tpu.matmul %362, %370, %cst_208 {dimension_numbers = #tpu.dot_dimension_numbers<[1], [0], [0], [1], [0, 0, 1, 1], [], []>} : vector<16x8xf32>, vector<8x16xf32>, vector<16x16xf32> -> vector<16x16xf32>
    %cst_209 = arith.constant 0.353553385 : f32
    %372 = vector.broadcast %cst_209 : f32 to vector<16x16xf32>
    %373 = arith.mulf %371, %372 : vector<16x16xf32>
    %374 = vector.broadcast %11 : vector<1x16xf32> to vector<16x16xf32>
    %375 = arith.addf %373, %374 : vector<16x16xf32>
    %cst_210 = arith.constant dense<0xFF800000> : vector<16xf32>
    %376 = vector.multi_reduction <maximumf>, %375, %cst_210 [1] : vector<16x16xf32> to vector<16xf32>
    %377 = vector.shape_cast %376 : vector<16xf32> to vector<16x1xf32>
    %378 = vector.broadcast %377 : vector<16x1xf32> to vector<16x16xf32>
    %379 = arith.subf %375, %378 : vector<16x16xf32>
    %380 = math.exp %379 : vector<16x16xf32>
    %cst_211 = arith.constant dense<0.000000e+00> : vector<16xf32>
    %381 = vector.multi_reduction <add>, %380, %cst_211 [1] : vector<16x16xf32> to vector<16xf32>
    %382 = vector.shape_cast %381 : vector<16xf32> to vector<16x1xf32>
    %383 = tpu.reciprocal %382 : vector<16x1xf32> -> vector<16x1xf32>
    %384 = vector.broadcast %383 : vector<16x1xf32> to vector<16x16xf32>
    %385 = arith.mulf %380, %384 : vector<16x16xf32>
    %cst_212 = arith.constant dense<0.000000e+00> : vector<16x8xf32>
    %386 = tpu.matmul %385, %369, %cst_212 {dimension_numbers = #tpu.dot_dimension_numbers<[1], [0], [0], [1], [0, 0, 1, 1], [], []>} : vector<16x16xf32>, vector<16x8xf32>, vector<16x8xf32> -> vector<16x8xf32>
    %387 = arith.truncf %386 : vector<16x8xf32> to vector<16x8xbf16>
    %c1_213 = arith.constant 1 : index
    %c48_214 = arith.constant 48 : index
    %c0_215 = arith.constant 0 : index
    %388 = vector.load %arg4[%c1_213, %c48_214, %c0_215] : memref<4x160x64xbf16, #tpu.memory_space<vmem>>, vector<1x8x32xbf16>
    %389 = vector.shape_cast %388 : vector<1x8x32xbf16> to vector<8x32xbf16>
    %cst_216 = arith.constant dense<0.000000e+00> : vector<16x32xf32>
    %390 = tpu.matmul %387, %389, %cst_216 {dimension_numbers = #tpu.dot_dimension_numbers<[1], [0], [0], [1], [0, 0, 1, 1], [], []>} : vector<16x8xbf16>, vector<8x32xbf16>, vector<16x32xf32> -> vector<16x32xf32>
    %391 = arith.addf %355, %390 : vector<16x32xf32>
    %c11_217 = arith.constant 11 : index
    %c0_218 = arith.constant 0 : index
    %c0_219 = arith.constant 0 : index
    %392 = vector.load %arg3[%c11_217, %c0_218, %c0_219] : memref<32x32x8xbf16, #tpu.memory_space<vmem>>, vector<1x32x8xbf16>
    %393 = vector.shape_cast %392 : vector<1x32x8xbf16> to vector<32x8xbf16>
    %cst_220 = arith.constant dense<0.000000e+00> : vector<16x8xf32>
    %394 = tpu.matmul %274, %393, %cst_220 {dimension_numbers = #tpu.dot_dimension_numbers<[1], [0], [0], [1], [0, 0, 1, 1], [], []>} : vector<16x32xbf16>, vector<32x8xbf16>, vector<16x8xf32> -> vector<16x8xf32>
    %c1_221 = arith.constant 1 : index
    %c11_222 = arith.constant 11 : index
    %c0_223 = arith.constant 0 : index
    %395 = vector.load %arg5[%c1_221, %c11_222, %c0_223] : memref<4x16x64xf32, #tpu.memory_space<vmem>>, vector<1x1x8xf32>
    %396 = vector.shape_cast %395 : vector<1x1x8xf32> to vector<1x8xf32>
    %397 = vector.broadcast %396 : vector<1x8xf32> to vector<16x8xf32>
    %398 = arith.addf %394, %397 : vector<16x8xf32>
    %c15_224 = arith.constant 15 : index
    %c0_225 = arith.constant 0 : index
    %c0_226 = arith.constant 0 : index
    %399 = vector.load %arg3[%c15_224, %c0_225, %c0_226] : memref<32x32x8xbf16, #tpu.memory_space<vmem>>, vector<1x32x8xbf16>
    %400 = vector.shape_cast %399 : vector<1x32x8xbf16> to vector<32x8xbf16>
    %cst_227 = arith.constant dense<0.000000e+00> : vector<16x8xf32>
    %401 = tpu.matmul %274, %400, %cst_227 {dimension_numbers = #tpu.dot_dimension_numbers<[1], [0], [0], [1], [0, 0, 1, 1], [], []>} : vector<16x32xbf16>, vector<32x8xbf16>, vector<16x8xf32> -> vector<16x8xf32>
    %c1_228 = arith.constant 1 : index
    %c15_229 = arith.constant 15 : index
    %c0_230 = arith.constant 0 : index
    %402 = vector.load %arg5[%c1_228, %c15_229, %c0_230] : memref<4x16x64xf32, #tpu.memory_space<vmem>>, vector<1x1x8xf32>
    %403 = vector.shape_cast %402 : vector<1x1x8xf32> to vector<1x8xf32>
    %404 = vector.broadcast %403 : vector<1x8xf32> to vector<16x8xf32>
    %405 = arith.addf %401, %404 : vector<16x8xf32>
    %406 = vector.extract_strided_slice %282 {offsets = [24, 0], sizes = [8, 16], strides = [1, 1]} : vector<32x16xf32> to vector<8x16xf32>
    %cst_231 = arith.constant dense<0.000000e+00> : vector<16x16xf32>
    %407 = tpu.matmul %398, %406, %cst_231 {dimension_numbers = #tpu.dot_dimension_numbers<[1], [0], [0], [1], [0, 0, 1, 1], [], []>} : vector<16x8xf32>, vector<8x16xf32>, vector<16x16xf32> -> vector<16x16xf32>
    %cst_232 = arith.constant 0.353553385 : f32
    %408 = vector.broadcast %cst_232 : f32 to vector<16x16xf32>
    %409 = arith.mulf %407, %408 : vector<16x16xf32>
    %410 = vector.broadcast %11 : vector<1x16xf32> to vector<16x16xf32>
    %411 = arith.addf %409, %410 : vector<16x16xf32>
    %cst_233 = arith.constant dense<0xFF800000> : vector<16xf32>
    %412 = vector.multi_reduction <maximumf>, %411, %cst_233 [1] : vector<16x16xf32> to vector<16xf32>
    %413 = vector.shape_cast %412 : vector<16xf32> to vector<16x1xf32>
    %414 = vector.broadcast %413 : vector<16x1xf32> to vector<16x16xf32>
    %415 = arith.subf %411, %414 : vector<16x16xf32>
    %416 = math.exp %415 : vector<16x16xf32>
    %cst_234 = arith.constant dense<0.000000e+00> : vector<16xf32>
    %417 = vector.multi_reduction <add>, %416, %cst_234 [1] : vector<16x16xf32> to vector<16xf32>
    %418 = vector.shape_cast %417 : vector<16xf32> to vector<16x1xf32>
    %419 = tpu.reciprocal %418 : vector<16x1xf32> -> vector<16x1xf32>
    %420 = vector.broadcast %419 : vector<16x1xf32> to vector<16x16xf32>
    %421 = arith.mulf %416, %420 : vector<16x16xf32>
    %cst_235 = arith.constant dense<0.000000e+00> : vector<16x8xf32>
    %422 = tpu.matmul %421, %405, %cst_235 {dimension_numbers = #tpu.dot_dimension_numbers<[1], [0], [0], [1], [0, 0, 1, 1], [], []>} : vector<16x16xf32>, vector<16x8xf32>, vector<16x8xf32> -> vector<16x8xf32>
    %423 = arith.truncf %422 : vector<16x8xf32> to vector<16x8xbf16>
    %c1_236 = arith.constant 1 : index
    %c56_237 = arith.constant 56 : index
    %c0_238 = arith.constant 0 : index
    %424 = vector.load %arg4[%c1_236, %c56_237, %c0_238] : memref<4x160x64xbf16, #tpu.memory_space<vmem>>, vector<1x8x32xbf16>
    %425 = vector.shape_cast %424 : vector<1x8x32xbf16> to vector<8x32xbf16>
    %cst_239 = arith.constant dense<0.000000e+00> : vector<16x32xf32>
    %426 = tpu.matmul %423, %425, %cst_239 {dimension_numbers = #tpu.dot_dimension_numbers<[1], [0], [0], [1], [0, 0, 1, 1], [], []>} : vector<16x8xbf16>, vector<8x32xbf16>, vector<16x32xf32> -> vector<16x32xf32>
    %427 = arith.addf %391, %426 : vector<16x32xf32>
    %428 = arith.addf %247, %427 : vector<16x32xf32>
    %c1_240 = arith.constant 1 : index
    %c3_241 = arith.constant 3 : index
    %c0_242 = arith.constant 0 : index
    %429 = vector.load %arg5[%c1_240, %c3_241, %c0_242] : memref<4x16x64xf32, #tpu.memory_space<vmem>>, vector<1x1x32xf32>
    %430 = vector.shape_cast %429 : vector<1x1x32xf32> to vector<1x32xf32>
    %431 = vector.broadcast %430 : vector<1x32xf32> to vector<16x32xf32>
    %432 = arith.addf %428, %431 : vector<16x32xf32>
    %c1_243 = arith.constant 1 : index
    %c4_244 = arith.constant 4 : index
    %c0_245 = arith.constant 0 : index
    %433 = vector.load %arg5[%c1_243, %c4_244, %c0_245] : memref<4x16x64xf32, #tpu.memory_space<vmem>>, vector<1x1x32xf32>
    %434 = vector.shape_cast %433 : vector<1x1x32xf32> to vector<1x32xf32>
    %c1_246 = arith.constant 1 : index
    %c5_247 = arith.constant 5 : index
    %c0_248 = arith.constant 0 : index
    %435 = vector.load %arg5[%c1_246, %c5_247, %c0_248] : memref<4x16x64xf32, #tpu.memory_space<vmem>>, vector<1x1x32xf32>
    %436 = vector.shape_cast %435 : vector<1x1x32xf32> to vector<1x32xf32>
    %cst_249 = arith.constant dense<0.000000e+00> : vector<16xf32>
    %437 = vector.multi_reduction <add>, %432, %cst_249 [1] : vector<16x32xf32> to vector<16xf32>
    %438 = vector.shape_cast %437 : vector<16xf32> to vector<16x1xf32>
    %cst_250 = arith.constant 3.200000e+01 : f32
    %439 = vector.broadcast %cst_250 : f32 to vector<16x1xf32>
    %440 = arith.divf %438, %439 : vector<16x1xf32>
    %441 = vector.broadcast %440 : vector<16x1xf32> to vector<16x32xf32>
    %442 = arith.subf %432, %441 : vector<16x32xf32>
    %443 = arith.mulf %442, %442 : vector<16x32xf32>
    %cst_251 = arith.constant dense<0.000000e+00> : vector<16xf32>
    %444 = vector.multi_reduction <add>, %443, %cst_251 [1] : vector<16x32xf32> to vector<16xf32>
    %445 = vector.shape_cast %444 : vector<16xf32> to vector<16x1xf32>
    %cst_252 = arith.constant 3.200000e+01 : f32
    %446 = vector.broadcast %cst_252 : f32 to vector<16x1xf32>
    %447 = arith.divf %445, %446 : vector<16x1xf32>
    %448 = vector.broadcast %440 : vector<16x1xf32> to vector<16x32xf32>
    %449 = arith.subf %432, %448 : vector<16x32xf32>
    %cst_253 = arith.constant 9.99999997E-7 : f32
    %450 = vector.broadcast %cst_253 : f32 to vector<16x1xf32>
    %451 = arith.addf %447, %450 : vector<16x1xf32>
    %452 = math.rsqrt %451 : vector<16x1xf32>
    %453 = vector.broadcast %452 : vector<16x1xf32> to vector<16x32xf32>
    %454 = arith.mulf %449, %453 : vector<16x32xf32>
    %455 = vector.broadcast %434 : vector<1x32xf32> to vector<16x32xf32>
    %456 = arith.mulf %454, %455 : vector<16x32xf32>
    %457 = vector.broadcast %436 : vector<1x32xf32> to vector<16x32xf32>
    %458 = arith.addf %456, %457 : vector<16x32xf32>
    %459 = arith.truncf %458 : vector<16x32xf32> to vector<16x32xbf16>
    %c1_254 = arith.constant 1 : index
    %c64_255 = arith.constant 64 : index
    %c0_256 = arith.constant 0 : index
    %460 = vector.load %arg4[%c1_254, %c64_255, %c0_256] : memref<4x160x64xbf16, #tpu.memory_space<vmem>>, vector<1x32x64xbf16>
    %461 = vector.shape_cast %460 : vector<1x32x64xbf16> to vector<32x64xbf16>
    %cst_257 = arith.constant dense<0.000000e+00> : vector<16x64xf32>
    %462 = tpu.matmul %459, %461, %cst_257 {dimension_numbers = #tpu.dot_dimension_numbers<[1], [0], [0], [1], [0, 0, 1, 1], [], []>} : vector<16x32xbf16>, vector<32x64xbf16>, vector<16x64xf32> -> vector<16x64xf32>
    %c1_258 = arith.constant 1 : index
    %c6_259 = arith.constant 6 : index
    %c0_260 = arith.constant 0 : index
    %463 = vector.load %arg5[%c1_258, %c6_259, %c0_260] : memref<4x16x64xf32, #tpu.memory_space<vmem>>, vector<1x1x64xf32>
    %464 = vector.shape_cast %463 : vector<1x1x64xf32> to vector<1x64xf32>
    %465 = vector.broadcast %464 : vector<1x64xf32> to vector<16x64xf32>
    %466 = arith.addf %462, %465 : vector<16x64xf32>
    %cst_261 = arith.constant 5.000000e-01 : f32
    %467 = vector.broadcast %cst_261 : f32 to vector<16x64xf32>
    %468 = arith.mulf %467, %466 : vector<16x64xf32>
    %cst_262 = arith.constant 0.707106769 : f32
    %469 = vector.broadcast %cst_262 : f32 to vector<16x64xf32>
    %470 = arith.mulf %466, %469 : vector<16x64xf32>
    %471 = math.erf %470 : vector<16x64xf32>
    %cst_263 = arith.constant 1.000000e+00 : f32
    %472 = vector.broadcast %cst_263 : f32 to vector<16x64xf32>
    %473 = arith.addf %472, %471 : vector<16x64xf32>
    %474 = arith.mulf %468, %473 : vector<16x64xf32>
    %475 = arith.truncf %474 : vector<16x64xf32> to vector<16x64xbf16>
    %c1_264 = arith.constant 1 : index
    %c96_265 = arith.constant 96 : index
    %c0_266 = arith.constant 0 : index
    %476 = vector.load %arg4[%c1_264, %c96_265, %c0_266] : memref<4x160x64xbf16, #tpu.memory_space<vmem>>, vector<1x64x32xbf16>
    %477 = vector.shape_cast %476 : vector<1x64x32xbf16> to vector<64x32xbf16>
    %cst_267 = arith.constant dense<0.000000e+00> : vector<16x32xf32>
    %478 = tpu.matmul %475, %477, %cst_267 {dimension_numbers = #tpu.dot_dimension_numbers<[1], [0], [0], [1], [0, 0, 1, 1], [], []>} : vector<16x64xbf16>, vector<64x32xbf16>, vector<16x32xf32> -> vector<16x32xf32>
    %c1_268 = arith.constant 1 : index
    %c7_269 = arith.constant 7 : index
    %c0_270 = arith.constant 0 : index
    %479 = vector.load %arg5[%c1_268, %c7_269, %c0_270] : memref<4x16x64xf32, #tpu.memory_space<vmem>>, vector<1x1x32xf32>
    %480 = vector.shape_cast %479 : vector<1x1x32xf32> to vector<1x32xf32>
    %481 = vector.broadcast %480 : vector<1x32xf32> to vector<16x32xf32>
    %482 = arith.addf %478, %481 : vector<16x32xf32>
    %483 = arith.addf %432, %482 : vector<16x32xf32>
    %c48_271 = arith.constant 48 : index
    %c0_272 = arith.constant 0 : index
    %484 = vector.load %arg6[%c48_271, %c0_272] : memref<88x32xf32, #tpu.memory_space<vmem>>, vector<1x32xf32>
    %c49 = arith.constant 49 : index
    %c0_273 = arith.constant 0 : index
    %485 = vector.load %arg6[%c49, %c0_273] : memref<88x32xf32, #tpu.memory_space<vmem>>, vector<1x32xf32>
    %cst_274 = arith.constant dense<0.000000e+00> : vector<16xf32>
    %486 = vector.multi_reduction <add>, %483, %cst_274 [1] : vector<16x32xf32> to vector<16xf32>
    %487 = vector.shape_cast %486 : vector<16xf32> to vector<16x1xf32>
    %cst_275 = arith.constant 3.200000e+01 : f32
    %488 = vector.broadcast %cst_275 : f32 to vector<16x1xf32>
    %489 = arith.divf %487, %488 : vector<16x1xf32>
    %490 = vector.broadcast %489 : vector<16x1xf32> to vector<16x32xf32>
    %491 = arith.subf %483, %490 : vector<16x32xf32>
    %492 = arith.mulf %491, %491 : vector<16x32xf32>
    %cst_276 = arith.constant dense<0.000000e+00> : vector<16xf32>
    %493 = vector.multi_reduction <add>, %492, %cst_276 [1] : vector<16x32xf32> to vector<16xf32>
    %494 = vector.shape_cast %493 : vector<16xf32> to vector<16x1xf32>
    %cst_277 = arith.constant 3.200000e+01 : f32
    %495 = vector.broadcast %cst_277 : f32 to vector<16x1xf32>
    %496 = arith.divf %494, %495 : vector<16x1xf32>
    %497 = vector.broadcast %489 : vector<16x1xf32> to vector<16x32xf32>
    %498 = arith.subf %483, %497 : vector<16x32xf32>
    %cst_278 = arith.constant 9.99999997E-7 : f32
    %499 = vector.broadcast %cst_278 : f32 to vector<16x1xf32>
    %500 = arith.addf %496, %499 : vector<16x1xf32>
    %501 = math.rsqrt %500 : vector<16x1xf32>
    %502 = vector.broadcast %501 : vector<16x1xf32> to vector<16x32xf32>
    %503 = arith.mulf %498, %502 : vector<16x32xf32>
    %504 = vector.broadcast %484 : vector<1x32xf32> to vector<16x32xf32>
    %505 = arith.mulf %503, %504 : vector<16x32xf32>
    %506 = vector.broadcast %485 : vector<1x32xf32> to vector<16x32xf32>
    %507 = arith.addf %505, %506 : vector<16x32xf32>
    %c32_279 = arith.constant 32 : index
    %c0_280 = arith.constant 0 : index
    %508 = vector.load %arg6[%c32_279, %c0_280] : memref<88x32xf32, #tpu.memory_space<vmem>>, vector<16x16xf32>
    %cst_281 = arith.constant dense<0.000000e+00> : vector<16x32xf32>
    %509 = tpu.matmul %508, %507, %cst_281 {dimension_numbers = #tpu.dot_dimension_numbers<[1], [0], [0], [1], [0, 0, 1, 1], [], []>} : vector<16x16xf32>, vector<16x32xf32>, vector<16x32xf32> -> vector<16x32xf32>
    %c16 = arith.constant 16 : index
    %c0_282 = arith.constant 0 : index
    %510 = vector.load %arg6[%c16, %c0_282] : memref<88x32xf32, #tpu.memory_space<vmem>>, vector<16x32xf32>
    %511 = arith.addf %509, %510 : vector<16x32xf32>
    %512 = tpu.iota {dimensions = array<i32: 1>} : vector<1x16xi32>
    %c10_i32 = arith.constant 10 : i32
    %513 = vector.broadcast %c10_i32 : i32 to vector<1x16xi32>
    %514 = arith.cmpi slt, %512, %513 : vector<1x16xi32>
    %cst_283 = arith.constant 0.000000e+00 : f32
    %cst_284 = arith.constant -1.000000e+30 : f32
    %515 = vector.broadcast %cst_283 : f32 to vector<1x16xf32>
    %516 = vector.broadcast %cst_284 : f32 to vector<1x16xf32>
    %517 = arith.select %514, %515, %516 : vector<1x16xi1>, vector<1x16xf32>
    %c2_285 = arith.constant 2 : index
    %c0_286 = arith.constant 0 : index
    %c0_287 = arith.constant 0 : index
    %518 = vector.load %arg5[%c2_285, %c0_286, %c0_287] : memref<4x16x64xf32, #tpu.memory_space<vmem>>, vector<1x1x32xf32>
    %519 = vector.shape_cast %518 : vector<1x1x32xf32> to vector<1x32xf32>
    %c2_288 = arith.constant 2 : index
    %c1_289 = arith.constant 1 : index
    %c0_290 = arith.constant 0 : index
    %520 = vector.load %arg5[%c2_288, %c1_289, %c0_290] : memref<4x16x64xf32, #tpu.memory_space<vmem>>, vector<1x1x32xf32>
    %521 = vector.shape_cast %520 : vector<1x1x32xf32> to vector<1x32xf32>
    %cst_291 = arith.constant dense<0.000000e+00> : vector<16xf32>
    %522 = vector.multi_reduction <add>, %511, %cst_291 [1] : vector<16x32xf32> to vector<16xf32>
    %523 = vector.shape_cast %522 : vector<16xf32> to vector<16x1xf32>
    %cst_292 = arith.constant 3.200000e+01 : f32
    %524 = vector.broadcast %cst_292 : f32 to vector<16x1xf32>
    %525 = arith.divf %523, %524 : vector<16x1xf32>
    %526 = vector.broadcast %525 : vector<16x1xf32> to vector<16x32xf32>
    %527 = arith.subf %511, %526 : vector<16x32xf32>
    %528 = arith.mulf %527, %527 : vector<16x32xf32>
    %cst_293 = arith.constant dense<0.000000e+00> : vector<16xf32>
    %529 = vector.multi_reduction <add>, %528, %cst_293 [1] : vector<16x32xf32> to vector<16xf32>
    %530 = vector.shape_cast %529 : vector<16xf32> to vector<16x1xf32>
    %cst_294 = arith.constant 3.200000e+01 : f32
    %531 = vector.broadcast %cst_294 : f32 to vector<16x1xf32>
    %532 = arith.divf %530, %531 : vector<16x1xf32>
    %533 = vector.broadcast %525 : vector<16x1xf32> to vector<16x32xf32>
    %534 = arith.subf %511, %533 : vector<16x32xf32>
    %cst_295 = arith.constant 9.99999997E-7 : f32
    %535 = vector.broadcast %cst_295 : f32 to vector<16x1xf32>
    %536 = arith.addf %532, %535 : vector<16x1xf32>
    %537 = math.rsqrt %536 : vector<16x1xf32>
    %538 = vector.broadcast %537 : vector<16x1xf32> to vector<16x32xf32>
    %539 = arith.mulf %534, %538 : vector<16x32xf32>
    %540 = vector.broadcast %519 : vector<1x32xf32> to vector<16x32xf32>
    %541 = arith.mulf %539, %540 : vector<16x32xf32>
    %542 = vector.broadcast %521 : vector<1x32xf32> to vector<16x32xf32>
    %543 = arith.addf %541, %542 : vector<16x32xf32>
    %544 = arith.truncf %543 : vector<16x32xf32> to vector<16x32xbf16>
    %c2_296 = arith.constant 2 : index
    %c0_297 = arith.constant 0 : index
    %c0_298 = arith.constant 0 : index
    %545 = vector.load %arg4[%c2_296, %c0_297, %c0_298] : memref<4x160x64xbf16, #tpu.memory_space<vmem>>, vector<1x32x32xbf16>
    %546 = vector.shape_cast %545 : vector<1x32x32xbf16> to vector<32x32xbf16>
    %cst_299 = arith.constant dense<0.000000e+00> : vector<16x32xf32>
    %547 = tpu.matmul %544, %546, %cst_299 {dimension_numbers = #tpu.dot_dimension_numbers<[1], [0], [0], [1], [0, 0, 1, 1], [], []>} : vector<16x32xbf16>, vector<32x32xbf16>, vector<16x32xf32> -> vector<16x32xf32>
    %c2_300 = arith.constant 2 : index
    %c2_301 = arith.constant 2 : index
    %c0_302 = arith.constant 0 : index
    %548 = vector.load %arg5[%c2_300, %c2_301, %c0_302] : memref<4x16x64xf32, #tpu.memory_space<vmem>>, vector<1x1x32xf32>
    %549 = vector.shape_cast %548 : vector<1x1x32xf32> to vector<1x32xf32>
    %550 = vector.broadcast %549 : vector<1x32xf32> to vector<16x32xf32>
    %551 = arith.addf %547, %550 : vector<16x32xf32>
    %552 = tpu.transpose %551, [1, 0] : vector<16x32xf32> -> vector<32x16xf32>
    %cst_303 = arith.constant 0.000000e+00 : f32
    %553 = vector.broadcast %cst_303 : f32 to vector<16x32xf32>
    %c16_304 = arith.constant 16 : index
    %c0_305 = arith.constant 0 : index
    %c0_306 = arith.constant 0 : index
    %554 = vector.load %arg3[%c16_304, %c0_305, %c0_306] : memref<32x32x8xbf16, #tpu.memory_space<vmem>>, vector<1x32x8xbf16>
    %555 = vector.shape_cast %554 : vector<1x32x8xbf16> to vector<32x8xbf16>
    %cst_307 = arith.constant dense<0.000000e+00> : vector<16x8xf32>
    %556 = tpu.matmul %544, %555, %cst_307 {dimension_numbers = #tpu.dot_dimension_numbers<[1], [0], [0], [1], [0, 0, 1, 1], [], []>} : vector<16x32xbf16>, vector<32x8xbf16>, vector<16x8xf32> -> vector<16x8xf32>
    %c2_308 = arith.constant 2 : index
    %c8_309 = arith.constant 8 : index
    %c0_310 = arith.constant 0 : index
    %557 = vector.load %arg5[%c2_308, %c8_309, %c0_310] : memref<4x16x64xf32, #tpu.memory_space<vmem>>, vector<1x1x8xf32>
    %558 = vector.shape_cast %557 : vector<1x1x8xf32> to vector<1x8xf32>
    %559 = vector.broadcast %558 : vector<1x8xf32> to vector<16x8xf32>
    %560 = arith.addf %556, %559 : vector<16x8xf32>
    %c20 = arith.constant 20 : index
    %c0_311 = arith.constant 0 : index
    %c0_312 = arith.constant 0 : index
    %561 = vector.load %arg3[%c20, %c0_311, %c0_312] : memref<32x32x8xbf16, #tpu.memory_space<vmem>>, vector<1x32x8xbf16>
    %562 = vector.shape_cast %561 : vector<1x32x8xbf16> to vector<32x8xbf16>
    %cst_313 = arith.constant dense<0.000000e+00> : vector<16x8xf32>
    %563 = tpu.matmul %544, %562, %cst_313 {dimension_numbers = #tpu.dot_dimension_numbers<[1], [0], [0], [1], [0, 0, 1, 1], [], []>} : vector<16x32xbf16>, vector<32x8xbf16>, vector<16x8xf32> -> vector<16x8xf32>
    %c2_314 = arith.constant 2 : index
    %c12_315 = arith.constant 12 : index
    %c0_316 = arith.constant 0 : index
    %564 = vector.load %arg5[%c2_314, %c12_315, %c0_316] : memref<4x16x64xf32, #tpu.memory_space<vmem>>, vector<1x1x8xf32>
    %565 = vector.shape_cast %564 : vector<1x1x8xf32> to vector<1x8xf32>
    %566 = vector.broadcast %565 : vector<1x8xf32> to vector<16x8xf32>
    %567 = arith.addf %563, %566 : vector<16x8xf32>
    %568 = vector.extract_strided_slice %552 {offsets = [0, 0], sizes = [8, 16], strides = [1, 1]} : vector<32x16xf32> to vector<8x16xf32>
    %cst_317 = arith.constant dense<0.000000e+00> : vector<16x16xf32>
    %569 = tpu.matmul %560, %568, %cst_317 {dimension_numbers = #tpu.dot_dimension_numbers<[1], [0], [0], [1], [0, 0, 1, 1], [], []>} : vector<16x8xf32>, vector<8x16xf32>, vector<16x16xf32> -> vector<16x16xf32>
    %cst_318 = arith.constant 0.353553385 : f32
    %570 = vector.broadcast %cst_318 : f32 to vector<16x16xf32>
    %571 = arith.mulf %569, %570 : vector<16x16xf32>
    %572 = vector.broadcast %517 : vector<1x16xf32> to vector<16x16xf32>
    %573 = arith.addf %571, %572 : vector<16x16xf32>
    %cst_319 = arith.constant dense<0xFF800000> : vector<16xf32>
    %574 = vector.multi_reduction <maximumf>, %573, %cst_319 [1] : vector<16x16xf32> to vector<16xf32>
    %575 = vector.shape_cast %574 : vector<16xf32> to vector<16x1xf32>
    %576 = vector.broadcast %575 : vector<16x1xf32> to vector<16x16xf32>
    %577 = arith.subf %573, %576 : vector<16x16xf32>
    %578 = math.exp %577 : vector<16x16xf32>
    %cst_320 = arith.constant dense<0.000000e+00> : vector<16xf32>
    %579 = vector.multi_reduction <add>, %578, %cst_320 [1] : vector<16x16xf32> to vector<16xf32>
    %580 = vector.shape_cast %579 : vector<16xf32> to vector<16x1xf32>
    %581 = tpu.reciprocal %580 : vector<16x1xf32> -> vector<16x1xf32>
    %582 = vector.broadcast %581 : vector<16x1xf32> to vector<16x16xf32>
    %583 = arith.mulf %578, %582 : vector<16x16xf32>
    %cst_321 = arith.constant dense<0.000000e+00> : vector<16x8xf32>
    %584 = tpu.matmul %583, %567, %cst_321 {dimension_numbers = #tpu.dot_dimension_numbers<[1], [0], [0], [1], [0, 0, 1, 1], [], []>} : vector<16x16xf32>, vector<16x8xf32>, vector<16x8xf32> -> vector<16x8xf32>
    %585 = arith.truncf %584 : vector<16x8xf32> to vector<16x8xbf16>
    %c2_322 = arith.constant 2 : index
    %c32_323 = arith.constant 32 : index
    %c0_324 = arith.constant 0 : index
    %586 = vector.load %arg4[%c2_322, %c32_323, %c0_324] : memref<4x160x64xbf16, #tpu.memory_space<vmem>>, vector<1x8x32xbf16>
    %587 = vector.shape_cast %586 : vector<1x8x32xbf16> to vector<8x32xbf16>
    %cst_325 = arith.constant dense<0.000000e+00> : vector<16x32xf32>
    %588 = tpu.matmul %585, %587, %cst_325 {dimension_numbers = #tpu.dot_dimension_numbers<[1], [0], [0], [1], [0, 0, 1, 1], [], []>} : vector<16x8xbf16>, vector<8x32xbf16>, vector<16x32xf32> -> vector<16x32xf32>
    %589 = arith.addf %553, %588 : vector<16x32xf32>
    %c17 = arith.constant 17 : index
    %c0_326 = arith.constant 0 : index
    %c0_327 = arith.constant 0 : index
    %590 = vector.load %arg3[%c17, %c0_326, %c0_327] : memref<32x32x8xbf16, #tpu.memory_space<vmem>>, vector<1x32x8xbf16>
    %591 = vector.shape_cast %590 : vector<1x32x8xbf16> to vector<32x8xbf16>
    %cst_328 = arith.constant dense<0.000000e+00> : vector<16x8xf32>
    %592 = tpu.matmul %544, %591, %cst_328 {dimension_numbers = #tpu.dot_dimension_numbers<[1], [0], [0], [1], [0, 0, 1, 1], [], []>} : vector<16x32xbf16>, vector<32x8xbf16>, vector<16x8xf32> -> vector<16x8xf32>
    %c2_329 = arith.constant 2 : index
    %c9_330 = arith.constant 9 : index
    %c0_331 = arith.constant 0 : index
    %593 = vector.load %arg5[%c2_329, %c9_330, %c0_331] : memref<4x16x64xf32, #tpu.memory_space<vmem>>, vector<1x1x8xf32>
    %594 = vector.shape_cast %593 : vector<1x1x8xf32> to vector<1x8xf32>
    %595 = vector.broadcast %594 : vector<1x8xf32> to vector<16x8xf32>
    %596 = arith.addf %592, %595 : vector<16x8xf32>
    %c21 = arith.constant 21 : index
    %c0_332 = arith.constant 0 : index
    %c0_333 = arith.constant 0 : index
    %597 = vector.load %arg3[%c21, %c0_332, %c0_333] : memref<32x32x8xbf16, #tpu.memory_space<vmem>>, vector<1x32x8xbf16>
    %598 = vector.shape_cast %597 : vector<1x32x8xbf16> to vector<32x8xbf16>
    %cst_334 = arith.constant dense<0.000000e+00> : vector<16x8xf32>
    %599 = tpu.matmul %544, %598, %cst_334 {dimension_numbers = #tpu.dot_dimension_numbers<[1], [0], [0], [1], [0, 0, 1, 1], [], []>} : vector<16x32xbf16>, vector<32x8xbf16>, vector<16x8xf32> -> vector<16x8xf32>
    %c2_335 = arith.constant 2 : index
    %c13_336 = arith.constant 13 : index
    %c0_337 = arith.constant 0 : index
    %600 = vector.load %arg5[%c2_335, %c13_336, %c0_337] : memref<4x16x64xf32, #tpu.memory_space<vmem>>, vector<1x1x8xf32>
    %601 = vector.shape_cast %600 : vector<1x1x8xf32> to vector<1x8xf32>
    %602 = vector.broadcast %601 : vector<1x8xf32> to vector<16x8xf32>
    %603 = arith.addf %599, %602 : vector<16x8xf32>
    %604 = vector.extract_strided_slice %552 {offsets = [8, 0], sizes = [8, 16], strides = [1, 1]} : vector<32x16xf32> to vector<8x16xf32>
    %cst_338 = arith.constant dense<0.000000e+00> : vector<16x16xf32>
    %605 = tpu.matmul %596, %604, %cst_338 {dimension_numbers = #tpu.dot_dimension_numbers<[1], [0], [0], [1], [0, 0, 1, 1], [], []>} : vector<16x8xf32>, vector<8x16xf32>, vector<16x16xf32> -> vector<16x16xf32>
    %cst_339 = arith.constant 0.353553385 : f32
    %606 = vector.broadcast %cst_339 : f32 to vector<16x16xf32>
    %607 = arith.mulf %605, %606 : vector<16x16xf32>
    %608 = vector.broadcast %517 : vector<1x16xf32> to vector<16x16xf32>
    %609 = arith.addf %607, %608 : vector<16x16xf32>
    %cst_340 = arith.constant dense<0xFF800000> : vector<16xf32>
    %610 = vector.multi_reduction <maximumf>, %609, %cst_340 [1] : vector<16x16xf32> to vector<16xf32>
    %611 = vector.shape_cast %610 : vector<16xf32> to vector<16x1xf32>
    %612 = vector.broadcast %611 : vector<16x1xf32> to vector<16x16xf32>
    %613 = arith.subf %609, %612 : vector<16x16xf32>
    %614 = math.exp %613 : vector<16x16xf32>
    %cst_341 = arith.constant dense<0.000000e+00> : vector<16xf32>
    %615 = vector.multi_reduction <add>, %614, %cst_341 [1] : vector<16x16xf32> to vector<16xf32>
    %616 = vector.shape_cast %615 : vector<16xf32> to vector<16x1xf32>
    %617 = tpu.reciprocal %616 : vector<16x1xf32> -> vector<16x1xf32>
    %618 = vector.broadcast %617 : vector<16x1xf32> to vector<16x16xf32>
    %619 = arith.mulf %614, %618 : vector<16x16xf32>
    %cst_342 = arith.constant dense<0.000000e+00> : vector<16x8xf32>
    %620 = tpu.matmul %619, %603, %cst_342 {dimension_numbers = #tpu.dot_dimension_numbers<[1], [0], [0], [1], [0, 0, 1, 1], [], []>} : vector<16x16xf32>, vector<16x8xf32>, vector<16x8xf32> -> vector<16x8xf32>
    %621 = arith.truncf %620 : vector<16x8xf32> to vector<16x8xbf16>
    %c2_343 = arith.constant 2 : index
    %c40_344 = arith.constant 40 : index
    %c0_345 = arith.constant 0 : index
    %622 = vector.load %arg4[%c2_343, %c40_344, %c0_345] : memref<4x160x64xbf16, #tpu.memory_space<vmem>>, vector<1x8x32xbf16>
    %623 = vector.shape_cast %622 : vector<1x8x32xbf16> to vector<8x32xbf16>
    %cst_346 = arith.constant dense<0.000000e+00> : vector<16x32xf32>
    %624 = tpu.matmul %621, %623, %cst_346 {dimension_numbers = #tpu.dot_dimension_numbers<[1], [0], [0], [1], [0, 0, 1, 1], [], []>} : vector<16x8xbf16>, vector<8x32xbf16>, vector<16x32xf32> -> vector<16x32xf32>
    %625 = arith.addf %589, %624 : vector<16x32xf32>
    %c18 = arith.constant 18 : index
    %c0_347 = arith.constant 0 : index
    %c0_348 = arith.constant 0 : index
    %626 = vector.load %arg3[%c18, %c0_347, %c0_348] : memref<32x32x8xbf16, #tpu.memory_space<vmem>>, vector<1x32x8xbf16>
    %627 = vector.shape_cast %626 : vector<1x32x8xbf16> to vector<32x8xbf16>
    %cst_349 = arith.constant dense<0.000000e+00> : vector<16x8xf32>
    %628 = tpu.matmul %544, %627, %cst_349 {dimension_numbers = #tpu.dot_dimension_numbers<[1], [0], [0], [1], [0, 0, 1, 1], [], []>} : vector<16x32xbf16>, vector<32x8xbf16>, vector<16x8xf32> -> vector<16x8xf32>
    %c2_350 = arith.constant 2 : index
    %c10_351 = arith.constant 10 : index
    %c0_352 = arith.constant 0 : index
    %629 = vector.load %arg5[%c2_350, %c10_351, %c0_352] : memref<4x16x64xf32, #tpu.memory_space<vmem>>, vector<1x1x8xf32>
    %630 = vector.shape_cast %629 : vector<1x1x8xf32> to vector<1x8xf32>
    %631 = vector.broadcast %630 : vector<1x8xf32> to vector<16x8xf32>
    %632 = arith.addf %628, %631 : vector<16x8xf32>
    %c22 = arith.constant 22 : index
    %c0_353 = arith.constant 0 : index
    %c0_354 = arith.constant 0 : index
    %633 = vector.load %arg3[%c22, %c0_353, %c0_354] : memref<32x32x8xbf16, #tpu.memory_space<vmem>>, vector<1x32x8xbf16>
    %634 = vector.shape_cast %633 : vector<1x32x8xbf16> to vector<32x8xbf16>
    %cst_355 = arith.constant dense<0.000000e+00> : vector<16x8xf32>
    %635 = tpu.matmul %544, %634, %cst_355 {dimension_numbers = #tpu.dot_dimension_numbers<[1], [0], [0], [1], [0, 0, 1, 1], [], []>} : vector<16x32xbf16>, vector<32x8xbf16>, vector<16x8xf32> -> vector<16x8xf32>
    %c2_356 = arith.constant 2 : index
    %c14_357 = arith.constant 14 : index
    %c0_358 = arith.constant 0 : index
    %636 = vector.load %arg5[%c2_356, %c14_357, %c0_358] : memref<4x16x64xf32, #tpu.memory_space<vmem>>, vector<1x1x8xf32>
    %637 = vector.shape_cast %636 : vector<1x1x8xf32> to vector<1x8xf32>
    %638 = vector.broadcast %637 : vector<1x8xf32> to vector<16x8xf32>
    %639 = arith.addf %635, %638 : vector<16x8xf32>
    %640 = vector.extract_strided_slice %552 {offsets = [16, 0], sizes = [8, 16], strides = [1, 1]} : vector<32x16xf32> to vector<8x16xf32>
    %cst_359 = arith.constant dense<0.000000e+00> : vector<16x16xf32>
    %641 = tpu.matmul %632, %640, %cst_359 {dimension_numbers = #tpu.dot_dimension_numbers<[1], [0], [0], [1], [0, 0, 1, 1], [], []>} : vector<16x8xf32>, vector<8x16xf32>, vector<16x16xf32> -> vector<16x16xf32>
    %cst_360 = arith.constant 0.353553385 : f32
    %642 = vector.broadcast %cst_360 : f32 to vector<16x16xf32>
    %643 = arith.mulf %641, %642 : vector<16x16xf32>
    %644 = vector.broadcast %517 : vector<1x16xf32> to vector<16x16xf32>
    %645 = arith.addf %643, %644 : vector<16x16xf32>
    %cst_361 = arith.constant dense<0xFF800000> : vector<16xf32>
    %646 = vector.multi_reduction <maximumf>, %645, %cst_361 [1] : vector<16x16xf32> to vector<16xf32>
    %647 = vector.shape_cast %646 : vector<16xf32> to vector<16x1xf32>
    %648 = vector.broadcast %647 : vector<16x1xf32> to vector<16x16xf32>
    %649 = arith.subf %645, %648 : vector<16x16xf32>
    %650 = math.exp %649 : vector<16x16xf32>
    %cst_362 = arith.constant dense<0.000000e+00> : vector<16xf32>
    %651 = vector.multi_reduction <add>, %650, %cst_362 [1] : vector<16x16xf32> to vector<16xf32>
    %652 = vector.shape_cast %651 : vector<16xf32> to vector<16x1xf32>
    %653 = tpu.reciprocal %652 : vector<16x1xf32> -> vector<16x1xf32>
    %654 = vector.broadcast %653 : vector<16x1xf32> to vector<16x16xf32>
    %655 = arith.mulf %650, %654 : vector<16x16xf32>
    %cst_363 = arith.constant dense<0.000000e+00> : vector<16x8xf32>
    %656 = tpu.matmul %655, %639, %cst_363 {dimension_numbers = #tpu.dot_dimension_numbers<[1], [0], [0], [1], [0, 0, 1, 1], [], []>} : vector<16x16xf32>, vector<16x8xf32>, vector<16x8xf32> -> vector<16x8xf32>
    %657 = arith.truncf %656 : vector<16x8xf32> to vector<16x8xbf16>
    %c2_364 = arith.constant 2 : index
    %c48_365 = arith.constant 48 : index
    %c0_366 = arith.constant 0 : index
    %658 = vector.load %arg4[%c2_364, %c48_365, %c0_366] : memref<4x160x64xbf16, #tpu.memory_space<vmem>>, vector<1x8x32xbf16>
    %659 = vector.shape_cast %658 : vector<1x8x32xbf16> to vector<8x32xbf16>
    %cst_367 = arith.constant dense<0.000000e+00> : vector<16x32xf32>
    %660 = tpu.matmul %657, %659, %cst_367 {dimension_numbers = #tpu.dot_dimension_numbers<[1], [0], [0], [1], [0, 0, 1, 1], [], []>} : vector<16x8xbf16>, vector<8x32xbf16>, vector<16x32xf32> -> vector<16x32xf32>
    %661 = arith.addf %625, %660 : vector<16x32xf32>
    %c19 = arith.constant 19 : index
    %c0_368 = arith.constant 0 : index
    %c0_369 = arith.constant 0 : index
    %662 = vector.load %arg3[%c19, %c0_368, %c0_369] : memref<32x32x8xbf16, #tpu.memory_space<vmem>>, vector<1x32x8xbf16>
    %663 = vector.shape_cast %662 : vector<1x32x8xbf16> to vector<32x8xbf16>
    %cst_370 = arith.constant dense<0.000000e+00> : vector<16x8xf32>
    %664 = tpu.matmul %544, %663, %cst_370 {dimension_numbers = #tpu.dot_dimension_numbers<[1], [0], [0], [1], [0, 0, 1, 1], [], []>} : vector<16x32xbf16>, vector<32x8xbf16>, vector<16x8xf32> -> vector<16x8xf32>
    %c2_371 = arith.constant 2 : index
    %c11_372 = arith.constant 11 : index
    %c0_373 = arith.constant 0 : index
    %665 = vector.load %arg5[%c2_371, %c11_372, %c0_373] : memref<4x16x64xf32, #tpu.memory_space<vmem>>, vector<1x1x8xf32>
    %666 = vector.shape_cast %665 : vector<1x1x8xf32> to vector<1x8xf32>
    %667 = vector.broadcast %666 : vector<1x8xf32> to vector<16x8xf32>
    %668 = arith.addf %664, %667 : vector<16x8xf32>
    %c23 = arith.constant 23 : index
    %c0_374 = arith.constant 0 : index
    %c0_375 = arith.constant 0 : index
    %669 = vector.load %arg3[%c23, %c0_374, %c0_375] : memref<32x32x8xbf16, #tpu.memory_space<vmem>>, vector<1x32x8xbf16>
    %670 = vector.shape_cast %669 : vector<1x32x8xbf16> to vector<32x8xbf16>
    %cst_376 = arith.constant dense<0.000000e+00> : vector<16x8xf32>
    %671 = tpu.matmul %544, %670, %cst_376 {dimension_numbers = #tpu.dot_dimension_numbers<[1], [0], [0], [1], [0, 0, 1, 1], [], []>} : vector<16x32xbf16>, vector<32x8xbf16>, vector<16x8xf32> -> vector<16x8xf32>
    %c2_377 = arith.constant 2 : index
    %c15_378 = arith.constant 15 : index
    %c0_379 = arith.constant 0 : index
    %672 = vector.load %arg5[%c2_377, %c15_378, %c0_379] : memref<4x16x64xf32, #tpu.memory_space<vmem>>, vector<1x1x8xf32>
    %673 = vector.shape_cast %672 : vector<1x1x8xf32> to vector<1x8xf32>
    %674 = vector.broadcast %673 : vector<1x8xf32> to vector<16x8xf32>
    %675 = arith.addf %671, %674 : vector<16x8xf32>
    %676 = vector.extract_strided_slice %552 {offsets = [24, 0], sizes = [8, 16], strides = [1, 1]} : vector<32x16xf32> to vector<8x16xf32>
    %cst_380 = arith.constant dense<0.000000e+00> : vector<16x16xf32>
    %677 = tpu.matmul %668, %676, %cst_380 {dimension_numbers = #tpu.dot_dimension_numbers<[1], [0], [0], [1], [0, 0, 1, 1], [], []>} : vector<16x8xf32>, vector<8x16xf32>, vector<16x16xf32> -> vector<16x16xf32>
    %cst_381 = arith.constant 0.353553385 : f32
    %678 = vector.broadcast %cst_381 : f32 to vector<16x16xf32>
    %679 = arith.mulf %677, %678 : vector<16x16xf32>
    %680 = vector.broadcast %517 : vector<1x16xf32> to vector<16x16xf32>
    %681 = arith.addf %679, %680 : vector<16x16xf32>
    %cst_382 = arith.constant dense<0xFF800000> : vector<16xf32>
    %682 = vector.multi_reduction <maximumf>, %681, %cst_382 [1] : vector<16x16xf32> to vector<16xf32>
    %683 = vector.shape_cast %682 : vector<16xf32> to vector<16x1xf32>
    %684 = vector.broadcast %683 : vector<16x1xf32> to vector<16x16xf32>
    %685 = arith.subf %681, %684 : vector<16x16xf32>
    %686 = math.exp %685 : vector<16x16xf32>
    %cst_383 = arith.constant dense<0.000000e+00> : vector<16xf32>
    %687 = vector.multi_reduction <add>, %686, %cst_383 [1] : vector<16x16xf32> to vector<16xf32>
    %688 = vector.shape_cast %687 : vector<16xf32> to vector<16x1xf32>
    %689 = tpu.reciprocal %688 : vector<16x1xf32> -> vector<16x1xf32>
    %690 = vector.broadcast %689 : vector<16x1xf32> to vector<16x16xf32>
    %691 = arith.mulf %686, %690 : vector<16x16xf32>
    %cst_384 = arith.constant dense<0.000000e+00> : vector<16x8xf32>
    %692 = tpu.matmul %691, %675, %cst_384 {dimension_numbers = #tpu.dot_dimension_numbers<[1], [0], [0], [1], [0, 0, 1, 1], [], []>} : vector<16x16xf32>, vector<16x8xf32>, vector<16x8xf32> -> vector<16x8xf32>
    %693 = arith.truncf %692 : vector<16x8xf32> to vector<16x8xbf16>
    %c2_385 = arith.constant 2 : index
    %c56_386 = arith.constant 56 : index
    %c0_387 = arith.constant 0 : index
    %694 = vector.load %arg4[%c2_385, %c56_386, %c0_387] : memref<4x160x64xbf16, #tpu.memory_space<vmem>>, vector<1x8x32xbf16>
    %695 = vector.shape_cast %694 : vector<1x8x32xbf16> to vector<8x32xbf16>
    %cst_388 = arith.constant dense<0.000000e+00> : vector<16x32xf32>
    %696 = tpu.matmul %693, %695, %cst_388 {dimension_numbers = #tpu.dot_dimension_numbers<[1], [0], [0], [1], [0, 0, 1, 1], [], []>} : vector<16x8xbf16>, vector<8x32xbf16>, vector<16x32xf32> -> vector<16x32xf32>
    %697 = arith.addf %661, %696 : vector<16x32xf32>
    %698 = arith.addf %511, %697 : vector<16x32xf32>
    %c2_389 = arith.constant 2 : index
    %c3_390 = arith.constant 3 : index
    %c0_391 = arith.constant 0 : index
    %699 = vector.load %arg5[%c2_389, %c3_390, %c0_391] : memref<4x16x64xf32, #tpu.memory_space<vmem>>, vector<1x1x32xf32>
    %700 = vector.shape_cast %699 : vector<1x1x32xf32> to vector<1x32xf32>
    %701 = vector.broadcast %700 : vector<1x32xf32> to vector<16x32xf32>
    %702 = arith.addf %698, %701 : vector<16x32xf32>
    %c2_392 = arith.constant 2 : index
    %c4_393 = arith.constant 4 : index
    %c0_394 = arith.constant 0 : index
    %703 = vector.load %arg5[%c2_392, %c4_393, %c0_394] : memref<4x16x64xf32, #tpu.memory_space<vmem>>, vector<1x1x32xf32>
    %704 = vector.shape_cast %703 : vector<1x1x32xf32> to vector<1x32xf32>
    %c2_395 = arith.constant 2 : index
    %c5_396 = arith.constant 5 : index
    %c0_397 = arith.constant 0 : index
    %705 = vector.load %arg5[%c2_395, %c5_396, %c0_397] : memref<4x16x64xf32, #tpu.memory_space<vmem>>, vector<1x1x32xf32>
    %706 = vector.shape_cast %705 : vector<1x1x32xf32> to vector<1x32xf32>
    %cst_398 = arith.constant dense<0.000000e+00> : vector<16xf32>
    %707 = vector.multi_reduction <add>, %702, %cst_398 [1] : vector<16x32xf32> to vector<16xf32>
    %708 = vector.shape_cast %707 : vector<16xf32> to vector<16x1xf32>
    %cst_399 = arith.constant 3.200000e+01 : f32
    %709 = vector.broadcast %cst_399 : f32 to vector<16x1xf32>
    %710 = arith.divf %708, %709 : vector<16x1xf32>
    %711 = vector.broadcast %710 : vector<16x1xf32> to vector<16x32xf32>
    %712 = arith.subf %702, %711 : vector<16x32xf32>
    %713 = arith.mulf %712, %712 : vector<16x32xf32>
    %cst_400 = arith.constant dense<0.000000e+00> : vector<16xf32>
    %714 = vector.multi_reduction <add>, %713, %cst_400 [1] : vector<16x32xf32> to vector<16xf32>
    %715 = vector.shape_cast %714 : vector<16xf32> to vector<16x1xf32>
    %cst_401 = arith.constant 3.200000e+01 : f32
    %716 = vector.broadcast %cst_401 : f32 to vector<16x1xf32>
    %717 = arith.divf %715, %716 : vector<16x1xf32>
    %718 = vector.broadcast %710 : vector<16x1xf32> to vector<16x32xf32>
    %719 = arith.subf %702, %718 : vector<16x32xf32>
    %cst_402 = arith.constant 9.99999997E-7 : f32
    %720 = vector.broadcast %cst_402 : f32 to vector<16x1xf32>
    %721 = arith.addf %717, %720 : vector<16x1xf32>
    %722 = math.rsqrt %721 : vector<16x1xf32>
    %723 = vector.broadcast %722 : vector<16x1xf32> to vector<16x32xf32>
    %724 = arith.mulf %719, %723 : vector<16x32xf32>
    %725 = vector.broadcast %704 : vector<1x32xf32> to vector<16x32xf32>
    %726 = arith.mulf %724, %725 : vector<16x32xf32>
    %727 = vector.broadcast %706 : vector<1x32xf32> to vector<16x32xf32>
    %728 = arith.addf %726, %727 : vector<16x32xf32>
    %729 = arith.truncf %728 : vector<16x32xf32> to vector<16x32xbf16>
    %c2_403 = arith.constant 2 : index
    %c64_404 = arith.constant 64 : index
    %c0_405 = arith.constant 0 : index
    %730 = vector.load %arg4[%c2_403, %c64_404, %c0_405] : memref<4x160x64xbf16, #tpu.memory_space<vmem>>, vector<1x32x64xbf16>
    %731 = vector.shape_cast %730 : vector<1x32x64xbf16> to vector<32x64xbf16>
    %cst_406 = arith.constant dense<0.000000e+00> : vector<16x64xf32>
    %732 = tpu.matmul %729, %731, %cst_406 {dimension_numbers = #tpu.dot_dimension_numbers<[1], [0], [0], [1], [0, 0, 1, 1], [], []>} : vector<16x32xbf16>, vector<32x64xbf16>, vector<16x64xf32> -> vector<16x64xf32>
    %c2_407 = arith.constant 2 : index
    %c6_408 = arith.constant 6 : index
    %c0_409 = arith.constant 0 : index
    %733 = vector.load %arg5[%c2_407, %c6_408, %c0_409] : memref<4x16x64xf32, #tpu.memory_space<vmem>>, vector<1x1x64xf32>
    %734 = vector.shape_cast %733 : vector<1x1x64xf32> to vector<1x64xf32>
    %735 = vector.broadcast %734 : vector<1x64xf32> to vector<16x64xf32>
    %736 = arith.addf %732, %735 : vector<16x64xf32>
    %cst_410 = arith.constant 5.000000e-01 : f32
    %737 = vector.broadcast %cst_410 : f32 to vector<16x64xf32>
    %738 = arith.mulf %737, %736 : vector<16x64xf32>
    %cst_411 = arith.constant 0.707106769 : f32
    %739 = vector.broadcast %cst_411 : f32 to vector<16x64xf32>
    %740 = arith.mulf %736, %739 : vector<16x64xf32>
    %741 = math.erf %740 : vector<16x64xf32>
    %cst_412 = arith.constant 1.000000e+00 : f32
    %742 = vector.broadcast %cst_412 : f32 to vector<16x64xf32>
    %743 = arith.addf %742, %741 : vector<16x64xf32>
    %744 = arith.mulf %738, %743 : vector<16x64xf32>
    %745 = arith.truncf %744 : vector<16x64xf32> to vector<16x64xbf16>
    %c2_413 = arith.constant 2 : index
    %c96_414 = arith.constant 96 : index
    %c0_415 = arith.constant 0 : index
    %746 = vector.load %arg4[%c2_413, %c96_414, %c0_415] : memref<4x160x64xbf16, #tpu.memory_space<vmem>>, vector<1x64x32xbf16>
    %747 = vector.shape_cast %746 : vector<1x64x32xbf16> to vector<64x32xbf16>
    %cst_416 = arith.constant dense<0.000000e+00> : vector<16x32xf32>
    %748 = tpu.matmul %745, %747, %cst_416 {dimension_numbers = #tpu.dot_dimension_numbers<[1], [0], [0], [1], [0, 0, 1, 1], [], []>} : vector<16x64xbf16>, vector<64x32xbf16>, vector<16x32xf32> -> vector<16x32xf32>
    %c2_417 = arith.constant 2 : index
    %c7_418 = arith.constant 7 : index
    %c0_419 = arith.constant 0 : index
    %749 = vector.load %arg5[%c2_417, %c7_418, %c0_419] : memref<4x16x64xf32, #tpu.memory_space<vmem>>, vector<1x1x32xf32>
    %750 = vector.shape_cast %749 : vector<1x1x32xf32> to vector<1x32xf32>
    %751 = vector.broadcast %750 : vector<1x32xf32> to vector<16x32xf32>
    %752 = arith.addf %748, %751 : vector<16x32xf32>
    %753 = arith.addf %702, %752 : vector<16x32xf32>
    %c3_420 = arith.constant 3 : index
    %c0_421 = arith.constant 0 : index
    %c0_422 = arith.constant 0 : index
    %754 = vector.load %arg5[%c3_420, %c0_421, %c0_422] : memref<4x16x64xf32, #tpu.memory_space<vmem>>, vector<1x1x32xf32>
    %755 = vector.shape_cast %754 : vector<1x1x32xf32> to vector<1x32xf32>
    %c3_423 = arith.constant 3 : index
    %c1_424 = arith.constant 1 : index
    %c0_425 = arith.constant 0 : index
    %756 = vector.load %arg5[%c3_423, %c1_424, %c0_425] : memref<4x16x64xf32, #tpu.memory_space<vmem>>, vector<1x1x32xf32>
    %757 = vector.shape_cast %756 : vector<1x1x32xf32> to vector<1x32xf32>
    %cst_426 = arith.constant dense<0.000000e+00> : vector<16xf32>
    %758 = vector.multi_reduction <add>, %753, %cst_426 [1] : vector<16x32xf32> to vector<16xf32>
    %759 = vector.shape_cast %758 : vector<16xf32> to vector<16x1xf32>
    %cst_427 = arith.constant 3.200000e+01 : f32
    %760 = vector.broadcast %cst_427 : f32 to vector<16x1xf32>
    %761 = arith.divf %759, %760 : vector<16x1xf32>
    %762 = vector.broadcast %761 : vector<16x1xf32> to vector<16x32xf32>
    %763 = arith.subf %753, %762 : vector<16x32xf32>
    %764 = arith.mulf %763, %763 : vector<16x32xf32>
    %cst_428 = arith.constant dense<0.000000e+00> : vector<16xf32>
    %765 = vector.multi_reduction <add>, %764, %cst_428 [1] : vector<16x32xf32> to vector<16xf32>
    %766 = vector.shape_cast %765 : vector<16xf32> to vector<16x1xf32>
    %cst_429 = arith.constant 3.200000e+01 : f32
    %767 = vector.broadcast %cst_429 : f32 to vector<16x1xf32>
    %768 = arith.divf %766, %767 : vector<16x1xf32>
    %769 = vector.broadcast %761 : vector<16x1xf32> to vector<16x32xf32>
    %770 = arith.subf %753, %769 : vector<16x32xf32>
    %cst_430 = arith.constant 9.99999997E-7 : f32
    %771 = vector.broadcast %cst_430 : f32 to vector<16x1xf32>
    %772 = arith.addf %768, %771 : vector<16x1xf32>
    %773 = math.rsqrt %772 : vector<16x1xf32>
    %774 = vector.broadcast %773 : vector<16x1xf32> to vector<16x32xf32>
    %775 = arith.mulf %770, %774 : vector<16x32xf32>
    %776 = vector.broadcast %755 : vector<1x32xf32> to vector<16x32xf32>
    %777 = arith.mulf %775, %776 : vector<16x32xf32>
    %778 = vector.broadcast %757 : vector<1x32xf32> to vector<16x32xf32>
    %779 = arith.addf %777, %778 : vector<16x32xf32>
    %780 = arith.truncf %779 : vector<16x32xf32> to vector<16x32xbf16>
    %c3_431 = arith.constant 3 : index
    %c0_432 = arith.constant 0 : index
    %c0_433 = arith.constant 0 : index
    %781 = vector.load %arg4[%c3_431, %c0_432, %c0_433] : memref<4x160x64xbf16, #tpu.memory_space<vmem>>, vector<1x32x32xbf16>
    %782 = vector.shape_cast %781 : vector<1x32x32xbf16> to vector<32x32xbf16>
    %cst_434 = arith.constant dense<0.000000e+00> : vector<16x32xf32>
    %783 = tpu.matmul %780, %782, %cst_434 {dimension_numbers = #tpu.dot_dimension_numbers<[1], [0], [0], [1], [0, 0, 1, 1], [], []>} : vector<16x32xbf16>, vector<32x32xbf16>, vector<16x32xf32> -> vector<16x32xf32>
    %c3_435 = arith.constant 3 : index
    %c2_436 = arith.constant 2 : index
    %c0_437 = arith.constant 0 : index
    %784 = vector.load %arg5[%c3_435, %c2_436, %c0_437] : memref<4x16x64xf32, #tpu.memory_space<vmem>>, vector<1x1x32xf32>
    %785 = vector.shape_cast %784 : vector<1x1x32xf32> to vector<1x32xf32>
    %786 = vector.broadcast %785 : vector<1x32xf32> to vector<16x32xf32>
    %787 = arith.addf %783, %786 : vector<16x32xf32>
    %788 = tpu.transpose %787, [1, 0] : vector<16x32xf32> -> vector<32x16xf32>
    %cst_438 = arith.constant 0.000000e+00 : f32
    %789 = vector.broadcast %cst_438 : f32 to vector<16x32xf32>
    %c24 = arith.constant 24 : index
    %c0_439 = arith.constant 0 : index
    %c0_440 = arith.constant 0 : index
    %790 = vector.load %arg3[%c24, %c0_439, %c0_440] : memref<32x32x8xbf16, #tpu.memory_space<vmem>>, vector<1x32x8xbf16>
    %791 = vector.shape_cast %790 : vector<1x32x8xbf16> to vector<32x8xbf16>
    %cst_441 = arith.constant dense<0.000000e+00> : vector<16x8xf32>
    %792 = tpu.matmul %780, %791, %cst_441 {dimension_numbers = #tpu.dot_dimension_numbers<[1], [0], [0], [1], [0, 0, 1, 1], [], []>} : vector<16x32xbf16>, vector<32x8xbf16>, vector<16x8xf32> -> vector<16x8xf32>
    %c3_442 = arith.constant 3 : index
    %c8_443 = arith.constant 8 : index
    %c0_444 = arith.constant 0 : index
    %793 = vector.load %arg5[%c3_442, %c8_443, %c0_444] : memref<4x16x64xf32, #tpu.memory_space<vmem>>, vector<1x1x8xf32>
    %794 = vector.shape_cast %793 : vector<1x1x8xf32> to vector<1x8xf32>
    %795 = vector.broadcast %794 : vector<1x8xf32> to vector<16x8xf32>
    %796 = arith.addf %792, %795 : vector<16x8xf32>
    %c28 = arith.constant 28 : index
    %c0_445 = arith.constant 0 : index
    %c0_446 = arith.constant 0 : index
    %797 = vector.load %arg3[%c28, %c0_445, %c0_446] : memref<32x32x8xbf16, #tpu.memory_space<vmem>>, vector<1x32x8xbf16>
    %798 = vector.shape_cast %797 : vector<1x32x8xbf16> to vector<32x8xbf16>
    %cst_447 = arith.constant dense<0.000000e+00> : vector<16x8xf32>
    %799 = tpu.matmul %780, %798, %cst_447 {dimension_numbers = #tpu.dot_dimension_numbers<[1], [0], [0], [1], [0, 0, 1, 1], [], []>} : vector<16x32xbf16>, vector<32x8xbf16>, vector<16x8xf32> -> vector<16x8xf32>
    %c3_448 = arith.constant 3 : index
    %c12_449 = arith.constant 12 : index
    %c0_450 = arith.constant 0 : index
    %800 = vector.load %arg5[%c3_448, %c12_449, %c0_450] : memref<4x16x64xf32, #tpu.memory_space<vmem>>, vector<1x1x8xf32>
    %801 = vector.shape_cast %800 : vector<1x1x8xf32> to vector<1x8xf32>
    %802 = vector.broadcast %801 : vector<1x8xf32> to vector<16x8xf32>
    %803 = arith.addf %799, %802 : vector<16x8xf32>
    %804 = vector.extract_strided_slice %788 {offsets = [0, 0], sizes = [8, 16], strides = [1, 1]} : vector<32x16xf32> to vector<8x16xf32>
    %cst_451 = arith.constant dense<0.000000e+00> : vector<16x16xf32>
    %805 = tpu.matmul %796, %804, %cst_451 {dimension_numbers = #tpu.dot_dimension_numbers<[1], [0], [0], [1], [0, 0, 1, 1], [], []>} : vector<16x8xf32>, vector<8x16xf32>, vector<16x16xf32> -> vector<16x16xf32>
    %cst_452 = arith.constant 0.353553385 : f32
    %806 = vector.broadcast %cst_452 : f32 to vector<16x16xf32>
    %807 = arith.mulf %805, %806 : vector<16x16xf32>
    %808 = vector.broadcast %517 : vector<1x16xf32> to vector<16x16xf32>
    %809 = arith.addf %807, %808 : vector<16x16xf32>
    %cst_453 = arith.constant dense<0xFF800000> : vector<16xf32>
    %810 = vector.multi_reduction <maximumf>, %809, %cst_453 [1] : vector<16x16xf32> to vector<16xf32>
    %811 = vector.shape_cast %810 : vector<16xf32> to vector<16x1xf32>
    %812 = vector.broadcast %811 : vector<16x1xf32> to vector<16x16xf32>
    %813 = arith.subf %809, %812 : vector<16x16xf32>
    %814 = math.exp %813 : vector<16x16xf32>
    %cst_454 = arith.constant dense<0.000000e+00> : vector<16xf32>
    %815 = vector.multi_reduction <add>, %814, %cst_454 [1] : vector<16x16xf32> to vector<16xf32>
    %816 = vector.shape_cast %815 : vector<16xf32> to vector<16x1xf32>
    %817 = tpu.reciprocal %816 : vector<16x1xf32> -> vector<16x1xf32>
    %818 = vector.broadcast %817 : vector<16x1xf32> to vector<16x16xf32>
    %819 = arith.mulf %814, %818 : vector<16x16xf32>
    %cst_455 = arith.constant dense<0.000000e+00> : vector<16x8xf32>
    %820 = tpu.matmul %819, %803, %cst_455 {dimension_numbers = #tpu.dot_dimension_numbers<[1], [0], [0], [1], [0, 0, 1, 1], [], []>} : vector<16x16xf32>, vector<16x8xf32>, vector<16x8xf32> -> vector<16x8xf32>
    %821 = arith.truncf %820 : vector<16x8xf32> to vector<16x8xbf16>
    %c3_456 = arith.constant 3 : index
    %c32_457 = arith.constant 32 : index
    %c0_458 = arith.constant 0 : index
    %822 = vector.load %arg4[%c3_456, %c32_457, %c0_458] : memref<4x160x64xbf16, #tpu.memory_space<vmem>>, vector<1x8x32xbf16>
    %823 = vector.shape_cast %822 : vector<1x8x32xbf16> to vector<8x32xbf16>
    %cst_459 = arith.constant dense<0.000000e+00> : vector<16x32xf32>
    %824 = tpu.matmul %821, %823, %cst_459 {dimension_numbers = #tpu.dot_dimension_numbers<[1], [0], [0], [1], [0, 0, 1, 1], [], []>} : vector<16x8xbf16>, vector<8x32xbf16>, vector<16x32xf32> -> vector<16x32xf32>
    %825 = arith.addf %789, %824 : vector<16x32xf32>
    %c25 = arith.constant 25 : index
    %c0_460 = arith.constant 0 : index
    %c0_461 = arith.constant 0 : index
    %826 = vector.load %arg3[%c25, %c0_460, %c0_461] : memref<32x32x8xbf16, #tpu.memory_space<vmem>>, vector<1x32x8xbf16>
    %827 = vector.shape_cast %826 : vector<1x32x8xbf16> to vector<32x8xbf16>
    %cst_462 = arith.constant dense<0.000000e+00> : vector<16x8xf32>
    %828 = tpu.matmul %780, %827, %cst_462 {dimension_numbers = #tpu.dot_dimension_numbers<[1], [0], [0], [1], [0, 0, 1, 1], [], []>} : vector<16x32xbf16>, vector<32x8xbf16>, vector<16x8xf32> -> vector<16x8xf32>
    %c3_463 = arith.constant 3 : index
    %c9_464 = arith.constant 9 : index
    %c0_465 = arith.constant 0 : index
    %829 = vector.load %arg5[%c3_463, %c9_464, %c0_465] : memref<4x16x64xf32, #tpu.memory_space<vmem>>, vector<1x1x8xf32>
    %830 = vector.shape_cast %829 : vector<1x1x8xf32> to vector<1x8xf32>
    %831 = vector.broadcast %830 : vector<1x8xf32> to vector<16x8xf32>
    %832 = arith.addf %828, %831 : vector<16x8xf32>
    %c29 = arith.constant 29 : index
    %c0_466 = arith.constant 0 : index
    %c0_467 = arith.constant 0 : index
    %833 = vector.load %arg3[%c29, %c0_466, %c0_467] : memref<32x32x8xbf16, #tpu.memory_space<vmem>>, vector<1x32x8xbf16>
    %834 = vector.shape_cast %833 : vector<1x32x8xbf16> to vector<32x8xbf16>
    %cst_468 = arith.constant dense<0.000000e+00> : vector<16x8xf32>
    %835 = tpu.matmul %780, %834, %cst_468 {dimension_numbers = #tpu.dot_dimension_numbers<[1], [0], [0], [1], [0, 0, 1, 1], [], []>} : vector<16x32xbf16>, vector<32x8xbf16>, vector<16x8xf32> -> vector<16x8xf32>
    %c3_469 = arith.constant 3 : index
    %c13_470 = arith.constant 13 : index
    %c0_471 = arith.constant 0 : index
    %836 = vector.load %arg5[%c3_469, %c13_470, %c0_471] : memref<4x16x64xf32, #tpu.memory_space<vmem>>, vector<1x1x8xf32>
    %837 = vector.shape_cast %836 : vector<1x1x8xf32> to vector<1x8xf32>
    %838 = vector.broadcast %837 : vector<1x8xf32> to vector<16x8xf32>
    %839 = arith.addf %835, %838 : vector<16x8xf32>
    %840 = vector.extract_strided_slice %788 {offsets = [8, 0], sizes = [8, 16], strides = [1, 1]} : vector<32x16xf32> to vector<8x16xf32>
    %cst_472 = arith.constant dense<0.000000e+00> : vector<16x16xf32>
    %841 = tpu.matmul %832, %840, %cst_472 {dimension_numbers = #tpu.dot_dimension_numbers<[1], [0], [0], [1], [0, 0, 1, 1], [], []>} : vector<16x8xf32>, vector<8x16xf32>, vector<16x16xf32> -> vector<16x16xf32>
    %cst_473 = arith.constant 0.353553385 : f32
    %842 = vector.broadcast %cst_473 : f32 to vector<16x16xf32>
    %843 = arith.mulf %841, %842 : vector<16x16xf32>
    %844 = vector.broadcast %517 : vector<1x16xf32> to vector<16x16xf32>
    %845 = arith.addf %843, %844 : vector<16x16xf32>
    %cst_474 = arith.constant dense<0xFF800000> : vector<16xf32>
    %846 = vector.multi_reduction <maximumf>, %845, %cst_474 [1] : vector<16x16xf32> to vector<16xf32>
    %847 = vector.shape_cast %846 : vector<16xf32> to vector<16x1xf32>
    %848 = vector.broadcast %847 : vector<16x1xf32> to vector<16x16xf32>
    %849 = arith.subf %845, %848 : vector<16x16xf32>
    %850 = math.exp %849 : vector<16x16xf32>
    %cst_475 = arith.constant dense<0.000000e+00> : vector<16xf32>
    %851 = vector.multi_reduction <add>, %850, %cst_475 [1] : vector<16x16xf32> to vector<16xf32>
    %852 = vector.shape_cast %851 : vector<16xf32> to vector<16x1xf32>
    %853 = tpu.reciprocal %852 : vector<16x1xf32> -> vector<16x1xf32>
    %854 = vector.broadcast %853 : vector<16x1xf32> to vector<16x16xf32>
    %855 = arith.mulf %850, %854 : vector<16x16xf32>
    %cst_476 = arith.constant dense<0.000000e+00> : vector<16x8xf32>
    %856 = tpu.matmul %855, %839, %cst_476 {dimension_numbers = #tpu.dot_dimension_numbers<[1], [0], [0], [1], [0, 0, 1, 1], [], []>} : vector<16x16xf32>, vector<16x8xf32>, vector<16x8xf32> -> vector<16x8xf32>
    %857 = arith.truncf %856 : vector<16x8xf32> to vector<16x8xbf16>
    %c3_477 = arith.constant 3 : index
    %c40_478 = arith.constant 40 : index
    %c0_479 = arith.constant 0 : index
    %858 = vector.load %arg4[%c3_477, %c40_478, %c0_479] : memref<4x160x64xbf16, #tpu.memory_space<vmem>>, vector<1x8x32xbf16>
    %859 = vector.shape_cast %858 : vector<1x8x32xbf16> to vector<8x32xbf16>
    %cst_480 = arith.constant dense<0.000000e+00> : vector<16x32xf32>
    %860 = tpu.matmul %857, %859, %cst_480 {dimension_numbers = #tpu.dot_dimension_numbers<[1], [0], [0], [1], [0, 0, 1, 1], [], []>} : vector<16x8xbf16>, vector<8x32xbf16>, vector<16x32xf32> -> vector<16x32xf32>
    %861 = arith.addf %825, %860 : vector<16x32xf32>
    %c26 = arith.constant 26 : index
    %c0_481 = arith.constant 0 : index
    %c0_482 = arith.constant 0 : index
    %862 = vector.load %arg3[%c26, %c0_481, %c0_482] : memref<32x32x8xbf16, #tpu.memory_space<vmem>>, vector<1x32x8xbf16>
    %863 = vector.shape_cast %862 : vector<1x32x8xbf16> to vector<32x8xbf16>
    %cst_483 = arith.constant dense<0.000000e+00> : vector<16x8xf32>
    %864 = tpu.matmul %780, %863, %cst_483 {dimension_numbers = #tpu.dot_dimension_numbers<[1], [0], [0], [1], [0, 0, 1, 1], [], []>} : vector<16x32xbf16>, vector<32x8xbf16>, vector<16x8xf32> -> vector<16x8xf32>
    %c3_484 = arith.constant 3 : index
    %c10_485 = arith.constant 10 : index
    %c0_486 = arith.constant 0 : index
    %865 = vector.load %arg5[%c3_484, %c10_485, %c0_486] : memref<4x16x64xf32, #tpu.memory_space<vmem>>, vector<1x1x8xf32>
    %866 = vector.shape_cast %865 : vector<1x1x8xf32> to vector<1x8xf32>
    %867 = vector.broadcast %866 : vector<1x8xf32> to vector<16x8xf32>
    %868 = arith.addf %864, %867 : vector<16x8xf32>
    %c30 = arith.constant 30 : index
    %c0_487 = arith.constant 0 : index
    %c0_488 = arith.constant 0 : index
    %869 = vector.load %arg3[%c30, %c0_487, %c0_488] : memref<32x32x8xbf16, #tpu.memory_space<vmem>>, vector<1x32x8xbf16>
    %870 = vector.shape_cast %869 : vector<1x32x8xbf16> to vector<32x8xbf16>
    %cst_489 = arith.constant dense<0.000000e+00> : vector<16x8xf32>
    %871 = tpu.matmul %780, %870, %cst_489 {dimension_numbers = #tpu.dot_dimension_numbers<[1], [0], [0], [1], [0, 0, 1, 1], [], []>} : vector<16x32xbf16>, vector<32x8xbf16>, vector<16x8xf32> -> vector<16x8xf32>
    %c3_490 = arith.constant 3 : index
    %c14_491 = arith.constant 14 : index
    %c0_492 = arith.constant 0 : index
    %872 = vector.load %arg5[%c3_490, %c14_491, %c0_492] : memref<4x16x64xf32, #tpu.memory_space<vmem>>, vector<1x1x8xf32>
    %873 = vector.shape_cast %872 : vector<1x1x8xf32> to vector<1x8xf32>
    %874 = vector.broadcast %873 : vector<1x8xf32> to vector<16x8xf32>
    %875 = arith.addf %871, %874 : vector<16x8xf32>
    %876 = vector.extract_strided_slice %788 {offsets = [16, 0], sizes = [8, 16], strides = [1, 1]} : vector<32x16xf32> to vector<8x16xf32>
    %cst_493 = arith.constant dense<0.000000e+00> : vector<16x16xf32>
    %877 = tpu.matmul %868, %876, %cst_493 {dimension_numbers = #tpu.dot_dimension_numbers<[1], [0], [0], [1], [0, 0, 1, 1], [], []>} : vector<16x8xf32>, vector<8x16xf32>, vector<16x16xf32> -> vector<16x16xf32>
    %cst_494 = arith.constant 0.353553385 : f32
    %878 = vector.broadcast %cst_494 : f32 to vector<16x16xf32>
    %879 = arith.mulf %877, %878 : vector<16x16xf32>
    %880 = vector.broadcast %517 : vector<1x16xf32> to vector<16x16xf32>
    %881 = arith.addf %879, %880 : vector<16x16xf32>
    %cst_495 = arith.constant dense<0xFF800000> : vector<16xf32>
    %882 = vector.multi_reduction <maximumf>, %881, %cst_495 [1] : vector<16x16xf32> to vector<16xf32>
    %883 = vector.shape_cast %882 : vector<16xf32> to vector<16x1xf32>
    %884 = vector.broadcast %883 : vector<16x1xf32> to vector<16x16xf32>
    %885 = arith.subf %881, %884 : vector<16x16xf32>
    %886 = math.exp %885 : vector<16x16xf32>
    %cst_496 = arith.constant dense<0.000000e+00> : vector<16xf32>
    %887 = vector.multi_reduction <add>, %886, %cst_496 [1] : vector<16x16xf32> to vector<16xf32>
    %888 = vector.shape_cast %887 : vector<16xf32> to vector<16x1xf32>
    %889 = tpu.reciprocal %888 : vector<16x1xf32> -> vector<16x1xf32>
    %890 = vector.broadcast %889 : vector<16x1xf32> to vector<16x16xf32>
    %891 = arith.mulf %886, %890 : vector<16x16xf32>
    %cst_497 = arith.constant dense<0.000000e+00> : vector<16x8xf32>
    %892 = tpu.matmul %891, %875, %cst_497 {dimension_numbers = #tpu.dot_dimension_numbers<[1], [0], [0], [1], [0, 0, 1, 1], [], []>} : vector<16x16xf32>, vector<16x8xf32>, vector<16x8xf32> -> vector<16x8xf32>
    %893 = arith.truncf %892 : vector<16x8xf32> to vector<16x8xbf16>
    %c3_498 = arith.constant 3 : index
    %c48_499 = arith.constant 48 : index
    %c0_500 = arith.constant 0 : index
    %894 = vector.load %arg4[%c3_498, %c48_499, %c0_500] : memref<4x160x64xbf16, #tpu.memory_space<vmem>>, vector<1x8x32xbf16>
    %895 = vector.shape_cast %894 : vector<1x8x32xbf16> to vector<8x32xbf16>
    %cst_501 = arith.constant dense<0.000000e+00> : vector<16x32xf32>
    %896 = tpu.matmul %893, %895, %cst_501 {dimension_numbers = #tpu.dot_dimension_numbers<[1], [0], [0], [1], [0, 0, 1, 1], [], []>} : vector<16x8xbf16>, vector<8x32xbf16>, vector<16x32xf32> -> vector<16x32xf32>
    %897 = arith.addf %861, %896 : vector<16x32xf32>
    %c27 = arith.constant 27 : index
    %c0_502 = arith.constant 0 : index
    %c0_503 = arith.constant 0 : index
    %898 = vector.load %arg3[%c27, %c0_502, %c0_503] : memref<32x32x8xbf16, #tpu.memory_space<vmem>>, vector<1x32x8xbf16>
    %899 = vector.shape_cast %898 : vector<1x32x8xbf16> to vector<32x8xbf16>
    %cst_504 = arith.constant dense<0.000000e+00> : vector<16x8xf32>
    %900 = tpu.matmul %780, %899, %cst_504 {dimension_numbers = #tpu.dot_dimension_numbers<[1], [0], [0], [1], [0, 0, 1, 1], [], []>} : vector<16x32xbf16>, vector<32x8xbf16>, vector<16x8xf32> -> vector<16x8xf32>
    %c3_505 = arith.constant 3 : index
    %c11_506 = arith.constant 11 : index
    %c0_507 = arith.constant 0 : index
    %901 = vector.load %arg5[%c3_505, %c11_506, %c0_507] : memref<4x16x64xf32, #tpu.memory_space<vmem>>, vector<1x1x8xf32>
    %902 = vector.shape_cast %901 : vector<1x1x8xf32> to vector<1x8xf32>
    %903 = vector.broadcast %902 : vector<1x8xf32> to vector<16x8xf32>
    %904 = arith.addf %900, %903 : vector<16x8xf32>
    %c31 = arith.constant 31 : index
    %c0_508 = arith.constant 0 : index
    %c0_509 = arith.constant 0 : index
    %905 = vector.load %arg3[%c31, %c0_508, %c0_509] : memref<32x32x8xbf16, #tpu.memory_space<vmem>>, vector<1x32x8xbf16>
    %906 = vector.shape_cast %905 : vector<1x32x8xbf16> to vector<32x8xbf16>
    %cst_510 = arith.constant dense<0.000000e+00> : vector<16x8xf32>
    %907 = tpu.matmul %780, %906, %cst_510 {dimension_numbers = #tpu.dot_dimension_numbers<[1], [0], [0], [1], [0, 0, 1, 1], [], []>} : vector<16x32xbf16>, vector<32x8xbf16>, vector<16x8xf32> -> vector<16x8xf32>
    %c3_511 = arith.constant 3 : index
    %c15_512 = arith.constant 15 : index
    %c0_513 = arith.constant 0 : index
    %908 = vector.load %arg5[%c3_511, %c15_512, %c0_513] : memref<4x16x64xf32, #tpu.memory_space<vmem>>, vector<1x1x8xf32>
    %909 = vector.shape_cast %908 : vector<1x1x8xf32> to vector<1x8xf32>
    %910 = vector.broadcast %909 : vector<1x8xf32> to vector<16x8xf32>
    %911 = arith.addf %907, %910 : vector<16x8xf32>
    %912 = vector.extract_strided_slice %788 {offsets = [24, 0], sizes = [8, 16], strides = [1, 1]} : vector<32x16xf32> to vector<8x16xf32>
    %cst_514 = arith.constant dense<0.000000e+00> : vector<16x16xf32>
    %913 = tpu.matmul %904, %912, %cst_514 {dimension_numbers = #tpu.dot_dimension_numbers<[1], [0], [0], [1], [0, 0, 1, 1], [], []>} : vector<16x8xf32>, vector<8x16xf32>, vector<16x16xf32> -> vector<16x16xf32>
    %cst_515 = arith.constant 0.353553385 : f32
    %914 = vector.broadcast %cst_515 : f32 to vector<16x16xf32>
    %915 = arith.mulf %913, %914 : vector<16x16xf32>
    %916 = vector.broadcast %517 : vector<1x16xf32> to vector<16x16xf32>
    %917 = arith.addf %915, %916 : vector<16x16xf32>
    %cst_516 = arith.constant dense<0xFF800000> : vector<16xf32>
    %918 = vector.multi_reduction <maximumf>, %917, %cst_516 [1] : vector<16x16xf32> to vector<16xf32>
    %919 = vector.shape_cast %918 : vector<16xf32> to vector<16x1xf32>
    %920 = vector.broadcast %919 : vector<16x1xf32> to vector<16x16xf32>
    %921 = arith.subf %917, %920 : vector<16x16xf32>
    %922 = math.exp %921 : vector<16x16xf32>
    %cst_517 = arith.constant dense<0.000000e+00> : vector<16xf32>
    %923 = vector.multi_reduction <add>, %922, %cst_517 [1] : vector<16x16xf32> to vector<16xf32>
    %924 = vector.shape_cast %923 : vector<16xf32> to vector<16x1xf32>
    %925 = tpu.reciprocal %924 : vector<16x1xf32> -> vector<16x1xf32>
    %926 = vector.broadcast %925 : vector<16x1xf32> to vector<16x16xf32>
    %927 = arith.mulf %922, %926 : vector<16x16xf32>
    %cst_518 = arith.constant dense<0.000000e+00> : vector<16x8xf32>
    %928 = tpu.matmul %927, %911, %cst_518 {dimension_numbers = #tpu.dot_dimension_numbers<[1], [0], [0], [1], [0, 0, 1, 1], [], []>} : vector<16x16xf32>, vector<16x8xf32>, vector<16x8xf32> -> vector<16x8xf32>
    %929 = arith.truncf %928 : vector<16x8xf32> to vector<16x8xbf16>
    %c3_519 = arith.constant 3 : index
    %c56_520 = arith.constant 56 : index
    %c0_521 = arith.constant 0 : index
    %930 = vector.load %arg4[%c3_519, %c56_520, %c0_521] : memref<4x160x64xbf16, #tpu.memory_space<vmem>>, vector<1x8x32xbf16>
    %931 = vector.shape_cast %930 : vector<1x8x32xbf16> to vector<8x32xbf16>
    %cst_522 = arith.constant dense<0.000000e+00> : vector<16x32xf32>
    %932 = tpu.matmul %929, %931, %cst_522 {dimension_numbers = #tpu.dot_dimension_numbers<[1], [0], [0], [1], [0, 0, 1, 1], [], []>} : vector<16x8xbf16>, vector<8x32xbf16>, vector<16x32xf32> -> vector<16x32xf32>
    %933 = arith.addf %897, %932 : vector<16x32xf32>
    %934 = arith.addf %753, %933 : vector<16x32xf32>
    %c3_523 = arith.constant 3 : index
    %c3_524 = arith.constant 3 : index
    %c0_525 = arith.constant 0 : index
    %935 = vector.load %arg5[%c3_523, %c3_524, %c0_525] : memref<4x16x64xf32, #tpu.memory_space<vmem>>, vector<1x1x32xf32>
    %936 = vector.shape_cast %935 : vector<1x1x32xf32> to vector<1x32xf32>
    %937 = vector.broadcast %936 : vector<1x32xf32> to vector<16x32xf32>
    %938 = arith.addf %934, %937 : vector<16x32xf32>
    %c3_526 = arith.constant 3 : index
    %c4_527 = arith.constant 4 : index
    %c0_528 = arith.constant 0 : index
    %939 = vector.load %arg5[%c3_526, %c4_527, %c0_528] : memref<4x16x64xf32, #tpu.memory_space<vmem>>, vector<1x1x32xf32>
    %940 = vector.shape_cast %939 : vector<1x1x32xf32> to vector<1x32xf32>
    %c3_529 = arith.constant 3 : index
    %c5_530 = arith.constant 5 : index
    %c0_531 = arith.constant 0 : index
    %941 = vector.load %arg5[%c3_529, %c5_530, %c0_531] : memref<4x16x64xf32, #tpu.memory_space<vmem>>, vector<1x1x32xf32>
    %942 = vector.shape_cast %941 : vector<1x1x32xf32> to vector<1x32xf32>
    %cst_532 = arith.constant dense<0.000000e+00> : vector<16xf32>
    %943 = vector.multi_reduction <add>, %938, %cst_532 [1] : vector<16x32xf32> to vector<16xf32>
    %944 = vector.shape_cast %943 : vector<16xf32> to vector<16x1xf32>
    %cst_533 = arith.constant 3.200000e+01 : f32
    %945 = vector.broadcast %cst_533 : f32 to vector<16x1xf32>
    %946 = arith.divf %944, %945 : vector<16x1xf32>
    %947 = vector.broadcast %946 : vector<16x1xf32> to vector<16x32xf32>
    %948 = arith.subf %938, %947 : vector<16x32xf32>
    %949 = arith.mulf %948, %948 : vector<16x32xf32>
    %cst_534 = arith.constant dense<0.000000e+00> : vector<16xf32>
    %950 = vector.multi_reduction <add>, %949, %cst_534 [1] : vector<16x32xf32> to vector<16xf32>
    %951 = vector.shape_cast %950 : vector<16xf32> to vector<16x1xf32>
    %cst_535 = arith.constant 3.200000e+01 : f32
    %952 = vector.broadcast %cst_535 : f32 to vector<16x1xf32>
    %953 = arith.divf %951, %952 : vector<16x1xf32>
    %954 = vector.broadcast %946 : vector<16x1xf32> to vector<16x32xf32>
    %955 = arith.subf %938, %954 : vector<16x32xf32>
    %cst_536 = arith.constant 9.99999997E-7 : f32
    %956 = vector.broadcast %cst_536 : f32 to vector<16x1xf32>
    %957 = arith.addf %953, %956 : vector<16x1xf32>
    %958 = math.rsqrt %957 : vector<16x1xf32>
    %959 = vector.broadcast %958 : vector<16x1xf32> to vector<16x32xf32>
    %960 = arith.mulf %955, %959 : vector<16x32xf32>
    %961 = vector.broadcast %940 : vector<1x32xf32> to vector<16x32xf32>
    %962 = arith.mulf %960, %961 : vector<16x32xf32>
    %963 = vector.broadcast %942 : vector<1x32xf32> to vector<16x32xf32>
    %964 = arith.addf %962, %963 : vector<16x32xf32>
    %965 = arith.truncf %964 : vector<16x32xf32> to vector<16x32xbf16>
    %c3_537 = arith.constant 3 : index
    %c64_538 = arith.constant 64 : index
    %c0_539 = arith.constant 0 : index
    %966 = vector.load %arg4[%c3_537, %c64_538, %c0_539] : memref<4x160x64xbf16, #tpu.memory_space<vmem>>, vector<1x32x64xbf16>
    %967 = vector.shape_cast %966 : vector<1x32x64xbf16> to vector<32x64xbf16>
    %cst_540 = arith.constant dense<0.000000e+00> : vector<16x64xf32>
    %968 = tpu.matmul %965, %967, %cst_540 {dimension_numbers = #tpu.dot_dimension_numbers<[1], [0], [0], [1], [0, 0, 1, 1], [], []>} : vector<16x32xbf16>, vector<32x64xbf16>, vector<16x64xf32> -> vector<16x64xf32>
    %c3_541 = arith.constant 3 : index
    %c6_542 = arith.constant 6 : index
    %c0_543 = arith.constant 0 : index
    %969 = vector.load %arg5[%c3_541, %c6_542, %c0_543] : memref<4x16x64xf32, #tpu.memory_space<vmem>>, vector<1x1x64xf32>
    %970 = vector.shape_cast %969 : vector<1x1x64xf32> to vector<1x64xf32>
    %971 = vector.broadcast %970 : vector<1x64xf32> to vector<16x64xf32>
    %972 = arith.addf %968, %971 : vector<16x64xf32>
    %cst_544 = arith.constant 5.000000e-01 : f32
    %973 = vector.broadcast %cst_544 : f32 to vector<16x64xf32>
    %974 = arith.mulf %973, %972 : vector<16x64xf32>
    %cst_545 = arith.constant 0.707106769 : f32
    %975 = vector.broadcast %cst_545 : f32 to vector<16x64xf32>
    %976 = arith.mulf %972, %975 : vector<16x64xf32>
    %977 = math.erf %976 : vector<16x64xf32>
    %cst_546 = arith.constant 1.000000e+00 : f32
    %978 = vector.broadcast %cst_546 : f32 to vector<16x64xf32>
    %979 = arith.addf %978, %977 : vector<16x64xf32>
    %980 = arith.mulf %974, %979 : vector<16x64xf32>
    %981 = arith.truncf %980 : vector<16x64xf32> to vector<16x64xbf16>
    %c3_547 = arith.constant 3 : index
    %c96_548 = arith.constant 96 : index
    %c0_549 = arith.constant 0 : index
    %982 = vector.load %arg4[%c3_547, %c96_548, %c0_549] : memref<4x160x64xbf16, #tpu.memory_space<vmem>>, vector<1x64x32xbf16>
    %983 = vector.shape_cast %982 : vector<1x64x32xbf16> to vector<64x32xbf16>
    %cst_550 = arith.constant dense<0.000000e+00> : vector<16x32xf32>
    %984 = tpu.matmul %981, %983, %cst_550 {dimension_numbers = #tpu.dot_dimension_numbers<[1], [0], [0], [1], [0, 0, 1, 1], [], []>} : vector<16x64xbf16>, vector<64x32xbf16>, vector<16x32xf32> -> vector<16x32xf32>
    %c3_551 = arith.constant 3 : index
    %c7_552 = arith.constant 7 : index
    %c0_553 = arith.constant 0 : index
    %985 = vector.load %arg5[%c3_551, %c7_552, %c0_553] : memref<4x16x64xf32, #tpu.memory_space<vmem>>, vector<1x1x32xf32>
    %986 = vector.shape_cast %985 : vector<1x1x32xf32> to vector<1x32xf32>
    %987 = vector.broadcast %986 : vector<1x32xf32> to vector<16x32xf32>
    %988 = arith.addf %984, %987 : vector<16x32xf32>
    %989 = arith.addf %938, %988 : vector<16x32xf32>
    %c50 = arith.constant 50 : index
    %c0_554 = arith.constant 0 : index
    %990 = vector.load %arg6[%c50, %c0_554] : memref<88x32xf32, #tpu.memory_space<vmem>>, vector<1x32xf32>
    %c51 = arith.constant 51 : index
    %c0_555 = arith.constant 0 : index
    %991 = vector.load %arg6[%c51, %c0_555] : memref<88x32xf32, #tpu.memory_space<vmem>>, vector<1x32xf32>
    %cst_556 = arith.constant dense<0.000000e+00> : vector<16xf32>
    %992 = vector.multi_reduction <add>, %989, %cst_556 [1] : vector<16x32xf32> to vector<16xf32>
    %993 = vector.shape_cast %992 : vector<16xf32> to vector<16x1xf32>
    %cst_557 = arith.constant 3.200000e+01 : f32
    %994 = vector.broadcast %cst_557 : f32 to vector<16x1xf32>
    %995 = arith.divf %993, %994 : vector<16x1xf32>
    %996 = vector.broadcast %995 : vector<16x1xf32> to vector<16x32xf32>
    %997 = arith.subf %989, %996 : vector<16x32xf32>
    %998 = arith.mulf %997, %997 : vector<16x32xf32>
    %cst_558 = arith.constant dense<0.000000e+00> : vector<16xf32>
    %999 = vector.multi_reduction <add>, %998, %cst_558 [1] : vector<16x32xf32> to vector<16xf32>
    %1000 = vector.shape_cast %999 : vector<16xf32> to vector<16x1xf32>
    %cst_559 = arith.constant 3.200000e+01 : f32
    %1001 = vector.broadcast %cst_559 : f32 to vector<16x1xf32>
    %1002 = arith.divf %1000, %1001 : vector<16x1xf32>
    %1003 = vector.broadcast %995 : vector<16x1xf32> to vector<16x32xf32>
    %1004 = arith.subf %989, %1003 : vector<16x32xf32>
    %cst_560 = arith.constant 9.99999997E-7 : f32
    %1005 = vector.broadcast %cst_560 : f32 to vector<16x1xf32>
    %1006 = arith.addf %1002, %1005 : vector<16x1xf32>
    %1007 = math.rsqrt %1006 : vector<16x1xf32>
    %1008 = vector.broadcast %1007 : vector<16x1xf32> to vector<16x32xf32>
    %1009 = arith.mulf %1004, %1008 : vector<16x32xf32>
    %1010 = vector.broadcast %990 : vector<1x32xf32> to vector<16x32xf32>
    %1011 = arith.mulf %1009, %1010 : vector<16x32xf32>
    %1012 = vector.broadcast %991 : vector<1x32xf32> to vector<16x32xf32>
    %1013 = arith.addf %1011, %1012 : vector<16x32xf32>
    %1014 = vector.extract_strided_slice %1013 {offsets = [0, 0], sizes = [1, 32], strides = [1, 1]} : vector<16x32xf32> to vector<1x32xf32>
    %c52 = arith.constant 52 : index
    %c0_561 = arith.constant 0 : index
    %1015 = vector.load %arg6[%c52, %c0_561] : memref<88x32xf32, #tpu.memory_space<vmem>>, vector<1x32xf32>
    %c53 = arith.constant 53 : index
    %c0_562 = arith.constant 0 : index
    %1016 = vector.load %arg6[%c53, %c0_562] : memref<88x32xf32, #tpu.memory_space<vmem>>, vector<1x32xf32>
    %cst_563 = arith.constant dense<0.000000e+00> : vector<1xf32>
    %1017 = vector.multi_reduction <add>, %1014, %cst_563 [1] : vector<1x32xf32> to vector<1xf32>
    %1018 = vector.shape_cast %1017 : vector<1xf32> to vector<1x1xf32>
    %cst_564 = arith.constant 3.200000e+01 : f32
    %1019 = vector.broadcast %cst_564 : f32 to vector<1x1xf32>
    %1020 = arith.divf %1018, %1019 : vector<1x1xf32>
    %1021 = vector.broadcast %1020 : vector<1x1xf32> to vector<1x32xf32>
    %1022 = arith.subf %1014, %1021 : vector<1x32xf32>
    %1023 = arith.mulf %1022, %1022 : vector<1x32xf32>
    %cst_565 = arith.constant dense<0.000000e+00> : vector<1xf32>
    %1024 = vector.multi_reduction <add>, %1023, %cst_565 [1] : vector<1x32xf32> to vector<1xf32>
    %1025 = vector.shape_cast %1024 : vector<1xf32> to vector<1x1xf32>
    %cst_566 = arith.constant 3.200000e+01 : f32
    %1026 = vector.broadcast %cst_566 : f32 to vector<1x1xf32>
    %1027 = arith.divf %1025, %1026 : vector<1x1xf32>
    %1028 = vector.broadcast %1020 : vector<1x1xf32> to vector<1x32xf32>
    %1029 = arith.subf %1014, %1028 : vector<1x32xf32>
    %cst_567 = arith.constant 9.99999974E-6 : f32
    %1030 = vector.broadcast %cst_567 : f32 to vector<1x1xf32>
    %1031 = arith.addf %1027, %1030 : vector<1x1xf32>
    %1032 = math.rsqrt %1031 : vector<1x1xf32>
    %1033 = vector.broadcast %1032 : vector<1x1xf32> to vector<1x32xf32>
    %1034 = arith.mulf %1029, %1033 : vector<1x32xf32>
    %1035 = arith.mulf %1034, %1015 : vector<1x32xf32>
    %1036 = arith.addf %1035, %1016 : vector<1x32xf32>
    %c56_568 = arith.constant 56 : index
    %c0_569 = arith.constant 0 : index
    %1037 = vector.load %arg6[%c56_568, %c0_569] : memref<88x32xf32, #tpu.memory_space<vmem>>, vector<32x10xf32>
    %cst_570 = arith.constant dense<0.000000e+00> : vector<1x10xf32>
    %1038 = tpu.matmul %1036, %1037, %cst_570 {dimension_numbers = #tpu.dot_dimension_numbers<[1], [0], [0], [1], [0, 0, 1, 1], [], []>} : vector<1x32xf32>, vector<32x10xf32>, vector<1x10xf32> -> vector<1x10xf32>
    %c54 = arith.constant 54 : index
    %c0_571 = arith.constant 0 : index
    %1039 = vector.load %arg6[%c54, %c0_571] : memref<88x32xf32, #tpu.memory_space<vmem>>, vector<1x10xf32>
    %1040 = arith.addf %1038, %1039 : vector<1x10xf32>
    %c0_572 = arith.constant 0 : index
    %c0_573 = arith.constant 0 : index
    %c0_574 = arith.constant 0 : index
    %1041 = vector.load %arg7[%c0_572, %c0_573, %c0_574] : memref<1x1x10xf32, #tpu.memory_space<vmem>>, vector<1x1x10xf32>
    %1042 = vector.shape_cast %1041 : vector<1x1x10xf32> to vector<1x10xf32>
    %1043 = vector.shape_cast %1040 : vector<1x10xf32> to vector<1x1x10xf32>
    tpu.vector_store %arg7[%c0_572, %c0_573, %c0_574], %1043 {strides = array<i32>} : memref<1x1x10xf32, #tpu.memory_space<vmem>>, vector<1x1x10xf32>,
    return
  }
  func.func @transform_0(%arg0: i32) -> (i32, i32, i32) {
    %c0_i32 = arith.constant 0 : i32
    %c0_i32_0 = arith.constant 0 : i32
    %c0_i32_1 = arith.constant 0 : i32
    return %arg0, %c0_i32, %c0_i32_0 : i32, i32, i32
  }
  func.func @transform_1(%arg0: i32) -> (i32, i32) {
    %c0_i32 = arith.constant 0 : i32
    %c0_i32_0 = arith.constant 0 : i32
    %c0_i32_1 = arith.constant 0 : i32
    return %c0_i32, %c0_i32_0 : i32, i32
  }
  func.func @transform_2(%arg0: i32) -> (i32, i32, i32) {
    %c0_i32 = arith.constant 0 : i32
    %c0_i32_0 = arith.constant 0 : i32
    %c0_i32_1 = arith.constant 0 : i32
    %c0_i32_2 = arith.constant 0 : i32
    return %c0_i32, %c0_i32_0, %c0_i32_1 : i32, i32, i32
  }
  func.func @transform_3(%arg0: i32) -> (i32, i32, i32) {
    %c0_i32 = arith.constant 0 : i32
    %c0_i32_0 = arith.constant 0 : i32
    %c0_i32_1 = arith.constant 0 : i32
    %c0_i32_2 = arith.constant 0 : i32
    return %c0_i32, %c0_i32_0, %c0_i32_1 : i32, i32, i32
  }
  func.func @transform_4(%arg0: i32) -> (i32, i32, i32) {
    %c0_i32 = arith.constant 0 : i32
    %c0_i32_0 = arith.constant 0 : i32
    %c0_i32_1 = arith.constant 0 : i32
    %c0_i32_2 = arith.constant 0 : i32
    return %c0_i32, %c0_i32_0, %c0_i32_1 : i32, i32, i32
  }
  func.func @transform_5(%arg0: i32) -> (i32, i32) {
    %c0_i32 = arith.constant 0 : i32
    %c0_i32_0 = arith.constant 0 : i32
    %c0_i32_1 = arith.constant 0 : i32
    return %c0_i32, %c0_i32_0 : i32, i32
  }
  func.func @transform_6(%arg0: i32) -> (i32, i32, i32) {
    %c0_i32 = arith.constant 0 : i32
    %c0_i32_0 = arith.constant 0 : i32
    %c0_i32_1 = arith.constant 0 : i32
    return %arg0, %c0_i32, %c0_i32_0 : i32, i32, i32
  }
}

</mosaic_0001>

<llo_original>
// kernel: vivit_forward.1
$region0: #{vivit_forward.1}
  #allocation0 [shape = 'u32[]', space=smem, size = 0x4, offset = 0x4, fixed_abs, tag = 'smem constant byte address 0x4 - core index']
  #allocation1 [shape = 'u32[144,128]{1,0:T(1,128)}', space=vmem, size = 0x12000, scoped, tag = 'internal scratch']
  %s0 = inlined_call_operand.vmem [shape: bf16[2,16,384], index: 0, kind: input, shape index: {}]
  %s1 = inlined_call_operand.vmem [shape: bf16[384,32], index: 1, kind: input, shape index: {}]
  %s2 = inlined_call_operand.vmem [shape: bf16[32,32,8], index: 2, kind: input, shape index: {}]
  %s3 = inlined_call_operand.vmem [shape: bf16[4,160,64], index: 3, kind: input, shape index: {}]
  %s4 = inlined_call_operand.vmem [shape: f32[4,16,64], index: 4, kind: input, shape index: {}]
  %s5 = inlined_call_operand.vmem [shape: f32[88,32], index: 5, kind: input, shape index: {}]
  %s6 = inlined_call_operand.hbm [shape: f32[2,1,10], index: 6, kind: output, shape index: {}]
  %s7 = sld [smem:[#allocation0]]
  $region57: #{vivit_forward.1} parent=0
    _
  %s9 = ssub.s32 1, %s7
  %s10 = scalar_select 0, %s9, %s7
  $region1: #{vivit_forward.1} parent=0
    #allocation2 [shape = 'u8[1024]{0}', space=vmem, size = 0x400, scoped, tag = 'output window, operand 0']
    #allocation3 [shape = 's32[2]{0}', space=sflag, size = 0x8, scoped, tag = 'scoped memory for vivit_forward.1']
    %11 = vsyncpa [#allocation3], 0
    %s12 = scalar_lea.sflag [#allocation3], 1
    %13 = vsyncpa %s12, 0
    loop: start=0, step=1, limit=4
    $region2: #{vivit_forward.1} parent=1 // loop_pre_header
      _
    $region3: #{vivit_forward.1} parent=1 // loop_header
      %s15 = sphi 0, %s19
      %p16 = scmp.ge.s32.totalorder %s15, 4
      %s25 = sphi 0, %s27
      %s28 = sphi 0, %s25
      %s29 = sphi 0, %s28
      %s45 = sphi 0, %s29
      %s49 = sphi 0, %s49
      %s51 = sphi 0, %s49
      %s52 = sphi 0, %s51
      %s66 = sphi 0, %s52
      %s70 = sphi 0, %s70
      %s72 = sphi 0, %s70
      %s73 = sphi 0, %s72
      %s87 = sphi 0, %s73
      %s91 = sphi 0, %s91
      %s93 = sphi 0, %s91
      %s94 = sphi 0, %s93
      %s108 = sphi 0, %s94
      %s112 = sphi 0, %s112
      %s114 = sphi 0, %s112
      %s115 = sphi 0, %s114
      %s129 = sphi 0, %s115
      %s133 = sphi 0, %s133
      %s135 = sphi 0, %s133
      %s136 = sphi 0, %s135
      %s150 = sphi 0, %s136
      %s156 = sphi 0, %s158
      %s159 = sphi 0, %s156
      %s160 = sphi 0, %s159
      %s176 = sphi 0, %s160
    $region4: #{vivit_forward.1} parent=1 // loop_header_branch
      %18 = sbr.rel (%p16) target = $region8
    $region5: #{vivit_forward.1} parent=1 // loop_body
      %s20 = ssub.s32 %s15, 1
      %s21 = ssub.s32 %s15, 2
      %s22 = sadd.s32 %s15, 1
      %s23 = ssub.s32 %s15, %s22
      %p24 = scmp.eq.s32.totalorder %s23, 0
      %s26 = sadd.s32 %s25, 1
      %s27 = scalar_select %p24, %s25, %s26
      %p30 = pneg %p24
      %p31 = scmp.eq.s32.totalorder %s15, 1
      %p32 = por %p30, %p31
      %p33 = scmp.ne.s32.totalorder %s25, %s28
      %p34 = scmp.eq.s32.totalorder %s15, 0
      %p35 = por %p33, %p34
      %p36 = scmp.ne.s32.totalorder %s25, %s28
      %p37 = scmp.eq.s32.totalorder %s20, 1
      %p38 = por %p36, %p37
      %p39 = scmp.ne.s32.totalorder %s28, %s29
      %p40 = scmp.eq.s32.totalorder %s20, 0
      %p41 = por %p39, %p40
      %p42 = scmp.ne.s32.totalorder %s28, %s29
      %p43 = scmp.eq.s32.totalorder %s21, 1
      %p44 = por %p42, %p43
      %p46 = scmp.ne.s32.totalorder %s29, %s45
      %p47 = scmp.eq.s32.totalorder %s21, 0
      %p48 = por %p46, %p47
      %s50 = sadd.s32 %s49, 1
      %p53 = scmp.eq.s32.totalorder %s15, 1
      %p54 = scmp.ne.s32.totalorder %s49, %s51
      %p55 = scmp.eq.s32.totalorder %s15, 0
      %p56 = por %p54, %p55
      %p57 = scmp.ne.s32.totalorder %s49, %s51
      %p58 = scmp.eq.s32.totalorder %s20, 1
      %p59 = por %p57, %p58
      %p60 = scmp.ne.s32.totalorder %s51, %s52
      %p61 = scmp.eq.s32.totalorder %s20, 0
      %p62 = por %p60, %p61
      %p63 = scmp.ne.s32.totalorder %s51, %s52
      %p64 = scmp.eq.s32.totalorder %s21, 1
      %p65 = por %p63, %p64
      %p67 = scmp.ne.s32.totalorder %s52, %s66
      %p68 = scmp.eq.s32.totalorder %s21, 0
      %p69 = por %p67, %p68
      %s71 = sadd.s32 %s70, 1
      %p74 = scmp.eq.s32.totalorder %s15, 1
      %p75 = scmp.ne.s32.totalorder %s70, %s72
      %p76 = scmp.eq.s32.totalorder %s15, 0
      %p77 = por %p75, %p76
      %p78 = scmp.ne.s32.totalorder %s70, %s72
      %p79 = scmp.eq.s32.totalorder %s20, 1
      %p80 = por %p78, %p79
      %p81 = scmp.ne.s32.totalorder %s72, %s73
      %p82 = scmp.eq.s32.totalorder %s20, 0
      %p83 = por %p81, %p82
      %p84 = scmp.ne.s32.totalorder %s72, %s73
      %p85 = scmp.eq.s32.totalorder %s21, 1
      %p86 = por %p84, %p85
      %p88 = scmp.ne.s32.totalorder %s73, %s87
      %p89 = scmp.eq.s32.totalorder %s21, 0
      %p90 = por %p88, %p89
      %s92 = sadd.s32 %s91, 1
      %p95 = scmp.eq.s32.totalorder %s15, 1
      %p96 = scmp.ne.s32.totalorder %s91, %s93
      %p97 = scmp.eq.s32.totalorder %s15, 0
      %p98 = por %p96, %p97
      %p99 = scmp.ne.s32.totalorder %s91, %s93
      %p100 = scmp.eq.s32.totalorder %s20, 1
      %p101 = por %p99, %p100
      %p102 = scmp.ne.s32.totalorder %s93, %s94
      %p103 = scmp.eq.s32.totalorder %s20, 0
      %p104 = por %p102, %p103
      %p105 = scmp.ne.s32.totalorder %s93, %s94
      %p106 = scmp.eq.s32.totalorder %s21, 1
      %p107 = por %p105, %p106
      %p109 = scmp.ne.s32.totalorder %s94, %s108
      %p110 = scmp.eq.s32.totalorder %s21, 0
      %p111 = por %p109, %p110
      %s113 = sadd.s32 %s112, 1
      %p116 = scmp.eq.s32.totalorder %s15, 1
      %p117 = scmp.ne.s32.totalorder %s112, %s114
      %p118 = scmp.eq.s32.totalorder %s15, 0
      %p119 = por %p117, %p118
      %p120 = scmp.ne.s32.totalorder %s112, %s114
      %p121 = scmp.eq.s32.totalorder %s20, 1
      %p122 = por %p120, %p121
      %p123 = scmp.ne.s32.totalorder %s114, %s115
      %p124 = scmp.eq.s32.totalorder %s20, 0
      %p125 = por %p123, %p124
      %p126 = scmp.ne.s32.totalorder %s114, %s115
      %p127 = scmp.eq.s32.totalorder %s21, 1
      %p128 = por %p126, %p127
      %p130 = scmp.ne.s32.totalorder %s115, %s129
      %p131 = scmp.eq.s32.totalorder %s21, 0
      %p132 = por %p130, %p131
      %s134 = sadd.s32 %s133, 1
      %p137 = scmp.eq.s32.totalorder %s15, 1
      %p138 = scmp.ne.s32.totalorder %s133, %s135
      %p139 = scmp.eq.s32.totalorder %s15, 0
      %p140 = por %p138, %p139
      %p141 = scmp.ne.s32.totalorder %s133, %s135
      %p142 = scmp.eq.s32.totalorder %s20, 1
      %p143 = por %p141, %p142
      %p144 = scmp.ne.s32.totalorder %s135, %s136
      %p145 = scmp.eq.s32.totalorder %s20, 0
      %p146 = por %p144, %p145
      %p147 = scmp.ne.s32.totalorder %s135, %s136
      %p148 = scmp.eq.s32.totalorder %s21, 1
      %p149 = por %p147, %p148
      %p151 = scmp.ne.s32.totalorder %s136, %s150
      %p152 = scmp.eq.s32.totalorder %s21, 0
      %p153 = por %p151, %p152
      %s154 = ssub.s32 %s15, %s22
      %p155 = scmp.eq.s32.totalorder %s154, 0
      %s157 = sadd.s32 %s156, 1
      %s158 = scalar_select %p155, %s156, %s157
      %p161 = pneg %p155
      %p162 = scmp.eq.s32.totalorder %s15, 1
      %p163 = por %p161, %p162
      %p164 = scmp.ne.s32.totalorder %s156, %s159
      %p165 = scmp.eq.s32.totalorder %s15, 0
      %p166 = por %p164, %p165
      %p167 = scmp.ne.s32.totalorder %s156, %s159
      %p168 = scmp.eq.s32.totalorder %s20, 1
      %p169 = por %p167, %p168
      %p170 = scmp.ne.s32.totalorder %s159, %s160
      %p171 = scmp.eq.s32.totalorder %s20, 0
      %p172 = por %p170, %p171
      %p173 = scmp.ne.s32.totalorder %s159, %s160
      %p174 = scmp.eq.s32.totalorder %s21, 1
      %p175 = por %p173, %p174
      %p177 = scmp.ne.s32.totalorder %s160, %s176
      %p178 = scmp.eq.s32.totalorder %s21, 0
      %p179 = por %p177, %p178
      %p180 = scmp.le.s32.totalorder 1, %s15
      %p181 = scmp.lt.s32.totalorder %s15, 3
      %p182 = pnand %p180, %p181
      %p183 = pneg %p182
      // Predicated region
      $region9: #{vivit_forward.1} parent=5 // pred_check
        _
      $region10: #{vivit_forward.1} parent=5 // pred_check_branch
        %185 = sbr.rel (%p182) target = $region12
      $region11: #{vivit_forward.1} parent=5 // pred_region
        %s186 = ssub.s32 %s15, 1
        // Predicated region
        $region13: #{vivit_forward.1} parent=11 // pred_check
          %p187 = pneg %p62
        $region14: #{vivit_forward.1} parent=11 // pred_check_branch
          %189 = sbr.rel (%p187) target = $region16
        $region15: #{vivit_forward.1} parent=11 // pred_region
          _
        $region16: #{vivit_forward.1} parent=11 // pred_fallthru
          _
        // Predicated region
        $region17: #{vivit_forward.1} parent=11 // pred_check
          %p190 = pneg %p83
        $region18: #{vivit_forward.1} parent=11 // pred_check_branch
          %192 = sbr.rel (%p190) target = $region20
        $region19: #{vivit_forward.1} parent=11 // pred_region
          _
        $region20: #{vivit_forward.1} parent=11 // pred_fallthru
          _
        // Predicated region
        $region21: #{vivit_forward.1} parent=11 // pred_check
          %p193 = pneg %p104
        $region22: #{vivit_forward.1} parent=11 // pred_check_branch
          %195 = sbr.rel (%p193) target = $region24
        $region23: #{vivit_forward.1} parent=11 // pred_region
          _
        $region24: #{vivit_forward.1} parent=11 // pred_fallthru
          _
        // Predicated region
        $region25: #{vivit_forward.1} parent=11 // pred_check
          %p196 = pneg %p125
        $region26: #{vivit_forward.1} parent=11 // pred_check_branch
          %198 = sbr.rel (%p196) target = $region28
        $region27: #{vivit_forward.1} parent=11 // pred_region
          _
        $region28: #{vivit_forward.1} parent=11 // pred_fallthru
          _
        // Predicated region
        $region29: #{vivit_forward.1} parent=11 // pred_check
          %p199 = pneg %p146
        $region30: #{vivit_forward.1} parent=11 // pred_check_branch
          %201 = sbr.rel (%p199) target = $region32
        $region31: #{vivit_forward.1} parent=11 // pred_region
          _
        $region32: #{vivit_forward.1} parent=11 // pred_fallthru
          _
      $region12: #{vivit_forward.1} parent=5 // pred_fallthru
        _
      %p202 = scmp.lt.s32.totalorder %s15, 2
      // Predicated region
      $region33: #{vivit_forward.1} parent=5 // pred_check
        %p203 = pneg %p202
      $region34: #{vivit_forward.1} parent=5 // pred_check_branch
        %205 = sbr.rel (%p203) target = $region36
      $region35: #{vivit_forward.1} parent=5 // pred_region
        // Predicated region
        $region37: #{vivit_forward.1} parent=35 // pred_check
          %p206 = pneg %p35
        $region38: #{vivit_forward.1} parent=35 // pred_check_branch
          %208 = sbr.rel (%p206) target = $region40
        $region39: #{vivit_forward.1} parent=35 // pred_region
          %p209 = scmp.lt.s32.totalorder %s15, 1
          %s210 = scalar_select %p209, %s15, 1
          %s211 = smul.addr %s210, 6
          %s212 = smul.addr %s211, 4
          %s213 = scalar_lea.vmem %s0, %s212
        $region40: #{vivit_forward.1} parent=35 // pred_fallthru
          _
      $region36: #{vivit_forward.1} parent=5 // pred_fallthru
        _
      %p214 = scmp.le.s32.totalorder 1, %s15
      %p215 = scmp.lt.s32.totalorder %s15, 3
      %p216 = pnand %p214, %p215
      %p217 = pneg %p216
      // Predicated region
      $region41: #{vivit_forward.1} parent=5 // pred_check
        _
      $region42: #{vivit_forward.1} parent=5 // pred_check_branch
        %219 = sbr.rel (%p216) target = $region44
      $region43: #{vivit_forward.1} parent=5 // pred_region
        %s220 = ssub.s32 %s15, 1
        %p221 = scmp.lt.s32.totalorder %s20, 1
        %s222 = scalar_select %p221, %s20, 1
        %s223 = smul.addr %s222, 6
        %s224 = smul.addr %s223, 4
        %s225 = scalar_lea.vmem %s0, %s224
        %p226 = pneg %p41
        %p227 = pneg %p38
        %p228 = pneg %p62
        %p229 = pneg %p59
        %p230 = pneg %p83
        %p231 = pneg %p80
        %p232 = pneg %p104
        %p233 = pneg %p101
        %p234 = pneg %p125
        %p235 = pneg %p122
        %p236 = pneg %p146
        %p237 = pneg %p143
        %p238 = pneg %p172
        %p239 = pneg %p169
        %s240 = sand.u32 %s159, 1
        %s241 = scalar_lea.sflag [#allocation3], %s240
        %s242 = sand.u32 %s159, 1
        %s243 = scalar_lea.vmem [#allocation2], %s242
        %p244 = scmp.lt.s32.totalorder %s20, 1
        %s245 = scalar_select %p244, %s20, 1
        %s246 = smul.addr %s245, 6
        %s247 = smul.addr %s246, 4
        %s248 = scalar_lea.vmem %s0, %s247
        %v250 = vld [vmem:[%s248] sm:$0xff]
        %v251 = vld [vmem:[%s248 + $0x8] sm:$0xf]
        %v252 = vld [vmem:[%s248 + $0xc] sm:$0xff]
        %v253 = vld [vmem:[%s248 + $0x14] sm:$0xf]
        %v254 = vld [vmem:[%s1] sm:$0xf]
        %v255 = vld [vmem:[%s1 + $0x4] sm:$0xf]
        %v256 = vld [vmem:[%s1 + $0x8] sm:$0xf]
        %v257 = vld [vmem:[%s1 + $0xc] sm:$0xf]
        %v258 = vld [vmem:[%s1 + $0x10] sm:$0xf]
        %v259 = vld [vmem:[%s1 + $0x14] sm:$0xf]
        %v260 = vld [vmem:[%s1 + $0x18] sm:$0xf]
        %v261 = vld [vmem:[%s1 + $0x1c] sm:$0xf]
        %v262 = vld [vmem:[%s1 + $0x20] sm:$0xf]
        %v263 = vld [vmem:[%s1 + $0x24] sm:$0xf]
        %v264 = vld [vmem:[%s1 + $0x28] sm:$0xf]
        %v265 = vld [vmem:[%s1 + $0x2c] sm:$0xf]
        %v266 = vld [vmem:[%s1 + $0x30] sm:$0xf]
        %v267 = vld [vmem:[%s1 + $0x34] sm:$0xf]
        %v268 = vld [vmem:[%s1 + $0x38] sm:$0xf]
        %v269 = vld [vmem:[%s1 + $0x3c] sm:$0xf]
        %v270 = vld [vmem:[%s1 + $0x40] sm:$0xf]
        %v271 = vld [vmem:[%s1 + $0x44] sm:$0xf]
        %v272 = vld [vmem:[%s1 + $0x48] sm:$0xf]
        %v273 = vld [vmem:[%s1 + $0x4c] sm:$0xf]
        %v274 = vld [vmem:[%s1 + $0x50] sm:$0xf]
        %v275 = vld [vmem:[%s1 + $0x54] sm:$0xf]
        %v276 = vld [vmem:[%s1 + $0x58] sm:$0xf]
        %v277 = vld [vmem:[%s1 + $0x5c] sm:$0xf]
        %v278 = vld [vmem:[%s1 + $0x60] sm:$0xf]
        %v279 = vld [vmem:[%s1 + $0x64] sm:$0xf]
        %v280 = vld [vmem:[%s1 + $0x68] sm:$0xf]
        %v281 = vld [vmem:[%s1 + $0x6c] sm:$0xf]
        %v282 = vld [vmem:[%s1 + $0x70] sm:$0xf]
        %v283 = vld [vmem:[%s1 + $0x74] sm:$0xf]
        %v284 = vld [vmem:[%s1 + $0x78] sm:$0xf]
        %v285 = vld [vmem:[%s1 + $0x7c] sm:$0xf]
        %v286 = vld [vmem:[%s1 + $0x80] sm:$0xf]
        %v287 = vld [vmem:[%s1 + $0x84] sm:$0xf]
        %v288 = vld [vmem:[%s1 + $0x88] sm:$0xf]
        %v289 = vld [vmem:[%s1 + $0x8c] sm:$0xf]
        %v290 = vld [vmem:[%s1 + $0x90] sm:$0xf]
        %v291 = vld [vmem:[%s1 + $0x94] sm:$0xf]
        %v292 = vld [vmem:[%s1 + $0x98] sm:$0xf]
        %v293 = vld [vmem:[%s1 + $0x9c] sm:$0xf]
        %v294 = vld [vmem:[%s1 + $0xa0] sm:$0xf]
        %v295 = vld [vmem:[%s1 + $0xa4] sm:$0xf]
        %v296 = vld [vmem:[%s1 + $0xa8] sm:$0xf]
        %v297 = vld [vmem:[%s1 + $0xac] sm:$0xf]
        %v298 = vld [vmem:[%s1 + $0xb0] sm:$0xf]
        %v299 = vld [vmem:[%s1 + $0xb4] sm:$0xf]
        %v300 = vld [vmem:[%s1 + $0xb8] sm:$0xf]
        %v301 = vld [vmem:[%s1 + $0xbc] sm:$0xf]
        %v302 = vld [vmem:[%s5] sm:$0xff]
        %v303 = vld [vmem:[%s5 + $0x8] sm:$0xff]
        %v308 = vunpack.c.l.b16 %v250
        %v309 = vunpack.c.h.b16 %v250
        %v310 = vunpack.c.l.b16 %v251
        %v311 = vunpack.c.l.b16 %v252
        %v312 = vunpack.c.h.b16 %v252
        %v313 = vunpack.c.l.b16 %v253
        %v314 = vpack.c.b16 %v311, %v308
        %v315 = vpack.c.b16 %v312, %v309
        %v316 = vpack.c.b16 %v313, %v310
        %v368 = vunpack.c.l.b16 %v254
        %v369 = vunpack.c.l.b16 %v255
        %v370 = vunpack.c.l.b16 %v256
        %v371 = vunpack.c.l.b16 %v257
        %v372 = vunpack.c.l.b16 %v258
        %v373 = vunpack.c.l.b16 %v259
        %v374 = vunpack.c.l.b16 %v260
        %v375 = vunpack.c.l.b16 %v261
        %v376 = vunpack.c.l.b16 %v262
        %v377 = vunpack.c.l.b16 %v263
        %v378 = vunpack.c.l.b16 %v264
        %v379 = vunpack.c.l.b16 %v265
        %v380 = vunpack.c.l.b16 %v266
        %v381 = vunpack.c.l.b16 %v267
        %v382 = vunpack.c.l.b16 %v268
        %v383 = vunpack.c.l.b16 %v269
        %v384 = vunpack.c.l.b16 %v270
        %v385 = vunpack.c.l.b16 %v271
        %v386 = vunpack.c.l.b16 %v272
        %v387 = vunpack.c.l.b16 %v273
        %v388 = vunpack.c.l.b16 %v274
        %v389 = vunpack.c.l.b16 %v275
        %v390 = vunpack.c.l.b16 %v276
        %v391 = vunpack.c.l.b16 %v277
        %v392 = vunpack.c.l.b16 %v278
        %v393 = vunpack.c.l.b16 %v279
        %v394 = vunpack.c.l.b16 %v280
        %v395 = vunpack.c.l.b16 %v281
        %v396 = vunpack.c.l.b16 %v282
        %v397 = vunpack.c.l.b16 %v283
        %v398 = vunpack.c.l.b16 %v284
        %v399 = vunpack.c.l.b16 %v285
        %v400 = vunpack.c.l.b16 %v286
        %v401 = vunpack.c.l.b16 %v287
        %v402 = vunpack.c.l.b16 %v288
        %v403 = vunpack.c.l.b16 %v289
        %v404 = vunpack.c.l.b16 %v290
        %v405 = vunpack.c.l.b16 %v291
        %v406 = vunpack.c.l.b16 %v292
        %v407 = vunpack.c.l.b16 %v293
        %v408 = vunpack.c.l.b16 %v294
        %v409 = vunpack.c.l.b16 %v295
        %v410 = vunpack.c.l.b16 %v296
        %v411 = vunpack.c.l.b16 %v297
        %v412 = vunpack.c.l.b16 %v298
        %v413 = vunpack.c.l.b16 %v299
        %v414 = vunpack.c.l.b16 %v300
        %v415 = vunpack.c.l.b16 %v301
        %v416 = vpack.c.b16 %v369, %v368
        %v417 = vpack.c.b16 %v371, %v370
        %v418 = vpack.c.b16 %v373, %v372
        %v419 = vpack.c.b16 %v375, %v374
        %v420 = vpack.c.b16 %v377, %v376
        %v421 = vpack.c.b16 %v379, %v378
        %v422 = vpack.c.b16 %v381, %v380
        %v423 = vpack.c.b16 %v383, %v382
        %v424 = vpack.c.b16 %v385, %v384
        %v425 = vpack.c.b16 %v387, %v386
        %v426 = vpack.c.b16 %v389, %v388
        %v427 = vpack.c.b16 %v391, %v390
        %v428 = vpack.c.b16 %v393, %v392
        %v429 = vpack.c.b16 %v395, %v394
        %v430 = vpack.c.b16 %v397, %v396
        %v431 = vpack.c.b16 %v399, %v398
        %v432 = vpack.c.b16 %v401, %v400
        %v433 = vpack.c.b16 %v403, %v402
        %v434 = vpack.c.b16 %v405, %v404
        %v435 = vpack.c.b16 %v407, %v406
        %v436 = vpack.c.b16 %v409, %v408
        %v437 = vpack.c.b16 %v411, %v410
        %v438 = vpack.c.b16 %v413, %v412
        %v439 = vpack.c.b16 %v415, %v414
        %464 = vmatprep.subr.bf16.mxu0 0
        %465 = vmatpush1.bf16.msra.mxu0 %v416
        %466 = vmatprep.subr.bf16.mxu0 0
        %467 = vmatpush1.bf16.msra.mxu0 %v417
        %468 = vmatprep.subr.bf16.mxu0 0
        %469 = vmatpush1.bf16.msra.mxu0 %v418
        %470 = vmatprep.subr.bf16.mxu0 0
        %471 = vmatpush1.bf16.msra.mxu0 %v419
        %472 = vmatprep.subr.bf16.mxu0 0
        %473 = vmatpush1.bf16.msra.mxu0 %v420
        %474 = vmatprep.subr.bf16.mxu0 0
        %475 = vmatpush1.bf16.msra.mxu0 %v421
        %476 = vmatprep.subr.bf16.mxu0 0
        %477 = vmatpush1.bf16.msra.mxu0 %v422
        %478 = vmatprep.subr.bf16.mxu0 0
        %479 = vmatpush1.bf16.msra.mxu0 %v423
        %480 = vmatprep.subr.bf16.mxu0 0
        %481 = vmatpush1.bf16.msra.mxu0 %v424
        %482 = vmatprep.subr.bf16.mxu0 0
        %483 = vmatpush1.bf16.msra.mxu0 %v425
        %484 = vmatprep.subr.bf16.mxu0 0
        %485 = vmatpush1.bf16.msra.mxu0 %v426
        %486 = vmatprep.subr.bf16.mxu0 0
        %487 = vmatpush1.bf16.msra.mxu0 %v427
        %488 = vmatprep.subr.bf16.mxu0 0
        %489 = vmatpush1.bf16.msra.mxu0 %v428
        %490 = vmatprep.subr.bf16.mxu0 0
        %491 = vmatpush1.bf16.msra.mxu0 %v429
        %492 = vmatprep.subr.bf16.mxu0 0
        %493 = vmatpush1.bf16.msra.mxu0 %v430
        %494 = vmatprep.subr.bf16.mxu0 0
        %495 = vmatpush1.bf16.msra.mxu0 %v431
        %496 = vmatprep.mubr.bf16.mxu0 %v315
        %497 = vmatmul.mubr.bf16.gmra.mrb[0].mxu0 %v314
        %v498 = vpop.f32.mrb[0].mxu0
        %v499 = vadd.f32 %v302, %v498
        %v500 = vpop.f32.mrb[0].mxu0
        %v501 = vpop.f32.mrb[0].mxu0
        %v502 = vadd.f32 %v303, %v501
        %v503 = vpop.f32.mrb[0].mxu0
        %504 = vdwg.mxu0
        %505 = vmatprep.subr.bf16.mxu0 0
        %506 = vmatpush1.bf16.msra.mxu0 %v432
        %507 = vmatprep.subr.bf16.mxu0 0
        %508 = vmatpush1.bf16.msra.mxu0 %v433
        %509 = vmatprep.subr.bf16.mxu0 0
        %510 = vmatpush1.bf16.msra.mxu0 %v434
        %511 = vmatprep.subr.bf16.mxu0 0
        %512 = vmatpush1.bf16.msra.mxu0 %v435
        %513 = vmatprep.subr.bf16.mxu0 0
        %514 = vmatpush1.bf16.msra.mxu0 %v436
        %515 = vmatprep.subr.bf16.mxu0 0
        %516 = vmatpush1.bf16.msra.mxu0 %v437
        %517 = vmatprep.subr.bf16.mxu0 0
        %518 = vmatpush1.bf16.msra.mxu0 %v438
        %519 = vmatprep.subr.bf16.mxu0 0
        %520 = vmatpush1.bf16.msra.mxu0 %v439
        %521 = vmatprep.subr.bf16.mxu0 0
        %522 = vmatpush1.bf16.msra.mxu0 0
        %523 = vmatprep.subr.bf16.mxu0 0
        %524 = vmatpush1.bf16.msra.mxu0 0
        %525 = vmatprep.subr.bf16.mxu0 0
        %526 = vmatpush1.bf16.msra.mxu0 0
        %527 = vmatprep.subr.bf16.mxu0 0
        %528 = vmatpush1.bf16.msra.mxu0 0
        %529 = vmatprep.subr.bf16.mxu0 0
        %530 = vmatpush1.bf16.msra.mxu0 0
        %531 = vmatprep.subr.bf16.mxu0 0
        %532 = vmatpush1.bf16.msra.mxu0 0
        %533 = vmatprep.subr.bf16.mxu0 0
        %534 = vmatpush1.bf16.msra.mxu0 0
        %535 = vmatprep.subr.bf16.mxu0 0
        %536 = vmatpush1.bf16.msra.mxu0 0
        %537 = vmatprep.mubr.bf16.mxu0 0
        %538 = vmatmul.mubr.bf16.gmra.mrb[0].mxu0 %v316
        %v539 = vpop.f32.mrb[0].mxu0
        %v540 = vadd.f32 %v499, %v539
        %v541 = vpop.f32.mrb[0].mxu0
        %v542 = vpop.f32.mrb[0].mxu0
        %v543 = vadd.f32 %v502, %v542
        %v544 = vpop.f32.mrb[0].mxu0
        %545 = vdwg.mxu0
        %v546 = vlaneseq
        %v547 = vand.u32 %v546, 127
        %vm548 = vcmp.lt.s32.totalorder %v547, 9
        %v549 = vsel %vm548, 0.0, -1e+30
        %v550 = vld [vmem:[%s4] sm:$0x1]
        %v551 = vld [vmem:[%s4 + $0x1] sm:$0x1]
        %vm552 = vcmask 261120
        %v553 = vsel %vm552, %v540, 0.0
        %554 = vadd.xlane.f32.xlu0 %v553
        %v555 = vpop.xlane.xlu0 %554
        %v556 = vsel %vm552, %v543, 0.0
        %557 = vadd.xlane.f32.xlu0 %v556
        %v558 = vpop.xlane.xlu0 %557
        %v559 = vrcp.pop 32.0
        %v560 = vmul.f32 %v555, %v559
        %v561 = vmul.f32 %v558, %v559
        %v562 = vsub.f32 %v540, %v560
        %v563 = vsub.f32 %v543, %v561
        %v564 = vmul.f32 %v562, %v562
        %v565 = vmul.f32 %v563, %v563
        %v566 = vsel %vm552, %v564, 0.0
        %567 = vadd.xlane.f32.xlu0 %v566
        %v568 = vpop.xlane.xlu0 %567
        %v569 = vsel %vm552, %v565, 0.0
        %570 = vadd.xlane.f32.xlu0 %v569
        %v571 = vpop.xlane.xlu0 %570
        %v572 = vmul.f32 %v568, %v559
        %v573 = vmul.f32 %v571, %v559
        %v574 = vadd.f32 %v572, 1e-06
        %v575 = vadd.f32 %v573, 1e-06
        %v576 = vrsqrt.pop %v574
        %v577 = vrsqrt.pop %v575
        %v578 = vmul.f32 %v562, %v576
        %v579 = vmul.f32 %v563, %v577
        %v580 = vlaneseq
        %v581 = vshrl.u32 %v580, 7
        %v582 = vsub.s32 0, %v581
        %v583 = vrot.slane %v550, %v582
        %v584 = vmul.f32 %v578, %v583
        %v585 = vmul.f32 %v579, %v583
        %v586 = vlaneseq
        %v587 = vshrl.u32 %v586, 7
        %v588 = vsub.s32 0, %v587
        %v589 = vrot.slane %v551, %v588
        %v590 = vadd.f32 %v584, %v589
        %v591 = vadd.f32 %v585, %v589
        %v592 = vpack.c.bf16 %v591, %v590
        %v593 = vld [vmem:[%s3] sm:$0xf]
        %v594 = vld [vmem:[%s3 + $0x4] sm:$0xf]
        %v595 = vld [vmem:[%s3 + $0x8] sm:$0xf]
        %v596 = vld [vmem:[%s3 + $0xc] sm:$0xf]
        %v597 = vld [vmem:[%s4 + $0x2] sm:$0x1]
        %v598 = vlaneseq
        %v599 = vshrl.u32 %v598, 7
        %v600 = vsub.s32 0, %v599
        %v601 = vrot.slane %v597, %v600
        %v606 = vunpack.c.l.b16 %v593
        %v607 = vunpack.c.l.b16 %v594
        %v608 = vunpack.c.l.b16 %v595
        %v609 = vunpack.c.l.b16 %v596
        %v610 = vpack.c.b16 %v607, %v606
        %v611 = vpack.c.b16 %v609, %v608
        %v615 = vsel %vm552, %v592, 0
        %617 = vmatprep.subr.bf16.mxu0 0
        %618 = vmatpush1.bf16.msra.mxu0 %v610
        %619 = vmatprep.subr.bf16.mxu0 0
        %620 = vmatpush1.bf16.msra.mxu0 %v611
        %621 = vmatprep.subr.bf16.mxu0 0
        %622 = vmatpush1.bf16.msra.mxu0 0
        %623 = vmatprep.subr.bf16.mxu0 0
        %624 = vmatpush1.bf16.msra.mxu0 0
        %625 = vmatprep.subr.bf16.mxu0 0
        %626 = vmatpush1.bf16.msra.mxu0 0
        %627 = vmatprep.subr.bf16.mxu0 0
        %628 = vmatpush1.bf16.msra.mxu0 0
        %629 = vmatprep.subr.bf16.mxu0 0
        %630 = vmatpush1.bf16.msra.mxu0 0
        %631 = vmatprep.subr.bf16.mxu0 0
        %632 = vmatpush1.bf16.msra.mxu0 0
        %633 = vmatprep.subr.bf16.mxu0 0
        %634 = vmatpush1.bf16.msra.mxu0 0
        %635 = vmatprep.subr.bf16.mxu0 0
        %636 = vmatpush1.bf16.msra.mxu0 0
        %637 = vmatprep.subr.bf16.mxu0 0
        %638 = vmatpush1.bf16.msra.mxu0 0
        %639 = vmatprep.subr.bf16.mxu0 0
        %640 = vmatpush1.bf16.msra.mxu0 0
        %641 = vmatprep.subr.bf16.mxu0 0
        %642 = vmatpush1.bf16.msra.mxu0 0
        %643 = vmatprep.subr.bf16.mxu0 0
        %644 = vmatpush1.bf16.msra.mxu0 0
        %645 = vmatprep.subr.bf16.mxu0 0
        %646 = vmatpush1.bf16.msra.mxu0 0
        %647 = vmatprep.subr.bf16.mxu0 0
        %648 = vmatpush1.bf16.msra.mxu0 0
        %649 = vmatprep.mubr.bf16.mxu0 0
        %650 = vmatmul.mubr.bf16.gmra.mrb[0].mxu0 %v615
        %v651 = vpop.f32.mrb[0].mxu0
        %v652 = vadd.f32 %v601, %v651
        %v653 = vpop.f32.mrb[0].mxu0
        %v654 = vpop.f32.mrb[0].mxu0
        %v655 = vadd.f32 %v601, %v654
        %v656 = vpop.f32.mrb[0].mxu0
        %657 = vdwg.mxu0
        %v658 = vld [vmem:[%s2] sm:$0xf]
        %v659 = vld [vmem:[%s2 + $0x4] sm:$0xf]
        %v660 = vld [vmem:[%s2 + $0x8] sm:$0xf]
        %v661 = vld [vmem:[%s2 + $0xc] sm:$0xf]
        %v662 = vld [vmem:[%s4 + $0x8] sm:$0x1]
        %v663 = vlaneseq
        %v664 = vshrl.u32 %v663, 7
        %v665 = vsub.s32 0, %v664
        %v666 = vrot.slane %v662, %v665
        %v671 = vunpack.c.l.b16 %v658
        %v672 = vunpack.c.l.b16 %v659
        %v673 = vunpack.c.l.b16 %v660
        %v674 = vunpack.c.l.b16 %v661
        %v675 = vpack.c.b16 %v672, %v671
        %v676 = vpack.c.b16 %v674, %v673
        %679 = vmatprep.subr.bf16.mxu0 0
        %680 = vmatpush1.bf16.msra.mxu0 %v675
        %681 = vmatprep.subr.bf16.mxu0 0
        %682 = vmatpush1.bf16.msra.mxu0 %v676
        %683 = vmatprep.subr.bf16.mxu0 0
        %684 = vmatpush1.bf16.msra.mxu0 0
        %685 = vmatprep.subr.bf16.mxu0 0
        %686 = vmatpush1.bf16.msra.mxu0 0
        %687 = vmatprep.subr.bf16.mxu0 0
        %688 = vmatpush1.bf16.msra.mxu0 0
        %689 = vmatprep.subr.bf16.mxu0 0
        %690 = vmatpush1.bf16.msra.mxu0 0
        %691 = vmatprep.subr.bf16.mxu0 0
        %692 = vmatpush1.bf16.msra.mxu0 0
        %693 = vmatprep.subr.bf16.mxu0 0
        %694 = vmatpush1.bf16.msra.mxu0 0
        %695 = vmatprep.subr.bf16.mxu0 0
        %696 = vmatpush1.bf16.msra.mxu0 0
        %697 = vmatprep.subr.bf16.mxu0 0
        %698 = vmatpush1.bf16.msra.mxu0 0
        %699 = vmatprep.subr.bf16.mxu0 0
        %700 = vmatpush1.bf16.msra.mxu0 0
        %701 = vmatprep.subr.bf16.mxu0 0
        %702 = vmatpush1.bf16.msra.mxu0 0
        %703 = vmatprep.subr.bf16.mxu0 0
        %704 = vmatpush1.bf16.msra.mxu0 0
        %705 = vmatprep.subr.bf16.mxu0 0
        %706 = vmatpush1.bf16.msra.mxu0 0
        %707 = vmatprep.subr.bf16.mxu0 0
        %708 = vmatpush1.bf16.msra.mxu0 0
        %709 = vmatprep.subr.bf16.mxu0 0
        %710 = vmatpush1.bf16.msra.mxu0 0
        %711 = vmatprep.mubr.bf16.mxu0 0
        %712 = vmatmul.mubr.bf16.gmra.mrb[0].mxu0 %v615
        %v713 = vpop.f32.mrb[0].mxu0
        %v714 = vadd.f32 %v666, %v713
        %v715 = vpop.f32.mrb[0].mxu0
        %v716 = vpop.f32.mrb[0].mxu0
        %v717 = vadd.f32 %v666, %v716
        %v718 = vpop.f32.mrb[0].mxu0
        %719 = vdwg.mxu0
        %s720 = scalar_lea.vmem %s2, 64
        %v721 = vld [vmem:[%s720] sm:$0xf]
        %v722 = vld [vmem:[%s720 + $0x4] sm:$0xf]
        %v723 = vld [vmem:[%s720 + $0x8] sm:$0xf]
        %v724 = vld [vmem:[%s720 + $0xc] sm:$0xf]
        %v725 = vld [vmem:[%s4 + $0xc] sm:$0x1]
        %v726 = vlaneseq
        %v727 = vshrl.u32 %v726, 7
        %v728 = vsub.s32 0, %v727
        %v729 = vrot.slane %v725, %v728
        %v734 = vunpack.c.l.b16 %v721
        %v735 = vunpack.c.l.b16 %v722
        %v736 = vunpack.c.l.b16 %v723
        %v737 = vunpack.c.l.b16 %v724
        %v738 = vpack.c.b16 %v735, %v734
        %v739 = vpack.c.b16 %v737, %v736
        %742 = vmatprep.subr.bf16.mxu0 0
        %743 = vmatpush1.bf16.msra.mxu0 %v738
        %744 = vmatprep.subr.bf16.mxu0 0
        %745 = vmatpush1.bf16.msra.mxu0 %v739
        %746 = vmatprep.subr.bf16.mxu0 0
        %747 = vmatpush1.bf16.msra.mxu0 0
        %748 = vmatprep.subr.bf16.mxu0 0
        %749 = vmatpush1.bf16.msra.mxu0 0
        %750 = vmatprep.subr.bf16.mxu0 0
        %751 = vmatpush1.bf16.msra.mxu0 0
        %752 = vmatprep.subr.bf16.mxu0 0
        %753 = vmatpush1.bf16.msra.mxu0 0
        %754 = vmatprep.subr.bf16.mxu0 0
        %755 = vmatpush1.bf16.msra.mxu0 0
        %756 = vmatprep.subr.bf16.mxu0 0
        %757 = vmatpush1.bf16.msra.mxu0 0
        %758 = vmatprep.subr.bf16.mxu0 0
        %759 = vmatpush1.bf16.msra.mxu0 0
        %760 = vmatprep.subr.bf16.mxu0 0
        %761 = vmatpush1.bf16.msra.mxu0 0
        %762 = vmatprep.subr.bf16.mxu0 0
        %763 = vmatpush1.bf16.msra.mxu0 0
        %764 = vmatprep.subr.bf16.mxu0 0
        %765 = vmatpush1.bf16.msra.mxu0 0
        %766 = vmatprep.subr.bf16.mxu0 0
        %767 = vmatpush1.bf16.msra.mxu0 0
        %768 = vmatprep.subr.bf16.mxu0 0
        %769 = vmatpush1.bf16.msra.mxu0 0
        %770 = vmatprep.subr.bf16.mxu0 0
        %771 = vmatpush1.bf16.msra.mxu0 0
        %772 = vmatprep.subr.bf16.mxu0 0
        %773 = vmatpush1.bf16.msra.mxu0 0
        %774 = vmatprep.mubr.bf16.mxu0 0
        %775 = vmatmul.mubr.bf16.gmra.mrb[0].mxu0 %v615
        %v776 = vpop.f32.mrb[0].mxu0
        %v777 = vadd.f32 %v729, %v776
        %v778 = vpop.f32.mrb[0].mxu0
        %v779 = vpop.f32.mrb[0].mxu0
        %v780 = vadd.f32 %v729, %v779
        %v781 = vpop.f32.mrb[0].mxu0
        %782 = vdwg.mxu0
        %vm783 = vcmask 64512
        %v785 = vsel %vm783, %v714, 0
        %v788 = vsel %vm783, %v717, 0
        %v791 = vsel %vm783, %v652, 0
        %v794 = vsel %vm783, %v655, 0
        %796 = vmatprep.subr.mxu0 0.0
        %797 = vmatpush1.xpose.msra.mxu0 %v791
        %798 = vmatprep.subr.mxu0 0.0
        %799 = vmatpush1.xpose.msra.mxu0 %v794
        %800 = vmatprep.subr.mxu0 0.0
        %801 = vmatpush1.xpose.msra.mxu0 0.0
        %802 = vmatprep.subr.mxu0 0.0
        %803 = vmatpush1.xpose.msra.mxu0 0.0
        %804 = vmatprep.subr.mxu0 0.0
        %805 = vmatpush1.xpose.msra.mxu0 0.0
        %806 = vmatprep.subr.mxu0 0.0
        %807 = vmatpush1.xpose.msra.mxu0 0.0
        %808 = vmatprep.subr.mxu0 0.0
        %809 = vmatpush1.xpose.msra.mxu0 0.0
        %810 = vmatprep.subr.mxu0 0.0
        %811 = vmatpush1.xpose.msra.mxu0 0.0
        %812 = vmatprep.subr.mxu0 0.0
        %813 = vmatpush1.xpose.msra.mxu0 0.0
        %814 = vmatprep.subr.mxu0 0.0
        %815 = vmatpush1.xpose.msra.mxu0 0.0
        %816 = vmatprep.subr.mxu0 0.0
        %817 = vmatpush1.xpose.msra.mxu0 0.0
        %818 = vmatprep.subr.mxu0 0.0
        %819 = vmatpush1.xpose.msra.mxu0 0.0
        %820 = vmatprep.subr.mxu0 0.0
        %821 = vmatpush1.xpose.msra.mxu0 0.0
        %822 = vmatprep.subr.mxu0 0.0
        %823 = vmatpush1.xpose.msra.mxu0 0.0
        %824 = vmatprep.subr.mxu0 0.0
        %825 = vmatpush1.xpose.msra.mxu0 0.0
        %826 = vmatprep.subr.mxu0 0.0
        %827 = vmatpush1.xpose.msra.mxu0 0.0
        %828 = vmatprep.subr.mxu0 0.0
        %829 = vmatpush1.xpose.msra.mxu0 0.0
        %830 = vmatprep.subr.mxu0 0.0
        %831 = vmatpush1.xpose.msra.mxu0 0.0
        %832 = vmatprep.subr.mxu0 0.0
        %833 = vmatpush1.xpose.msra.mxu0 0.0
        %834 = vmatprep.subr.mxu0 0.0
        %835 = vmatpush1.xpose.msra.mxu0 0.0
        %836 = vmatprep.subr.mxu0 0.0
        %837 = vmatpush1.xpose.msra.mxu0 0.0
        %838 = vmatprep.subr.mxu0 0.0
        %839 = vmatpush1.xpose.msra.mxu0 0.0
        %840 = vmatprep.subr.mxu0 0.0
        %841 = vmatpush1.xpose.msra.mxu0 0.0
        %842 = vmatprep.subr.mxu0 0.0
        %843 = vmatpush1.xpose.msra.mxu0 0.0
        %844 = vmatprep.subr.mxu0 0.0
        %845 = vmatpush1.xpose.msra.mxu0 0.0
        %846 = vmatprep.subr.mxu0 0.0
        %847 = vmatpush1.xpose.msra.mxu0 0.0
        %848 = vmatprep.subr.mxu0 0.0
        %849 = vmatpush1.xpose.msra.mxu0 0.0
        %850 = vmatprep.subr.mxu0 0.0
        %851 = vmatpush1.xpose.msra.mxu0 0.0
        %852 = vmatprep.subr.mxu0 0.0
        %853 = vmatpush1.xpose.msra.mxu0 0.0
        %854 = vmatprep.subr.mxu0 0.0
        %855 = vmatpush1.xpose.msra.mxu0 0.0
        %856 = vmatprep.subr.mxu0 0.0
        %857 = vmatpush1.xpose.msra.mxu0 0.0
        %858 = vmatprep.subr.mxu0 0.0
        %859 = vmatpush1.xpose.msra.mxu0 0.0
        %860 = vmatprep.mubr.f32.mxu0 0.0
        %861 = vmatmul.mubr.f32.gmra.mrb[0].mxu0 %v785
        %v862 = vpop.f32.mrb[0].mxu0
        %v863 = vadd.f32 0.0, %v862
        %v864 = vpop.f32.mrb[0].mxu0
        %865 = vmatprep.mubr.f32.mxu0 0.0
        %866 = vmatmul.mubr.f32.gmra.mrb[0].mxu0 %v788
        %v867 = vpop.f32.mrb[0].mxu0
        %v868 = vadd.f32 0.0, %v867
        %v869 = vpop.f32.mrb[0].mxu0
        %870 = vdwg.mxu0
        %v871 = vmul.f32 %v863, 0.35355338
        %v872 = vmul.f32 %v868, 0.35355338
        %v873 = vadd.f32 %v871, %v549
        %v874 = vadd.f32 %v872, %v549
        %vm875 = vcmask 130048
        %v876 = vsel %vm875, %v873, -inf
        %877 = vmax.xlane.f32.xlu0 %v876
        %v878 = vpop.xlane.xlu0 %877
        %v879 = vsel %vm875, %v874, -inf
        %880 = vmax.xlane.f32.xlu0 %v879
        %v881 = vpop.xlane.xlu0 %880
        %v882 = vsub.f32 %v873, %v878
        %v883 = vsub.f32 %v874, %v881
        %v884 = vmul.f32 %v882, 1.442695
        %v885 = vpow.pop %v884
        %v886 = vmul.f32 %v883, 1.442695
        %v887 = vpow.pop %v886
        %v888 = vsel %vm875, %v885, 0.0
        %889 = vadd.xlane.f32.xlu0 %v888
        %v890 = vpop.xlane.xlu0 %889
        %v891 = vsel %vm875, %v887, 0.0
        %892 = vadd.xlane.f32.xlu0 %v891
        %v893 = vpop.xlane.xlu0 %892
        %v894 = vrcp.pop %v890
        %v895 = vrcp.pop %v893
        %v896 = vmul.f32 %v885, %v894
        %v897 = vmul.f32 %v887, %v895
        %v899 = vsel %vm875, %v896, 0
        %v902 = vsel %vm875, %v897, 0
        %904 = vmatprep.subr.mxu0 0.0
        %905 = vmatpush1.msra.mxu0 %v777
        %906 = vmatprep.subr.mxu0 0.0
        %907 = vmatpush1.msra.mxu0 %v780
        %908 = vmatprep.subr.mxu0 0.0
        %909 = vmatpush1.msra.mxu0 0.0
        %910 = vmatprep.subr.mxu0 0.0
        %911 = vmatpush1.msra.mxu0 0.0
        %912 = vmatprep.subr.mxu0 0.0
        %913 = vmatpush1.msra.mxu0 0.0
        %914 = vmatprep.subr.mxu0 0.0
        %915 = vmatpush1.msra.mxu0 0.0
        %916 = vmatprep.subr.mxu0 0.0
        %917 = vmatpush1.msra.mxu0 0.0
        %918 = vmatprep.subr.mxu0 0.0
        %919 = vmatpush1.msra.mxu0 0.0
        %920 = vmatprep.subr.mxu0 0.0
        %921 = vmatpush1.msra.mxu0 0.0
        %922 = vmatprep.subr.mxu0 0.0
        %923 = vmatpush1.msra.mxu0 0.0
        %924 = vmatprep.subr.mxu0 0.0
        %925 = vmatpush1.msra.mxu0 0.0
        %926 = vmatprep.subr.mxu0 0.0
        %927 = vmatpush1.msra.mxu0 0.0
        %928 = vmatprep.subr.mxu0 0.0
        %929 = vmatpush1.msra.mxu0 0.0
        %930 = vmatprep.subr.mxu0 0.0
        %931 = vmatpush1.msra.mxu0 0.0
        %932 = vmatprep.subr.mxu0 0.0
        %933 = vmatpush1.msra.mxu0 0.0
        %934 = vmatprep.subr.mxu0 0.0
        %935 = vmatpush1.msra.mxu0 0.0
        %936 = vmatprep.subr.mxu0 0.0
        %937 = vmatpush1.msra.mxu0 0.0
        %938 = vmatprep.subr.mxu0 0.0
        %939 = vmatpush1.msra.mxu0 0.0
        %940 = vmatprep.subr.mxu0 0.0
        %941 = vmatpush1.msra.mxu0 0.0
        %942 = vmatprep.subr.mxu0 0.0
        %943 = vmatpush1.msra.mxu0 0.0
        %944 = vmatprep.subr.mxu0 0.0
        %945 = vmatpush1.msra.mxu0 0.0
        %946 = vmatprep.subr.mxu0 0.0
        %947 = vmatpush1.msra.mxu0 0.0
        %948 = vmatprep.subr.mxu0 0.0
        %949 = vmatpush1.msra.mxu0 0.0
        %950 = vmatprep.subr.mxu0 0.0
        %951 = vmatpush1.msra.mxu0 0.0
        %952 = vmatprep.subr.mxu0 0.0
        %953 = vmatpush1.msra.mxu0 0.0
        %954 = vmatprep.subr.mxu0 0.0
        %955 = vmatpush1.msra.mxu0 0.0
        %956 = vmatprep.subr.mxu0 0.0
        %957 = vmatpush1.msra.mxu0 0.0
        %958 = vmatprep.subr.mxu0 0.0
        %959 = vmatpush1.msra.mxu0 0.0
        %960 = vmatprep.subr.mxu0 0.0
        %961 = vmatpush1.msra.mxu0 0.0
        %962 = vmatprep.subr.mxu0 0.0
        %963 = vmatpush1.msra.mxu0 0.0
        %964 = vmatprep.subr.mxu0 0.0
        %965 = vmatpush1.msra.mxu0 0.0
        %966 = vmatprep.subr.mxu0 0.0
        %967 = vmatpush1.msra.mxu0 0.0
        %968 = vmatprep.mubr.f32.mxu0 0.0
        %969 = vmatmul.mubr.f32.gmra.mrb[0].mxu0 %v899
        %v970 = vpop.f32.mrb[0].mxu0
        %v971 = vadd.f32 0.0, %v970
        %v972 = vpop.f32.mrb[0].mxu0
        %973 = vmatprep.mubr.f32.mxu0 0.0
        %974 = vmatmul.mubr.f32.gmra.mrb[0].mxu0 %v902
        %v975 = vpop.f32.mrb[0].mxu0
        %v976 = vadd.f32 0.0, %v975
        %v977 = vpop.f32.mrb[0].mxu0
        %978 = vdwg.mxu0
        %v979 = vpack.c.bf16 %v976, %v971
        %v980 = vld [vmem:[%s3 + $0x10] sm:$0xf]
        %s981 = scalar_lea.vmem %s2, 16
        %v982 = vld [vmem:[%s981] sm:$0xf]
        %v983 = vld [vmem:[%s981 + $0x4] sm:$0xf]
        %v984 = vld [vmem:[%s981 + $0x8] sm:$0xf]
        %v985 = vld [vmem:[%s981 + $0xc] sm:$0xf]
        %v986 = vld [vmem:[%s4 + $0x9] sm:$0x1]
        %v987 = vlaneseq
        %v988 = vshrl.u32 %v987, 7
        %v989 = vsub.s32 0, %v988
        %v990 = vrot.slane %v986, %v989
        %v995 = vunpack.c.l.b16 %v982
        %v996 = vunpack.c.l.b16 %v983
        %v997 = vunpack.c.l.b16 %v984
        %v998 = vunpack.c.l.b16 %v985
        %v999 = vpack.c.b16 %v996, %v995
        %v1000 = vpack.c.b16 %v998, %v997
        %1003 = vmatprep.subr.bf16.mxu0 0
        %1004 = vmatpush1.bf16.msra.mxu0 %v999
        %1005 = vmatprep.subr.bf16.mxu0 0
        %1006 = vmatpush1.bf16.msra.mxu0 %v1000
        %1007 = vmatprep.subr.bf16.mxu0 0
        %1008 = vmatpush1.bf16.msra.mxu0 0
        %1009 = vmatprep.subr.bf16.mxu0 0
        %1010 = vmatpush1.bf16.msra.mxu0 0
        %1011 = vmatprep.subr.bf16.mxu0 0
        %1012 = vmatpush1.bf16.msra.mxu0 0
        %1013 = vmatprep.subr.bf16.mxu0 0
        %1014 = vmatpush1.bf16.msra.mxu0 0
        %1015 = vmatprep.subr.bf16.mxu0 0
        %1016 = vmatpush1.bf16.msra.mxu0 0
        %1017 = vmatprep.subr.bf16.mxu0 0
        %1018 = vmatpush1.bf16.msra.mxu0 0
        %1019 = vmatprep.subr.bf16.mxu0 0
        %1020 = vmatpush1.bf16.msra.mxu0 0
        %1021 = vmatprep.subr.bf16.mxu0 0
        %1022 = vmatpush1.bf16.msra.mxu0 0
        %1023 = vmatprep.subr.bf16.mxu0 0
        %1024 = vmatpush1.bf16.msra.mxu0 0
        %1025 = vmatprep.subr.bf16.mxu0 0
        %1026 = vmatpush1.bf16.msra.mxu0 0
        %1027 = vmatprep.subr.bf16.mxu0 0
        %1028 = vmatpush1.bf16.msra.mxu0 0
        %1029 = vmatprep.subr.bf16.mxu0 0
        %1030 = vmatpush1.bf16.msra.mxu0 0
        %1031 = vmatprep.subr.bf16.mxu0 0
        %1032 = vmatpush1.bf16.msra.mxu0 0
        %1033 = vmatprep.subr.bf16.mxu0 0
        %1034 = vmatpush1.bf16.msra.mxu0 0
        %1035 = vmatprep.mubr.bf16.mxu0 0
        %1036 = vmatmul.mubr.bf16.gmra.mrb[0].mxu0 %v615
        %v1037 = vpop.f32.mrb[0].mxu0
        %v1038 = vadd.f32 %v990, %v1037
        %v1039 = vpop.f32.mrb[0].mxu0
        %v1040 = vpop.f32.mrb[0].mxu0
        %v1041 = vadd.f32 %v990, %v1040
        %v1042 = vpop.f32.mrb[0].mxu0
        %1043 = vdwg.mxu0
        %s1044 = scalar_lea.vmem %s2, 80
        %v1045 = vld [vmem:[%s1044] sm:$0xf]
        %v1046 = vld [vmem:[%s1044 + $0x4] sm:$0xf]
        %v1047 = vld [vmem:[%s1044 + $0x8] sm:$0xf]
        %v1048 = vld [vmem:[%s1044 + $0xc] sm:$0xf]
        %v1049 = vld [vmem:[%s4 + $0xd] sm:$0x1]
        %v1050 = vlaneseq
        %v1051 = vshrl.u32 %v1050, 7
        %v1052 = vsub.s32 0, %v1051
        %v1053 = vrot.slane %v1049, %v1052
        %v1058 = vunpack.c.l.b16 %v1045
        %v1059 = vunpack.c.l.b16 %v1046
        %v1060 = vunpack.c.l.b16 %v1047
        %v1061 = vunpack.c.l.b16 %v1048
        %v1062 = vpack.c.b16 %v1059, %v1058
        %v1063 = vpack.c.b16 %v1061, %v1060
        %1066 = vmatprep.subr.bf16.mxu0 0
        %1067 = vmatpush1.bf16.msra.mxu0 %v1062
        %1068 = vmatprep.subr.bf16.mxu0 0
        %1069 = vmatpush1.bf16.msra.mxu0 %v1063
        %1070 = vmatprep.subr.bf16.mxu0 0
        %1071 = vmatpush1.bf16.msra.mxu0 0
        %1072 = vmatprep.subr.bf16.mxu0 0
        %1073 = vmatpush1.bf16.msra.mxu0 0
        %1074 = vmatprep.subr.bf16.mxu0 0
        %1075 = vmatpush1.bf16.msra.mxu0 0
        %1076 = vmatprep.subr.bf16.mxu0 0
        %1077 = vmatpush1.bf16.msra.mxu0 0
        %1078 = vmatprep.subr.bf16.mxu0 0
        %1079 = vmatpush1.bf16.msra.mxu0 0
        %1080 = vmatprep.subr.bf16.mxu0 0
        %1081 = vmatpush1.bf16.msra.mxu0 0
        %1082 = vmatprep.subr.bf16.mxu0 0
        %1083 = vmatpush1.bf16.msra.mxu0 0
        %1084 = vmatprep.subr.bf16.mxu0 0
        %1085 = vmatpush1.bf16.msra.mxu0 0
        %1086 = vmatprep.subr.bf16.mxu0 0
        %1087 = vmatpush1.bf16.msra.mxu0 0
        %1088 = vmatprep.subr.bf16.mxu0 0
        %1089 = vmatpush1.bf16.msra.mxu0 0
        %1090 = vmatprep.subr.bf16.mxu0 0
        %1091 = vmatpush1.bf16.msra.mxu0 0
        %1092 = vmatprep.subr.bf16.mxu0 0
        %1093 = vmatpush1.bf16.msra.mxu0 0
        %1094 = vmatprep.subr.bf16.mxu0 0
        %1095 = vmatpush1.bf16.msra.mxu0 0
        %1096 = vmatprep.subr.bf16.mxu0 0
        %1097 = vmatpush1.bf16.msra.mxu0 0
        %1098 = vmatprep.mubr.bf16.mxu0 0
        %1099 = vmatmul.mubr.bf16.gmra.mrb[0].mxu0 %v615
        %v1100 = vpop.f32.mrb[0].mxu0
        %v1101 = vadd.f32 %v1053, %v1100
        %v1102 = vpop.f32.mrb[0].mxu0
        %v1103 = vpop.f32.mrb[0].mxu0
        %v1104 = vadd.f32 %v1053, %v1103
        %v1105 = vpop.f32.mrb[0].mxu0
        %1106 = vdwg.mxu0
        %1107 = vrot.lane.b32.xlu0 %v652, 120
        %v1108 = vpop.permute.xlu0 %1107
        %1109 = vrot.lane.b32.xlu0 %v655, 120
        %v1110 = vpop.permute.xlu0 %1109
        %v1112 = vsel %vm783, %v1038, 0
        %v1115 = vsel %vm783, %v1041, 0
        %v1117 = vsel %vm783, %v1108, 0
        %v1119 = vsel %vm783, %v1110, 0
        %1121 = vmatprep.subr.mxu0 0.0
        %1122 = vmatpush1.xpose.msra.mxu0 %v1117
        %1123 = vmatprep.subr.mxu0 0.0
        %1124 = vmatpush1.xpose.msra.mxu0 %v1119
        %1125 = vmatprep.subr.mxu0 0.0
        %1126 = vmatpush1.xpose.msra.mxu0 0.0
        %1127 = vmatprep.subr.mxu0 0.0
        %1128 = vmatpush1.xpose.msra.mxu0 0.0
        %1129 = vmatprep.subr.mxu0 0.0
        %1130 = vmatpush1.xpose.msra.mxu0 0.0
        %1131 = vmatprep.subr.mxu0 0.0
        %1132 = vmatpush1.xpose.msra.mxu0 0.0
        %1133 = vmatprep.subr.mxu0 0.0
        %1134 = vmatpush1.xpose.msra.mxu0 0.0
        %1135 = vmatprep.subr.mxu0 0.0
        %1136 = vmatpush1.xpose.msra.mxu0 0.0
        %1137 = vmatprep.subr.mxu0 0.0
        %1138 = vmatpush1.xpose.msra.mxu0 0.0
        %1139 = vmatprep.subr.mxu0 0.0
        %1140 = vmatpush1.xpose.msra.mxu0 0.0
        %1141 = vmatprep.subr.mxu0 0.0
        %1142 = vmatpush1.xpose.msra.mxu0 0.0
        %1143 = vmatprep.subr.mxu0 0.0
        %1144 = vmatpush1.xpose.msra.mxu0 0.0
        %1145 = vmatprep.subr.mxu0 0.0
        %1146 = vmatpush1.xpose.msra.mxu0 0.0
        %1147 = vmatprep.subr.mxu0 0.0
        %1148 = vmatpush1.xpose.msra.mxu0 0.0
        %1149 = vmatprep.subr.mxu0 0.0
        %1150 = vmatpush1.xpose.msra.mxu0 0.0
        %1151 = vmatprep.subr.mxu0 0.0
        %1152 = vmatpush1.xpose.msra.mxu0 0.0
        %1153 = vmatprep.subr.mxu0 0.0
        %1154 = vmatpush1.xpose.msra.mxu0 0.0
        %1155 = vmatprep.subr.mxu0 0.0
        %1156 = vmatpush1.xpose.msra.mxu0 0.0
        %1157 = vmatprep.subr.mxu0 0.0
        %1158 = vmatpush1.xpose.msra.mxu0 0.0
        %1159 = vmatprep.subr.mxu0 0.0
        %1160 = vmatpush1.xpose.msra.mxu0 0.0
        %1161 = vmatprep.subr.mxu0 0.0
        %1162 = vmatpush1.xpose.msra.mxu0 0.0
        %1163 = vmatprep.subr.mxu0 0.0
        %1164 = vmatpush1.xpose.msra.mxu0 0.0
        %1165 = vmatprep.subr.mxu0 0.0
        %1166 = vmatpush1.xpose.msra.mxu0 0.0
        %1167 = vmatprep.subr.mxu0 0.0
        %1168 = vmatpush1.xpose.msra.mxu0 0.0
        %1169 = vmatprep.subr.mxu0 0.0
        %1170 = vmatpush1.xpose.msra.mxu0 0.0
        %1171 = vmatprep.subr.mxu0 0.0
        %1172 = vmatpush1.xpose.msra.mxu0 0.0
        %1173 = vmatprep.subr.mxu0 0.0
        %1174 = vmatpush1.xpose.msra.mxu0 0.0
        %1175 = vmatprep.subr.mxu0 0.0
        %1176 = vmatpush1.xpose.msra.mxu0 0.0
        %1177 = vmatprep.subr.mxu0 0.0
        %1178 = vmatpush1.xpose.msra.mxu0 0.0
        %1179 = vmatprep.subr.mxu0 0.0
        %1180 = vmatpush1.xpose.msra.mxu0 0.0
        %1181 = vmatprep.subr.mxu0 0.0
        %1182 = vmatpush1.xpose.msra.mxu0 0.0
        %1183 = vmatprep.subr.mxu0 0.0
        %1184 = vmatpush1.xpose.msra.mxu0 0.0
        %1185 = vmatprep.mubr.f32.mxu0 0.0
        %1186 = vmatmul.mubr.f32.gmra.mrb[0].mxu0 %v1112
        %v1187 = vpop.f32.mrb[0].mxu0
        %v1188 = vadd.f32 0.0, %v1187
        %v1189 = vpop.f32.mrb[0].mxu0
        %1190 = vmatprep.mubr.f32.mxu0 0.0
        %1191 = vmatmul.mubr.f32.gmra.mrb[0].mxu0 %v1115
        %v1192 = vpop.f32.mrb[0].mxu0
        %v1193 = vadd.f32 0.0, %v1192
        %v1194 = vpop.f32.mrb[0].mxu0
        %1195 = vdwg.mxu0
        %v1196 = vmul.f32 %v1188, 0.35355338
        %v1197 = vmul.f32 %v1193, 0.35355338
        %v1198 = vadd.f32 %v1196, %v549
        %v1199 = vadd.f32 %v1197, %v549
        %v1200 = vsel %vm875, %v1198, -inf
        %1201 = vmax.xlane.f32.xlu0 %v1200
        %v1202 = vpop.xlane.xlu0 %1201
        %v1203 = vsel %vm875, %v1199, -inf
        %1204 = vmax.xlane.f32.xlu0 %v1203
        %v1205 = vpop.xlane.xlu0 %1204
        %v1206 = vsub.f32 %v1198, %v1202
        %v1207 = vsub.f32 %v1199, %v1205
        %v1208 = vmul.f32 %v1206, 1.442695
        %v1209 = vpow.pop %v1208
        %v1210 = vmul.f32 %v1207, 1.442695
        %v1211 = vpow.pop %v1210
        %v1212 = vsel %vm875, %v1209, 0.0
        %1213 = vadd.xlane.f32.xlu0 %v1212
        %v1214 = vpop.xlane.xlu0 %1213
        %v1215 = vsel %vm875, %v1211, 0.0
        %1216 = vadd.xlane.f32.xlu0 %v1215
        %v1217 = vpop.xlane.xlu0 %1216
        %v1218 = vrcp.pop %v1214
        %v1219 = vrcp.pop %v1217
        %v1220 = vmul.f32 %v1209, %v1218
        %v1221 = vmul.f32 %v1211, %v1219
        %v1223 = vsel %vm875, %v1220, 0
        %v1226 = vsel %vm875, %v1221, 0
        %1228 = vmatprep.subr.mxu0 0.0
        %1229 = vmatpush1.msra.mxu0 %v1101
        %1230 = vmatprep.subr.mxu0 0.0
        %1231 = vmatpush1.msra.mxu0 %v1104
        %1232 = vmatprep.subr.mxu0 0.0
        %1233 = vmatpush1.msra.mxu0 0.0
        %1234 = vmatprep.subr.mxu0 0.0
        %1235 = vmatpush1.msra.mxu0 0.0
        %1236 = vmatprep.subr.mxu0 0.0
        %1237 = vmatpush1.msra.mxu0 0.0
        %1238 = vmatprep.subr.mxu0 0.0
        %1239 = vmatpush1.msra.mxu0 0.0
        %1240 = vmatprep.subr.mxu0 0.0
        %1241 = vmatpush1.msra.mxu0 0.0
        %1242 = vmatprep.subr.mxu0 0.0
        %1243 = vmatpush1.msra.mxu0 0.0
        %1244 = vmatprep.subr.mxu0 0.0
        %1245 = vmatpush1.msra.mxu0 0.0
        %1246 = vmatprep.subr.mxu0 0.0
        %1247 = vmatpush1.msra.mxu0 0.0
        %1248 = vmatprep.subr.mxu0 0.0
        %1249 = vmatpush1.msra.mxu0 0.0
        %1250 = vmatprep.subr.mxu0 0.0
        %1251 = vmatpush1.msra.mxu0 0.0
        %1252 = vmatprep.subr.mxu0 0.0
        %1253 = vmatpush1.msra.mxu0 0.0
        %1254 = vmatprep.subr.mxu0 0.0
        %1255 = vmatpush1.msra.mxu0 0.0
        %1256 = vmatprep.subr.mxu0 0.0
        %1257 = vmatpush1.msra.mxu0 0.0
        %1258 = vmatprep.subr.mxu0 0.0
        %1259 = vmatpush1.msra.mxu0 0.0
        %1260 = vmatprep.subr.mxu0 0.0
        %1261 = vmatpush1.msra.mxu0 0.0
        %1262 = vmatprep.subr.mxu0 0.0
        %1263 = vmatpush1.msra.mxu0 0.0
        %1264 = vmatprep.subr.mxu0 0.0
        %1265 = vmatpush1.msra.mxu0 0.0
        %1266 = vmatprep.subr.mxu0 0.0
        %1267 = vmatpush1.msra.mxu0 0.0
        %1268 = vmatprep.subr.mxu0 0.0
        %1269 = vmatpush1.msra.mxu0 0.0
        %1270 = vmatprep.subr.mxu0 0.0
        %1271 = vmatpush1.msra.mxu0 0.0
        %1272 = vmatprep.subr.mxu0 0.0
        %1273 = vmatpush1.msra.mxu0 0.0
        %1274 = vmatprep.subr.mxu0 0.0
        %1275 = vmatpush1.msra.mxu0 0.0
        %1276 = vmatprep.subr.mxu0 0.0
        %1277 = vmatpush1.msra.mxu0 0.0
        %1278 = vmatprep.subr.mxu0 0.0
        %1279 = vmatpush1.msra.mxu0 0.0
        %1280 = vmatprep.subr.mxu0 0.0
        %1281 = vmatpush1.msra.mxu0 0.0
        %1282 = vmatprep.subr.mxu0 0.0
        %1283 = vmatpush1.msra.mxu0 0.0
        %1284 = vmatprep.subr.mxu0 0.0
        %1285 = vmatpush1.msra.mxu0 0.0
        %1286 = vmatprep.subr.mxu0 0.0
        %1287 = vmatpush1.msra.mxu0 0.0
        %1288 = vmatprep.subr.mxu0 0.0
        %1289 = vmatpush1.msra.mxu0 0.0
        %1290 = vmatprep.subr.mxu0 0.0
        %1291 = vmatpush1.msra.mxu0 0.0
        %1292 = vmatprep.mubr.f32.mxu0 0.0
        %1293 = vmatmul.mubr.f32.gmra.mrb[0].mxu0 %v1223
        %v1294 = vpop.f32.mrb[0].mxu0
        %v1295 = vadd.f32 0.0, %v1294
        %v1296 = vpop.f32.mrb[0].mxu0
        %1297 = vmatprep.mubr.f32.mxu0 0.0
        %1298 = vmatmul.mubr.f32.gmra.mrb[0].mxu0 %v1226
        %v1299 = vpop.f32.mrb[0].mxu0
        %v1300 = vadd.f32 0.0, %v1299
        %v1301 = vpop.f32.mrb[0].mxu0
        %1302 = vdwg.mxu0
        %v1303 = vpack.c.bf16 %v1300, %v1295
        %v1304 = vld [vmem:[%s3 + $0x14] sm:$0xf]
        %v1306 = vsel %vm783, %v1303, 0
        %vm1308 = vcmask 1043456
        %v1310 = vsel %vm1308, %v1304, 0
        %1312 = vmatprep.subr.bf16.mxu0 0
        %1313 = vmatpush1.bf16.msra.mxu0 %v1310
        %1314 = vmatprep.subr.bf16.mxu0 0
        %1315 = vmatpush1.bf16.msra.mxu0 0
        %1316 = vmatprep.subr.bf16.mxu0 0
        %1317 = vmatpush1.bf16.msra.mxu0 0
        %1318 = vmatprep.subr.bf16.mxu0 0
        %1319 = vmatpush1.bf16.msra.mxu0 0
        %1320 = vmatprep.subr.bf16.mxu0 0
        %1321 = vmatpush1.bf16.msra.mxu0 0
        %1322 = vmatprep.subr.bf16.mxu0 0
        %1323 = vmatpush1.bf16.msra.mxu0 0
        %1324 = vmatprep.subr.bf16.mxu0 0
        %1325 = vmatpush1.bf16.msra.mxu0 0
        %1326 = vmatprep.subr.bf16.mxu0 0
        %1327 = vmatpush1.bf16.msra.mxu0 0
        %1328 = vmatprep.subr.bf16.mxu0 0
        %1329 = vmatpush1.bf16.msra.mxu0 0
        %1330 = vmatprep.subr.bf16.mxu0 0
        %1331 = vmatpush1.bf16.msra.mxu0 0
        %1332 = vmatprep.subr.bf16.mxu0 0
        %1333 = vmatpush1.bf16.msra.mxu0 0
        %1334 = vmatprep.subr.bf16.mxu0 0
        %1335 = vmatpush1.bf16.msra.mxu0 0
        %1336 = vmatprep.subr.bf16.mxu0 0
        %1337 = vmatpush1.bf16.msra.mxu0 0
        %1338 = vmatprep.subr.bf16.mxu0 0
        %1339 = vmatpush1.bf16.msra.mxu0 0
        %1340 = vmatprep.subr.bf16.mxu0 0
        %1341 = vmatpush1.bf16.msra.mxu0 0
        %1342 = vmatprep.subr.bf16.mxu0 0
        %1343 = vmatpush1.bf16.msra.mxu0 0
        %1344 = vmatprep.mubr.bf16.mxu0 0
        %1345 = vmatmul.mubr.bf16.gmra.mrb[0].mxu0 %v1306
        %v1346 = vpop.f32.mrb[0].mxu0
        %v1347 = vadd.f32 0.0, %v1346
        %v1348 = vpop.f32.mrb[0].mxu0
        %v1349 = vpop.f32.mrb[0].mxu0
        %v1350 = vadd.f32 0.0, %v1349
        %v1351 = vpop.f32.mrb[0].mxu0
        %1352 = vdwg.mxu0
        %v1354 = vsel %vm783, %v979, 0
        %v1357 = vsel %vm1308, %v980, 0
        %1359 = vmatprep.subr.bf16.mxu0 0
        %1360 = vmatpush1.bf16.msra.mxu0 %v1357
        %1361 = vmatprep.subr.bf16.mxu0 0
        %1362 = vmatpush1.bf16.msra.mxu0 0
        %1363 = vmatprep.subr.bf16.mxu0 0
        %1364 = vmatpush1.bf16.msra.mxu0 0
        %1365 = vmatprep.subr.bf16.mxu0 0
        %1366 = vmatpush1.bf16.msra.mxu0 0
        %1367 = vmatprep.subr.bf16.mxu0 0
        %1368 = vmatpush1.bf16.msra.mxu0 0
        %1369 = vmatprep.subr.bf16.mxu0 0
        %1370 = vmatpush1.bf16.msra.mxu0 0
        %1371 = vmatprep.subr.bf16.mxu0 0
        %1372 = vmatpush1.bf16.msra.mxu0 0
        %1373 = vmatprep.subr.bf16.mxu0 0
        %1374 = vmatpush1.bf16.msra.mxu0 0
        %1375 = vmatprep.subr.bf16.mxu0 0
        %1376 = vmatpush1.bf16.msra.mxu0 0
        %1377 = vmatprep.subr.bf16.mxu0 0
        %1378 = vmatpush1.bf16.msra.mxu0 0
        %1379 = vmatprep.subr.bf16.mxu0 0
        %1380 = vmatpush1.bf16.msra.mxu0 0
        %1381 = vmatprep.subr.bf16.mxu0 0
        %1382 = vmatpush1.bf16.msra.mxu0 0
        %1383 = vmatprep.subr.bf16.mxu0 0
        %1384 = vmatpush1.bf16.msra.mxu0 0
        %1385 = vmatprep.subr.bf16.mxu0 0
        %1386 = vmatpush1.bf16.msra.mxu0 0
        %1387 = vmatprep.subr.bf16.mxu0 0
        %1388 = vmatpush1.bf16.msra.mxu0 0
        %1389 = vmatprep.subr.bf16.mxu0 0
        %1390 = vmatpush1.bf16.msra.mxu0 0
        %1391 = vmatprep.mubr.bf16.mxu0 0
        %1392 = vmatmul.mubr.bf16.gmra.mrb[0].mxu0 %v1354
        %v1393 = vpop.f32.mrb[0].mxu0
        %v1394 = vadd.f32 %v1347, %v1393
        %v1395 = vpop.f32.mrb[0].mxu0
        %v1396 = vpop.f32.mrb[0].mxu0
        %v1397 = vadd.f32 %v1350, %v1396
        %v1398 = vpop.f32.mrb[0].mxu0
        %1399 = vdwg.mxu0
        %s1400 = scalar_lea.vmem %s2, 32
        %v1401 = vld [vmem:[%s1400] sm:$0xf]
        %v1402 = vld [vmem:[%s1400 + $0x4] sm:$0xf]
        %v1403 = vld [vmem:[%s1400 + $0x8] sm:$0xf]
        %v1404 = vld [vmem:[%s1400 + $0xc] sm:$0xf]
        %v1405 = vld [vmem:[%s4 + $0xa] sm:$0x1]
        %v1406 = vlaneseq
        %v1407 = vshrl.u32 %v1406, 7
        %v1408 = vsub.s32 0, %v1407
        %v1409 = vrot.slane %v1405, %v1408
        %v1414 = vunpack.c.l.b16 %v1401
        %v1415 = vunpack.c.l.b16 %v1402
        %v1416 = vunpack.c.l.b16 %v1403
        %v1417 = vunpack.c.l.b16 %v1404
        %v1418 = vpack.c.b16 %v1415, %v1414
        %v1419 = vpack.c.b16 %v1417, %v1416
        %1422 = vmatprep.subr.bf16.mxu0 0
        %1423 = vmatpush1.bf16.msra.mxu0 %v1418
        %1424 = vmatprep.subr.bf16.mxu0 0
        %1425 = vmatpush1.bf16.msra.mxu0 %v1419
        %1426 = vmatprep.subr.bf16.mxu0 0
        %1427 = vmatpush1.bf16.msra.mxu0 0
        %1428 = vmatprep.subr.bf16.mxu0 0
        %1429 = vmatpush1.bf16.msra.mxu0 0
        %1430 = vmatprep.subr.bf16.mxu0 0
        %1431 = vmatpush1.bf16.msra.mxu0 0
        %1432 = vmatprep.subr.bf16.mxu0 0
        %1433 = vmatpush1.bf16.msra.mxu0 0
        %1434 = vmatprep.subr.bf16.mxu0 0
        %1435 = vmatpush1.bf16.msra.mxu0 0
        %1436 = vmatprep.subr.bf16.mxu0 0
        %1437 = vmatpush1.bf16.msra.mxu0 0
        %1438 = vmatprep.subr.bf16.mxu0 0
        %1439 = vmatpush1.bf16.msra.mxu0 0
        %1440 = vmatprep.subr.bf16.mxu0 0
        %1441 = vmatpush1.bf16.msra.mxu0 0
        %1442 = vmatprep.subr.bf16.mxu0 0
        %1443 = vmatpush1.bf16.msra.mxu0 0
        %1444 = vmatprep.subr.bf16.mxu0 0
        %1445 = vmatpush1.bf16.msra.mxu0 0
        %1446 = vmatprep.subr.bf16.mxu0 0
        %1447 = vmatpush1.bf16.msra.mxu0 0
        %1448 = vmatprep.subr.bf16.mxu0 0
        %1449 = vmatpush1.bf16.msra.mxu0 0
        %1450 = vmatprep.subr.bf16.mxu0 0
        %1451 = vmatpush1.bf16.msra.mxu0 0
        %1452 = vmatprep.subr.bf16.mxu0 0
        %1453 = vmatpush1.bf16.msra.mxu0 0
        %1454 = vmatprep.mubr.bf16.mxu0 0
        %1455 = vmatmul.mubr.bf16.gmra.mrb[0].mxu0 %v615
        %v1456 = vpop.f32.mrb[0].mxu0
        %v1457 = vadd.f32 %v1409, %v1456
        %v1458 = vpop.f32.mrb[0].mxu0
        %v1459 = vpop.f32.mrb[0].mxu0
        %v1460 = vadd.f32 %v1409, %v1459
        %v1461 = vpop.f32.mrb[0].mxu0
        %1462 = vdwg.mxu0
        %s1463 = scalar_lea.vmem %s2, 96
        %v1464 = vld [vmem:[%s1463] sm:$0xf]
        %v1465 = vld [vmem:[%s1463 + $0x4] sm:$0xf]
        %v1466 = vld [vmem:[%s1463 + $0x8] sm:$0xf]
        %v1467 = vld [vmem:[%s1463 + $0xc] sm:$0xf]
        %v1468 = vld [vmem:[%s4 + $0xe] sm:$0x1]
        %v1469 = vlaneseq
        %v1470 = vshrl.u32 %v1469, 7
        %v1471 = vsub.s32 0, %v1470
        %v1472 = vrot.slane %v1468, %v1471
        %v1477 = vunpack.c.l.b16 %v1464
        %v1478 = vunpack.c.l.b16 %v1465
        %v1479 = vunpack.c.l.b16 %v1466
        %v1480 = vunpack.c.l.b16 %v1467
        %v1481 = vpack.c.b16 %v1478, %v1477
        %v1482 = vpack.c.b16 %v1480, %v1479
        %1485 = vmatprep.subr.bf16.mxu0 0
        %1486 = vmatpush1.bf16.msra.mxu0 %v1481
        %1487 = vmatprep.subr.bf16.mxu0 0
        %1488 = vmatpush1.bf16.msra.mxu0 %v1482
        %1489 = vmatprep.subr.bf16.mxu0 0
        %1490 = vmatpush1.bf16.msra.mxu0 0
        %1491 = vmatprep.subr.bf16.mxu0 0
        %1492 = vmatpush1.bf16.msra.mxu0 0
        %1493 = vmatprep.subr.bf16.mxu0 0
        %1494 = vmatpush1.bf16.msra.mxu0 0
        %1495 = vmatprep.subr.bf16.mxu0 0
        %1496 = vmatpush1.bf16.msra.mxu0 0
        %1497 = vmatprep.subr.bf16.mxu0 0
        %1498 = vmatpush1.bf16.msra.mxu0 0
        %1499 = vmatprep.subr.bf16.mxu0 0
        %1500 = vmatpush1.bf16.msra.mxu0 0
        %1501 = vmatprep.subr.bf16.mxu0 0
        %1502 = vmatpush1.bf16.msra.mxu0 0
        %1503 = vmatprep.subr.bf16.mxu0 0
        %1504 = vmatpush1.bf16.msra.mxu0 0
        %1505 = vmatprep.subr.bf16.mxu0 0
        %1506 = vmatpush1.bf16.msra.mxu0 0
        %1507 = vmatprep.subr.bf16.mxu0 0
        %1508 = vmatpush1.bf16.msra.mxu0 0
        %1509 = vmatprep.subr.bf16.mxu0 0
        %1510 = vmatpush1.bf16.msra.mxu0 0
        %1511 = vmatprep.subr.bf16.mxu0 0
        %1512 = vmatpush1.bf16.msra.mxu0 0
        %1513 = vmatprep.subr.bf16.mxu0 0
        %1514 = vmatpush1.bf16.msra.mxu0 0
        %1515 = vmatprep.subr.bf16.mxu0 0
        %1516 = vmatpush1.bf16.msra.mxu0 0
        %1517 = vmatprep.mubr.bf16.mxu0 0
        %1518 = vmatmul.mubr.bf16.gmra.mrb[0].mxu0 %v615
        %v1519 = vpop.f32.mrb[0].mxu0
        %v1520 = vadd.f32 %v1472, %v1519
        %v1521 = vpop.f32.mrb[0].mxu0
        %v1522 = vpop.f32.mrb[0].mxu0
        %v1523 = vadd.f32 %v1472, %v1522
        %v1524 = vpop.f32.mrb[0].mxu0
        %1525 = vdwg.mxu0
        %1526 = vrot.lane.b32.xlu0 %v652, 112
        %v1527 = vpop.permute.xlu0 %1526
        %1528 = vrot.lane.b32.xlu0 %v655, 112
        %v1529 = vpop.permute.xlu0 %1528
        %v1531 = vsel %vm783, %v1457, 0
        %v1534 = vsel %vm783, %v1460, 0
        %v1536 = vsel %vm783, %v1527, 0
        %v1538 = vsel %vm783, %v1529, 0
        %1540 = vmatprep.subr.mxu0 0.0
        %1541 = vmatpush1.xpose.msra.mxu0 %v1536
        %1542 = vmatprep.subr.mxu0 0.0
        %1543 = vmatpush1.xpose.msra.mxu0 %v1538
        %1544 = vmatprep.subr.mxu0 0.0
        %1545 = vmatpush1.xpose.msra.mxu0 0.0
        %1546 = vmatprep.subr.mxu0 0.0
        %1547 = vmatpush1.xpose.msra.mxu0 0.0
        %1548 = vmatprep.subr.mxu0 0.0
        %1549 = vmatpush1.xpose.msra.mxu0 0.0
        %1550 = vmatprep.subr.mxu0 0.0
        %1551 = vmatpush1.xpose.msra.mxu0 0.0
        %1552 = vmatprep.subr.mxu0 0.0
        %1553 = vmatpush1.xpose.msra.mxu0 0.0
        %1554 = vmatprep.subr.mxu0 0.0
        %1555 = vmatpush1.xpose.msra.mxu0 0.0
        %1556 = vmatprep.subr.mxu0 0.0
        %1557 = vmatpush1.xpose.msra.mxu0 0.0
        %1558 = vmatprep.subr.mxu0 0.0
        %1559 = vmatpush1.xpose.msra.mxu0 0.0
        %1560 = vmatprep.subr.mxu0 0.0
        %1561 = vmatpush1.xpose.msra.mxu0 0.0
        %1562 = vmatprep.subr.mxu0 0.0
        %1563 = vmatpush1.xpose.msra.mxu0 0.0
        %1564 = vmatprep.subr.mxu0 0.0
        %1565 = vmatpush1.xpose.msra.mxu0 0.0
        %1566 = vmatprep.subr.mxu0 0.0
        %1567 = vmatpush1.xpose.msra.mxu0 0.0
        %1568 = vmatprep.subr.mxu0 0.0
        %1569 = vmatpush1.xpose.msra.mxu0 0.0
        %1570 = vmatprep.subr.mxu0 0.0
        %1571 = vmatpush1.xpose.msra.mxu0 0.0
        %1572 = vmatprep.subr.mxu0 0.0
        %1573 = vmatpush1.xpose.msra.mxu0 0.0
        %1574 = vmatprep.subr.mxu0 0.0
        %1575 = vmatpush1.xpose.msra.mxu0 0.0
        %1576 = vmatprep.subr.mxu0 0.0
        %1577 = vmatpush1.xpose.msra.mxu0 0.0
        %1578 = vmatprep.subr.mxu0 0.0
        %1579 = vmatpush1.xpose.msra.mxu0 0.0
        %1580 = vmatprep.subr.mxu0 0.0
        %1581 = vmatpush1.xpose.msra.mxu0 0.0
        %1582 = vmatprep.subr.mxu0 0.0
        %1583 = vmatpush1.xpose.msra.mxu0 0.0
        %1584 = vmatprep.subr.mxu0 0.0
        %1585 = vmatpush1.xpose.msra.mxu0 0.0
        %1586 = vmatprep.subr.mxu0 0.0
        %1587 = vmatpush1.xpose.msra.mxu0 0.0
        %1588 = vmatprep.subr.mxu0 0.0
        %1589 = vmatpush1.xpose.msra.mxu0 0.0
        %1590 = vmatprep.subr.mxu0 0.0
        %1591 = vmatpush1.xpose.msra.mxu0 0.0
        %1592 = vmatprep.subr.mxu0 0.0
        %1593 = vmatpush1.xpose.msra.mxu0 0.0
        %1594 = vmatprep.subr.mxu0 0.0
        %1595 = vmatpush1.xpose.msra.mxu0 0.0
        %1596 = vmatprep.subr.mxu0 0.0
        %1597 = vmatpush1.xpose.msra.mxu0 0.0
        %1598 = vmatprep.subr.mxu0 0.0
        %1599 = vmatpush1.xpose.msra.mxu0 0.0
        %1600 = vmatprep.subr.mxu0 0.0
        %1601 = vmatpush1.xpose.msra.mxu0 0.0
        %1602 = vmatprep.subr.mxu0 0.0
        %1603 = vmatpush1.xpose.msra.mxu0 0.0
        %1604 = vmatprep.mubr.f32.mxu0 0.0
        %1605 = vmatmul.mubr.f32.gmra.mrb[0].mxu0 %v1531
        %v1606 = vpop.f32.mrb[0].mxu0
        %v1607 = vadd.f32 0.0, %v1606
        %v1608 = vpop.f32.mrb[0].mxu0
        %1609 = vmatprep.mubr.f32.mxu0 0.0
        %1610 = vmatmul.mubr.f32.gmra.mrb[0].mxu0 %v1534
        %v1611 = vpop.f32.mrb[0].mxu0
        %v1612 = vadd.f32 0.0, %v1611
        %v1613 = vpop.f32.mrb[0].mxu0
        %1614 = vdwg.mxu0
        %v1615 = vmul.f32 %v1607, 0.35355338
        %v1616 = vmul.f32 %v1612, 0.35355338
        %v1617 = vadd.f32 %v1615, %v549
        %v1618 = vadd.f32 %v1616, %v549
        %v1619 = vsel %vm875, %v1617, -inf
        %1620 = vmax.xlane.f32.xlu0 %v1619
        %v1621 = vpop.xlane.xlu0 %1620
        %v1622 = vsel %vm875, %v1618, -inf
        %1623 = vmax.xlane.f32.xlu0 %v1622
        %v1624 = vpop.xlane.xlu0 %1623
        %v1625 = vsub.f32 %v1617, %v1621
        %v1626 = vsub.f32 %v1618, %v1624
        %v1627 = vmul.f32 %v1625, 1.442695
        %v1628 = vpow.pop %v1627
        %v1629 = vmul.f32 %v1626, 1.442695
        %v1630 = vpow.pop %v1629
        %v1631 = vsel %vm875, %v1628, 0.0
        %1632 = vadd.xlane.f32.xlu0 %v1631
        %v1633 = vpop.xlane.xlu0 %1632
        %v1634 = vsel %vm875, %v1630, 0.0
        %1635 = vadd.xlane.f32.xlu0 %v1634
        %v1636 = vpop.xlane.xlu0 %1635
        %v1637 = vrcp.pop %v1633
        %v1638 = vrcp.pop %v1636
        %v1639 = vmul.f32 %v1628, %v1637
        %v1640 = vmul.f32 %v1630, %v1638
        %v1642 = vsel %vm875, %v1639, 0
        %v1645 = vsel %vm875, %v1640, 0
        %1647 = vmatprep.subr.mxu0 0.0
        %1648 = vmatpush1.msra.mxu0 %v1520
        %1649 = vmatprep.subr.mxu0 0.0
        %1650 = vmatpush1.msra.mxu0 %v1523
        %1651 = vmatprep.subr.mxu0 0.0
        %1652 = vmatpush1.msra.mxu0 0.0
        %1653 = vmatprep.subr.mxu0 0.0
        %1654 = vmatpush1.msra.mxu0 0.0
        %1655 = vmatprep.subr.mxu0 0.0
        %1656 = vmatpush1.msra.mxu0 0.0
        %1657 = vmatprep.subr.mxu0 0.0
        %1658 = vmatpush1.msra.mxu0 0.0
        %1659 = vmatprep.subr.mxu0 0.0
        %1660 = vmatpush1.msra.mxu0 0.0
        %1661 = vmatprep.subr.mxu0 0.0
        %1662 = vmatpush1.msra.mxu0 0.0
        %1663 = vmatprep.subr.mxu0 0.0
        %1664 = vmatpush1.msra.mxu0 0.0
        %1665 = vmatprep.subr.mxu0 0.0
        %1666 = vmatpush1.msra.mxu0 0.0
        %1667 = vmatprep.subr.mxu0 0.0
        %1668 = vmatpush1.msra.mxu0 0.0
        %1669 = vmatprep.subr.mxu0 0.0
        %1670 = vmatpush1.msra.mxu0 0.0
        %1671 = vmatprep.subr.mxu0 0.0
        %1672 = vmatpush1.msra.mxu0 0.0
        %1673 = vmatprep.subr.mxu0 0.0
        %1674 = vmatpush1.msra.mxu0 0.0
        %1675 = vmatprep.subr.mxu0 0.0
        %1676 = vmatpush1.msra.mxu0 0.0
        %1677 = vmatprep.subr.mxu0 0.0
        %1678 = vmatpush1.msra.mxu0 0.0
        %1679 = vmatprep.subr.mxu0 0.0
        %1680 = vmatpush1.msra.mxu0 0.0
        %1681 = vmatprep.subr.mxu0 0.0
        %1682 = vmatpush1.msra.mxu0 0.0
        %1683 = vmatprep.subr.mxu0 0.0
        %1684 = vmatpush1.msra.mxu0 0.0
        %1685 = vmatprep.subr.mxu0 0.0
        %1686 = vmatpush1.msra.mxu0 0.0
        %1687 = vmatprep.subr.mxu0 0.0
        %1688 = vmatpush1.msra.mxu0 0.0
        %1689 = vmatprep.subr.mxu0 0.0
        %1690 = vmatpush1.msra.mxu0 0.0
        %1691 = vmatprep.subr.mxu0 0.0
        %1692 = vmatpush1.msra.mxu0 0.0
        %1693 = vmatprep.subr.mxu0 0.0
        %1694 = vmatpush1.msra.mxu0 0.0
        %1695 = vmatprep.subr.mxu0 0.0
        %1696 = vmatpush1.msra.mxu0 0.0
        %1697 = vmatprep.subr.mxu0 0.0
        %1698 = vmatpush1.msra.mxu0 0.0
        %1699 = vmatprep.subr.mxu0 0.0
        %1700 = vmatpush1.msra.mxu0 0.0
        %1701 = vmatprep.subr.mxu0 0.0
        %1702 = vmatpush1.msra.mxu0 0.0
        %1703 = vmatprep.subr.mxu0 0.0
        %1704 = vmatpush1.msra.mxu0 0.0
        %1705 = vmatprep.subr.mxu0 0.0
        %1706 = vmatpush1.msra.mxu0 0.0
        %1707 = vmatprep.subr.mxu0 0.0
        %1708 = vmatpush1.msra.mxu0 0.0
        %1709 = vmatprep.subr.mxu0 0.0
        %1710 = vmatpush1.msra.mxu0 0.0
        %1711 = vmatprep.mubr.f32.mxu0 0.0
        %1712 = vmatmul.mubr.f32.gmra.mrb[0].mxu0 %v1642
        %v1713 = vpop.f32.mrb[0].mxu0
        %v1714 = vadd.f32 0.0, %v1713
        %v1715 = vpop.f32.mrb[0].mxu0
        %1716 = vmatprep.mubr.f32.mxu0 0.0
        %1717 = vmatmul.mubr.f32.gmra.mrb[0].mxu0 %v1645
        %v1718 = vpop.f32.mrb[0].mxu0
        %v1719 = vadd.f32 0.0, %v1718
        %v1720 = vpop.f32.mrb[0].mxu0
        %1721 = vdwg.mxu0
        %v1722 = vpack.c.bf16 %v1719, %v1714
        %v1723 = vld [vmem:[%s3 + $0x18] sm:$0xf]
        %v1725 = vsel %vm783, %v1722, 0
        %v1728 = vsel %vm1308, %v1723, 0
        %1730 = vmatprep.subr.bf16.mxu0 0
        %1731 = vmatpush1.bf16.msra.mxu0 %v1728
        %1732 = vmatprep.subr.bf16.mxu0 0
        %1733 = vmatpush1.bf16.msra.mxu0 0
        %1734 = vmatprep.subr.bf16.mxu0 0
        %1735 = vmatpush1.bf16.msra.mxu0 0
        %1736 = vmatprep.subr.bf16.mxu0 0
        %1737 = vmatpush1.bf16.msra.mxu0 0
        %1738 = vmatprep.subr.bf16.mxu0 0
        %1739 = vmatpush1.bf16.msra.mxu0 0
        %1740 = vmatprep.subr.bf16.mxu0 0
        %1741 = vmatpush1.bf16.msra.mxu0 0
        %1742 = vmatprep.subr.bf16.mxu0 0
        %1743 = vmatpush1.bf16.msra.mxu0 0
        %1744 = vmatprep.subr.bf16.mxu0 0
        %1745 = vmatpush1.bf16.msra.mxu0 0
        %1746 = vmatprep.subr.bf16.mxu0 0
        %1747 = vmatpush1.bf16.msra.mxu0 0
        %1748 = vmatprep.subr.bf16.mxu0 0
        %1749 = vmatpush1.bf16.msra.mxu0 0
        %1750 = vmatprep.subr.bf16.mxu0 0
        %1751 = vmatpush1.bf16.msra.mxu0 0
        %1752 = vmatprep.subr.bf16.mxu0 0
        %1753 = vmatpush1.bf16.msra.mxu0 0
        %1754 = vmatprep.subr.bf16.mxu0 0
        %1755 = vmatpush1.bf16.msra.mxu0 0
        %1756 = vmatprep.subr.bf16.mxu0 0
        %1757 = vmatpush1.bf16.msra.mxu0 0
        %1758 = vmatprep.subr.bf16.mxu0 0
        %1759 = vmatpush1.bf16.msra.mxu0 0
        %1760 = vmatprep.subr.bf16.mxu0 0
        %1761 = vmatpush1.bf16.msra.mxu0 0
        %1762 = vmatprep.mubr.bf16.mxu0 0
        %1763 = vmatmul.mubr.bf16.gmra.mrb[0].mxu0 %v1725
        %v1764 = vpop.f32.mrb[0].mxu0
        %v1765 = vadd.f32 0.0, %v1764
        %v1766 = vpop.f32.mrb[0].mxu0
        %v1767 = vpop.f32.mrb[0].mxu0
        %v1768 = vadd.f32 0.0, %v1767
        %v1769 = vpop.f32.mrb[0].mxu0
        %1770 = vdwg.mxu0
        %v1771 = vadd.f32 %v1394, %v1765
        %v1772 = vadd.f32 %v1397, %v1768
        %s1773 = scalar_lea.vmem %s2, 48
        %v1774 = vld [vmem:[%s1773] sm:$0xf]
        %v1775 = vld [vmem:[%s1773 + $0x4] sm:$0xf]
        %v1776 = vld [vmem:[%s1773 + $0x8] sm:$0xf]
        %v1777 = vld [vmem:[%s1773 + $0xc] sm:$0xf]
        %v1778 = vld [vmem:[%s4 + $0xb] sm:$0x1]
        %v1779 = vlaneseq
        %v1780 = vshrl.u32 %v1779, 7
        %v1781 = vsub.s32 0, %v1780
        %v1782 = vrot.slane %v1778, %v1781
        %v1787 = vunpack.c.l.b16 %v1774
        %v1788 = vunpack.c.l.b16 %v1775
        %v1789 = vunpack.c.l.b16 %v1776
        %v1790 = vunpack.c.l.b16 %v1777
        %v1791 = vpack.c.b16 %v1788, %v1787
        %v1792 = vpack.c.b16 %v1790, %v1789
        %1795 = vmatprep.subr.bf16.mxu0 0
        %1796 = vmatpush1.bf16.msra.mxu0 %v1791
        %1797 = vmatprep.subr.bf16.mxu0 0
        %1798 = vmatpush1.bf16.msra.mxu0 %v1792
        %1799 = vmatprep.subr.bf16.mxu0 0
        %1800 = vmatpush1.bf16.msra.mxu0 0
        %1801 = vmatprep.subr.bf16.mxu0 0
        %1802 = vmatpush1.bf16.msra.mxu0 0
        %1803 = vmatprep.subr.bf16.mxu0 0
        %1804 = vmatpush1.bf16.msra.mxu0 0
        %1805 = vmatprep.subr.bf16.mxu0 0
        %1806 = vmatpush1.bf16.msra.mxu0 0
        %1807 = vmatprep.subr.bf16.mxu0 0
        %1808 = vmatpush1.bf16.msra.mxu0 0
        %1809 = vmatprep.subr.bf16.mxu0 0
        %1810 = vmatpush1.bf16.msra.mxu0 0
        %1811 = vmatprep.subr.bf16.mxu0 0
        %1812 = vmatpush1.bf16.msra.mxu0 0
        %1813 = vmatprep.subr.bf16.mxu0 0
        %1814 = vmatpush1.bf16.msra.mxu0 0
        %1815 = vmatprep.subr.bf16.mxu0 0
        %1816 = vmatpush1.bf16.msra.mxu0 0
        %1817 = vmatprep.subr.bf16.mxu0 0
        %1818 = vmatpush1.bf16.msra.mxu0 0
        %1819 = vmatprep.subr.bf16.mxu0 0
        %1820 = vmatpush1.bf16.msra.mxu0 0
        %1821 = vmatprep.subr.bf16.mxu0 0
        %1822 = vmatpush1.bf16.msra.mxu0 0
        %1823 = vmatprep.subr.bf16.mxu0 0
        %1824 = vmatpush1.bf16.msra.mxu0 0
        %1825 = vmatprep.subr.bf16.mxu0 0
        %1826 = vmatpush1.bf16.msra.mxu0 0
        %1827 = vmatprep.mubr.bf16.mxu0 0
        %1828 = vmatmul.mubr.bf16.gmra.mrb[0].mxu0 %v615
        %v1829 = vpop.f32.mrb[0].mxu0
        %v1830 = vadd.f32 %v1782, %v1829
        %v1831 = vpop.f32.mrb[0].mxu0
        %v1832 = vpop.f32.mrb[0].mxu0
        %v1833 = vadd.f32 %v1782, %v1832
        %v1834 = vpop.f32.mrb[0].mxu0
        %1835 = vdwg.mxu0
        %s1836 = scalar_lea.vmem %s2, 112
        %v1837 = vld [vmem:[%s1836] sm:$0xf]
        %v1838 = vld [vmem:[%s1836 + $0x4] sm:$0xf]
        %v1839 = vld [vmem:[%s1836 + $0x8] sm:$0xf]
        %v1840 = vld [vmem:[%s1836 + $0xc] sm:$0xf]
        %v1841 = vld [vmem:[%s4 + $0xf] sm:$0x1]
        %v1842 = vlaneseq
        %v1843 = vshrl.u32 %v1842, 7
        %v1844 = vsub.s32 0, %v1843
        %v1845 = vrot.slane %v1841, %v1844
        %v1850 = vunpack.c.l.b16 %v1837
        %v1851 = vunpack.c.l.b16 %v1838
        %v1852 = vunpack.c.l.b16 %v1839
        %v1853 = vunpack.c.l.b16 %v1840
        %v1854 = vpack.c.b16 %v1851, %v1850
        %v1855 = vpack.c.b16 %v1853, %v1852
        %1858 = vmatprep.subr.bf16.mxu0 0
        %1859 = vmatpush1.bf16.msra.mxu0 %v1854
        %1860 = vmatprep.subr.bf16.mxu0 0
        %1861 = vmatpush1.bf16.msra.mxu0 %v1855
        %1862 = vmatprep.subr.bf16.mxu0 0
        %1863 = vmatpush1.bf16.msra.mxu0 0
        %1864 = vmatprep.subr.bf16.mxu0 0
        %1865 = vmatpush1.bf16.msra.mxu0 0
        %1866 = vmatprep.subr.bf16.mxu0 0
        %1867 = vmatpush1.bf16.msra.mxu0 0
        %1868 = vmatprep.subr.bf16.mxu0 0
        %1869 = vmatpush1.bf16.msra.mxu0 0
        %1870 = vmatprep.subr.bf16.mxu0 0
        %1871 = vmatpush1.bf16.msra.mxu0 0
        %1872 = vmatprep.subr.bf16.mxu0 0
        %1873 = vmatpush1.bf16.msra.mxu0 0
        %1874 = vmatprep.subr.bf16.mxu0 0
        %1875 = vmatpush1.bf16.msra.mxu0 0
        %1876 = vmatprep.subr.bf16.mxu0 0
        %1877 = vmatpush1.bf16.msra.mxu0 0
        %1878 = vmatprep.subr.bf16.mxu0 0
        %1879 = vmatpush1.bf16.msra.mxu0 0
        %1880 = vmatprep.subr.bf16.mxu0 0
        %1881 = vmatpush1.bf16.msra.mxu0 0
        %1882 = vmatprep.subr.bf16.mxu0 0
        %1883 = vmatpush1.bf16.msra.mxu0 0
        %1884 = vmatprep.subr.bf16.mxu0 0
        %1885 = vmatpush1.bf16.msra.mxu0 0
        %1886 = vmatprep.subr.bf16.mxu0 0
        %1887 = vmatpush1.bf16.msra.mxu0 0
        %1888 = vmatprep.subr.bf16.mxu0 0
        %1889 = vmatpush1.bf16.msra.mxu0 0
        %1890 = vmatprep.mubr.bf16.mxu0 0
        %1891 = vmatmul.mubr.bf16.gmra.mrb[0].mxu0 %v615
        %v1892 = vpop.f32.mrb[0].mxu0
        %v1893 = vadd.f32 %v1845, %v1892
        %v1894 = vpop.f32.mrb[0].mxu0
        %v1895 = vpop.f32.mrb[0].mxu0
        %v1896 = vadd.f32 %v1845, %v1895
        %v1897 = vpop.f32.mrb[0].mxu0
        %1898 = vdwg.mxu0
        %1899 = vrot.lane.b32.xlu0 %v652, 104
        %v1900 = vpop.permute.xlu0 %1899
        %1901 = vrot.lane.b32.xlu0 %v655, 104
        %v1902 = vpop.permute.xlu0 %1901
        %v1904 = vsel %vm783, %v1830, 0
        %v1907 = vsel %vm783, %v1833, 0
        %v1909 = vsel %vm783, %v1900, 0
        %v1911 = vsel %vm783, %v1902, 0
        %1913 = vmatprep.subr.mxu0 0.0
        %1914 = vmatpush1.xpose.msra.mxu0 %v1909
        %1915 = vmatprep.subr.mxu0 0.0
        %1916 = vmatpush1.xpose.msra.mxu0 %v1911
        %1917 = vmatprep.subr.mxu0 0.0
        %1918 = vmatpush1.xpose.msra.mxu0 0.0
        %1919 = vmatprep.subr.mxu0 0.0
        %1920 = vmatpush1.xpose.msra.mxu0 0.0
        %1921 = vmatprep.subr.mxu0 0.0
        %1922 = vmatpush1.xpose.msra.mxu0 0.0
        %1923 = vmatprep.subr.mxu0 0.0
        %1924 = vmatpush1.xpose.msra.mxu0 0.0
        %1925 = vmatprep.subr.mxu0 0.0
        %1926 = vmatpush1.xpose.msra.mxu0 0.0
        %1927 = vmatprep.subr.mxu0 0.0
        %1928 = vmatpush1.xpose.msra.mxu0 0.0
        %1929 = vmatprep.subr.mxu0 0.0
        %1930 = vmatpush1.xpose.msra.mxu0 0.0
        %1931 = vmatprep.subr.mxu0 0.0
        %1932 = vmatpush1.xpose.msra.mxu0 0.0
        %1933 = vmatprep.subr.mxu0 0.0
        %1934 = vmatpush1.xpose.msra.mxu0 0.0
        %1935 = vmatprep.subr.mxu0 0.0
        %1936 = vmatpush1.xpose.msra.mxu0 0.0
        %1937 = vmatprep.subr.mxu0 0.0
        %1938 = vmatpush1.xpose.msra.mxu0 0.0
        %1939 = vmatprep.subr.mxu0 0.0
        %1940 = vmatpush1.xpose.msra.mxu0 0.0
        %1941 = vmatprep.subr.mxu0 0.0
        %1942 = vmatpush1.xpose.msra.mxu0 0.0
        %1943 = vmatprep.subr.mxu0 0.0
        %1944 = vmatpush1.xpose.msra.mxu0 0.0
        %1945 = vmatprep.subr.mxu0 0.0
        %1946 = vmatpush1.xpose.msra.mxu0 0.0
        %1947 = vmatprep.subr.mxu0 0.0
        %1948 = vmatpush1.xpose.msra.mxu0 0.0
        %1949 = vmatprep.subr.mxu0 0.0
        %1950 = vmatpush1.xpose.msra.mxu0 0.0
        %1951 = vmatprep.subr.mxu0 0.0
        %1952 = vmatpush1.xpose.msra.mxu0 0.0
        %1953 = vmatprep.subr.mxu0 0.0
        %1954 = vmatpush1.xpose.msra.mxu0 0.0
        %1955 = vmatprep.subr.mxu0 0.0
        %1956 = vmatpush1.xpose.msra.mxu0 0.0
        %1957 = vmatprep.subr.mxu0 0.0
        %1958 = vmatpush1.xpose.msra.mxu0 0.0
        %1959 = vmatprep.subr.mxu0 0.0
        %1960 = vmatpush1.xpose.msra.mxu0 0.0
        %1961 = vmatprep.subr.mxu0 0.0
        %1962 = vmatpush1.xpose.msra.mxu0 0.0
        %1963 = vmatprep.subr.mxu0 0.0
        %1964 = vmatpush1.xpose.msra.mxu0 0.0
        %1965 = vmatprep.subr.mxu0 0.0
        %1966 = vmatpush1.xpose.msra.mxu0 0.0
        %1967 = vmatprep.subr.mxu0 0.0
        %1968 = vmatpush1.xpose.msra.mxu0 0.0
        %1969 = vmatprep.subr.mxu0 0.0
        %1970 = vmatpush1.xpose.msra.mxu0 0.0
        %1971 = vmatprep.subr.mxu0 0.0
        %1972 = vmatpush1.xpose.msra.mxu0 0.0
        %1973 = vmatprep.subr.mxu0 0.0
        %1974 = vmatpush1.xpose.msra.mxu0 0.0
        %1975 = vmatprep.subr.mxu0 0.0
        %1976 = vmatpush1.xpose.msra.mxu0 0.0
        %1977 = vmatprep.mubr.f32.mxu0 0.0
        %1978 = vmatmul.mubr.f32.gmra.mrb[0].mxu0 %v1904
        %v1979 = vpop.f32.mrb[0].mxu0
        %v1980 = vadd.f32 0.0, %v1979
        %v1981 = vpop.f32.mrb[0].mxu0
        %1982 = vmatprep.mubr.f32.mxu0 0.0
        %1983 = vmatmul.mubr.f32.gmra.mrb[0].mxu0 %v1907
        %v1984 = vpop.f32.mrb[0].mxu0
        %v1985 = vadd.f32 0.0, %v1984
        %v1986 = vpop.f32.mrb[0].mxu0
        %1987 = vdwg.mxu0
        %v1988 = vmul.f32 %v1980, 0.35355338
        %v1989 = vmul.f32 %v1985, 0.35355338
        %v1990 = vadd.f32 %v1988, %v549
        %v1991 = vadd.f32 %v1989, %v549
        %v1992 = vsel %vm875, %v1990, -inf
        %1993 = vmax.xlane.f32.xlu0 %v1992
        %v1994 = vpop.xlane.xlu0 %1993
        %v1995 = vsel %vm875, %v1991, -inf
        %1996 = vmax.xlane.f32.xlu0 %v1995
        %v1997 = vpop.xlane.xlu0 %1996
        %v1998 = vsub.f32 %v1990, %v1994
        %v1999 = vsub.f32 %v1991, %v1997
        %v2000 = vmul.f32 %v1998, 1.442695
        %v2001 = vpow.pop %v2000
        %v2002 = vmul.f32 %v1999, 1.442695
        %v2003 = vpow.pop %v2002
        %v2004 = vsel %vm875, %v2001, 0.0
        %2005 = vadd.xlane.f32.xlu0 %v2004
        %v2006 = vpop.xlane.xlu0 %2005
        %v2007 = vsel %vm875, %v2003, 0.0
        %2008 = vadd.xlane.f32.xlu0 %v2007
        %v2009 = vpop.xlane.xlu0 %2008
        %v2010 = vrcp.pop %v2006
        %v2011 = vrcp.pop %v2009
        %v2012 = vmul.f32 %v2001, %v2010
        %v2013 = vmul.f32 %v2003, %v2011
        %v2015 = vsel %vm875, %v2012, 0
        %v2018 = vsel %vm875, %v2013, 0
        %2020 = vmatprep.subr.mxu0 0.0
        %2021 = vmatpush1.msra.mxu0 %v1893
        %2022 = vmatprep.subr.mxu0 0.0
        %2023 = vmatpush1.msra.mxu0 %v1896
        %2024 = vmatprep.subr.mxu0 0.0
        %2025 = vmatpush1.msra.mxu0 0.0
        %2026 = vmatprep.subr.mxu0 0.0
        %2027 = vmatpush1.msra.mxu0 0.0
        %2028 = vmatprep.subr.mxu0 0.0
        %2029 = vmatpush1.msra.mxu0 0.0
        %2030 = vmatprep.subr.mxu0 0.0
        %2031 = vmatpush1.msra.mxu0 0.0
        %2032 = vmatprep.subr.mxu0 0.0
        %2033 = vmatpush1.msra.mxu0 0.0
        %2034 = vmatprep.subr.mxu0 0.0
        %2035 = vmatpush1.msra.mxu0 0.0
        %2036 = vmatprep.subr.mxu0 0.0
        %2037 = vmatpush1.msra.mxu0 0.0
        %2038 = vmatprep.subr.mxu0 0.0
        %2039 = vmatpush1.msra.mxu0 0.0
        %2040 = vmatprep.subr.mxu0 0.0
        %2041 = vmatpush1.msra.mxu0 0.0
        %2042 = vmatprep.subr.mxu0 0.0
        %2043 = vmatpush1.msra.mxu0 0.0
        %2044 = vmatprep.subr.mxu0 0.0
        %2045 = vmatpush1.msra.mxu0 0.0
        %2046 = vmatprep.subr.mxu0 0.0
        %2047 = vmatpush1.msra.mxu0 0.0
        %2048 = vmatprep.subr.mxu0 0.0
        %2049 = vmatpush1.msra.mxu0 0.0
        %2050 = vmatprep.subr.mxu0 0.0
        %2051 = vmatpush1.msra.mxu0 0.0
        %2052 = vmatprep.subr.mxu0 0.0
        %2053 = vmatpush1.msra.mxu0 0.0
        %2054 = vmatprep.subr.mxu0 0.0
        %2055 = vmatpush1.msra.mxu0 0.0
        %2056 = vmatprep.subr.mxu0 0.0
        %2057 = vmatpush1.msra.mxu0 0.0
        %2058 = vmatprep.subr.mxu0 0.0
        %2059 = vmatpush1.msra.mxu0 0.0
        %2060 = vmatprep.subr.mxu0 0.0
        %2061 = vmatpush1.msra.mxu0 0.0
        %2062 = vmatprep.subr.mxu0 0.0
        %2063 = vmatpush1.msra.mxu0 0.0
        %2064 = vmatprep.subr.mxu0 0.0
        %2065 = vmatpush1.msra.mxu0 0.0
        %2066 = vmatprep.subr.mxu0 0.0
        %2067 = vmatpush1.msra.mxu0 0.0
        %2068 = vmatprep.subr.mxu0 0.0
        %2069 = vmatpush1.msra.mxu0 0.0
        %2070 = vmatprep.subr.mxu0 0.0
        %2071 = vmatpush1.msra.mxu0 0.0
        %2072 = vmatprep.subr.mxu0 0.0
        %2073 = vmatpush1.msra.mxu0 0.0
        %2074 = vmatprep.subr.mxu0 0.0
        %2075 = vmatpush1.msra.mxu0 0.0
        %2076 = vmatprep.subr.mxu0 0.0
        %2077 = vmatpush1.msra.mxu0 0.0
        %2078 = vmatprep.subr.mxu0 0.0
        %2079 = vmatpush1.msra.mxu0 0.0
        %2080 = vmatprep.subr.mxu0 0.0
        %2081 = vmatpush1.msra.mxu0 0.0
        %2082 = vmatprep.subr.mxu0 0.0
        %2083 = vmatpush1.msra.mxu0 0.0
        %2084 = vmatprep.mubr.f32.mxu0 0.0
        %2085 = vmatmul.mubr.f32.gmra.mrb[0].mxu0 %v2015
        %v2086 = vpop.f32.mrb[0].mxu0
        %v2087 = vadd.f32 0.0, %v2086
        %v2088 = vpop.f32.mrb[0].mxu0
        %2089 = vmatprep.mubr.f32.mxu0 0.0
        %2090 = vmatmul.mubr.f32.gmra.mrb[0].mxu0 %v2018
        %v2091 = vpop.f32.mrb[0].mxu0
        %v2092 = vadd.f32 0.0, %v2091
        %v2093 = vpop.f32.mrb[0].mxu0
        %2094 = vdwg.mxu0
        %v2095 = vpack.c.bf16 %v2092, %v2087
        %v2096 = vld [vmem:[%s3 + $0x1c] sm:$0xf]
        %v2098 = vsel %vm783, %v2095, 0
        %v2101 = vsel %vm1308, %v2096, 0
        %2103 = vmatprep.subr.bf16.mxu0 0
        %2104 = vmatpush1.bf16.msra.mxu0 %v2101
        %2105 = vmatprep.subr.bf16.mxu0 0
        %2106 = vmatpush1.bf16.msra.mxu0 0
        %2107 = vmatprep.subr.bf16.mxu0 0
        %2108 = vmatpush1.bf16.msra.mxu0 0
        %2109 = vmatprep.subr.bf16.mxu0 0
        %2110 = vmatpush1.bf16.msra.mxu0 0
        %2111 = vmatprep.subr.bf16.mxu0 0
        %2112 = vmatpush1.bf16.msra.mxu0 0
        %2113 = vmatprep.subr.bf16.mxu0 0
        %2114 = vmatpush1.bf16.msra.mxu0 0
        %2115 = vmatprep.subr.bf16.mxu0 0
        %2116 = vmatpush1.bf16.msra.mxu0 0
        %2117 = vmatprep.subr.bf16.mxu0 0
        %2118 = vmatpush1.bf16.msra.mxu0 0
        %2119 = vmatprep.subr.bf16.mxu0 0
        %2120 = vmatpush1.bf16.msra.mxu0 0
        %2121 = vmatprep.subr.bf16.mxu0 0
        %2122 = vmatpush1.bf16.msra.mxu0 0
        %2123 = vmatprep.subr.bf16.mxu0 0
        %2124 = vmatpush1.bf16.msra.mxu0 0
        %2125 = vmatprep.subr.bf16.mxu0 0
        %2126 = vmatpush1.bf16.msra.mxu0 0
        %2127 = vmatprep.subr.bf16.mxu0 0
        %2128 = vmatpush1.bf16.msra.mxu0 0
        %2129 = vmatprep.subr.bf16.mxu0 0
        %2130 = vmatpush1.bf16.msra.mxu0 0
        %2131 = vmatprep.subr.bf16.mxu0 0
        %2132 = vmatpush1.bf16.msra.mxu0 0
        %2133 = vmatprep.subr.bf16.mxu0 0
        %2134 = vmatpush1.bf16.msra.mxu0 0
        %2135 = vmatprep.mubr.bf16.mxu0 0
        %2136 = vmatmul.mubr.bf16.gmra.mrb[0].mxu0 %v2098
        %v2137 = vpop.f32.mrb[0].mxu0
        %v2138 = vadd.f32 0.0, %v2137
        %v2139 = vpop.f32.mrb[0].mxu0
        %v2140 = vpop.f32.mrb[0].mxu0
        %v2141 = vadd.f32 0.0, %v2140
        %v2142 = vpop.f32.mrb[0].mxu0
        %2143 = vdwg.mxu0
        %v2144 = vadd.f32 %v1771, %v2138
        %v2145 = vadd.f32 %v1772, %v2141
        %v2146 = vadd.f32 %v540, %v2144
        %v2147 = vadd.f32 %v543, %v2145
        %v2148 = vld [vmem:[%s4 + $0x3] sm:$0x1]
        %v2149 = vlaneseq
        %v2150 = vshrl.u32 %v2149, 7
        %v2151 = vsub.s32 0, %v2150
        %v2152 = vrot.slane %v2148, %v2151
        %v2153 = vadd.f32 %v2146, %v2152
        %v2154 = vadd.f32 %v2147, %v2152
        %v2155 = vld [vmem:[%s4 + $0x4] sm:$0x1]
        %v2156 = vld [vmem:[%s4 + $0x5] sm:$0x1]
        %v2157 = vsel %vm552, %v2153, 0.0
        %2158 = vadd.xlane.f32.xlu0 %v2157
        %v2159 = vpop.xlane.xlu0 %2158
        %v2160 = vsel %vm552, %v2154, 0.0
        %2161 = vadd.xlane.f32.xlu0 %v2160
        %v2162 = vpop.xlane.xlu0 %2161
        %v2163 = vmul.f32 %v2159, %v559
        %v2164 = vmul.f32 %v2162, %v559
        %v2165 = vsub.f32 %v2153, %v2163
        %v2166 = vsub.f32 %v2154, %v2164
        %v2167 = vmul.f32 %v2165, %v2165
        %v2168 = vmul.f32 %v2166, %v2166
        %v2169 = vsel %vm552, %v2167, 0.0
        %2170 = vadd.xlane.f32.xlu0 %v2169
        %v2171 = vpop.xlane.xlu0 %2170
        %v2172 = vsel %vm552, %v2168, 0.0
        %2173 = vadd.xlane.f32.xlu0 %v2172
        %v2174 = vpop.xlane.xlu0 %2173
        %v2175 = vmul.f32 %v2171, %v559
        %v2176 = vmul.f32 %v2174, %v559
        %v2177 = vadd.f32 %v2175, 1e-06
        %v2178 = vadd.f32 %v2176, 1e-06
        %v2179 = vrsqrt.pop %v2177
        %v2180 = vrsqrt.pop %v2178
        %v2181 = vmul.f32 %v2165, %v2179
        %v2182 = vmul.f32 %v2166, %v2180
        %v2183 = vlaneseq
        %v2184 = vshrl.u32 %v2183, 7
        %v2185 = vsub.s32 0, %v2184
        %v2186 = vrot.slane %v2155, %v2185
        %v2187 = vmul.f32 %v2181, %v2186
        %v2188 = vmul.f32 %v2182, %v2186
        %v2189 = vlaneseq
        %v2190 = vshrl.u32 %v2189, 7
        %v2191 = vsub.s32 0, %v2190
        %v2192 = vrot.slane %v2156, %v2191
        %v2193 = vadd.f32 %v2187, %v2192
        %v2194 = vadd.f32 %v2188, %v2192
        %v2195 = vpack.c.bf16 %v2194, %v2193
        %v2196 = vld [vmem:[%s3 + $0x20] sm:$0xf]
        %v2197 = vld [vmem:[%s3 + $0x24] sm:$0xf]
        %v2198 = vld [vmem:[%s3 + $0x28] sm:$0xf]
        %v2199 = vld [vmem:[%s3 + $0x2c] sm:$0xf]
        %v2200 = vld [vmem:[%s4 + $0x6] sm:$0x1]
        %v2201 = vlaneseq
        %v2202 = vshrl.u32 %v2201, 7
        %v2203 = vsub.s32 0, %v2202
        %v2204 = vrot.slane %v2200, %v2203
        %v2209 = vunpack.c.l.b16 %v2196
        %v2210 = vunpack.c.l.b16 %v2197
        %v2211 = vunpack.c.l.b16 %v2198
        %v2212 = vunpack.c.l.b16 %v2199
        %v2213 = vpack.c.b16 %v2210, %v2209
        %v2214 = vpack.c.b16 %v2212, %v2211
        %v2218 = vsel %vm552, %v2195, 0
        %2220 = vmatprep.subr.bf16.mxu0 0
        %2221 = vmatpush1.bf16.msra.mxu0 %v2213
        %2222 = vmatprep.subr.bf16.mxu0 0
        %2223 = vmatpush1.bf16.msra.mxu0 %v2214
        %2224 = vmatprep.subr.bf16.mxu0 0
        %2225 = vmatpush1.bf16.msra.mxu0 0
        %2226 = vmatprep.subr.bf16.mxu0 0
        %2227 = vmatpush1.bf16.msra.mxu0 0
        %2228 = vmatprep.subr.bf16.mxu0 0
        %2229 = vmatpush1.bf16.msra.mxu0 0
        %2230 = vmatprep.subr.bf16.mxu0 0
        %2231 = vmatpush1.bf16.msra.mxu0 0
        %2232 = vmatprep.subr.bf16.mxu0 0
        %2233 = vmatpush1.bf16.msra.mxu0 0
        %2234 = vmatprep.subr.bf16.mxu0 0
        %2235 = vmatpush1.bf16.msra.mxu0 0
        %2236 = vmatprep.subr.bf16.mxu0 0
        %2237 = vmatpush1.bf16.msra.mxu0 0
        %2238 = vmatprep.subr.bf16.mxu0 0
        %2239 = vmatpush1.bf16.msra.mxu0 0
        %2240 = vmatprep.subr.bf16.mxu0 0
        %2241 = vmatpush1.bf16.msra.mxu0 0
        %2242 = vmatprep.subr.bf16.mxu0 0
        %2243 = vmatpush1.bf16.msra.mxu0 0
        %2244 = vmatprep.subr.bf16.mxu0 0
        %2245 = vmatpush1.bf16.msra.mxu0 0
        %2246 = vmatprep.subr.bf16.mxu0 0
        %2247 = vmatpush1.bf16.msra.mxu0 0
        %2248 = vmatprep.subr.bf16.mxu0 0
        %2249 = vmatpush1.bf16.msra.mxu0 0
        %2250 = vmatprep.subr.bf16.mxu0 0
        %2251 = vmatpush1.bf16.msra.mxu0 0
        %2252 = vmatprep.mubr.bf16.mxu0 0
        %2253 = vmatmul.mubr.bf16.gmra.mrb[0].mxu0 %v2218
        %v2254 = vpop.f32.mrb[0].mxu0
        %v2255 = vadd.f32 %v2204, %v2254
        %v2256 = vpop.f32.mrb[0].mxu0
        %v2257 = vpop.f32.mrb[0].mxu0
        %v2258 = vadd.f32 %v2204, %v2257
        %v2259 = vpop.f32.mrb[0].mxu0
        %2260 = vdwg.mxu0
        %v2261 = vmul.f32 %v2255, 0.5
        %v2262 = vmul.f32 %v2258, 0.5
        %v2263 = vmul.f32 %v2255, 0.70710677
        %v2264 = vmul.f32 %v2258, 0.70710677
        %v2265 = verf.f32.pop %v2263
        %v2266 = verf.f32.pop %v2264
        %v2267 = vadd.f32 %v2265, 1.0
        %v2268 = vadd.f32 %v2266, 1.0
        %v2269 = vmul.f32 %v2261, %v2267
        %v2270 = vmul.f32 %v2262, %v2268
        %v2271 = vpack.c.bf16 %v2270, %v2269
        %v2272 = vld [vmem:[%s3 + $0x30] sm:$0xf]
        %v2273 = vld [vmem:[%s3 + $0x34] sm:$0xf]
        %v2274 = vld [vmem:[%s3 + $0x38] sm:$0xf]
        %v2275 = vld [vmem:[%s3 + $0x3c] sm:$0xf]
        %v2276 = vld [vmem:[%s3 + $0x40] sm:$0xf]
        %v2277 = vld [vmem:[%s3 + $0x44] sm:$0xf]
        %v2278 = vld [vmem:[%s3 + $0x48] sm:$0xf]
        %v2279 = vld [vmem:[%s3 + $0x4c] sm:$0xf]
        %v2280 = vld [vmem:[%s4 + $0x7] sm:$0x1]
        %v2281 = vlaneseq
        %v2282 = vshrl.u32 %v2281, 7
        %v2283 = vsub.s32 0, %v2282
        %v2284 = vrot.slane %v2280, %v2283
        %v2293 = vunpack.c.l.b16 %v2272
        %v2294 = vunpack.c.l.b16 %v2273
        %v2295 = vunpack.c.l.b16 %v2274
        %v2296 = vunpack.c.l.b16 %v2275
        %v2297 = vunpack.c.l.b16 %v2276
        %v2298 = vunpack.c.l.b16 %v2277
        %v2299 = vunpack.c.l.b16 %v2278
        %v2300 = vunpack.c.l.b16 %v2279
        %v2301 = vpack.c.b16 %v2294, %v2293
        %v2302 = vpack.c.b16 %v2296, %v2295
        %v2303 = vpack.c.b16 %v2298, %v2297
        %v2304 = vpack.c.b16 %v2300, %v2299
        %vm2309 = vcmask 523264
        %v2311 = vsel %vm2309, %v2271, 0
        %2313 = vmatprep.subr.bf16.mxu0 0
        %2314 = vmatpush1.bf16.msra.mxu0 %v2301
        %2315 = vmatprep.subr.bf16.mxu0 0
        %2316 = vmatpush1.bf16.msra.mxu0 %v2302
        %2317 = vmatprep.subr.bf16.mxu0 0
        %2318 = vmatpush1.bf16.msra.mxu0 %v2303
        %2319 = vmatprep.subr.bf16.mxu0 0
        %2320 = vmatpush1.bf16.msra.mxu0 %v2304
        %2321 = vmatprep.subr.bf16.mxu0 0
        %2322 = vmatpush1.bf16.msra.mxu0 0
        %2323 = vmatprep.subr.bf16.mxu0 0
        %2324 = vmatpush1.bf16.msra.mxu0 0
        %2325 = vmatprep.subr.bf16.mxu0 0
        %2326 = vmatpush1.bf16.msra.mxu0 0
        %2327 = vmatprep.subr.bf16.mxu0 0
        %2328 = vmatpush1.bf16.msra.mxu0 0
        %2329 = vmatprep.subr.bf16.mxu0 0
        %2330 = vmatpush1.bf16.msra.mxu0 0
        %2331 = vmatprep.subr.bf16.mxu0 0
        %2332 = vmatpush1.bf16.msra.mxu0 0
        %2333 = vmatprep.subr.bf16.mxu0 0
        %2334 = vmatpush1.bf16.msra.mxu0 0
        %2335 = vmatprep.subr.bf16.mxu0 0
        %2336 = vmatpush1.bf16.msra.mxu0 0
        %2337 = vmatprep.subr.bf16.mxu0 0
        %2338 = vmatpush1.bf16.msra.mxu0 0
        %2339 = vmatprep.subr.bf16.mxu0 0
        %2340 = vmatpush1.bf16.msra.mxu0 0
        %2341 = vmatprep.subr.bf16.mxu0 0
        %2342 = vmatpush1.bf16.msra.mxu0 0
        %2343 = vmatprep.subr.bf16.mxu0 0
        %2344 = vmatpush1.bf16.msra.mxu0 0
        %2345 = vmatprep.mubr.bf16.mxu0 0
        %2346 = vmatmul.mubr.bf16.gmra.mrb[0].mxu0 %v2311
        %v2347 = vpop.f32.mrb[0].mxu0
        %v2348 = vadd.f32 %v2284, %v2347
        %v2349 = vpop.f32.mrb[0].mxu0
        %v2350 = vpop.f32.mrb[0].mxu0
        %v2351 = vadd.f32 %v2284, %v2350
        %v2352 = vpop.f32.mrb[0].mxu0
        %2353 = vdwg.mxu0
        %v2354 = vadd.f32 %v2153, %v2348
        %v2355 = vadd.f32 %v2154, %v2351
        %s2356 = scalar_lea.vmem %s4, 16
        %v2357 = vld [vmem:[%s2356] sm:$0x1]
        %v2358 = vld [vmem:[%s2356 + $0x1] sm:$0x1]
        %v2359 = vsel %vm552, %v2354, 0.0
        %2360 = vadd.xlane.f32.xlu0 %v2359
        %v2361 = vpop.xlane.xlu0 %2360
        %v2362 = vsel %vm552, %v2355, 0.0
        %2363 = vadd.xlane.f32.xlu0 %v2362
        %v2364 = vpop.xlane.xlu0 %2363
        %v2365 = vmul.f32 %v2361, %v559
        %v2366 = vmul.f32 %v2364, %v559
        %v2367 = vsub.f32 %v2354, %v2365
        %v2368 = vsub.f32 %v2355, %v2366
        %v2369 = vmul.f32 %v2367, %v2367
        %v2370 = vmul.f32 %v2368, %v2368
        %v2371 = vsel %vm552, %v2369, 0.0
        %2372 = vadd.xlane.f32.xlu0 %v2371
        %v2373 = vpop.xlane.xlu0 %2372
        %v2374 = vsel %vm552, %v2370, 0.0
        %2375 = vadd.xlane.f32.xlu0 %v2374
        %v2376 = vpop.xlane.xlu0 %2375
        %v2377 = vmul.f32 %v2373, %v559
        %v2378 = vmul.f32 %v2376, %v559
        %v2379 = vadd.f32 %v2377, 1e-06
        %v2380 = vadd.f32 %v2378, 1e-06
        %v2381 = vrsqrt.pop %v2379
        %v2382 = vrsqrt.pop %v2380
        %v2383 = vmul.f32 %v2367, %v2381
        %v2384 = vmul.f32 %v2368, %v2382
        %v2385 = vlaneseq
        %v2386 = vshrl.u32 %v2385, 7
        %v2387 = vsub.s32 0, %v2386
        %v2388 = vrot.slane %v2357, %v2387
        %v2389 = vmul.f32 %v2383, %v2388
        %v2390 = vmul.f32 %v2384, %v2388
        %v2391 = vlaneseq
        %v2392 = vshrl.u32 %v2391, 7
        %v2393 = vsub.s32 0, %v2392
        %v2394 = vrot.slane %v2358, %v2393
        %v2395 = vadd.f32 %v2389, %v2394
        %v2396 = vadd.f32 %v2390, %v2394
        %v2397 = vpack.c.bf16 %v2396, %v2395
        %s2398 = scalar_lea.vmem %s3, 80
        %v2399 = vld [vmem:[%s2398] sm:$0xf]
        %v2400 = vld [vmem:[%s2398 + $0x4] sm:$0xf]
        %v2401 = vld [vmem:[%s2398 + $0x8] sm:$0xf]
        %v2402 = vld [vmem:[%s2398 + $0xc] sm:$0xf]
        %v2403 = vld [vmem:[%s2356 + $0x2] sm:$0x1]
        %v2404 = vlaneseq
        %v2405 = vshrl.u32 %v2404, 7
        %v2406 = vsub.s32 0, %v2405
        %v2407 = vrot.slane %v2403, %v2406
        %v2412 = vunpack.c.l.b16 %v2399
        %v2413 = vunpack.c.l.b16 %v2400
        %v2414 = vunpack.c.l.b16 %v2401
        %v2415 = vunpack.c.l.b16 %v2402
        %v2416 = vpack.c.b16 %v2413, %v2412
        %v2417 = vpack.c.b16 %v2415, %v2414
        %v2421 = vsel %vm552, %v2397, 0
        %2423 = vmatprep.subr.bf16.mxu0 0
        %2424 = vmatpush1.bf16.msra.mxu0 %v2416
        %2425 = vmatprep.subr.bf16.mxu0 0
        %2426 = vmatpush1.bf16.msra.mxu0 %v2417
        %2427 = vmatprep.subr.bf16.mxu0 0
        %2428 = vmatpush1.bf16.msra.mxu0 0
        %2429 = vmatprep.subr.bf16.mxu0 0
        %2430 = vmatpush1.bf16.msra.mxu0 0
        %2431 = vmatprep.subr.bf16.mxu0 0
        %2432 = vmatpush1.bf16.msra.mxu0 0
        %2433 = vmatprep.subr.bf16.mxu0 0
        %2434 = vmatpush1.bf16.msra.mxu0 0
        %2435 = vmatprep.subr.bf16.mxu0 0
        %2436 = vmatpush1.bf16.msra.mxu0 0
        %2437 = vmatprep.subr.bf16.mxu0 0
        %2438 = vmatpush1.bf16.msra.mxu0 0
        %2439 = vmatprep.subr.bf16.mxu0 0
        %2440 = vmatpush1.bf16.msra.mxu0 0
        %2441 = vmatprep.subr.bf16.mxu0 0
        %2442 = vmatpush1.bf16.msra.mxu0 0
        %2443 = vmatprep.subr.bf16.mxu0 0
        %2444 = vmatpush1.bf16.msra.mxu0 0
        %2445 = vmatprep.subr.bf16.mxu0 0
        %2446 = vmatpush1.bf16.msra.mxu0 0
        %2447 = vmatprep.subr.bf16.mxu0 0
        %2448 = vmatpush1.bf16.msra.mxu0 0
        %2449 = vmatprep.subr.bf16.mxu0 0
        %2450 = vmatpush1.bf16.msra.mxu0 0
        %2451 = vmatprep.subr.bf16.mxu0 0
        %2452 = vmatpush1.bf16.msra.mxu0 0
        %2453 = vmatprep.subr.bf16.mxu0 0
        %2454 = vmatpush1.bf16.msra.mxu0 0
        %2455 = vmatprep.mubr.bf16.mxu0 0
        %2456 = vmatmul.mubr.bf16.gmra.mrb[0].mxu0 %v2421
        %v2457 = vpop.f32.mrb[0].mxu0
        %v2458 = vadd.f32 %v2407, %v2457
        %v2459 = vpop.f32.mrb[0].mxu0
        %v2460 = vpop.f32.mrb[0].mxu0
        %v2461 = vadd.f32 %v2407, %v2460
        %v2462 = vpop.f32.mrb[0].mxu0
        %2463 = vdwg.mxu0
        %s2464 = scalar_lea.vmem %s2, 128
        %v2465 = vld [vmem:[%s2464] sm:$0xf]
        %v2466 = vld [vmem:[%s2464 + $0x4] sm:$0xf]
        %v2467 = vld [vmem:[%s2464 + $0x8] sm:$0xf]
        %v2468 = vld [vmem:[%s2464 + $0xc] sm:$0xf]
        %v2469 = vld [vmem:[%s2356 + $0x8] sm:$0x1]
        %v2470 = vlaneseq
        %v2471 = vshrl.u32 %v2470, 7
        %v2472 = vsub.s32 0, %v2471
        %v2473 = vrot.slane %v2469, %v2472
        %v2478 = vunpack.c.l.b16 %v2465
        %v2479 = vunpack.c.l.b16 %v2466
        %v2480 = vunpack.c.l.b16 %v2467
        %v2481 = vunpack.c.l.b16 %v2468
        %v2482 = vpack.c.b16 %v2479, %v2478
        %v2483 = vpack.c.b16 %v2481, %v2480
        %2486 = vmatprep.subr.bf16.mxu0 0
        %2487 = vmatpush1.bf16.msra.mxu0 %v2482
        %2488 = vmatprep.subr.bf16.mxu0 0
        %2489 = vmatpush1.bf16.msra.mxu0 %v2483
        %2490 = vmatprep.subr.bf16.mxu0 0
        %2491 = vmatpush1.bf16.msra.mxu0 0
        %2492 = vmatprep.subr.bf16.mxu0 0
        %2493 = vmatpush1.bf16.msra.mxu0 0
        %2494 = vmatprep.subr.bf16.mxu0 0
        %2495 = vmatpush1.bf16.msra.mxu0 0
        %2496 = vmatprep.subr.bf16.mxu0 0
        %2497 = vmatpush1.bf16.msra.mxu0 0
        %2498 = vmatprep.subr.bf16.mxu0 0
        %2499 = vmatpush1.bf16.msra.mxu0 0
        %2500 = vmatprep.subr.bf16.mxu0 0
        %2501 = vmatpush1.bf16.msra.mxu0 0
        %2502 = vmatprep.subr.bf16.mxu0 0
        %2503 = vmatpush1.bf16.msra.mxu0 0
        %2504 = vmatprep.subr.bf16.mxu0 0
        %2505 = vmatpush1.bf16.msra.mxu0 0
        %2506 = vmatprep.subr.bf16.mxu0 0
        %2507 = vmatpush1.bf16.msra.mxu0 0
        %2508 = vmatprep.subr.bf16.mxu0 0
        %2509 = vmatpush1.bf16.msra.mxu0 0
        %2510 = vmatprep.subr.bf16.mxu0 0
        %2511 = vmatpush1.bf16.msra.mxu0 0
        %2512 = vmatprep.subr.bf16.mxu0 0
        %2513 = vmatpush1.bf16.msra.mxu0 0
        %2514 = vmatprep.subr.bf16.mxu0 0
        %2515 = vmatpush1.bf16.msra.mxu0 0
        %2516 = vmatprep.subr.bf16.mxu0 0
        %2517 = vmatpush1.bf16.msra.mxu0 0
        %2518 = vmatprep.mubr.bf16.mxu0 0
        %2519 = vmatmul.mubr.bf16.gmra.mrb[0].mxu0 %v2421
        %v2520 = vpop.f32.mrb[0].mxu0
        %v2521 = vadd.f32 %v2473, %v2520
        %v2522 = vpop.f32.mrb[0].mxu0
        %v2523 = vpop.f32.mrb[0].mxu0
        %v2524 = vadd.f32 %v2473, %v2523
        %v2525 = vpop.f32.mrb[0].mxu0
        %2526 = vdwg.mxu0
        %s2527 = scalar_lea.vmem %s2, 192
        %v2528 = vld [vmem:[%s2527] sm:$0xf]
        %v2529 = vld [vmem:[%s2527 + $0x4] sm:$0xf]
        %v2530 = vld [vmem:[%s2527 + $0x8] sm:$0xf]
        %v2531 = vld [vmem:[%s2527 + $0xc] sm:$0xf]
        %v2532 = vld [vmem:[%s2356 + $0xc] sm:$0x1]
        %v2533 = vlaneseq
        %v2534 = vshrl.u32 %v2533, 7
        %v2535 = vsub.s32 0, %v2534
        %v2536 = vrot.slane %v2532, %v2535
        %v2541 = vunpack.c.l.b16 %v2528
        %v2542 = vunpack.c.l.b16 %v2529
        %v2543 = vunpack.c.l.b16 %v2530
        %v2544 = vunpack.c.l.b16 %v2531
        %v2545 = vpack.c.b16 %v2542, %v2541
        %v2546 = vpack.c.b16 %v2544, %v2543
        %2549 = vmatprep.subr.bf16.mxu0 0
        %2550 = vmatpush1.bf16.msra.mxu0 %v2545
        %2551 = vmatprep.subr.bf16.mxu0 0
        %2552 = vmatpush1.bf16.msra.mxu0 %v2546
        %2553 = vmatprep.subr.bf16.mxu0 0
        %2554 = vmatpush1.bf16.msra.mxu0 0
        %2555 = vmatprep.subr.bf16.mxu0 0
        %2556 = vmatpush1.bf16.msra.mxu0 0
        %2557 = vmatprep.subr.bf16.mxu0 0
        %2558 = vmatpush1.bf16.msra.mxu0 0
        %2559 = vmatprep.subr.bf16.mxu0 0
        %2560 = vmatpush1.bf16.msra.mxu0 0
        %2561 = vmatprep.subr.bf16.mxu0 0
        %2562 = vmatpush1.bf16.msra.mxu0 0
        %2563 = vmatprep.subr.bf16.mxu0 0
        %2564 = vmatpush1.bf16.msra.mxu0 0
        %2565 = vmatprep.subr.bf16.mxu0 0
        %2566 = vmatpush1.bf16.msra.mxu0 0
        %2567 = vmatprep.subr.bf16.mxu0 0
        %2568 = vmatpush1.bf16.msra.mxu0 0
        %2569 = vmatprep.subr.bf16.mxu0 0
        %2570 = vmatpush1.bf16.msra.mxu0 0
        %2571 = vmatprep.subr.bf16.mxu0 0
        %2572 = vmatpush1.bf16.msra.mxu0 0
        %2573 = vmatprep.subr.bf16.mxu0 0
        %2574 = vmatpush1.bf16.msra.mxu0 0
        %2575 = vmatprep.subr.bf16.mxu0 0
        %2576 = vmatpush1.bf16.msra.mxu0 0
        %2577 = vmatprep.subr.bf16.mxu0 0
        %2578 = vmatpush1.bf16.msra.mxu0 0
        %2579 = vmatprep.subr.bf16.mxu0 0
        %2580 = vmatpush1.bf16.msra.mxu0 0
        %2581 = vmatprep.mubr.bf16.mxu0 0
        %2582 = vmatmul.mubr.bf16.gmra.mrb[0].mxu0 %v2421
        %v2583 = vpop.f32.mrb[0].mxu0
        %v2584 = vadd.f32 %v2536, %v2583
        %v2585 = vpop.f32.mrb[0].mxu0
        %v2586 = vpop.f32.mrb[0].mxu0
        %v2587 = vadd.f32 %v2536, %v2586
        %v2588 = vpop.f32.mrb[0].mxu0
        %2589 = vdwg.mxu0
        %v2591 = vsel %vm783, %v2521, 0
        %v2594 = vsel %vm783, %v2524, 0
        %v2597 = vsel %vm783, %v2458, 0
        %v2600 = vsel %vm783, %v2461, 0
        %2602 = vmatprep.subr.mxu0 0.0
        %2603 = vmatpush1.xpose.msra.mxu0 %v2597
        %2604 = vmatprep.subr.mxu0 0.0
        %2605 = vmatpush1.xpose.msra.mxu0 %v2600
        %2606 = vmatprep.subr.mxu0 0.0
        %2607 = vmatpush1.xpose.msra.mxu0 0.0
        %2608 = vmatprep.subr.mxu0 0.0
        %2609 = vmatpush1.xpose.msra.mxu0 0.0
        %2610 = vmatprep.subr.mxu0 0.0
        %2611 = vmatpush1.xpose.msra.mxu0 0.0
        %2612 = vmatprep.subr.mxu0 0.0
        %2613 = vmatpush1.xpose.msra.mxu0 0.0
        %2614 = vmatprep.subr.mxu0 0.0
        %2615 = vmatpush1.xpose.msra.mxu0 0.0
        %2616 = vmatprep.subr.mxu0 0.0
        %2617 = vmatpush1.xpose.msra.mxu0 0.0
        %2618 = vmatprep.subr.mxu0 0.0
        %2619 = vmatpush1.xpose.msra.mxu0 0.0
        %2620 = vmatprep.subr.mxu0 0.0
        %2621 = vmatpush1.xpose.msra.mxu0 0.0
        %2622 = vmatprep.subr.mxu0 0.0
        %2623 = vmatpush1.xpose.msra.mxu0 0.0
        %2624 = vmatprep.subr.mxu0 0.0
        %2625 = vmatpush1.xpose.msra.mxu0 0.0
        %2626 = vmatprep.subr.mxu0 0.0
        %2627 = vmatpush1.xpose.msra.mxu0 0.0
        %2628 = vmatprep.subr.mxu0 0.0
        %2629 = vmatpush1.xpose.msra.mxu0 0.0
        %2630 = vmatprep.subr.mxu0 0.0
        %2631 = vmatpush1.xpose.msra.mxu0 0.0
        %2632 = vmatprep.subr.mxu0 0.0
        %2633 = vmatpush1.xpose.msra.mxu0 0.0
        %2634 = vmatprep.subr.mxu0 0.0
        %2635 = vmatpush1.xpose.msra.mxu0 0.0
        %2636 = vmatprep.subr.mxu0 0.0
        %2637 = vmatpush1.xpose.msra.mxu0 0.0
        %2638 = vmatprep.subr.mxu0 0.0
        %2639 = vmatpush1.xpose.msra.mxu0 0.0
        %2640 = vmatprep.subr.mxu0 0.0
        %2641 = vmatpush1.xpose.msra.mxu0 0.0
        %2642 = vmatprep.subr.mxu0 0.0
        %2643 = vmatpush1.xpose.msra.mxu0 0.0
        %2644 = vmatprep.subr.mxu0 0.0
        %2645 = vmatpush1.xpose.msra.mxu0 0.0
        %2646 = vmatprep.subr.mxu0 0.0
        %2647 = vmatpush1.xpose.msra.mxu0 0.0
        %2648 = vmatprep.subr.mxu0 0.0
        %2649 = vmatpush1.xpose.msra.mxu0 0.0
        %2650 = vmatprep.subr.mxu0 0.0
        %2651 = vmatpush1.xpose.msra.mxu0 0.0
        %2652 = vmatprep.subr.mxu0 0.0
        %2653 = vmatpush1.xpose.msra.mxu0 0.0
        %2654 = vmatprep.subr.mxu0 0.0
        %2655 = vmatpush1.xpose.msra.mxu0 0.0
        %2656 = vmatprep.subr.mxu0 0.0
        %2657 = vmatpush1.xpose.msra.mxu0 0.0
        %2658 = vmatprep.subr.mxu0 0.0
        %2659 = vmatpush1.xpose.msra.mxu0 0.0
        %2660 = vmatprep.subr.mxu0 0.0
        %2661 = vmatpush1.xpose.msra.mxu0 0.0
        %2662 = vmatprep.subr.mxu0 0.0
        %2663 = vmatpush1.xpose.msra.mxu0 0.0
        %2664 = vmatprep.subr.mxu0 0.0
        %2665 = vmatpush1.xpose.msra.mxu0 0.0
        %2666 = vmatprep.mubr.f32.mxu0 0.0
        %2667 = vmatmul.mubr.f32.gmra.mrb[0].mxu0 %v2591
        %v2668 = vpop.f32.mrb[0].mxu0
        %v2669 = vadd.f32 0.0, %v2668
        %v2670 = vpop.f32.mrb[0].mxu0
        %2671 = vmatprep.mubr.f32.mxu0 0.0
        %2672 = vmatmul.mubr.f32.gmra.mrb[0].mxu0 %v2594
        %v2673 = vpop.f32.mrb[0].mxu0
        %v2674 = vadd.f32 0.0, %v2673
        %v2675 = vpop.f32.mrb[0].mxu0
        %2676 = vdwg.mxu0
        %v2677 = vmul.f32 %v2669, 0.35355338
        %v2678 = vmul.f32 %v2674, 0.35355338
        %v2679 = vadd.f32 %v2677, %v549
        %v2680 = vadd.f32 %v2678, %v549
        %v2681 = vsel %vm875, %v2679, -inf
        %2682 = vmax.xlane.f32.xlu0 %v2681
        %v2683 = vpop.xlane.xlu0 %2682
        %v2684 = vsel %vm875, %v2680, -inf
        %2685 = vmax.xlane.f32.xlu0 %v2684
        %v2686 = vpop.xlane.xlu0 %2685
        %v2687 = vsub.f32 %v2679, %v2683
        %v2688 = vsub.f32 %v2680, %v2686
        %v2689 = vmul.f32 %v2687, 1.442695
        %v2690 = vpow.pop %v2689
        %v2691 = vmul.f32 %v2688, 1.442695
        %v2692 = vpow.pop %v2691
        %v2693 = vsel %vm875, %v2690, 0.0
        %2694 = vadd.xlane.f32.xlu0 %v2693
        %v2695 = vpop.xlane.xlu0 %2694
        %v2696 = vsel %vm875, %v2692, 0.0
        %2697 = vadd.xlane.f32.xlu0 %v2696
        %v2698 = vpop.xlane.xlu0 %2697
        %v2699 = vrcp.pop %v2695
        %v2700 = vrcp.pop %v2698
        %v2701 = vmul.f32 %v2690, %v2699
        %v2702 = vmul.f32 %v2692, %v2700
        %v2704 = vsel %vm875, %v2701, 0
        %v2707 = vsel %vm875, %v2702, 0
        %2709 = vmatprep.subr.mxu0 0.0
        %2710 = vmatpush1.msra.mxu0 %v2584
        %2711 = vmatprep.subr.mxu0 0.0
        %2712 = vmatpush1.msra.mxu0 %v2587
        %2713 = vmatprep.subr.mxu0 0.0
        %2714 = vmatpush1.msra.mxu0 0.0
        %2715 = vmatprep.subr.mxu0 0.0
        %2716 = vmatpush1.msra.mxu0 0.0
        %2717 = vmatprep.subr.mxu0 0.0
        %2718 = vmatpush1.msra.mxu0 0.0
        %2719 = vmatprep.subr.mxu0 0.0
        %2720 = vmatpush1.msra.mxu0 0.0
        %2721 = vmatprep.subr.mxu0 0.0
        %2722 = vmatpush1.msra.mxu0 0.0
        %2723 = vmatprep.subr.mxu0 0.0
        %2724 = vmatpush1.msra.mxu0 0.0
        %2725 = vmatprep.subr.mxu0 0.0
        %2726 = vmatpush1.msra.mxu0 0.0
        %2727 = vmatprep.subr.mxu0 0.0
        %2728 = vmatpush1.msra.mxu0 0.0
        %2729 = vmatprep.subr.mxu0 0.0
        %2730 = vmatpush1.msra.mxu0 0.0
        %2731 = vmatprep.subr.mxu0 0.0
        %2732 = vmatpush1.msra.mxu0 0.0
        %2733 = vmatprep.subr.mxu0 0.0
        %2734 = vmatpush1.msra.mxu0 0.0
        %2735 = vmatprep.subr.mxu0 0.0
        %2736 = vmatpush1.msra.mxu0 0.0
        %2737 = vmatprep.subr.mxu0 0.0
        %2738 = vmatpush1.msra.mxu0 0.0
        %2739 = vmatprep.subr.mxu0 0.0
        %2740 = vmatpush1.msra.mxu0 0.0
        %2741 = vmatprep.subr.mxu0 0.0
        %2742 = vmatpush1.msra.mxu0 0.0
        %2743 = vmatprep.subr.mxu0 0.0
        %2744 = vmatpush1.msra.mxu0 0.0
        %2745 = vmatprep.subr.mxu0 0.0
        %2746 = vmatpush1.msra.mxu0 0.0
        %2747 = vmatprep.subr.mxu0 0.0
        %2748 = vmatpush1.msra.mxu0 0.0
        %2749 = vmatprep.subr.mxu0 0.0
        %2750 = vmatpush1.msra.mxu0 0.0
        %2751 = vmatprep.subr.mxu0 0.0
        %2752 = vmatpush1.msra.mxu0 0.0
        %2753 = vmatprep.subr.mxu0 0.0
        %2754 = vmatpush1.msra.mxu0 0.0
        %2755 = vmatprep.subr.mxu0 0.0
        %2756 = vmatpush1.msra.mxu0 0.0
        %2757 = vmatprep.subr.mxu0 0.0
        %2758 = vmatpush1.msra.mxu0 0.0
        %2759 = vmatprep.subr.mxu0 0.0
        %2760 = vmatpush1.msra.mxu0 0.0
        %2761 = vmatprep.subr.mxu0 0.0
        %2762 = vmatpush1.msra.mxu0 0.0
        %2763 = vmatprep.subr.mxu0 0.0
        %2764 = vmatpush1.msra.mxu0 0.0
        %2765 = vmatprep.subr.mxu0 0.0
        %2766 = vmatpush1.msra.mxu0 0.0
        %2767 = vmatprep.subr.mxu0 0.0
        %2768 = vmatpush1.msra.mxu0 0.0
        %2769 = vmatprep.subr.mxu0 0.0
        %2770 = vmatpush1.msra.mxu0 0.0
        %2771 = vmatprep.subr.mxu0 0.0
        %2772 = vmatpush1.msra.mxu0 0.0
        %2773 = vmatprep.mubr.f32.mxu0 0.0
        %2774 = vmatmul.mubr.f32.gmra.mrb[0].mxu0 %v2704
        %v2775 = vpop.f32.mrb[0].mxu0
        %v2776 = vadd.f32 0.0, %v2775
        %v2777 = vpop.f32.mrb[0].mxu0
        %2778 = vmatprep.mubr.f32.mxu0 0.0
        %2779 = vmatmul.mubr.f32.gmra.mrb[0].mxu0 %v2707
        %v2780 = vpop.f32.mrb[0].mxu0
        %v2781 = vadd.f32 0.0, %v2780
        %v2782 = vpop.f32.mrb[0].mxu0
        %2783 = vdwg.mxu0
        %v2784 = vpack.c.bf16 %v2781, %v2776
        %v2785 = vld [vmem:[%s2398 + $0x10] sm:$0xf]
        %s2786 = scalar_lea.vmem %s2, 144
        %v2787 = vld [vmem:[%s2786] sm:$0xf]
        %v2788 = vld [vmem:[%s2786 + $0x4] sm:$0xf]
        %v2789 = vld [vmem:[%s2786 + $0x8] sm:$0xf]
        %v2790 = vld [vmem:[%s2786 + $0xc] sm:$0xf]
        %v2791 = vld [vmem:[%s2356 + $0x9] sm:$0x1]
        %v2792 = vlaneseq
        %v2793 = vshrl.u32 %v2792, 7
        %v2794 = vsub.s32 0, %v2793
        %v2795 = vrot.slane %v2791, %v2794
        %v2800 = vunpack.c.l.b16 %v2787
        %v2801 = vunpack.c.l.b16 %v2788
        %v2802 = vunpack.c.l.b16 %v2789
        %v2803 = vunpack.c.l.b16 %v2790
        %v2804 = vpack.c.b16 %v2801, %v2800
        %v2805 = vpack.c.b16 %v2803, %v2802
        %2808 = vmatprep.subr.bf16.mxu0 0
        %2809 = vmatpush1.bf16.msra.mxu0 %v2804
        %2810 = vmatprep.subr.bf16.mxu0 0
        %2811 = vmatpush1.bf16.msra.mxu0 %v2805
        %2812 = vmatprep.subr.bf16.mxu0 0
        %2813 = vmatpush1.bf16.msra.mxu0 0
        %2814 = vmatprep.subr.bf16.mxu0 0
        %2815 = vmatpush1.bf16.msra.mxu0 0
        %2816 = vmatprep.subr.bf16.mxu0 0
        %2817 = vmatpush1.bf16.msra.mxu0 0
        %2818 = vmatprep.subr.bf16.mxu0 0
        %2819 = vmatpush1.bf16.msra.mxu0 0
        %2820 = vmatprep.subr.bf16.mxu0 0
        %2821 = vmatpush1.bf16.msra.mxu0 0
        %2822 = vmatprep.subr.bf16.mxu0 0
        %2823 = vmatpush1.bf16.msra.mxu0 0
        %2824 = vmatprep.subr.bf16.mxu0 0
        %2825 = vmatpush1.bf16.msra.mxu0 0
        %2826 = vmatprep.subr.bf16.mxu0 0
        %2827 = vmatpush1.bf16.msra.mxu0 0
        %2828 = vmatprep.subr.bf16.mxu0 0
        %2829 = vmatpush1.bf16.msra.mxu0 0
        %2830 = vmatprep.subr.bf16.mxu0 0
        %2831 = vmatpush1.bf16.msra.mxu0 0
        %2832 = vmatprep.subr.bf16.mxu0 0
        %2833 = vmatpush1.bf16.msra.mxu0 0
        %2834 = vmatprep.subr.bf16.mxu0 0
        %2835 = vmatpush1.bf16.msra.mxu0 0
        %2836 = vmatprep.subr.bf16.mxu0 0
        %2837 = vmatpush1.bf16.msra.mxu0 0
        %2838 = vmatprep.subr.bf16.mxu0 0
        %2839 = vmatpush1.bf16.msra.mxu0 0
        %2840 = vmatprep.mubr.bf16.mxu0 0
        %2841 = vmatmul.mubr.bf16.gmra.mrb[0].mxu0 %v2421
        %v2842 = vpop.f32.mrb[0].mxu0
        %v2843 = vadd.f32 %v2795, %v2842
        %v2844 = vpop.f32.mrb[0].mxu0
        %v2845 = vpop.f32.mrb[0].mxu0
        %v2846 = vadd.f32 %v2795, %v2845
        %v2847 = vpop.f32.mrb[0].mxu0
        %2848 = vdwg.mxu0
        %s2849 = scalar_lea.vmem %s2, 208
        %v2850 = vld [vmem:[%s2849] sm:$0xf]
        %v2851 = vld [vmem:[%s2849 + $0x4] sm:$0xf]
        %v2852 = vld [vmem:[%s2849 + $0x8] sm:$0xf]
        %v2853 = vld [vmem:[%s2849 + $0xc] sm:$0xf]
        %v2854 = vld [vmem:[%s2356 + $0xd] sm:$0x1]
        %v2855 = vlaneseq
        %v2856 = vshrl.u32 %v2855, 7
        %v2857 = vsub.s32 0, %v2856
        %v2858 = vrot.slane %v2854, %v2857
        %v2863 = vunpack.c.l.b16 %v2850
        %v2864 = vunpack.c.l.b16 %v2851
        %v2865 = vunpack.c.l.b16 %v2852
        %v2866 = vunpack.c.l.b16 %v2853
        %v2867 = vpack.c.b16 %v2864, %v2863
        %v2868 = vpack.c.b16 %v2866, %v2865
        %2871 = vmatprep.subr.bf16.mxu0 0
        %2872 = vmatpush1.bf16.msra.mxu0 %v2867
        %2873 = vmatprep.subr.bf16.mxu0 0
        %2874 = vmatpush1.bf16.msra.mxu0 %v2868
        %2875 = vmatprep.subr.bf16.mxu0 0
        %2876 = vmatpush1.bf16.msra.mxu0 0
        %2877 = vmatprep.subr.bf16.mxu0 0
        %2878 = vmatpush1.bf16.msra.mxu0 0
        %2879 = vmatprep.subr.bf16.mxu0 0
        %2880 = vmatpush1.bf16.msra.mxu0 0
        %2881 = vmatprep.subr.bf16.mxu0 0
        %2882 = vmatpush1.bf16.msra.mxu0 0
        %2883 = vmatprep.subr.bf16.mxu0 0
        %2884 = vmatpush1.bf16.msra.mxu0 0
        %2885 = vmatprep.subr.bf16.mxu0 0
        %2886 = vmatpush1.bf16.msra.mxu0 0
        %2887 = vmatprep.subr.bf16.mxu0 0
        %2888 = vmatpush1.bf16.msra.mxu0 0
        %2889 = vmatprep.subr.bf16.mxu0 0
        %2890 = vmatpush1.bf16.msra.mxu0 0
        %2891 = vmatprep.subr.bf16.mxu0 0
        %2892 = vmatpush1.bf16.msra.mxu0 0
        %2893 = vmatprep.subr.bf16.mxu0 0
        %2894 = vmatpush1.bf16.msra.mxu0 0
        %2895 = vmatprep.subr.bf16.mxu0 0
        %2896 = vmatpush1.bf16.msra.mxu0 0
        %2897 = vmatprep.subr.bf16.mxu0 0
        %2898 = vmatpush1.bf16.msra.mxu0 0
        %2899 = vmatprep.subr.bf16.mxu0 0
        %2900 = vmatpush1.bf16.msra.mxu0 0
        %2901 = vmatprep.subr.bf16.mxu0 0
        %2902 = vmatpush1.bf16.msra.mxu0 0
        %2903 = vmatprep.mubr.bf16.mxu0 0
        %2904 = vmatmul.mubr.bf16.gmra.mrb[0].mxu0 %v2421
        %v2905 = vpop.f32.mrb[0].mxu0
        %v2906 = vadd.f32 %v2858, %v2905
        %v2907 = vpop.f32.mrb[0].mxu0
        %v2908 = vpop.f32.mrb[0].mxu0
        %v2909 = vadd.f32 %v2858, %v2908
        %v2910 = vpop.f32.mrb[0].mxu0
        %2911 = vdwg.mxu0
        %2912 = vrot.lane.b32.xlu0 %v2458, 120
        %v2913 = vpop.permute.xlu0 %2912
        %2914 = vrot.lane.b32.xlu0 %v2461, 120
        %v2915 = vpop.permute.xlu0 %2914
        %v2917 = vsel %vm783, %v2843, 0
        %v2920 = vsel %vm783, %v2846, 0
        %v2922 = vsel %vm783, %v2913, 0
        %v2924 = vsel %vm783, %v2915, 0
        %2926 = vmatprep.subr.mxu0 0.0
        %2927 = vmatpush1.xpose.msra.mxu0 %v2922
        %2928 = vmatprep.subr.mxu0 0.0
        %2929 = vmatpush1.xpose.msra.mxu0 %v2924
        %2930 = vmatprep.subr.mxu0 0.0
        %2931 = vmatpush1.xpose.msra.mxu0 0.0
        %2932 = vmatprep.subr.mxu0 0.0
        %2933 = vmatpush1.xpose.msra.mxu0 0.0
        %2934 = vmatprep.subr.mxu0 0.0
        %2935 = vmatpush1.xpose.msra.mxu0 0.0
        %2936 = vmatprep.subr.mxu0 0.0
        %2937 = vmatpush1.xpose.msra.mxu0 0.0
        %2938 = vmatprep.subr.mxu0 0.0
        %2939 = vmatpush1.xpose.msra.mxu0 0.0
        %2940 = vmatprep.subr.mxu0 0.0
        %2941 = vmatpush1.xpose.msra.mxu0 0.0
        %2942 = vmatprep.subr.mxu0 0.0
        %2943 = vmatpush1.xpose.msra.mxu0 0.0
        %2944 = vmatprep.subr.mxu0 0.0
        %2945 = vmatpush1.xpose.msra.mxu0 0.0
        %2946 = vmatprep.subr.mxu0 0.0
        %2947 = vmatpush1.xpose.msra.mxu0 0.0
        %2948 = vmatprep.subr.mxu0 0.0
        %2949 = vmatpush1.xpose.msra.mxu0 0.0
        %2950 = vmatprep.subr.mxu0 0.0
        %2951 = vmatpush1.xpose.msra.mxu0 0.0
        %2952 = vmatprep.subr.mxu0 0.0
        %2953 = vmatpush1.xpose.msra.mxu0 0.0
        %2954 = vmatprep.subr.mxu0 0.0
        %2955 = vmatpush1.xpose.msra.mxu0 0.0
        %2956 = vmatprep.subr.mxu0 0.0
        %2957 = vmatpush1.xpose.msra.mxu0 0.0
        %2958 = vmatprep.subr.mxu0 0.0
        %2959 = vmatpush1.xpose.msra.mxu0 0.0
        %2960 = vmatprep.subr.mxu0 0.0
        %2961 = vmatpush1.xpose.msra.mxu0 0.0
        %2962 = vmatprep.subr.mxu0 0.0
        %2963 = vmatpush1.xpose.msra.mxu0 0.0
        %2964 = vmatprep.subr.mxu0 0.0
        %2965 = vmatpush1.xpose.msra.mxu0 0.0
        %2966 = vmatprep.subr.mxu0 0.0
        %2967 = vmatpush1.xpose.msra.mxu0 0.0
        %2968 = vmatprep.subr.mxu0 0.0
        %2969 = vmatpush1.xpose.msra.mxu0 0.0
        %2970 = vmatprep.subr.mxu0 0.0
        %2971 = vmatpush1.xpose.msra.mxu0 0.0
        %2972 = vmatprep.subr.mxu0 0.0
        %2973 = vmatpush1.xpose.msra.mxu0 0.0
        %2974 = vmatprep.subr.mxu0 0.0
        %2975 = vmatpush1.xpose.msra.mxu0 0.0
        %2976 = vmatprep.subr.mxu0 0.0
        %2977 = vmatpush1.xpose.msra.mxu0 0.0
        %2978 = vmatprep.subr.mxu0 0.0
        %2979 = vmatpush1.xpose.msra.mxu0 0.0
        %2980 = vmatprep.subr.mxu0 0.0
        %2981 = vmatpush1.xpose.msra.mxu0 0.0
        %2982 = vmatprep.subr.mxu0 0.0
        %2983 = vmatpush1.xpose.msra.mxu0 0.0
        %2984 = vmatprep.subr.mxu0 0.0
        %2985 = vmatpush1.xpose.msra.mxu0 0.0
        %2986 = vmatprep.subr.mxu0 0.0
        %2987 = vmatpush1.xpose.msra.mxu0 0.0
        %2988 = vmatprep.subr.mxu0 0.0
        %2989 = vmatpush1.xpose.msra.mxu0 0.0
        %2990 = vmatprep.mubr.f32.mxu0 0.0
        %2991 = vmatmul.mubr.f32.gmra.mrb[0].mxu0 %v2917
        %v2992 = vpop.f32.mrb[0].mxu0
        %v2993 = vadd.f32 0.0, %v2992
        %v2994 = vpop.f32.mrb[0].mxu0
        %2995 = vmatprep.mubr.f32.mxu0 0.0
        %2996 = vmatmul.mubr.f32.gmra.mrb[0].mxu0 %v2920
        %v2997 = vpop.f32.mrb[0].mxu0
        %v2998 = vadd.f32 0.0, %v2997
        %v2999 = vpop.f32.mrb[0].mxu0
        %3000 = vdwg.mxu0
        %v3001 = vmul.f32 %v2993, 0.35355338
        %v3002 = vmul.f32 %v2998, 0.35355338
        %v3003 = vadd.f32 %v3001, %v549
        %v3004 = vadd.f32 %v3002, %v549
        %v3005 = vsel %vm875, %v3003, -inf
        %3006 = vmax.xlane.f32.xlu0 %v3005
        %v3007 = vpop.xlane.xlu0 %3006
        %v3008 = vsel %vm875, %v3004, -inf
        %3009 = vmax.xlane.f32.xlu0 %v3008
        %v3010 = vpop.xlane.xlu0 %3009
        %v3011 = vsub.f32 %v3003, %v3007
        %v3012 = vsub.f32 %v3004, %v3010
        %v3013 = vmul.f32 %v3011, 1.442695
        %v3014 = vpow.pop %v3013
        %v3015 = vmul.f32 %v3012, 1.442695
        %v3016 = vpow.pop %v3015
        %v3017 = vsel %vm875, %v3014, 0.0
        %3018 = vadd.xlane.f32.xlu0 %v3017
        %v3019 = vpop.xlane.xlu0 %3018
        %v3020 = vsel %vm875, %v3016, 0.0
        %3021 = vadd.xlane.f32.xlu0 %v3020
        %v3022 = vpop.xlane.xlu0 %3021
        %v3023 = vrcp.pop %v3019
        %v3024 = vrcp.pop %v3022
        %v3025 = vmul.f32 %v3014, %v3023
        %v3026 = vmul.f32 %v3016, %v3024
        %v3028 = vsel %vm875, %v3025, 0
        %v3031 = vsel %vm875, %v3026, 0
        %3033 = vmatprep.subr.mxu0 0.0
        %3034 = vmatpush1.msra.mxu0 %v2906
        %3035 = vmatprep.subr.mxu0 0.0
        %3036 = vmatpush1.msra.mxu0 %v2909
        %3037 = vmatprep.subr.mxu0 0.0
        %3038 = vmatpush1.msra.mxu0 0.0
        %3039 = vmatprep.subr.mxu0 0.0
        %3040 = vmatpush1.msra.mxu0 0.0
        %3041 = vmatprep.subr.mxu0 0.0
        %3042 = vmatpush1.msra.mxu0 0.0
        %3043 = vmatprep.subr.mxu0 0.0
        %3044 = vmatpush1.msra.mxu0 0.0
        %3045 = vmatprep.subr.mxu0 0.0
        %3046 = vmatpush1.msra.mxu0 0.0
        %3047 = vmatprep.subr.mxu0 0.0
        %3048 = vmatpush1.msra.mxu0 0.0
        %3049 = vmatprep.subr.mxu0 0.0
        %3050 = vmatpush1.msra.mxu0 0.0
        %3051 = vmatprep.subr.mxu0 0.0
        %3052 = vmatpush1.msra.mxu0 0.0
        %3053 = vmatprep.subr.mxu0 0.0
        %3054 = vmatpush1.msra.mxu0 0.0
        %3055 = vmatprep.subr.mxu0 0.0
        %3056 = vmatpush1.msra.mxu0 0.0
        %3057 = vmatprep.subr.mxu0 0.0
        %3058 = vmatpush1.msra.mxu0 0.0
        %3059 = vmatprep.subr.mxu0 0.0
        %3060 = vmatpush1.msra.mxu0 0.0
        %3061 = vmatprep.subr.mxu0 0.0
        %3062 = vmatpush1.msra.mxu0 0.0
        %3063 = vmatprep.subr.mxu0 0.0
        %3064 = vmatpush1.msra.mxu0 0.0
        %3065 = vmatprep.subr.mxu0 0.0
        %3066 = vmatpush1.msra.mxu0 0.0
        %3067 = vmatprep.subr.mxu0 0.0
        %3068 = vmatpush1.msra.mxu0 0.0
        %3069 = vmatprep.subr.mxu0 0.0
        %3070 = vmatpush1.msra.mxu0 0.0
        %3071 = vmatprep.subr.mxu0 0.0
        %3072 = vmatpush1.msra.mxu0 0.0
        %3073 = vmatprep.subr.mxu0 0.0
        %3074 = vmatpush1.msra.mxu0 0.0
        %3075 = vmatprep.subr.mxu0 0.0
        %3076 = vmatpush1.msra.mxu0 0.0
        %3077 = vmatprep.subr.mxu0 0.0
        %3078 = vmatpush1.msra.mxu0 0.0
        %3079 = vmatprep.subr.mxu0 0.0
        %3080 = vmatpush1.msra.mxu0 0.0
        %3081 = vmatprep.subr.mxu0 0.0
        %3082 = vmatpush1.msra.mxu0 0.0
        %3083 = vmatprep.subr.mxu0 0.0
        %3084 = vmatpush1.msra.mxu0 0.0
        %3085 = vmatprep.subr.mxu0 0.0
        %3086 = vmatpush1.msra.mxu0 0.0
        %3087 = vmatprep.subr.mxu0 0.0
        %3088 = vmatpush1.msra.mxu0 0.0
        %3089 = vmatprep.subr.mxu0 0.0
        %3090 = vmatpush1.msra.mxu0 0.0
        %3091 = vmatprep.subr.mxu0 0.0
        %3092 = vmatpush1.msra.mxu0 0.0
        %3093 = vmatprep.subr.mxu0 0.0
        %3094 = vmatpush1.msra.mxu0 0.0
        %3095 = vmatprep.subr.mxu0 0.0
        %3096 = vmatpush1.msra.mxu0 0.0
        %3097 = vmatprep.mubr.f32.mxu0 0.0
        %3098 = vmatmul.mubr.f32.gmra.mrb[0].mxu0 %v3028
        %v3099 = vpop.f32.mrb[0].mxu0
        %v3100 = vadd.f32 0.0, %v3099
        %v3101 = vpop.f32.mrb[0].mxu0
        %3102 = vmatprep.mubr.f32.mxu0 0.0
        %3103 = vmatmul.mubr.f32.gmra.mrb[0].mxu0 %v3031
        %v3104 = vpop.f32.mrb[0].mxu0
        %v3105 = vadd.f32 0.0, %v3104
        %v3106 = vpop.f32.mrb[0].mxu0
        %3107 = vdwg.mxu0
        %v3108 = vpack.c.bf16 %v3105, %v3100
        %v3109 = vld [vmem:[%s2398 + $0x14] sm:$0xf]
        %v3111 = vsel %vm783, %v3108, 0
        %v3114 = vsel %vm1308, %v3109, 0
        %3116 = vmatprep.subr.bf16.mxu0 0
        %3117 = vmatpush1.bf16.msra.mxu0 %v3114
        %3118 = vmatprep.subr.bf16.mxu0 0
        %3119 = vmatpush1.bf16.msra.mxu0 0
        %3120 = vmatprep.subr.bf16.mxu0 0
        %3121 = vmatpush1.bf16.msra.mxu0 0
        %3122 = vmatprep.subr.bf16.mxu0 0
        %3123 = vmatpush1.bf16.msra.mxu0 0
        %3124 = vmatprep.subr.bf16.mxu0 0
        %3125 = vmatpush1.bf16.msra.mxu0 0
        %3126 = vmatprep.subr.bf16.mxu0 0
        %3127 = vmatpush1.bf16.msra.mxu0 0
        %3128 = vmatprep.subr.bf16.mxu0 0
        %3129 = vmatpush1.bf16.msra.mxu0 0
        %3130 = vmatprep.subr.bf16.mxu0 0
        %3131 = vmatpush1.bf16.msra.mxu0 0
        %3132 = vmatprep.subr.bf16.mxu0 0
        %3133 = vmatpush1.bf16.msra.mxu0 0
        %3134 = vmatprep.subr.bf16.mxu0 0
        %3135 = vmatpush1.bf16.msra.mxu0 0
        %3136 = vmatprep.subr.bf16.mxu0 0
        %3137 = vmatpush1.bf16.msra.mxu0 0
        %3138 = vmatprep.subr.bf16.mxu0 0
        %3139 = vmatpush1.bf16.msra.mxu0 0
        %3140 = vmatprep.subr.bf16.mxu0 0
        %3141 = vmatpush1.bf16.msra.mxu0 0
        %3142 = vmatprep.subr.bf16.mxu0 0
        %3143 = vmatpush1.bf16.msra.mxu0 0
        %3144 = vmatprep.subr.bf16.mxu0 0
        %3145 = vmatpush1.bf16.msra.mxu0 0
        %3146 = vmatprep.subr.bf16.mxu0 0
        %3147 = vmatpush1.bf16.msra.mxu0 0
        %3148 = vmatprep.mubr.bf16.mxu0 0
        %3149 = vmatmul.mubr.bf16.gmra.mrb[0].mxu0 %v3111
        %v3150 = vpop.f32.mrb[0].mxu0
        %v3151 = vadd.f32 0.0, %v3150
        %v3152 = vpop.f32.mrb[0].mxu0
        %v3153 = vpop.f32.mrb[0].mxu0
        %v3154 = vadd.f32 0.0, %v3153
        %v3155 = vpop.f32.mrb[0].mxu0
        %3156 = vdwg.mxu0
        %v3158 = vsel %vm783, %v2784, 0
        %v3161 = vsel %vm1308, %v2785, 0
        %3163 = vmatprep.subr.bf16.mxu0 0
        %3164 = vmatpush1.bf16.msra.mxu0 %v3161
        %3165 = vmatprep.subr.bf16.mxu0 0
        %3166 = vmatpush1.bf16.msra.mxu0 0
        %3167 = vmatprep.subr.bf16.mxu0 0
        %3168 = vmatpush1.bf16.msra.mxu0 0
        %3169 = vmatprep.subr.bf16.mxu0 0
        %3170 = vmatpush1.bf16.msra.mxu0 0
        %3171 = vmatprep.subr.bf16.mxu0 0
        %3172 = vmatpush1.bf16.msra.mxu0 0
        %3173 = vmatprep.subr.bf16.mxu0 0
        %3174 = vmatpush1.bf16.msra.mxu0 0
        %3175 = vmatprep.subr.bf16.mxu0 0
        %3176 = vmatpush1.bf16.msra.mxu0 0
        %3177 = vmatprep.subr.bf16.mxu0 0
        %3178 = vmatpush1.bf16.msra.mxu0 0
        %3179 = vmatprep.subr.bf16.mxu0 0
        %3180 = vmatpush1.bf16.msra.mxu0 0
        %3181 = vmatprep.subr.bf16.mxu0 0
        %3182 = vmatpush1.bf16.msra.mxu0 0
        %3183 = vmatprep.subr.bf16.mxu0 0
        %3184 = vmatpush1.bf16.msra.mxu0 0
        %3185 = vmatprep.subr.bf16.mxu0 0
        %3186 = vmatpush1.bf16.msra.mxu0 0
        %3187 = vmatprep.subr.bf16.mxu0 0
        %3188 = vmatpush1.bf16.msra.mxu0 0
        %3189 = vmatprep.subr.bf16.mxu0 0
        %3190 = vmatpush1.bf16.msra.mxu0 0
        %3191 = vmatprep.subr.bf16.mxu0 0
        %3192 = vmatpush1.bf16.msra.mxu0 0
        %3193 = vmatprep.subr.bf16.mxu0 0
        %3194 = vmatpush1.bf16.msra.mxu0 0
        %3195 = vmatprep.mubr.bf16.mxu0 0
        %3196 = vmatmul.mubr.bf16.gmra.mrb[0].mxu0 %v3158
        %v3197 = vpop.f32.mrb[0].mxu0
        %v3198 = vadd.f32 %v3151, %v3197
        %v3199 = vpop.f32.mrb[0].mxu0
        %v3200 = vpop.f32.mrb[0].mxu0
        %v3201 = vadd.f32 %v3154, %v3200
        %v3202 = vpop.f32.mrb[0].mxu0
        %3203 = vdwg.mxu0
        %s3204 = scalar_lea.vmem %s2, 160
        %v3205 = vld [vmem:[%s3204] sm:$0xf]
        %v3206 = vld [vmem:[%s3204 + $0x4] sm:$0xf]
        %v3207 = vld [vmem:[%s3204 + $0x8] sm:$0xf]
        %v3208 = vld [vmem:[%s3204 + $0xc] sm:$0xf]
        %v3209 = vld [vmem:[%s2356 + $0xa] sm:$0x1]
        %v3210 = vlaneseq
        %v3211 = vshrl.u32 %v3210, 7
        %v3212 = vsub.s32 0, %v3211
        %v3213 = vrot.slane %v3209, %v3212
        %v3218 = vunpack.c.l.b16 %v3205
        %v3219 = vunpack.c.l.b16 %v3206
        %v3220 = vunpack.c.l.b16 %v3207
        %v3221 = vunpack.c.l.b16 %v3208
        %v3222 = vpack.c.b16 %v3219, %v3218
        %v3223 = vpack.c.b16 %v3221, %v3220
        %3226 = vmatprep.subr.bf16.mxu0 0
        %3227 = vmatpush1.bf16.msra.mxu0 %v3222
        %3228 = vmatprep.subr.bf16.mxu0 0
        %3229 = vmatpush1.bf16.msra.mxu0 %v3223
        %3230 = vmatprep.subr.bf16.mxu0 0
        %3231 = vmatpush1.bf16.msra.mxu0 0
        %3232 = vmatprep.subr.bf16.mxu0 0
        %3233 = vmatpush1.bf16.msra.mxu0 0
        %3234 = vmatprep.subr.bf16.mxu0 0
        %3235 = vmatpush1.bf16.msra.mxu0 0
        %3236 = vmatprep.subr.bf16.mxu0 0
        %3237 = vmatpush1.bf16.msra.mxu0 0
        %3238 = vmatprep.subr.bf16.mxu0 0
        %3239 = vmatpush1.bf16.msra.mxu0 0
        %3240 = vmatprep.subr.bf16.mxu0 0
        %3241 = vmatpush1.bf16.msra.mxu0 0
        %3242 = vmatprep.subr.bf16.mxu0 0
        %3243 = vmatpush1.bf16.msra.mxu0 0
        %3244 = vmatprep.subr.bf16.mxu0 0
        %3245 = vmatpush1.bf16.msra.mxu0 0
        %3246 = vmatprep.subr.bf16.mxu0 0
        %3247 = vmatpush1.bf16.msra.mxu0 0
        %3248 = vmatprep.subr.bf16.mxu0 0
        %3249 = vmatpush1.bf16.msra.mxu0 0
        %3250 = vmatprep.subr.bf16.mxu0 0
        %3251 = vmatpush1.bf16.msra.mxu0 0
        %3252 = vmatprep.subr.bf16.mxu0 0
        %3253 = vmatpush1.bf16.msra.mxu0 0
        %3254 = vmatprep.subr.bf16.mxu0 0
        %3255 = vmatpush1.bf16.msra.mxu0 0
        %3256 = vmatprep.subr.bf16.mxu0 0
        %3257 = vmatpush1.bf16.msra.mxu0 0
        %3258 = vmatprep.mubr.bf16.mxu0 0
        %3259 = vmatmul.mubr.bf16.gmra.mrb[0].mxu0 %v2421
        %v3260 = vpop.f32.mrb[0].mxu0
        %v3261 = vadd.f32 %v3213, %v3260
        %v3262 = vpop.f32.mrb[0].mxu0
        %v3263 = vpop.f32.mrb[0].mxu0
        %v3264 = vadd.f32 %v3213, %v3263
        %v3265 = vpop.f32.mrb[0].mxu0
        %3266 = vdwg.mxu0
        %s3267 = scalar_lea.vmem %s2, 224
        %v3268 = vld [vmem:[%s3267] sm:$0xf]
        %v3269 = vld [vmem:[%s3267 + $0x4] sm:$0xf]
        %v3270 = vld [vmem:[%s3267 + $0x8] sm:$0xf]
        %v3271 = vld [vmem:[%s3267 + $0xc] sm:$0xf]
        %v3272 = vld [vmem:[%s2356 + $0xe] sm:$0x1]
        %v3273 = vlaneseq
        %v3274 = vshrl.u32 %v3273, 7
        %v3275 = vsub.s32 0, %v3274
        %v3276 = vrot.slane %v3272, %v3275
        %v3281 = vunpack.c.l.b16 %v3268
        %v3282 = vunpack.c.l.b16 %v3269
        %v3283 = vunpack.c.l.b16 %v3270
        %v3284 = vunpack.c.l.b16 %v3271
        %v3285 = vpack.c.b16 %v3282, %v3281
        %v3286 = vpack.c.b16 %v3284, %v3283
        %3289 = vmatprep.subr.bf16.mxu0 0
        %3290 = vmatpush1.bf16.msra.mxu0 %v3285
        %3291 = vmatprep.subr.bf16.mxu0 0
        %3292 = vmatpush1.bf16.msra.mxu0 %v3286
        %3293 = vmatprep.subr.bf16.mxu0 0
        %3294 = vmatpush1.bf16.msra.mxu0 0
        %3295 = vmatprep.subr.bf16.mxu0 0
        %3296 = vmatpush1.bf16.msra.mxu0 0
        %3297 = vmatprep.subr.bf16.mxu0 0
        %3298 = vmatpush1.bf16.msra.mxu0 0
        %3299 = vmatprep.subr.bf16.mxu0 0
        %3300 = vmatpush1.bf16.msra.mxu0 0
        %3301 = vmatprep.subr.bf16.mxu0 0
        %3302 = vmatpush1.bf16.msra.mxu0 0
        %3303 = vmatprep.subr.bf16.mxu0 0
        %3304 = vmatpush1.bf16.msra.mxu0 0
        %3305 = vmatprep.subr.bf16.mxu0 0
        %3306 = vmatpush1.bf16.msra.mxu0 0
        %3307 = vmatprep.subr.bf16.mxu0 0
        %3308 = vmatpush1.bf16.msra.mxu0 0
        %3309 = vmatprep.subr.bf16.mxu0 0
        %3310 = vmatpush1.bf16.msra.mxu0 0
        %3311 = vmatprep.subr.bf16.mxu0 0
        %3312 = vmatpush1.bf16.msra.mxu0 0
        %3313 = vmatprep.subr.bf16.mxu0 0
        %3314 = vmatpush1.bf16.msra.mxu0 0
        %3315 = vmatprep.subr.bf16.mxu0 0
        %3316 = vmatpush1.bf16.msra.mxu0 0
        %3317 = vmatprep.subr.bf16.mxu0 0
        %3318 = vmatpush1.bf16.msra.mxu0 0
        %3319 = vmatprep.subr.bf16.mxu0 0
        %3320 = vmatpush1.bf16.msra.mxu0 0
        %3321 = vmatprep.mubr.bf16.mxu0 0
        %3322 = vmatmul.mubr.bf16.gmra.mrb[0].mxu0 %v2421
        %v3323 = vpop.f32.mrb[0].mxu0
        %v3324 = vadd.f32 %v3276, %v3323
        %v3325 = vpop.f32.mrb[0].mxu0
        %v3326 = vpop.f32.mrb[0].mxu0
        %v3327 = vadd.f32 %v3276, %v3326
        %v3328 = vpop.f32.mrb[0].mxu0
        %3329 = vdwg.mxu0
        %3330 = vrot.lane.b32.xlu0 %v2458, 112
        %v3331 = vpop.permute.xlu0 %3330
        %3332 = vrot.lane.b32.xlu0 %v2461, 112
        %v3333 = vpop.permute.xlu0 %3332
        %v3335 = vsel %vm783, %v3261, 0
        %v3338 = vsel %vm783, %v3264, 0
        %v3340 = vsel %vm783, %v3331, 0
        %v3342 = vsel %vm783, %v3333, 0
        %3344 = vmatprep.subr.mxu0 0.0
        %3345 = vmatpush1.xpose.msra.mxu0 %v3340
        %3346 = vmatprep.subr.mxu0 0.0
        %3347 = vmatpush1.xpose.msra.mxu0 %v3342
        %3348 = vmatprep.subr.mxu0 0.0
        %3349 = vmatpush1.xpose.msra.mxu0 0.0
        %3350 = vmatprep.subr.mxu0 0.0
        %3351 = vmatpush1.xpose.msra.mxu0 0.0
        %3352 = vmatprep.subr.mxu0 0.0
        %3353 = vmatpush1.xpose.msra.mxu0 0.0
        %3354 = vmatprep.subr.mxu0 0.0
        %3355 = vmatpush1.xpose.msra.mxu0 0.0
        %3356 = vmatprep.subr.mxu0 0.0
        %3357 = vmatpush1.xpose.msra.mxu0 0.0
        %3358 = vmatprep.subr.mxu0 0.0
        %3359 = vmatpush1.xpose.msra.mxu0 0.0
        %3360 = vmatprep.subr.mxu0 0.0
        %3361 = vmatpush1.xpose.msra.mxu0 0.0
        %3362 = vmatprep.subr.mxu0 0.0
        %3363 = vmatpush1.xpose.msra.mxu0 0.0
        %3364 = vmatprep.subr.mxu0 0.0
        %3365 = vmatpush1.xpose.msra.mxu0 0.0
        %3366 = vmatprep.subr.mxu0 0.0
        %3367 = vmatpush1.xpose.msra.mxu0 0.0
        %3368 = vmatprep.subr.mxu0 0.0
        %3369 = vmatpush1.xpose.msra.mxu0 0.0
        %3370 = vmatprep.subr.mxu0 0.0
        %3371 = vmatpush1.xpose.msra.mxu0 0.0
        %3372 = vmatprep.subr.mxu0 0.0
        %3373 = vmatpush1.xpose.msra.mxu0 0.0
        %3374 = vmatprep.subr.mxu0 0.0
        %3375 = vmatpush1.xpose.msra.mxu0 0.0
        %3376 = vmatprep.subr.mxu0 0.0
        %3377 = vmatpush1.xpose.msra.mxu0 0.0
        %3378 = vmatprep.subr.mxu0 0.0
        %3379 = vmatpush1.xpose.msra.mxu0 0.0
        %3380 = vmatprep.subr.mxu0 0.0
        %3381 = vmatpush1.xpose.msra.mxu0 0.0
        %3382 = vmatprep.subr.mxu0 0.0
        %3383 = vmatpush1.xpose.msra.mxu0 0.0
        %3384 = vmatprep.subr.mxu0 0.0
        %3385 = vmatpush1.xpose.msra.mxu0 0.0
        %3386 = vmatprep.subr.mxu0 0.0
        %3387 = vmatpush1.xpose.msra.mxu0 0.0
        %3388 = vmatprep.subr.mxu0 0.0
        %3389 = vmatpush1.xpose.msra.mxu0 0.0
        %3390 = vmatprep.subr.mxu0 0.0
        %3391 = vmatpush1.xpose.msra.mxu0 0.0
        %3392 = vmatprep.subr.mxu0 0.0
        %3393 = vmatpush1.xpose.msra.mxu0 0.0
        %3394 = vmatprep.subr.mxu0 0.0
        %3395 = vmatpush1.xpose.msra.mxu0 0.0
        %3396 = vmatprep.subr.mxu0 0.0
        %3397 = vmatpush1.xpose.msra.mxu0 0.0
        %3398 = vmatprep.subr.mxu0 0.0
        %3399 = vmatpush1.xpose.msra.mxu0 0.0
        %3400 = vmatprep.subr.mxu0 0.0
        %3401 = vmatpush1.xpose.msra.mxu0 0.0
        %3402 = vmatprep.subr.mxu0 0.0
        %3403 = vmatpush1.xpose.msra.mxu0 0.0
        %3404 = vmatprep.subr.mxu0 0.0
        %3405 = vmatpush1.xpose.msra.mxu0 0.0
        %3406 = vmatprep.subr.mxu0 0.0
        %3407 = vmatpush1.xpose.msra.mxu0 0.0
        %3408 = vmatprep.mubr.f32.mxu0 0.0
        %3409 = vmatmul.mubr.f32.gmra.mrb[0].mxu0 %v3335
        %v3410 = vpop.f32.mrb[0].mxu0
        %v3411 = vadd.f32 0.0, %v3410
        %v3412 = vpop.f32.mrb[0].mxu0
        %3413 = vmatprep.mubr.f32.mxu0 0.0
        %3414 = vmatmul.mubr.f32.gmra.mrb[0].mxu0 %v3338
        %v3415 = vpop.f32.mrb[0].mxu0
        %v3416 = vadd.f32 0.0, %v3415
        %v3417 = vpop.f32.mrb[0].mxu0
        %3418 = vdwg.mxu0
        %v3419 = vmul.f32 %v3411, 0.35355338
        %v3420 = vmul.f32 %v3416, 0.35355338
        %v3421 = vadd.f32 %v3419, %v549
        %v3422 = vadd.f32 %v3420, %v549
        %v3423 = vsel %vm875, %v3421, -inf
        %3424 = vmax.xlane.f32.xlu0 %v3423
        %v3425 = vpop.xlane.xlu0 %3424
        %v3426 = vsel %vm875, %v3422, -inf
        %3427 = vmax.xlane.f32.xlu0 %v3426
        %v3428 = vpop.xlane.xlu0 %3427
        %v3429 = vsub.f32 %v3421, %v3425
        %v3430 = vsub.f32 %v3422, %v3428
        %v3431 = vmul.f32 %v3429, 1.442695
        %v3432 = vpow.pop %v3431
        %v3433 = vmul.f32 %v3430, 1.442695
        %v3434 = vpow.pop %v3433
        %v3435 = vsel %vm875, %v3432, 0.0
        %3436 = vadd.xlane.f32.xlu0 %v3435
        %v3437 = vpop.xlane.xlu0 %3436
        %v3438 = vsel %vm875, %v3434, 0.0
        %3439 = vadd.xlane.f32.xlu0 %v3438
        %v3440 = vpop.xlane.xlu0 %3439
        %v3441 = vrcp.pop %v3437
        %v3442 = vrcp.pop %v3440
        %v3443 = vmul.f32 %v3432, %v3441
        %v3444 = vmul.f32 %v3434, %v3442
        %v3446 = vsel %vm875, %v3443, 0
        %v3449 = vsel %vm875, %v3444, 0
        %3451 = vmatprep.subr.mxu0 0.0
        %3452 = vmatpush1.msra.mxu0 %v3324
        %3453 = vmatprep.subr.mxu0 0.0
        %3454 = vmatpush1.msra.mxu0 %v3327
        %3455 = vmatprep.subr.mxu0 0.0
        %3456 = vmatpush1.msra.mxu0 0.0
        %3457 = vmatprep.subr.mxu0 0.0
        %3458 = vmatpush1.msra.mxu0 0.0
        %3459 = vmatprep.subr.mxu0 0.0
        %3460 = vmatpush1.msra.mxu0 0.0
        %3461 = vmatprep.subr.mxu0 0.0
        %3462 = vmatpush1.msra.mxu0 0.0
        %3463 = vmatprep.subr.mxu0 0.0
        %3464 = vmatpush1.msra.mxu0 0.0
        %3465 = vmatprep.subr.mxu0 0.0
        %3466 = vmatpush1.msra.mxu0 0.0
        %3467 = vmatprep.subr.mxu0 0.0
        %3468 = vmatpush1.msra.mxu0 0.0
        %3469 = vmatprep.subr.mxu0 0.0
        %3470 = vmatpush1.msra.mxu0 0.0
        %3471 = vmatprep.subr.mxu0 0.0
        %3472 = vmatpush1.msra.mxu0 0.0
        %3473 = vmatprep.subr.mxu0 0.0
        %3474 = vmatpush1.msra.mxu0 0.0
        %3475 = vmatprep.subr.mxu0 0.0
        %3476 = vmatpush1.msra.mxu0 0.0
        %3477 = vmatprep.subr.mxu0 0.0
        %3478 = vmatpush1.msra.mxu0 0.0
        %3479 = vmatprep.subr.mxu0 0.0
        %3480 = vmatpush1.msra.mxu0 0.0
        %3481 = vmatprep.subr.mxu0 0.0
        %3482 = vmatpush1.msra.mxu0 0.0
        %3483 = vmatprep.subr.mxu0 0.0
        %3484 = vmatpush1.msra.mxu0 0.0
        %3485 = vmatprep.subr.mxu0 0.0
        %3486 = vmatpush1.msra.mxu0 0.0
        %3487 = vmatprep.subr.mxu0 0.0
        %3488 = vmatpush1.msra.mxu0 0.0
        %3489 = vmatprep.subr.mxu0 0.0
        %3490 = vmatpush1.msra.mxu0 0.0
        %3491 = vmatprep.subr.mxu0 0.0
        %3492 = vmatpush1.msra.mxu0 0.0
        %3493 = vmatprep.subr.mxu0 0.0
        %3494 = vmatpush1.msra.mxu0 0.0
        %3495 = vmatprep.subr.mxu0 0.0
        %3496 = vmatpush1.msra.mxu0 0.0
        %3497 = vmatprep.subr.mxu0 0.0
        %3498 = vmatpush1.msra.mxu0 0.0
        %3499 = vmatprep.subr.mxu0 0.0
        %3500 = vmatpush1.msra.mxu0 0.0
        %3501 = vmatprep.subr.mxu0 0.0
        %3502 = vmatpush1.msra.mxu0 0.0
        %3503 = vmatprep.subr.mxu0 0.0
        %3504 = vmatpush1.msra.mxu0 0.0
        %3505 = vmatprep.subr.mxu0 0.0
        %3506 = vmatpush1.msra.mxu0 0.0
        %3507 = vmatprep.subr.mxu0 0.0
        %3508 = vmatpush1.msra.mxu0 0.0
        %3509 = vmatprep.subr.mxu0 0.0
        %3510 = vmatpush1.msra.mxu0 0.0
        %3511 = vmatprep.subr.mxu0 0.0
        %3512 = vmatpush1.msra.mxu0 0.0
        %3513 = vmatprep.subr.mxu0 0.0
        %3514 = vmatpush1.msra.mxu0 0.0
        %3515 = vmatprep.mubr.f32.mxu0 0.0
        %3516 = vmatmul.mubr.f32.gmra.mrb[0].mxu0 %v3446
        %v3517 = vpop.f32.mrb[0].mxu0
        %v3518 = vadd.f32 0.0, %v3517
        %v3519 = vpop.f32.mrb[0].mxu0
        %3520 = vmatprep.mubr.f32.mxu0 0.0
        %3521 = vmatmul.mubr.f32.gmra.mrb[0].mxu0 %v3449
        %v3522 = vpop.f32.mrb[0].mxu0
        %v3523 = vadd.f32 0.0, %v3522
        %v3524 = vpop.f32.mrb[0].mxu0
        %3525 = vdwg.mxu0
        %v3526 = vpack.c.bf16 %v3523, %v3518
        %v3527 = vld [vmem:[%s2398 + $0x18] sm:$0xf]
        %v3529 = vsel %vm783, %v3526, 0
        %v3532 = vsel %vm1308, %v3527, 0
        %3534 = vmatprep.subr.bf16.mxu0 0
        %3535 = vmatpush1.bf16.msra.mxu0 %v3532
        %3536 = vmatprep.subr.bf16.mxu0 0
        %3537 = vmatpush1.bf16.msra.mxu0 0
        %3538 = vmatprep.subr.bf16.mxu0 0
        %3539 = vmatpush1.bf16.msra.mxu0 0
        %3540 = vmatprep.subr.bf16.mxu0 0
        %3541 = vmatpush1.bf16.msra.mxu0 0
        %3542 = vmatprep.subr.bf16.mxu0 0
        %3543 = vmatpush1.bf16.msra.mxu0 0
        %3544 = vmatprep.subr.bf16.mxu0 0
        %3545 = vmatpush1.bf16.msra.mxu0 0
        %3546 = vmatprep.subr.bf16.mxu0 0
        %3547 = vmatpush1.bf16.msra.mxu0 0
        %3548 = vmatprep.subr.bf16.mxu0 0
        %3549 = vmatpush1.bf16.msra.mxu0 0
        %3550 = vmatprep.subr.bf16.mxu0 0
        %3551 = vmatpush1.bf16.msra.mxu0 0
        %3552 = vmatprep.subr.bf16.mxu0 0
        %3553 = vmatpush1.bf16.msra.mxu0 0
        %3554 = vmatprep.subr.bf16.mxu0 0
        %3555 = vmatpush1.bf16.msra.mxu0 0
        %3556 = vmatprep.subr.bf16.mxu0 0
        %3557 = vmatpush1.bf16.msra.mxu0 0
        %3558 = vmatprep.subr.bf16.mxu0 0
        %3559 = vmatpush1.bf16.msra.mxu0 0
        %3560 = vmatprep.subr.bf16.mxu0 0
        %3561 = vmatpush1.bf16.msra.mxu0 0
        %3562 = vmatprep.subr.bf16.mxu0 0
        %3563 = vmatpush1.bf16.msra.mxu0 0
        %3564 = vmatprep.subr.bf16.mxu0 0
        %3565 = vmatpush1.bf16.msra.mxu0 0
        %3566 = vmatprep.mubr.bf16.mxu0 0
        %3567 = vmatmul.mubr.bf16.gmra.mrb[0].mxu0 %v3529
        %v3568 = vpop.f32.mrb[0].mxu0
        %v3569 = vadd.f32 0.0, %v3568
        %v3570 = vpop.f32.mrb[0].mxu0
        %v3571 = vpop.f32.mrb[0].mxu0
        %v3572 = vadd.f32 0.0, %v3571
        %v3573 = vpop.f32.mrb[0].mxu0
        %3574 = vdwg.mxu0
        %v3575 = vadd.f32 %v3198, %v3569
        %v3576 = vadd.f32 %v3201, %v3572
        %s3577 = scalar_lea.vmem %s2, 176
        %v3578 = vld [vmem:[%s3577] sm:$0xf]
        %v3579 = vld [vmem:[%s3577 + $0x4] sm:$0xf]
        %v3580 = vld [vmem:[%s3577 + $0x8] sm:$0xf]
        %v3581 = vld [vmem:[%s3577 + $0xc] sm:$0xf]
        %v3582 = vld [vmem:[%s2356 + $0xb] sm:$0x1]
        %v3583 = vlaneseq
        %v3584 = vshrl.u32 %v3583, 7
        %v3585 = vsub.s32 0, %v3584
        %v3586 = vrot.slane %v3582, %v3585
        %v3591 = vunpack.c.l.b16 %v3578
        %v3592 = vunpack.c.l.b16 %v3579
        %v3593 = vunpack.c.l.b16 %v3580
        %v3594 = vunpack.c.l.b16 %v3581
        %v3595 = vpack.c.b16 %v3592, %v3591
        %v3596 = vpack.c.b16 %v3594, %v3593
        %3599 = vmatprep.subr.bf16.mxu0 0
        %3600 = vmatpush1.bf16.msra.mxu0 %v3595
        %3601 = vmatprep.subr.bf16.mxu0 0
        %3602 = vmatpush1.bf16.msra.mxu0 %v3596
        %3603 = vmatprep.subr.bf16.mxu0 0
        %3604 = vmatpush1.bf16.msra.mxu0 0
        %3605 = vmatprep.subr.bf16.mxu0 0
        %3606 = vmatpush1.bf16.msra.mxu0 0
        %3607 = vmatprep.subr.bf16.mxu0 0
        %3608 = vmatpush1.bf16.msra.mxu0 0
        %3609 = vmatprep.subr.bf16.mxu0 0
        %3610 = vmatpush1.bf16.msra.mxu0 0
        %3611 = vmatprep.subr.bf16.mxu0 0
        %3612 = vmatpush1.bf16.msra.mxu0 0
        %3613 = vmatprep.subr.bf16.mxu0 0
        %3614 = vmatpush1.bf16.msra.mxu0 0
        %3615 = vmatprep.subr.bf16.mxu0 0
        %3616 = vmatpush1.bf16.msra.mxu0 0
        %3617 = vmatprep.subr.bf16.mxu0 0
        %3618 = vmatpush1.bf16.msra.mxu0 0
        %3619 = vmatprep.subr.bf16.mxu0 0
        %3620 = vmatpush1.bf16.msra.mxu0 0
        %3621 = vmatprep.subr.bf16.mxu0 0
        %3622 = vmatpush1.bf16.msra.mxu0 0
        %3623 = vmatprep.subr.bf16.mxu0 0
        %3624 = vmatpush1.bf16.msra.mxu0 0
        %3625 = vmatprep.subr.bf16.mxu0 0
        %3626 = vmatpush1.bf16.msra.mxu0 0
        %3627 = vmatprep.subr.bf16.mxu0 0
        %3628 = vmatpush1.bf16.msra.mxu0 0
        %3629 = vmatprep.subr.bf16.mxu0 0
        %3630 = vmatpush1.bf16.msra.mxu0 0
        %3631 = vmatprep.mubr.bf16.mxu0 0
        %3632 = vmatmul.mubr.bf16.gmra.mrb[0].mxu0 %v2421
        %v3633 = vpop.f32.mrb[0].mxu0
        %v3634 = vadd.f32 %v3586, %v3633
        %v3635 = vpop.f32.mrb[0].mxu0
        %v3636 = vpop.f32.mrb[0].mxu0
        %v3637 = vadd.f32 %v3586, %v3636
        %v3638 = vpop.f32.mrb[0].mxu0
        %3639 = vdwg.mxu0
        %s3640 = scalar_lea.vmem %s2, 240
        %v3641 = vld [vmem:[%s3640] sm:$0xf]
        %v3642 = vld [vmem:[%s3640 + $0x4] sm:$0xf]
        %v3643 = vld [vmem:[%s3640 + $0x8] sm:$0xf]
        %v3644 = vld [vmem:[%s3640 + $0xc] sm:$0xf]
        %v3645 = vld [vmem:[%s2356 + $0xf] sm:$0x1]
        %v3646 = vlaneseq
        %v3647 = vshrl.u32 %v3646, 7
        %v3648 = vsub.s32 0, %v3647
        %v3649 = vrot.slane %v3645, %v3648
        %v3654 = vunpack.c.l.b16 %v3641
        %v3655 = vunpack.c.l.b16 %v3642
        %v3656 = vunpack.c.l.b16 %v3643
        %v3657 = vunpack.c.l.b16 %v3644
        %v3658 = vpack.c.b16 %v3655, %v3654
        %v3659 = vpack.c.b16 %v3657, %v3656
        %3662 = vmatprep.subr.bf16.mxu0 0
        %3663 = vmatpush1.bf16.msra.mxu0 %v3658
        %3664 = vmatprep.subr.bf16.mxu0 0
        %3665 = vmatpush1.bf16.msra.mxu0 %v3659
        %3666 = vmatprep.subr.bf16.mxu0 0
        %3667 = vmatpush1.bf16.msra.mxu0 0
        %3668 = vmatprep.subr.bf16.mxu0 0
        %3669 = vmatpush1.bf16.msra.mxu0 0
        %3670 = vmatprep.subr.bf16.mxu0 0
        %3671 = vmatpush1.bf16.msra.mxu0 0
        %3672 = vmatprep.subr.bf16.mxu0 0
        %3673 = vmatpush1.bf16.msra.mxu0 0
        %3674 = vmatprep.subr.bf16.mxu0 0
        %3675 = vmatpush1.bf16.msra.mxu0 0
        %3676 = vmatprep.subr.bf16.mxu0 0
        %3677 = vmatpush1.bf16.msra.mxu0 0
        %3678 = vmatprep.subr.bf16.mxu0 0
        %3679 = vmatpush1.bf16.msra.mxu0 0
        %3680 = vmatprep.subr.bf16.mxu0 0
        %3681 = vmatpush1.bf16.msra.mxu0 0
        %3682 = vmatprep.subr.bf16.mxu0 0
        %3683 = vmatpush1.bf16.msra.mxu0 0
        %3684 = vmatprep.subr.bf16.mxu0 0
        %3685 = vmatpush1.bf16.msra.mxu0 0
        %3686 = vmatprep.subr.bf16.mxu0 0
        %3687 = vmatpush1.bf16.msra.mxu0 0
        %3688 = vmatprep.subr.bf16.mxu0 0
        %3689 = vmatpush1.bf16.msra.mxu0 0
        %3690 = vmatprep.subr.bf16.mxu0 0
        %3691 = vmatpush1.bf16.msra.mxu0 0
        %3692 = vmatprep.subr.bf16.mxu0 0
        %3693 = vmatpush1.bf16.msra.mxu0 0
        %3694 = vmatprep.mubr.bf16.mxu0 0
        %3695 = vmatmul.mubr.bf16.gmra.mrb[0].mxu0 %v2421
        %v3696 = vpop.f32.mrb[0].mxu0
        %v3697 = vadd.f32 %v3649, %v3696
        %v3698 = vpop.f32.mrb[0].mxu0
        %v3699 = vpop.f32.mrb[0].mxu0
        %v3700 = vadd.f32 %v3649, %v3699
        %v3701 = vpop.f32.mrb[0].mxu0
        %3702 = vdwg.mxu0
        %3703 = vrot.lane.b32.xlu0 %v2458, 104
        %v3704 = vpop.permute.xlu0 %3703
        %3705 = vrot.lane.b32.xlu0 %v2461, 104
        %v3706 = vpop.permute.xlu0 %3705
        %v3708 = vsel %vm783, %v3634, 0
        %v3711 = vsel %vm783, %v3637, 0
        %v3713 = vsel %vm783, %v3704, 0
        %v3715 = vsel %vm783, %v3706, 0
        %3717 = vmatprep.subr.mxu0 0.0
        %3718 = vmatpush1.xpose.msra.mxu0 %v3713
        %3719 = vmatprep.subr.mxu0 0.0
        %3720 = vmatpush1.xpose.msra.mxu0 %v3715
        %3721 = vmatprep.subr.mxu0 0.0
        %3722 = vmatpush1.xpose.msra.mxu0 0.0
        %3723 = vmatprep.subr.mxu0 0.0
        %3724 = vmatpush1.xpose.msra.mxu0 0.0
        %3725 = vmatprep.subr.mxu0 0.0
        %3726 = vmatpush1.xpose.msra.mxu0 0.0
        %3727 = vmatprep.subr.mxu0 0.0
        %3728 = vmatpush1.xpose.msra.mxu0 0.0
        %3729 = vmatprep.subr.mxu0 0.0
        %3730 = vmatpush1.xpose.msra.mxu0 0.0
        %3731 = vmatprep.subr.mxu0 0.0
        %3732 = vmatpush1.xpose.msra.mxu0 0.0
        %3733 = vmatprep.subr.mxu0 0.0
        %3734 = vmatpush1.xpose.msra.mxu0 0.0
        %3735 = vmatprep.subr.mxu0 0.0
        %3736 = vmatpush1.xpose.msra.mxu0 0.0
        %3737 = vmatprep.subr.mxu0 0.0
        %3738 = vmatpush1.xpose.msra.mxu0 0.0
        %3739 = vmatprep.subr.mxu0 0.0
        %3740 = vmatpush1.xpose.msra.mxu0 0.0
        %3741 = vmatprep.subr.mxu0 0.0
        %3742 = vmatpush1.xpose.msra.mxu0 0.0
        %3743 = vmatprep.subr.mxu0 0.0
        %3744 = vmatpush1.xpose.msra.mxu0 0.0
        %3745 = vmatprep.subr.mxu0 0.0
        %3746 = vmatpush1.xpose.msra.mxu0 0.0
        %3747 = vmatprep.subr.mxu0 0.0
        %3748 = vmatpush1.xpose.msra.mxu0 0.0
        %3749 = vmatprep.subr.mxu0 0.0
        %3750 = vmatpush1.xpose.msra.mxu0 0.0
        %3751 = vmatprep.subr.mxu0 0.0
        %3752 = vmatpush1.xpose.msra.mxu0 0.0
        %3753 = vmatprep.subr.mxu0 0.0
        %3754 = vmatpush1.xpose.msra.mxu0 0.0
        %3755 = vmatprep.subr.mxu0 0.0
        %3756 = vmatpush1.xpose.msra.mxu0 0.0
        %3757 = vmatprep.subr.mxu0 0.0
        %3758 = vmatpush1.xpose.msra.mxu0 0.0
        %3759 = vmatprep.subr.mxu0 0.0
        %3760 = vmatpush1.xpose.msra.mxu0 0.0
        %3761 = vmatprep.subr.mxu0 0.0
        %3762 = vmatpush1.xpose.msra.mxu0 0.0
        %3763 = vmatprep.subr.mxu0 0.0
        %3764 = vmatpush1.xpose.msra.mxu0 0.0
        %3765 = vmatprep.subr.mxu0 0.0
        %3766 = vmatpush1.xpose.msra.mxu0 0.0
        %3767 = vmatprep.subr.mxu0 0.0
        %3768 = vmatpush1.xpose.msra.mxu0 0.0
        %3769 = vmatprep.subr.mxu0 0.0
        %3770 = vmatpush1.xpose.msra.mxu0 0.0
        %3771 = vmatprep.subr.mxu0 0.0
        %3772 = vmatpush1.xpose.msra.mxu0 0.0
        %3773 = vmatprep.subr.mxu0 0.0
        %3774 = vmatpush1.xpose.msra.mxu0 0.0
        %3775 = vmatprep.subr.mxu0 0.0
        %3776 = vmatpush1.xpose.msra.mxu0 0.0
        %3777 = vmatprep.subr.mxu0 0.0
        %3778 = vmatpush1.xpose.msra.mxu0 0.0
        %3779 = vmatprep.subr.mxu0 0.0
        %3780 = vmatpush1.xpose.msra.mxu0 0.0
        %3781 = vmatprep.mubr.f32.mxu0 0.0
        %3782 = vmatmul.mubr.f32.gmra.mrb[0].mxu0 %v3708
        %v3783 = vpop.f32.mrb[0].mxu0
        %v3784 = vadd.f32 0.0, %v3783
        %v3785 = vpop.f32.mrb[0].mxu0
        %3786 = vmatprep.mubr.f32.mxu0 0.0
        %3787 = vmatmul.mubr.f32.gmra.mrb[0].mxu0 %v3711
        %v3788 = vpop.f32.mrb[0].mxu0
        %v3789 = vadd.f32 0.0, %v3788
        %v3790 = vpop.f32.mrb[0].mxu0
        %3791 = vdwg.mxu0
        %v3792 = vmul.f32 %v3784, 0.35355338
        %v3793 = vmul.f32 %v3789, 0.35355338
        %v3794 = vadd.f32 %v3792, %v549
        %v3795 = vadd.f32 %v3793, %v549
        %v3796 = vsel %vm875, %v3794, -inf
        %3797 = vmax.xlane.f32.xlu0 %v3796
        %v3798 = vpop.xlane.xlu0 %3797
        %v3799 = vsel %vm875, %v3795, -inf
        %3800 = vmax.xlane.f32.xlu0 %v3799
        %v3801 = vpop.xlane.xlu0 %3800
        %v3802 = vsub.f32 %v3794, %v3798
        %v3803 = vsub.f32 %v3795, %v3801
        %v3804 = vmul.f32 %v3802, 1.442695
        %v3805 = vpow.pop %v3804
        %v3806 = vmul.f32 %v3803, 1.442695
        %v3807 = vpow.pop %v3806
        %v3808 = vsel %vm875, %v3805, 0.0
        %3809 = vadd.xlane.f32.xlu0 %v3808
        %v3810 = vpop.xlane.xlu0 %3809
        %v3811 = vsel %vm875, %v3807, 0.0
        %3812 = vadd.xlane.f32.xlu0 %v3811
        %v3813 = vpop.xlane.xlu0 %3812
        %v3814 = vrcp.pop %v3810
        %v3815 = vrcp.pop %v3813
        %v3816 = vmul.f32 %v3805, %v3814
        %v3817 = vmul.f32 %v3807, %v3815
        %v3819 = vsel %vm875, %v3816, 0
        %v3822 = vsel %vm875, %v3817, 0
        %3824 = vmatprep.subr.mxu0 0.0
        %3825 = vmatpush1.msra.mxu0 %v3697
        %3826 = vmatprep.subr.mxu0 0.0
        %3827 = vmatpush1.msra.mxu0 %v3700
        %3828 = vmatprep.subr.mxu0 0.0
        %3829 = vmatpush1.msra.mxu0 0.0
        %3830 = vmatprep.subr.mxu0 0.0
        %3831 = vmatpush1.msra.mxu0 0.0
        %3832 = vmatprep.subr.mxu0 0.0
        %3833 = vmatpush1.msra.mxu0 0.0
        %3834 = vmatprep.subr.mxu0 0.0
        %3835 = vmatpush1.msra.mxu0 0.0
        %3836 = vmatprep.subr.mxu0 0.0
        %3837 = vmatpush1.msra.mxu0 0.0
        %3838 = vmatprep.subr.mxu0 0.0
        %3839 = vmatpush1.msra.mxu0 0.0
        %3840 = vmatprep.subr.mxu0 0.0
        %3841 = vmatpush1.msra.mxu0 0.0
        %3842 = vmatprep.subr.mxu0 0.0
        %3843 = vmatpush1.msra.mxu0 0.0
        %3844 = vmatprep.subr.mxu0 0.0
        %3845 = vmatpush1.msra.mxu0 0.0
        %3846 = vmatprep.subr.mxu0 0.0
        %3847 = vmatpush1.msra.mxu0 0.0
        %3848 = vmatprep.subr.mxu0 0.0
        %3849 = vmatpush1.msra.mxu0 0.0
        %3850 = vmatprep.subr.mxu0 0.0
        %3851 = vmatpush1.msra.mxu0 0.0
        %3852 = vmatprep.subr.mxu0 0.0
        %3853 = vmatpush1.msra.mxu0 0.0
        %3854 = vmatprep.subr.mxu0 0.0
        %3855 = vmatpush1.msra.mxu0 0.0
        %3856 = vmatprep.subr.mxu0 0.0
        %3857 = vmatpush1.msra.mxu0 0.0
        %3858 = vmatprep.subr.mxu0 0.0
        %3859 = vmatpush1.msra.mxu0 0.0
        %3860 = vmatprep.subr.mxu0 0.0
        %3861 = vmatpush1.msra.mxu0 0.0
        %3862 = vmatprep.subr.mxu0 0.0
        %3863 = vmatpush1.msra.mxu0 0.0
        %3864 = vmatprep.subr.mxu0 0.0
        %3865 = vmatpush1.msra.mxu0 0.0
        %3866 = vmatprep.subr.mxu0 0.0
        %3867 = vmatpush1.msra.mxu0 0.0
        %3868 = vmatprep.subr.mxu0 0.0
        %3869 = vmatpush1.msra.mxu0 0.0
        %3870 = vmatprep.subr.mxu0 0.0
        %3871 = vmatpush1.msra.mxu0 0.0
        %3872 = vmatprep.subr.mxu0 0.0
        %3873 = vmatpush1.msra.mxu0 0.0
        %3874 = vmatprep.subr.mxu0 0.0
        %3875 = vmatpush1.msra.mxu0 0.0
        %3876 = vmatprep.subr.mxu0 0.0
        %3877 = vmatpush1.msra.mxu0 0.0
        %3878 = vmatprep.subr.mxu0 0.0
        %3879 = vmatpush1.msra.mxu0 0.0
        %3880 = vmatprep.subr.mxu0 0.0
        %3881 = vmatpush1.msra.mxu0 0.0
        %3882 = vmatprep.subr.mxu0 0.0
        %3883 = vmatpush1.msra.mxu0 0.0
        %3884 = vmatprep.subr.mxu0 0.0
        %3885 = vmatpush1.msra.mxu0 0.0
        %3886 = vmatprep.subr.mxu0 0.0
        %3887 = vmatpush1.msra.mxu0 0.0
        %3888 = vmatprep.mubr.f32.mxu0 0.0
        %3889 = vmatmul.mubr.f32.gmra.mrb[0].mxu0 %v3819
        %v3890 = vpop.f32.mrb[0].mxu0
        %v3891 = vadd.f32 0.0, %v3890
        %v3892 = vpop.f32.mrb[0].mxu0
        %3893 = vmatprep.mubr.f32.mxu0 0.0
        %3894 = vmatmul.mubr.f32.gmra.mrb[0].mxu0 %v3822
        %v3895 = vpop.f32.mrb[0].mxu0
        %v3896 = vadd.f32 0.0, %v3895
        %v3897 = vpop.f32.mrb[0].mxu0
        %3898 = vdwg.mxu0
        %v3899 = vpack.c.bf16 %v3896, %v3891
        %v3900 = vld [vmem:[%s2398 + $0x1c] sm:$0xf]
        %v3902 = vsel %vm783, %v3899, 0
        %v3905 = vsel %vm1308, %v3900, 0
        %3907 = vmatprep.subr.bf16.mxu0 0
        %3908 = vmatpush1.bf16.msra.mxu0 %v3905
        %3909 = vmatprep.subr.bf16.mxu0 0
        %3910 = vmatpush1.bf16.msra.mxu0 0
        %3911 = vmatprep.subr.bf16.mxu0 0
        %3912 = vmatpush1.bf16.msra.mxu0 0
        %3913 = vmatprep.subr.bf16.mxu0 0
        %3914 = vmatpush1.bf16.msra.mxu0 0
        %3915 = vmatprep.subr.bf16.mxu0 0
        %3916 = vmatpush1.bf16.msra.mxu0 0
        %3917 = vmatprep.subr.bf16.mxu0 0
        %3918 = vmatpush1.bf16.msra.mxu0 0
        %3919 = vmatprep.subr.bf16.mxu0 0
        %3920 = vmatpush1.bf16.msra.mxu0 0
        %3921 = vmatprep.subr.bf16.mxu0 0
        %3922 = vmatpush1.bf16.msra.mxu0 0
        %3923 = vmatprep.subr.bf16.mxu0 0
        %3924 = vmatpush1.bf16.msra.mxu0 0
        %3925 = vmatprep.subr.bf16.mxu0 0
        %3926 = vmatpush1.bf16.msra.mxu0 0
        %3927 = vmatprep.subr.bf16.mxu0 0
        %3928 = vmatpush1.bf16.msra.mxu0 0
        %3929 = vmatprep.subr.bf16.mxu0 0
        %3930 = vmatpush1.bf16.msra.mxu0 0
        %3931 = vmatprep.subr.bf16.mxu0 0
        %3932 = vmatpush1.bf16.msra.mxu0 0
        %3933 = vmatprep.subr.bf16.mxu0 0
        %3934 = vmatpush1.bf16.msra.mxu0 0
        %3935 = vmatprep.subr.bf16.mxu0 0
        %3936 = vmatpush1.bf16.msra.mxu0 0
        %3937 = vmatprep.subr.bf16.mxu0 0
        %3938 = vmatpush1.bf16.msra.mxu0 0
        %3939 = vmatprep.mubr.bf16.mxu0 0
        %3940 = vmatmul.mubr.bf16.gmra.mrb[0].mxu0 %v3902
        %v3941 = vpop.f32.mrb[0].mxu0
        %v3942 = vadd.f32 0.0, %v3941
        %v3943 = vpop.f32.mrb[0].mxu0
        %v3944 = vpop.f32.mrb[0].mxu0
        %v3945 = vadd.f32 0.0, %v3944
        %v3946 = vpop.f32.mrb[0].mxu0
        %3947 = vdwg.mxu0
        %v3948 = vadd.f32 %v3575, %v3942
        %v3949 = vadd.f32 %v3576, %v3945
        %v3950 = vadd.f32 %v2354, %v3948
        %v3951 = vadd.f32 %v2355, %v3949
        %v3952 = vld [vmem:[%s2356 + $0x3] sm:$0x1]
        %v3953 = vlaneseq
        %v3954 = vshrl.u32 %v3953, 7
        %v3955 = vsub.s32 0, %v3954
        %v3956 = vrot.slane %v3952, %v3955
        %v3957 = vadd.f32 %v3950, %v3956
        %v3958 = vadd.f32 %v3951, %v3956
        %v3959 = vld [vmem:[%s2356 + $0x4] sm:$0x1]
        %v3960 = vld [vmem:[%s2356 + $0x5] sm:$0x1]
        %v3961 = vsel %vm552, %v3957, 0.0
        %3962 = vadd.xlane.f32.xlu0 %v3961
        %v3963 = vpop.xlane.xlu0 %3962
        %v3964 = vsel %vm552, %v3958, 0.0
        %3965 = vadd.xlane.f32.xlu0 %v3964
        %v3966 = vpop.xlane.xlu0 %3965
        %v3967 = vmul.f32 %v3963, %v559
        %v3968 = vmul.f32 %v3966, %v559
        %v3969 = vsub.f32 %v3957, %v3967
        %v3970 = vsub.f32 %v3958, %v3968
        %v3971 = vmul.f32 %v3969, %v3969
        %v3972 = vmul.f32 %v3970, %v3970
        %v3973 = vsel %vm552, %v3971, 0.0
        %3974 = vadd.xlane.f32.xlu0 %v3973
        %v3975 = vpop.xlane.xlu0 %3974
        %v3976 = vsel %vm552, %v3972, 0.0
        %3977 = vadd.xlane.f32.xlu0 %v3976
        %v3978 = vpop.xlane.xlu0 %3977
        %v3979 = vmul.f32 %v3975, %v559
        %v3980 = vmul.f32 %v3978, %v559
        %v3981 = vadd.f32 %v3979, 1e-06
        %v3982 = vadd.f32 %v3980, 1e-06
        %v3983 = vrsqrt.pop %v3981
        %v3984 = vrsqrt.pop %v3982
        %v3985 = vmul.f32 %v3969, %v3983
        %v3986 = vmul.f32 %v3970, %v3984
        %v3987 = vlaneseq
        %v3988 = vshrl.u32 %v3987, 7
        %v3989 = vsub.s32 0, %v3988
        %v3990 = vrot.slane %v3959, %v3989
        %v3991 = vmul.f32 %v3985, %v3990
        %v3992 = vmul.f32 %v3986, %v3990
        %v3993 = vlaneseq
        %v3994 = vshrl.u32 %v3993, 7
        %v3995 = vsub.s32 0, %v3994
        %v3996 = vrot.slane %v3960, %v3995
        %v3997 = vadd.f32 %v3991, %v3996
        %v3998 = vadd.f32 %v3992, %v3996
        %v3999 = vpack.c.bf16 %v3998, %v3997
        %v4000 = vld [vmem:[%s2398 + $0x20] sm:$0xf]
        %v4001 = vld [vmem:[%s2398 + $0x24] sm:$0xf]
        %v4002 = vld [vmem:[%s2398 + $0x28] sm:$0xf]
        %v4003 = vld [vmem:[%s2398 + $0x2c] sm:$0xf]
        %v4004 = vld [vmem:[%s2356 + $0x6] sm:$0x1]
        %v4005 = vlaneseq
        %v4006 = vshrl.u32 %v4005, 7
        %v4007 = vsub.s32 0, %v4006
        %v4008 = vrot.slane %v4004, %v4007
        %v4013 = vunpack.c.l.b16 %v4000
        %v4014 = vunpack.c.l.b16 %v4001
        %v4015 = vunpack.c.l.b16 %v4002
        %v4016 = vunpack.c.l.b16 %v4003
        %v4017 = vpack.c.b16 %v4014, %v4013
        %v4018 = vpack.c.b16 %v4016, %v4015
        %v4022 = vsel %vm552, %v3999, 0
        %4024 = vmatprep.subr.bf16.mxu0 0
        %4025 = vmatpush1.bf16.msra.mxu0 %v4017
        %4026 = vmatprep.subr.bf16.mxu0 0
        %4027 = vmatpush1.bf16.msra.mxu0 %v4018
        %4028 = vmatprep.subr.bf16.mxu0 0
        %4029 = vmatpush1.bf16.msra.mxu0 0
        %4030 = vmatprep.subr.bf16.mxu0 0
        %4031 = vmatpush1.bf16.msra.mxu0 0
        %4032 = vmatprep.subr.bf16.mxu0 0
        %4033 = vmatpush1.bf16.msra.mxu0 0
        %4034 = vmatprep.subr.bf16.mxu0 0
        %4035 = vmatpush1.bf16.msra.mxu0 0
        %4036 = vmatprep.subr.bf16.mxu0 0
        %4037 = vmatpush1.bf16.msra.mxu0 0
        %4038 = vmatprep.subr.bf16.mxu0 0
        %4039 = vmatpush1.bf16.msra.mxu0 0
        %4040 = vmatprep.subr.bf16.mxu0 0
        %4041 = vmatpush1.bf16.msra.mxu0 0
        %4042 = vmatprep.subr.bf16.mxu0 0
        %4043 = vmatpush1.bf16.msra.mxu0 0
        %4044 = vmatprep.subr.bf16.mxu0 0
        %4045 = vmatpush1.bf16.msra.mxu0 0
        %4046 = vmatprep.subr.bf16.mxu0 0
        %4047 = vmatpush1.bf16.msra.mxu0 0
        %4048 = vmatprep.subr.bf16.mxu0 0
        %4049 = vmatpush1.bf16.msra.mxu0 0
        %4050 = vmatprep.subr.bf16.mxu0 0
        %4051 = vmatpush1.bf16.msra.mxu0 0
        %4052 = vmatprep.subr.bf16.mxu0 0
        %4053 = vmatpush1.bf16.msra.mxu0 0
        %4054 = vmatprep.subr.bf16.mxu0 0
        %4055 = vmatpush1.bf16.msra.mxu0 0
        %4056 = vmatprep.mubr.bf16.mxu0 0
        %4057 = vmatmul.mubr.bf16.gmra.mrb[0].mxu0 %v4022
        %v4058 = vpop.f32.mrb[0].mxu0
        %v4059 = vadd.f32 %v4008, %v4058
        %v4060 = vpop.f32.mrb[0].mxu0
        %v4061 = vpop.f32.mrb[0].mxu0
        %v4062 = vadd.f32 %v4008, %v4061
        %v4063 = vpop.f32.mrb[0].mxu0
        %4064 = vdwg.mxu0
        %v4065 = vmul.f32 %v4059, 0.5
        %v4066 = vmul.f32 %v4062, 0.5
        %v4067 = vmul.f32 %v4059, 0.70710677
        %v4068 = vmul.f32 %v4062, 0.70710677
        %v4069 = verf.f32.pop %v4067
        %v4070 = verf.f32.pop %v4068
        %v4071 = vadd.f32 %v4069, 1.0
        %v4072 = vadd.f32 %v4070, 1.0
        %v4073 = vmul.f32 %v4065, %v4071
        %v4074 = vmul.f32 %v4066, %v4072
        %v4075 = vpack.c.bf16 %v4074, %v4073
        %v4076 = vld [vmem:[%s2398 + $0x30] sm:$0xf]
        %v4077 = vld [vmem:[%s2398 + $0x34] sm:$0xf]
        %v4078 = vld [vmem:[%s2398 + $0x38] sm:$0xf]
        %v4079 = vld [vmem:[%s2398 + $0x3c] sm:$0xf]
        %v4080 = vld [vmem:[%s2398 + $0x40] sm:$0xf]
        %v4081 = vld [vmem:[%s2398 + $0x44] sm:$0xf]
        %v4082 = vld [vmem:[%s2398 + $0x48] sm:$0xf]
        %v4083 = vld [vmem:[%s2398 + $0x4c] sm:$0xf]
        %v4084 = vld [vmem:[%s2356 + $0x7] sm:$0x1]
        %v4085 = vlaneseq
        %v4086 = vshrl.u32 %v4085, 7
        %v4087 = vsub.s32 0, %v4086
        %v4088 = vrot.slane %v4084, %v4087
        %v4097 = vunpack.c.l.b16 %v4076
        %v4098 = vunpack.c.l.b16 %v4077
        %v4099 = vunpack.c.l.b16 %v4078
        %v4100 = vunpack.c.l.b16 %v4079
        %v4101 = vunpack.c.l.b16 %v4080
        %v4102 = vunpack.c.l.b16 %v4081
        %v4103 = vunpack.c.l.b16 %v4082
        %v4104 = vunpack.c.l.b16 %v4083
        %v4105 = vpack.c.b16 %v4098, %v4097
        %v4106 = vpack.c.b16 %v4100, %v4099
        %v4107 = vpack.c.b16 %v4102, %v4101
        %v4108 = vpack.c.b16 %v4104, %v4103
        %v4114 = vsel %vm2309, %v4075, 0
        %4116 = vmatprep.subr.bf16.mxu0 0
        %4117 = vmatpush1.bf16.msra.mxu0 %v4105
        %4118 = vmatprep.subr.bf16.mxu0 0
        %4119 = vmatpush1.bf16.msra.mxu0 %v4106
        %4120 = vmatprep.subr.bf16.mxu0 0
        %4121 = vmatpush1.bf16.msra.mxu0 %v4107
        %4122 = vmatprep.subr.bf16.mxu0 0
        %4123 = vmatpush1.bf16.msra.mxu0 %v4108
        %4124 = vmatprep.subr.bf16.mxu0 0
        %4125 = vmatpush1.bf16.msra.mxu0 0
        %4126 = vmatprep.subr.bf16.mxu0 0
        %4127 = vmatpush1.bf16.msra.mxu0 0
        %4128 = vmatprep.subr.bf16.mxu0 0
        %4129 = vmatpush1.bf16.msra.mxu0 0
        %4130 = vmatprep.subr.bf16.mxu0 0
        %4131 = vmatpush1.bf16.msra.mxu0 0
        %4132 = vmatprep.subr.bf16.mxu0 0
        %4133 = vmatpush1.bf16.msra.mxu0 0
        %4134 = vmatprep.subr.bf16.mxu0 0
        %4135 = vmatpush1.bf16.msra.mxu0 0
        %4136 = vmatprep.subr.bf16.mxu0 0
        %4137 = vmatpush1.bf16.msra.mxu0 0
        %4138 = vmatprep.subr.bf16.mxu0 0
        %4139 = vmatpush1.bf16.msra.mxu0 0
        %4140 = vmatprep.subr.bf16.mxu0 0
        %4141 = vmatpush1.bf16.msra.mxu0 0
        %4142 = vmatprep.subr.bf16.mxu0 0
        %4143 = vmatpush1.bf16.msra.mxu0 0
        %4144 = vmatprep.subr.bf16.mxu0 0
        %4145 = vmatpush1.bf16.msra.mxu0 0
        %4146 = vmatprep.subr.bf16.mxu0 0
        %4147 = vmatpush1.bf16.msra.mxu0 0
        %4148 = vmatprep.mubr.bf16.mxu0 0
        %4149 = vmatmul.mubr.bf16.gmra.mrb[0].mxu0 %v4114
        %v4150 = vpop.f32.mrb[0].mxu0
        %v4151 = vadd.f32 %v4088, %v4150
        %v4152 = vpop.f32.mrb[0].mxu0
        %v4153 = vpop.f32.mrb[0].mxu0
        %v4154 = vadd.f32 %v4088, %v4153
        %v4155 = vpop.f32.mrb[0].mxu0
        %4156 = vdwg.mxu0
        %v4157 = vadd.f32 %v3957, %v4151
        %v4158 = vadd.f32 %v3958, %v4154
        %v4159 = vld [vmem:[%s5 + $0x30] sm:$0x1]
        %v4160 = vld [vmem:[%s5 + $0x31] sm:$0x1]
        %v4161 = vsel %vm552, %v4157, 0.0
        %4162 = vadd.xlane.f32.xlu0 %v4161
        %v4163 = vpop.xlane.xlu0 %4162
        %v4164 = vsel %vm552, %v4158, 0.0
        %4165 = vadd.xlane.f32.xlu0 %v4164
        %v4166 = vpop.xlane.xlu0 %4165
        %v4167 = vmul.f32 %v4163, %v559
        %v4168 = vmul.f32 %v4166, %v559
        %v4169 = vsub.f32 %v4157, %v4167
        %v4170 = vsub.f32 %v4158, %v4168
        %v4171 = vmul.f32 %v4169, %v4169
        %v4172 = vmul.f32 %v4170, %v4170
        %v4173 = vsel %vm552, %v4171, 0.0
        %4174 = vadd.xlane.f32.xlu0 %v4173
        %v4175 = vpop.xlane.xlu0 %4174
        %v4176 = vsel %vm552, %v4172, 0.0
        %4177 = vadd.xlane.f32.xlu0 %v4176
        %v4178 = vpop.xlane.xlu0 %4177
        %v4179 = vmul.f32 %v4175, %v559
        %v4180 = vmul.f32 %v4178, %v559
        %v4181 = vadd.f32 %v4179, 1e-06
        %v4182 = vadd.f32 %v4180, 1e-06
        %v4183 = vrsqrt.pop %v4181
        %v4184 = vrsqrt.pop %v4182
        %v4185 = vmul.f32 %v4169, %v4183
        %v4186 = vmul.f32 %v4170, %v4184
        %v4187 = vlaneseq
        %v4188 = vshrl.u32 %v4187, 7
        %v4189 = vsub.s32 0, %v4188
        %v4190 = vrot.slane %v4159, %v4189
        %v4191 = vmul.f32 %v4185, %v4190
        %v4192 = vmul.f32 %v4186, %v4190
        %v4193 = vlaneseq
        %v4194 = vshrl.u32 %v4193, 7
        %v4195 = vsub.s32 0, %v4194
        %v4196 = vrot.slane %v4160, %v4195
        %v4197 = vadd.f32 %v4191, %v4196
        %v4198 = vadd.f32 %v4192, %v4196
        %v4199 = vld [vmem:[%s5 + $0x20] sm:$0xff]
        %v4200 = vld [vmem:[%s5 + $0x28] sm:$0xff]
        %v4201 = vld [vmem:[%s5 + $0x10] sm:$0xff]
        %v4202 = vld [vmem:[%s5 + $0x18] sm:$0xff]
        %v4204 = vsel %vm875, %v4199, 0
        %v4207 = vsel %vm875, %v4200, 0
        %4209 = vmatprep.subr.mxu0 0.0
        %4210 = vmatpush1.msra.mxu0 %v4197
        %4211 = vmatprep.subr.mxu0 0.0
        %4212 = vmatpush1.msra.mxu0 %v4198
        %4213 = vmatprep.subr.mxu0 0.0
        %4214 = vmatpush1.msra.mxu0 0.0
        %4215 = vmatprep.subr.mxu0 0.0
        %4216 = vmatpush1.msra.mxu0 0.0
        %4217 = vmatprep.subr.mxu0 0.0
        %4218 = vmatpush1.msra.mxu0 0.0
        %4219 = vmatprep.subr.mxu0 0.0
        %4220 = vmatpush1.msra.mxu0 0.0
        %4221 = vmatprep.subr.mxu0 0.0
        %4222 = vmatpush1.msra.mxu0 0.0
        %4223 = vmatprep.subr.mxu0 0.0
        %4224 = vmatpush1.msra.mxu0 0.0
        %4225 = vmatprep.subr.mxu0 0.0
        %4226 = vmatpush1.msra.mxu0 0.0
        %4227 = vmatprep.subr.mxu0 0.0
        %4228 = vmatpush1.msra.mxu0 0.0
        %4229 = vmatprep.subr.mxu0 0.0
        %4230 = vmatpush1.msra.mxu0 0.0
        %4231 = vmatprep.subr.mxu0 0.0
        %4232 = vmatpush1.msra.mxu0 0.0
        %4233 = vmatprep.subr.mxu0 0.0
        %4234 = vmatpush1.msra.mxu0 0.0
        %4235 = vmatprep.subr.mxu0 0.0
        %4236 = vmatpush1.msra.mxu0 0.0
        %4237 = vmatprep.subr.mxu0 0.0
        %4238 = vmatpush1.msra.mxu0 0.0
        %4239 = vmatprep.subr.mxu0 0.0
        %4240 = vmatpush1.msra.mxu0 0.0
        %4241 = vmatprep.subr.mxu0 0.0
        %4242 = vmatpush1.msra.mxu0 0.0
        %4243 = vmatprep.subr.mxu0 0.0
        %4244 = vmatpush1.msra.mxu0 0.0
        %4245 = vmatprep.subr.mxu0 0.0
        %4246 = vmatpush1.msra.mxu0 0.0
        %4247 = vmatprep.subr.mxu0 0.0
        %4248 = vmatpush1.msra.mxu0 0.0
        %4249 = vmatprep.subr.mxu0 0.0
        %4250 = vmatpush1.msra.mxu0 0.0
        %4251 = vmatprep.subr.mxu0 0.0
        %4252 = vmatpush1.msra.mxu0 0.0
        %4253 = vmatprep.subr.mxu0 0.0
        %4254 = vmatpush1.msra.mxu0 0.0
        %4255 = vmatprep.subr.mxu0 0.0
        %4256 = vmatpush1.msra.mxu0 0.0
        %4257 = vmatprep.subr.mxu0 0.0
        %4258 = vmatpush1.msra.mxu0 0.0
        %4259 = vmatprep.subr.mxu0 0.0
        %4260 = vmatpush1.msra.mxu0 0.0
        %4261 = vmatprep.subr.mxu0 0.0
        %4262 = vmatpush1.msra.mxu0 0.0
        %4263 = vmatprep.subr.mxu0 0.0
        %4264 = vmatpush1.msra.mxu0 0.0
        %4265 = vmatprep.subr.mxu0 0.0
        %4266 = vmatpush1.msra.mxu0 0.0
        %4267 = vmatprep.subr.mxu0 0.0
        %4268 = vmatpush1.msra.mxu0 0.0
        %4269 = vmatprep.subr.mxu0 0.0
        %4270 = vmatpush1.msra.mxu0 0.0
        %4271 = vmatprep.subr.mxu0 0.0
        %4272 = vmatpush1.msra.mxu0 0.0
        %4273 = vmatprep.mubr.f32.mxu0 0.0
        %4274 = vmatmul.mubr.f32.gmra.mrb[0].mxu0 %v4204
        %v4275 = vpop.f32.mrb[0].mxu0
        %v4276 = vadd.f32 %v4201, %v4275
        %v4277 = vpop.f32.mrb[0].mxu0
        %4278 = vmatprep.mubr.f32.mxu0 0.0
        %4279 = vmatmul.mubr.f32.gmra.mrb[0].mxu0 %v4207
        %v4280 = vpop.f32.mrb[0].mxu0
        %v4281 = vadd.f32 %v4202, %v4280
        %v4282 = vpop.f32.mrb[0].mxu0
        %4283 = vdwg.mxu0
        %vm4284 = vcmp.lt.s32.totalorder %v547, 10
        %v4285 = vsel %vm4284, 0.0, -1e+30
        %s4286 = scalar_lea.vmem %s4, 32
        %v4287 = vld [vmem:[%s4286] sm:$0x1]
        %v4288 = vld [vmem:[%s4286 + $0x1] sm:$0x1]
        %v4289 = vsel %vm552, %v4276, 0.0
        %4290 = vadd.xlane.f32.xlu0 %v4289
        %v4291 = vpop.xlane.xlu0 %4290
        %v4292 = vsel %vm552, %v4281, 0.0
        %4293 = vadd.xlane.f32.xlu0 %v4292
        %v4294 = vpop.xlane.xlu0 %4293
        %v4295 = vmul.f32 %v4291, %v559
        %v4296 = vmul.f32 %v4294, %v559
        %v4297 = vsub.f32 %v4276, %v4295
        %v4298 = vsub.f32 %v4281, %v4296
        %v4299 = vmul.f32 %v4297, %v4297
        %v4300 = vmul.f32 %v4298, %v4298
        %v4301 = vsel %vm552, %v4299, 0.0
        %4302 = vadd.xlane.f32.xlu0 %v4301
        %v4303 = vpop.xlane.xlu0 %4302
        %v4304 = vsel %vm552, %v4300, 0.0
        %4305 = vadd.xlane.f32.xlu0 %v4304
        %v4306 = vpop.xlane.xlu0 %4305
        %v4307 = vmul.f32 %v4303, %v559
        %v4308 = vmul.f32 %v4306, %v559
        %v4309 = vadd.f32 %v4307, 1e-06
        %v4310 = vadd.f32 %v4308, 1e-06
        %v4311 = vrsqrt.pop %v4309
        %v4312 = vrsqrt.pop %v4310
        %v4313 = vmul.f32 %v4297, %v4311
        %v4314 = vmul.f32 %v4298, %v4312
        %v4315 = vlaneseq
        %v4316 = vshrl.u32 %v4315, 7
        %v4317 = vsub.s32 0, %v4316
        %v4318 = vrot.slane %v4287, %v4317
        %v4319 = vmul.f32 %v4313, %v4318
        %v4320 = vmul.f32 %v4314, %v4318
        %v4321 = vlaneseq
        %v4322 = vshrl.u32 %v4321, 7
        %v4323 = vsub.s32 0, %v4322
        %v4324 = vrot.slane %v4288, %v4323
        %v4325 = vadd.f32 %v4319, %v4324
        %v4326 = vadd.f32 %v4320, %v4324
        %v4327 = vpack.c.bf16 %v4326, %v4325
        %s4328 = scalar_lea.vmem %s3, 160
        %v4329 = vld [vmem:[%s4328] sm:$0xf]
        %v4330 = vld [vmem:[%s4328 + $0x4] sm:$0xf]
        %v4331 = vld [vmem:[%s4328 + $0x8] sm:$0xf]
        %v4332 = vld [vmem:[%s4328 + $0xc] sm:$0xf]
        %v4333 = vld [vmem:[%s4286 + $0x2] sm:$0x1]
        %v4334 = vlaneseq
        %v4335 = vshrl.u32 %v4334, 7
        %v4336 = vsub.s32 0, %v4335
        %v4337 = vrot.slane %v4333, %v4336
        %v4342 = vunpack.c.l.b16 %v4329
        %v4343 = vunpack.c.l.b16 %v4330
        %v4344 = vunpack.c.l.b16 %v4331
        %v4345 = vunpack.c.l.b16 %v4332
        %v4346 = vpack.c.b16 %v4343, %v4342
        %v4347 = vpack.c.b16 %v4345, %v4344
        %v4351 = vsel %vm552, %v4327, 0
        %4353 = vmatprep.subr.bf16.mxu0 0
        %4354 = vmatpush1.bf16.msra.mxu0 %v4346
        %4355 = vmatprep.subr.bf16.mxu0 0
        %4356 = vmatpush1.bf16.msra.mxu0 %v4347
        %4357 = vmatprep.subr.bf16.mxu0 0
        %4358 = vmatpush1.bf16.msra.mxu0 0
        %4359 = vmatprep.subr.bf16.mxu0 0
        %4360 = vmatpush1.bf16.msra.mxu0 0
        %4361 = vmatprep.subr.bf16.mxu0 0
        %4362 = vmatpush1.bf16.msra.mxu0 0
        %4363 = vmatprep.subr.bf16.mxu0 0
        %4364 = vmatpush1.bf16.msra.mxu0 0
        %4365 = vmatprep.subr.bf16.mxu0 0
        %4366 = vmatpush1.bf16.msra.mxu0 0
        %4367 = vmatprep.subr.bf16.mxu0 0
        %4368 = vmatpush1.bf16.msra.mxu0 0
        %4369 = vmatprep.subr.bf16.mxu0 0
        %4370 = vmatpush1.bf16.msra.mxu0 0
        %4371 = vmatprep.subr.bf16.mxu0 0
        %4372 = vmatpush1.bf16.msra.mxu0 0
        %4373 = vmatprep.subr.bf16.mxu0 0
        %4374 = vmatpush1.bf16.msra.mxu0 0
        %4375 = vmatprep.subr.bf16.mxu0 0
        %4376 = vmatpush1.bf16.msra.mxu0 0
        %4377 = vmatprep.subr.bf16.mxu0 0
        %4378 = vmatpush1.bf16.msra.mxu0 0
        %4379 = vmatprep.subr.bf16.mxu0 0
        %4380 = vmatpush1.bf16.msra.mxu0 0
        %4381 = vmatprep.subr.bf16.mxu0 0
        %4382 = vmatpush1.bf16.msra.mxu0 0
        %4383 = vmatprep.subr.bf16.mxu0 0
        %4384 = vmatpush1.bf16.msra.mxu0 0
        %4385 = vmatprep.mubr.bf16.mxu0 0
        %4386 = vmatmul.mubr.bf16.gmra.mrb[0].mxu0 %v4351
        %v4387 = vpop.f32.mrb[0].mxu0
        %v4388 = vadd.f32 %v4337, %v4387
        %v4389 = vpop.f32.mrb[0].mxu0
        %v4390 = vpop.f32.mrb[0].mxu0
        %v4391 = vadd.f32 %v4337, %v4390
        %v4392 = vpop.f32.mrb[0].mxu0
        %4393 = vdwg.mxu0
        %s4394 = scalar_lea.vmem %s2, 256
        %v4395 = vld [vmem:[%s4394] sm:$0xf]
        %v4396 = vld [vmem:[%s4394 + $0x4] sm:$0xf]
        %v4397 = vld [vmem:[%s4394 + $0x8] sm:$0xf]
        %v4398 = vld [vmem:[%s4394 + $0xc] sm:$0xf]
        %v4399 = vld [vmem:[%s4286 + $0x8] sm:$0x1]
        %v4400 = vlaneseq
        %v4401 = vshrl.u32 %v4400, 7
        %v4402 = vsub.s32 0, %v4401
        %v4403 = vrot.slane %v4399, %v4402
        %v4408 = vunpack.c.l.b16 %v4395
        %v4409 = vunpack.c.l.b16 %v4396
        %v4410 = vunpack.c.l.b16 %v4397
        %v4411 = vunpack.c.l.b16 %v4398
        %v4412 = vpack.c.b16 %v4409, %v4408
        %v4413 = vpack.c.b16 %v4411, %v4410
        %4416 = vmatprep.subr.bf16.mxu0 0
        %4417 = vmatpush1.bf16.msra.mxu0 %v4412
        %4418 = vmatprep.subr.bf16.mxu0 0
        %4419 = vmatpush1.bf16.msra.mxu0 %v4413
        %4420 = vmatprep.subr.bf16.mxu0 0
        %4421 = vmatpush1.bf16.msra.mxu0 0
        %4422 = vmatprep.subr.bf16.mxu0 0
        %4423 = vmatpush1.bf16.msra.mxu0 0
        %4424 = vmatprep.subr.bf16.mxu0 0
        %4425 = vmatpush1.bf16.msra.mxu0 0
        %4426 = vmatprep.subr.bf16.mxu0 0
        %4427 = vmatpush1.bf16.msra.mxu0 0
        %4428 = vmatprep.subr.bf16.mxu0 0
        %4429 = vmatpush1.bf16.msra.mxu0 0
        %4430 = vmatprep.subr.bf16.mxu0 0
        %4431 = vmatpush1.bf16.msra.mxu0 0
        %4432 = vmatprep.subr.bf16.mxu0 0
        %4433 = vmatpush1.bf16.msra.mxu0 0
        %4434 = vmatprep.subr.bf16.mxu0 0
        %4435 = vmatpush1.bf16.msra.mxu0 0
        %4436 = vmatprep.subr.bf16.mxu0 0
        %4437 = vmatpush1.bf16.msra.mxu0 0
        %4438 = vmatprep.subr.bf16.mxu0 0
        %4439 = vmatpush1.bf16.msra.mxu0 0
        %4440 = vmatprep.subr.bf16.mxu0 0
        %4441 = vmatpush1.bf16.msra.mxu0 0
        %4442 = vmatprep.subr.bf16.mxu0 0
        %4443 = vmatpush1.bf16.msra.mxu0 0
        %4444 = vmatprep.subr.bf16.mxu0 0
        %4445 = vmatpush1.bf16.msra.mxu0 0
        %4446 = vmatprep.subr.bf16.mxu0 0
        %4447 = vmatpush1.bf16.msra.mxu0 0
        %4448 = vmatprep.mubr.bf16.mxu0 0
        %4449 = vmatmul.mubr.bf16.gmra.mrb[0].mxu0 %v4351
        %v4450 = vpop.f32.mrb[0].mxu0
        %v4451 = vadd.f32 %v4403, %v4450
        %v4452 = vpop.f32.mrb[0].mxu0
        %v4453 = vpop.f32.mrb[0].mxu0
        %v4454 = vadd.f32 %v4403, %v4453
        %v4455 = vpop.f32.mrb[0].mxu0
        %4456 = vdwg.mxu0
        %s4457 = scalar_lea.vmem %s2, 320
        %v4458 = vld [vmem:[%s4457] sm:$0xf]
        %v4459 = vld [vmem:[%s4457 + $0x4] sm:$0xf]
        %v4460 = vld [vmem:[%s4457 + $0x8] sm:$0xf]
        %v4461 = vld [vmem:[%s4457 + $0xc] sm:$0xf]
        %v4462 = vld [vmem:[%s4286 + $0xc] sm:$0x1]
        %v4463 = vlaneseq
        %v4464 = vshrl.u32 %v4463, 7
        %v4465 = vsub.s32 0, %v4464
        %v4466 = vrot.slane %v4462, %v4465
        %v4471 = vunpack.c.l.b16 %v4458
        %v4472 = vunpack.c.l.b16 %v4459
        %v4473 = vunpack.c.l.b16 %v4460
        %v4474 = vunpack.c.l.b16 %v4461
        %v4475 = vpack.c.b16 %v4472, %v4471
        %v4476 = vpack.c.b16 %v4474, %v4473
        %4479 = vmatprep.subr.bf16.mxu0 0
        %4480 = vmatpush1.bf16.msra.mxu0 %v4475
        %4481 = vmatprep.subr.bf16.mxu0 0
        %4482 = vmatpush1.bf16.msra.mxu0 %v4476
        %4483 = vmatprep.subr.bf16.mxu0 0
        %4484 = vmatpush1.bf16.msra.mxu0 0
        %4485 = vmatprep.subr.bf16.mxu0 0
        %4486 = vmatpush1.bf16.msra.mxu0 0
        %4487 = vmatprep.subr.bf16.mxu0 0
        %4488 = vmatpush1.bf16.msra.mxu0 0
        %4489 = vmatprep.subr.bf16.mxu0 0
        %4490 = vmatpush1.bf16.msra.mxu0 0
        %4491 = vmatprep.subr.bf16.mxu0 0
        %4492 = vmatpush1.bf16.msra.mxu0 0
        %4493 = vmatprep.subr.bf16.mxu0 0
        %4494 = vmatpush1.bf16.msra.mxu0 0
        %4495 = vmatprep.subr.bf16.mxu0 0
        %4496 = vmatpush1.bf16.msra.mxu0 0
        %4497 = vmatprep.subr.bf16.mxu0 0
        %4498 = vmatpush1.bf16.msra.mxu0 0
        %4499 = vmatprep.subr.bf16.mxu0 0
        %4500 = vmatpush1.bf16.msra.mxu0 0
        %4501 = vmatprep.subr.bf16.mxu0 0
        %4502 = vmatpush1.bf16.msra.mxu0 0
        %4503 = vmatprep.subr.bf16.mxu0 0
        %4504 = vmatpush1.bf16.msra.mxu0 0
        %4505 = vmatprep.subr.bf16.mxu0 0
        %4506 = vmatpush1.bf16.msra.mxu0 0
        %4507 = vmatprep.subr.bf16.mxu0 0
        %4508 = vmatpush1.bf16.msra.mxu0 0
        %4509 = vmatprep.subr.bf16.mxu0 0
        %4510 = vmatpush1.bf16.msra.mxu0 0
        %4511 = vmatprep.mubr.bf16.mxu0 0
        %4512 = vmatmul.mubr.bf16.gmra.mrb[0].mxu0 %v4351
        %v4513 = vpop.f32.mrb[0].mxu0
        %v4514 = vadd.f32 %v4466, %v4513
        %v4515 = vpop.f32.mrb[0].mxu0
        %v4516 = vpop.f32.mrb[0].mxu0
        %v4517 = vadd.f32 %v4466, %v4516
        %v4518 = vpop.f32.mrb[0].mxu0
        %4519 = vdwg.mxu0
        %v4521 = vsel %vm783, %v4451, 0
        %v4524 = vsel %vm783, %v4454, 0
        %v4527 = vsel %vm783, %v4388, 0
        %v4530 = vsel %vm783, %v4391, 0
        %4532 = vmatprep.subr.mxu0 0.0
        %4533 = vmatpush1.xpose.msra.mxu0 %v4527
        %4534 = vmatprep.subr.mxu0 0.0
        %4535 = vmatpush1.xpose.msra.mxu0 %v4530
        %4536 = vmatprep.subr.mxu0 0.0
        %4537 = vmatpush1.xpose.msra.mxu0 0.0
        %4538 = vmatprep.subr.mxu0 0.0
        %4539 = vmatpush1.xpose.msra.mxu0 0.0
        %4540 = vmatprep.subr.mxu0 0.0
        %4541 = vmatpush1.xpose.msra.mxu0 0.0
        %4542 = vmatprep.subr.mxu0 0.0
        %4543 = vmatpush1.xpose.msra.mxu0 0.0
        %4544 = vmatprep.subr.mxu0 0.0
        %4545 = vmatpush1.xpose.msra.mxu0 0.0
        %4546 = vmatprep.subr.mxu0 0.0
        %4547 = vmatpush1.xpose.msra.mxu0 0.0
        %4548 = vmatprep.subr.mxu0 0.0
        %4549 = vmatpush1.xpose.msra.mxu0 0.0
        %4550 = vmatprep.subr.mxu0 0.0
        %4551 = vmatpush1.xpose.msra.mxu0 0.0
        %4552 = vmatprep.subr.mxu0 0.0
        %4553 = vmatpush1.xpose.msra.mxu0 0.0
        %4554 = vmatprep.subr.mxu0 0.0
        %4555 = vmatpush1.xpose.msra.mxu0 0.0
        %4556 = vmatprep.subr.mxu0 0.0
        %4557 = vmatpush1.xpose.msra.mxu0 0.0
        %4558 = vmatprep.subr.mxu0 0.0
        %4559 = vmatpush1.xpose.msra.mxu0 0.0
        %4560 = vmatprep.subr.mxu0 0.0
        %4561 = vmatpush1.xpose.msra.mxu0 0.0
        %4562 = vmatprep.subr.mxu0 0.0
        %4563 = vmatpush1.xpose.msra.mxu0 0.0
        %4564 = vmatprep.subr.mxu0 0.0
        %4565 = vmatpush1.xpose.msra.mxu0 0.0
        %4566 = vmatprep.subr.mxu0 0.0
        %4567 = vmatpush1.xpose.msra.mxu0 0.0
        %4568 = vmatprep.subr.mxu0 0.0
        %4569 = vmatpush1.xpose.msra.mxu0 0.0
        %4570 = vmatprep.subr.mxu0 0.0
        %4571 = vmatpush1.xpose.msra.mxu0 0.0
        %4572 = vmatprep.subr.mxu0 0.0
        %4573 = vmatpush1.xpose.msra.mxu0 0.0
        %4574 = vmatprep.subr.mxu0 0.0
        %4575 = vmatpush1.xpose.msra.mxu0 0.0
        %4576 = vmatprep.subr.mxu0 0.0
        %4577 = vmatpush1.xpose.msra.mxu0 0.0
        %4578 = vmatprep.subr.mxu0 0.0
        %4579 = vmatpush1.xpose.msra.mxu0 0.0
        %4580 = vmatprep.subr.mxu0 0.0
        %4581 = vmatpush1.xpose.msra.mxu0 0.0
        %4582 = vmatprep.subr.mxu0 0.0
        %4583 = vmatpush1.xpose.msra.mxu0 0.0
        %4584 = vmatprep.subr.mxu0 0.0
        %4585 = vmatpush1.xpose.msra.mxu0 0.0
        %4586 = vmatprep.subr.mxu0 0.0
        %4587 = vmatpush1.xpose.msra.mxu0 0.0
        %4588 = vmatprep.subr.mxu0 0.0
        %4589 = vmatpush1.xpose.msra.mxu0 0.0
        %4590 = vmatprep.subr.mxu0 0.0
        %4591 = vmatpush1.xpose.msra.mxu0 0.0
        %4592 = vmatprep.subr.mxu0 0.0
        %4593 = vmatpush1.xpose.msra.mxu0 0.0
        %4594 = vmatprep.subr.mxu0 0.0
        %4595 = vmatpush1.xpose.msra.mxu0 0.0
        %4596 = vmatprep.mubr.f32.mxu0 0.0
        %4597 = vmatmul.mubr.f32.gmra.mrb[0].mxu0 %v4521
        %v4598 = vpop.f32.mrb[0].mxu0
        %v4599 = vadd.f32 0.0, %v4598
        %v4600 = vpop.f32.mrb[0].mxu0
        %4601 = vmatprep.mubr.f32.mxu0 0.0
        %4602 = vmatmul.mubr.f32.gmra.mrb[0].mxu0 %v4524
        %v4603 = vpop.f32.mrb[0].mxu0
        %v4604 = vadd.f32 0.0, %v4603
        %v4605 = vpop.f32.mrb[0].mxu0
        %4606 = vdwg.mxu0
        %v4607 = vmul.f32 %v4599, 0.35355338
        %v4608 = vmul.f32 %v4604, 0.35355338
        %v4609 = vadd.f32 %v4607, %v4285
        %v4610 = vadd.f32 %v4608, %v4285
        %v4611 = vsel %vm875, %v4609, -inf
        %4612 = vmax.xlane.f32.xlu0 %v4611
        %v4613 = vpop.xlane.xlu0 %4612
        %v4614 = vsel %vm875, %v4610, -inf
        %4615 = vmax.xlane.f32.xlu0 %v4614
        %v4616 = vpop.xlane.xlu0 %4615
        %v4617 = vsub.f32 %v4609, %v4613
        %v4618 = vsub.f32 %v4610, %v4616
        %v4619 = vmul.f32 %v4617, 1.442695
        %v4620 = vpow.pop %v4619
        %v4621 = vmul.f32 %v4618, 1.442695
        %v4622 = vpow.pop %v4621
        %v4623 = vsel %vm875, %v4620, 0.0
        %4624 = vadd.xlane.f32.xlu0 %v4623
        %v4625 = vpop.xlane.xlu0 %4624
        %v4626 = vsel %vm875, %v4622, 0.0
        %4627 = vadd.xlane.f32.xlu0 %v4626
        %v4628 = vpop.xlane.xlu0 %4627
        %v4629 = vrcp.pop %v4625
        %v4630 = vrcp.pop %v4628
        %v4631 = vmul.f32 %v4620, %v4629
        %v4632 = vmul.f32 %v4622, %v4630
        %v4634 = vsel %vm875, %v4631, 0
        %v4637 = vsel %vm875, %v4632, 0
        %4639 = vmatprep.subr.mxu0 0.0
        %4640 = vmatpush1.msra.mxu0 %v4514
        %4641 = vmatprep.subr.mxu0 0.0
        %4642 = vmatpush1.msra.mxu0 %v4517
        %4643 = vmatprep.subr.mxu0 0.0
        %4644 = vmatpush1.msra.mxu0 0.0
        %4645 = vmatprep.subr.mxu0 0.0
        %4646 = vmatpush1.msra.mxu0 0.0
        %4647 = vmatprep.subr.mxu0 0.0
        %4648 = vmatpush1.msra.mxu0 0.0
        %4649 = vmatprep.subr.mxu0 0.0
        %4650 = vmatpush1.msra.mxu0 0.0
        %4651 = vmatprep.subr.mxu0 0.0
        %4652 = vmatpush1.msra.mxu0 0.0
        %4653 = vmatprep.subr.mxu0 0.0
        %4654 = vmatpush1.msra.mxu0 0.0
        %4655 = vmatprep.subr.mxu0 0.0
        %4656 = vmatpush1.msra.mxu0 0.0
        %4657 = vmatprep.subr.mxu0 0.0
        %4658 = vmatpush1.msra.mxu0 0.0
        %4659 = vmatprep.subr.mxu0 0.0
        %4660 = vmatpush1.msra.mxu0 0.0
        %4661 = vmatprep.subr.mxu0 0.0
        %4662 = vmatpush1.msra.mxu0 0.0
        %4663 = vmatprep.subr.mxu0 0.0
        %4664 = vmatpush1.msra.mxu0 0.0
        %4665 = vmatprep.subr.mxu0 0.0
        %4666 = vmatpush1.msra.mxu0 0.0
        %4667 = vmatprep.subr.mxu0 0.0
        %4668 = vmatpush1.msra.mxu0 0.0
        %4669 = vmatprep.subr.mxu0 0.0
        %4670 = vmatpush1.msra.mxu0 0.0
        %4671 = vmatprep.subr.mxu0 0.0
        %4672 = vmatpush1.msra.mxu0 0.0
        %4673 = vmatprep.subr.mxu0 0.0
        %4674 = vmatpush1.msra.mxu0 0.0
        %4675 = vmatprep.subr.mxu0 0.0
        %4676 = vmatpush1.msra.mxu0 0.0
        %4677 = vmatprep.subr.mxu0 0.0
        %4678 = vmatpush1.msra.mxu0 0.0
        %4679 = vmatprep.subr.mxu0 0.0
        %4680 = vmatpush1.msra.mxu0 0.0
        %4681 = vmatprep.subr.mxu0 0.0
        %4682 = vmatpush1.msra.mxu0 0.0
        %4683 = vmatprep.subr.mxu0 0.0
        %4684 = vmatpush1.msra.mxu0 0.0
        %4685 = vmatprep.subr.mxu0 0.0
        %4686 = vmatpush1.msra.mxu0 0.0
        %4687 = vmatprep.subr.mxu0 0.0
        %4688 = vmatpush1.msra.mxu0 0.0
        %4689 = vmatprep.subr.mxu0 0.0
        %4690 = vmatpush1.msra.mxu0 0.0
        %4691 = vmatprep.subr.mxu0 0.0
        %4692 = vmatpush1.msra.mxu0 0.0
        %4693 = vmatprep.subr.mxu0 0.0
        %4694 = vmatpush1.msra.mxu0 0.0
        %4695 = vmatprep.subr.mxu0 0.0
        %4696 = vmatpush1.msra.mxu0 0.0
        %4697 = vmatprep.subr.mxu0 0.0
        %4698 = vmatpush1.msra.mxu0 0.0
        %4699 = vmatprep.subr.mxu0 0.0
        %4700 = vmatpush1.msra.mxu0 0.0
        %4701 = vmatprep.subr.mxu0 0.0
        %4702 = vmatpush1.msra.mxu0 0.0
        %4703 = vmatprep.mubr.f32.mxu0 0.0
        %4704 = vmatmul.mubr.f32.gmra.mrb[0].mxu0 %v4634
        %v4705 = vpop.f32.mrb[0].mxu0
        %v4706 = vadd.f32 0.0, %v4705
        %v4707 = vpop.f32.mrb[0].mxu0
        %4708 = vmatprep.mubr.f32.mxu0 0.0
        %4709 = vmatmul.mubr.f32.gmra.mrb[0].mxu0 %v4637
        %v4710 = vpop.f32.mrb[0].mxu0
        %v4711 = vadd.f32 0.0, %v4710
        %v4712 = vpop.f32.mrb[0].mxu0
        %4713 = vdwg.mxu0
        %v4714 = vpack.c.bf16 %v4711, %v4706
        %v4715 = vld [vmem:[%s4328 + $0x10] sm:$0xf]
        %s4716 = scalar_lea.vmem %s2, 272
        %v4717 = vld [vmem:[%s4716] sm:$0xf]
        %v4718 = vld [vmem:[%s4716 + $0x4] sm:$0xf]
        %v4719 = vld [vmem:[%s4716 + $0x8] sm:$0xf]
        %v4720 = vld [vmem:[%s4716 + $0xc] sm:$0xf]
        %v4721 = vld [vmem:[%s4286 + $0x9] sm:$0x1]
        %v4722 = vlaneseq
        %v4723 = vshrl.u32 %v4722, 7
        %v4724 = vsub.s32 0, %v4723
        %v4725 = vrot.slane %v4721, %v4724
        %v4730 = vunpack.c.l.b16 %v4717
        %v4731 = vunpack.c.l.b16 %v4718
        %v4732 = vunpack.c.l.b16 %v4719
        %v4733 = vunpack.c.l.b16 %v4720
        %v4734 = vpack.c.b16 %v4731, %v4730
        %v4735 = vpack.c.b16 %v4733, %v4732
        %4738 = vmatprep.subr.bf16.mxu0 0
        %4739 = vmatpush1.bf16.msra.mxu0 %v4734
        %4740 = vmatprep.subr.bf16.mxu0 0
        %4741 = vmatpush1.bf16.msra.mxu0 %v4735
        %4742 = vmatprep.subr.bf16.mxu0 0
        %4743 = vmatpush1.bf16.msra.mxu0 0
        %4744 = vmatprep.subr.bf16.mxu0 0
        %4745 = vmatpush1.bf16.msra.mxu0 0
        %4746 = vmatprep.subr.bf16.mxu0 0
        %4747 = vmatpush1.bf16.msra.mxu0 0
        %4748 = vmatprep.subr.bf16.mxu0 0
        %4749 = vmatpush1.bf16.msra.mxu0 0
        %4750 = vmatprep.subr.bf16.mxu0 0
        %4751 = vmatpush1.bf16.msra.mxu0 0
        %4752 = vmatprep.subr.bf16.mxu0 0
        %4753 = vmatpush1.bf16.msra.mxu0 0
        %4754 = vmatprep.subr.bf16.mxu0 0
        %4755 = vmatpush1.bf16.msra.mxu0 0
        %4756 = vmatprep.subr.bf16.mxu0 0
        %4757 = vmatpush1.bf16.msra.mxu0 0
        %4758 = vmatprep.subr.bf16.mxu0 0
        %4759 = vmatpush1.bf16.msra.mxu0 0
        %4760 = vmatprep.subr.bf16.mxu0 0
        %4761 = vmatpush1.bf16.msra.mxu0 0
        %4762 = vmatprep.subr.bf16.mxu0 0
        %4763 = vmatpush1.bf16.msra.mxu0 0
        %4764 = vmatprep.subr.bf16.mxu0 0
        %4765 = vmatpush1.bf16.msra.mxu0 0
        %4766 = vmatprep.subr.bf16.mxu0 0
        %4767 = vmatpush1.bf16.msra.mxu0 0
        %4768 = vmatprep.subr.bf16.mxu0 0
        %4769 = vmatpush1.bf16.msra.mxu0 0
        %4770 = vmatprep.mubr.bf16.mxu0 0
        %4771 = vmatmul.mubr.bf16.gmra.mrb[0].mxu0 %v4351
        %v4772 = vpop.f32.mrb[0].mxu0
        %v4773 = vadd.f32 %v4725, %v4772
        %v4774 = vpop.f32.mrb[0].mxu0
        %v4775 = vpop.f32.mrb[0].mxu0
        %v4776 = vadd.f32 %v4725, %v4775
        %v4777 = vpop.f32.mrb[0].mxu0
        %4778 = vdwg.mxu0
        %s4779 = scalar_lea.vmem %s2, 336
        %v4780 = vld [vmem:[%s4779] sm:$0xf]
        %v4781 = vld [vmem:[%s4779 + $0x4] sm:$0xf]
        %v4782 = vld [vmem:[%s4779 + $0x8] sm:$0xf]
        %v4783 = vld [vmem:[%s4779 + $0xc] sm:$0xf]
        %v4784 = vld [vmem:[%s4286 + $0xd] sm:$0x1]
        %v4785 = vlaneseq
        %v4786 = vshrl.u32 %v4785, 7
        %v4787 = vsub.s32 0, %v4786
        %v4788 = vrot.slane %v4784, %v4787
        %v4793 = vunpack.c.l.b16 %v4780
        %v4794 = vunpack.c.l.b16 %v4781
        %v4795 = vunpack.c.l.b16 %v4782
        %v4796 = vunpack.c.l.b16 %v4783
        %v4797 = vpack.c.b16 %v4794, %v4793
        %v4798 = vpack.c.b16 %v4796, %v4795
        %4801 = vmatprep.subr.bf16.mxu0 0
        %4802 = vmatpush1.bf16.msra.mxu0 %v4797
        %4803 = vmatprep.subr.bf16.mxu0 0
        %4804 = vmatpush1.bf16.msra.mxu0 %v4798
        %4805 = vmatprep.subr.bf16.mxu0 0
        %4806 = vmatpush1.bf16.msra.mxu0 0
        %4807 = vmatprep.subr.bf16.mxu0 0
        %4808 = vmatpush1.bf16.msra.mxu0 0
        %4809 = vmatprep.subr.bf16.mxu0 0
        %4810 = vmatpush1.bf16.msra.mxu0 0
        %4811 = vmatprep.subr.bf16.mxu0 0
        %4812 = vmatpush1.bf16.msra.mxu0 0
        %4813 = vmatprep.subr.bf16.mxu0 0
        %4814 = vmatpush1.bf16.msra.mxu0 0
        %4815 = vmatprep.subr.bf16.mxu0 0
        %4816 = vmatpush1.bf16.msra.mxu0 0
        %4817 = vmatprep.subr.bf16.mxu0 0
        %4818 = vmatpush1.bf16.msra.mxu0 0
        %4819 = vmatprep.subr.bf16.mxu0 0
        %4820 = vmatpush1.bf16.msra.mxu0 0
        %4821 = vmatprep.subr.bf16.mxu0 0
        %4822 = vmatpush1.bf16.msra.mxu0 0
        %4823 = vmatprep.subr.bf16.mxu0 0
        %4824 = vmatpush1.bf16.msra.mxu0 0
        %4825 = vmatprep.subr.bf16.mxu0 0
        %4826 = vmatpush1.bf16.msra.mxu0 0
        %4827 = vmatprep.subr.bf16.mxu0 0
        %4828 = vmatpush1.bf16.msra.mxu0 0
        %4829 = vmatprep.subr.bf16.mxu0 0
        %4830 = vmatpush1.bf16.msra.mxu0 0
        %4831 = vmatprep.subr.bf16.mxu0 0
        %4832 = vmatpush1.bf16.msra.mxu0 0
        %4833 = vmatprep.mubr.bf16.mxu0 0
        %4834 = vmatmul.mubr.bf16.gmra.mrb[0].mxu0 %v4351
        %v4835 = vpop.f32.mrb[0].mxu0
        %v4836 = vadd.f32 %v4788, %v4835
        %v4837 = vpop.f32.mrb[0].mxu0
        %v4838 = vpop.f32.mrb[0].mxu0
        %v4839 = vadd.f32 %v4788, %v4838
        %v4840 = vpop.f32.mrb[0].mxu0
        %4841 = vdwg.mxu0
        %4842 = vrot.lane.b32.xlu0 %v4388, 120
        %v4843 = vpop.permute.xlu0 %4842
        %4844 = vrot.lane.b32.xlu0 %v4391, 120
        %v4845 = vpop.permute.xlu0 %4844
        %v4847 = vsel %vm783, %v4773, 0
        %v4850 = vsel %vm783, %v4776, 0
        %v4852 = vsel %vm783, %v4843, 0
        %v4854 = vsel %vm783, %v4845, 0
        %4856 = vmatprep.subr.mxu0 0.0
        %4857 = vmatpush1.xpose.msra.mxu0 %v4852
        %4858 = vmatprep.subr.mxu0 0.0
        %4859 = vmatpush1.xpose.msra.mxu0 %v4854
        %4860 = vmatprep.subr.mxu0 0.0
        %4861 = vmatpush1.xpose.msra.mxu0 0.0
        %4862 = vmatprep.subr.mxu0 0.0
        %4863 = vmatpush1.xpose.msra.mxu0 0.0
        %4864 = vmatprep.subr.mxu0 0.0
        %4865 = vmatpush1.xpose.msra.mxu0 0.0
        %4866 = vmatprep.subr.mxu0 0.0
        %4867 = vmatpush1.xpose.msra.mxu0 0.0
        %4868 = vmatprep.subr.mxu0 0.0
        %4869 = vmatpush1.xpose.msra.mxu0 0.0
        %4870 = vmatprep.subr.mxu0 0.0
        %4871 = vmatpush1.xpose.msra.mxu0 0.0
        %4872 = vmatprep.subr.mxu0 0.0
        %4873 = vmatpush1.xpose.msra.mxu0 0.0
        %4874 = vmatprep.subr.mxu0 0.0
        %4875 = vmatpush1.xpose.msra.mxu0 0.0
        %4876 = vmatprep.subr.mxu0 0.0
        %4877 = vmatpush1.xpose.msra.mxu0 0.0
        %4878 = vmatprep.subr.mxu0 0.0
        %4879 = vmatpush1.xpose.msra.mxu0 0.0
        %4880 = vmatprep.subr.mxu0 0.0
        %4881 = vmatpush1.xpose.msra.mxu0 0.0
        %4882 = vmatprep.subr.mxu0 0.0
        %4883 = vmatpush1.xpose.msra.mxu0 0.0
        %4884 = vmatprep.subr.mxu0 0.0
        %4885 = vmatpush1.xpose.msra.mxu0 0.0
        %4886 = vmatprep.subr.mxu0 0.0
        %4887 = vmatpush1.xpose.msra.mxu0 0.0
        %4888 = vmatprep.subr.mxu0 0.0
        %4889 = vmatpush1.xpose.msra.mxu0 0.0
        %4890 = vmatprep.subr.mxu0 0.0
        %4891 = vmatpush1.xpose.msra.mxu0 0.0
        %4892 = vmatprep.subr.mxu0 0.0
        %4893 = vmatpush1.xpose.msra.mxu0 0.0
        %4894 = vmatprep.subr.mxu0 0.0
        %4895 = vmatpush1.xpose.msra.mxu0 0.0
        %4896 = vmatprep.subr.mxu0 0.0
        %4897 = vmatpush1.xpose.msra.mxu0 0.0
        %4898 = vmatprep.subr.mxu0 0.0
        %4899 = vmatpush1.xpose.msra.mxu0 0.0
        %4900 = vmatprep.subr.mxu0 0.0
        %4901 = vmatpush1.xpose.msra.mxu0 0.0
        %4902 = vmatprep.subr.mxu0 0.0
        %4903 = vmatpush1.xpose.msra.mxu0 0.0
        %4904 = vmatprep.subr.mxu0 0.0
        %4905 = vmatpush1.xpose.msra.mxu0 0.0
        %4906 = vmatprep.subr.mxu0 0.0
        %4907 = vmatpush1.xpose.msra.mxu0 0.0
        %4908 = vmatprep.subr.mxu0 0.0
        %4909 = vmatpush1.xpose.msra.mxu0 0.0
        %4910 = vmatprep.subr.mxu0 0.0
        %4911 = vmatpush1.xpose.msra.mxu0 0.0
        %4912 = vmatprep.subr.mxu0 0.0
        %4913 = vmatpush1.xpose.msra.mxu0 0.0
        %4914 = vmatprep.subr.mxu0 0.0
        %4915 = vmatpush1.xpose.msra.mxu0 0.0
        %4916 = vmatprep.subr.mxu0 0.0
        %4917 = vmatpush1.xpose.msra.mxu0 0.0
        %4918 = vmatprep.subr.mxu0 0.0
        %4919 = vmatpush1.xpose.msra.mxu0 0.0
        %4920 = vmatprep.mubr.f32.mxu0 0.0
        %4921 = vmatmul.mubr.f32.gmra.mrb[0].mxu0 %v4847
        %v4922 = vpop.f32.mrb[0].mxu0
        %v4923 = vadd.f32 0.0, %v4922
        %v4924 = vpop.f32.mrb[0].mxu0
        %4925 = vmatprep.mubr.f32.mxu0 0.0
        %4926 = vmatmul.mubr.f32.gmra.mrb[0].mxu0 %v4850
        %v4927 = vpop.f32.mrb[0].mxu0
        %v4928 = vadd.f32 0.0, %v4927
        %v4929 = vpop.f32.mrb[0].mxu0
        %4930 = vdwg.mxu0
        %v4931 = vmul.f32 %v4923, 0.35355338
        %v4932 = vmul.f32 %v4928, 0.35355338
        %v4933 = vadd.f32 %v4931, %v4285
        %v4934 = vadd.f32 %v4932, %v4285
        %v4935 = vsel %vm875, %v4933, -inf
        %4936 = vmax.xlane.f32.xlu0 %v4935
        %v4937 = vpop.xlane.xlu0 %4936
        %v4938 = vsel %vm875, %v4934, -inf
        %4939 = vmax.xlane.f32.xlu0 %v4938
        %v4940 = vpop.xlane.xlu0 %4939
        %v4941 = vsub.f32 %v4933, %v4937
        %v4942 = vsub.f32 %v4934, %v4940
        %v4943 = vmul.f32 %v4941, 1.442695
        %v4944 = vpow.pop %v4943
        %v4945 = vmul.f32 %v4942, 1.442695
        %v4946 = vpow.pop %v4945
        %v4947 = vsel %vm875, %v4944, 0.0
        %4948 = vadd.xlane.f32.xlu0 %v4947
        %v4949 = vpop.xlane.xlu0 %4948
        %v4950 = vsel %vm875, %v4946, 0.0
        %4951 = vadd.xlane.f32.xlu0 %v4950
        %v4952 = vpop.xlane.xlu0 %4951
        %v4953 = vrcp.pop %v4949
        %v4954 = vrcp.pop %v4952
        %v4955 = vmul.f32 %v4944, %v4953
        %v4956 = vmul.f32 %v4946, %v4954
        %v4958 = vsel %vm875, %v4955, 0
        %v4961 = vsel %vm875, %v4956, 0
        %4963 = vmatprep.subr.mxu0 0.0
        %4964 = vmatpush1.msra.mxu0 %v4836
        %4965 = vmatprep.subr.mxu0 0.0
        %4966 = vmatpush1.msra.mxu0 %v4839
        %4967 = vmatprep.subr.mxu0 0.0
        %4968 = vmatpush1.msra.mxu0 0.0
        %4969 = vmatprep.subr.mxu0 0.0
        %4970 = vmatpush1.msra.mxu0 0.0
        %4971 = vmatprep.subr.mxu0 0.0
        %4972 = vmatpush1.msra.mxu0 0.0
        %4973 = vmatprep.subr.mxu0 0.0
        %4974 = vmatpush1.msra.mxu0 0.0
        %4975 = vmatprep.subr.mxu0 0.0
        %4976 = vmatpush1.msra.mxu0 0.0
        %4977 = vmatprep.subr.mxu0 0.0
        %4978 = vmatpush1.msra.mxu0 0.0
        %4979 = vmatprep.subr.mxu0 0.0
        %4980 = vmatpush1.msra.mxu0 0.0
        %4981 = vmatprep.subr.mxu0 0.0
        %4982 = vmatpush1.msra.mxu0 0.0
        %4983 = vmatprep.subr.mxu0 0.0
        %4984 = vmatpush1.msra.mxu0 0.0
        %4985 = vmatprep.subr.mxu0 0.0
        %4986 = vmatpush1.msra.mxu0 0.0
        %4987 = vmatprep.subr.mxu0 0.0
        %4988 = vmatpush1.msra.mxu0 0.0
        %4989 = vmatprep.subr.mxu0 0.0
        %4990 = vmatpush1.msra.mxu0 0.0
        %4991 = vmatprep.subr.mxu0 0.0
        %4992 = vmatpush1.msra.mxu0 0.0
        %4993 = vmatprep.subr.mxu0 0.0
        %4994 = vmatpush1.msra.mxu0 0.0
        %4995 = vmatprep.subr.mxu0 0.0
        %4996 = vmatpush1.msra.mxu0 0.0
        %4997 = vmatprep.subr.mxu0 0.0
        %4998 = vmatpush1.msra.mxu0 0.0
        %4999 = vmatprep.subr.mxu0 0.0
        %5000 = vmatpush1.msra.mxu0 0.0
        %5001 = vmatprep.subr.mxu0 0.0
        %5002 = vmatpush1.msra.mxu0 0.0
        %5003 = vmatprep.subr.mxu0 0.0
        %5004 = vmatpush1.msra.mxu0 0.0
        %5005 = vmatprep.subr.mxu0 0.0
        %5006 = vmatpush1.msra.mxu0 0.0
        %5007 = vmatprep.subr.mxu0 0.0
        %5008 = vmatpush1.msra.mxu0 0.0
        %5009 = vmatprep.subr.mxu0 0.0
        %5010 = vmatpush1.msra.mxu0 0.0
        %5011 = vmatprep.subr.mxu0 0.0
        %5012 = vmatpush1.msra.mxu0 0.0
        %5013 = vmatprep.subr.mxu0 0.0
        %5014 = vmatpush1.msra.mxu0 0.0
        %5015 = vmatprep.subr.mxu0 0.0
        %5016 = vmatpush1.msra.mxu0 0.0
        %5017 = vmatprep.subr.mxu0 0.0
        %5018 = vmatpush1.msra.mxu0 0.0
        %5019 = vmatprep.subr.mxu0 0.0
        %5020 = vmatpush1.msra.mxu0 0.0
        %5021 = vmatprep.subr.mxu0 0.0
        %5022 = vmatpush1.msra.mxu0 0.0
        %5023 = vmatprep.subr.mxu0 0.0
        %5024 = vmatpush1.msra.mxu0 0.0
        %5025 = vmatprep.subr.mxu0 0.0
        %5026 = vmatpush1.msra.mxu0 0.0
        %5027 = vmatprep.mubr.f32.mxu0 0.0
        %5028 = vmatmul.mubr.f32.gmra.mrb[0].mxu0 %v4958
        %v5029 = vpop.f32.mrb[0].mxu0
        %v5030 = vadd.f32 0.0, %v5029
        %v5031 = vpop.f32.mrb[0].mxu0
        %5032 = vmatprep.mubr.f32.mxu0 0.0
        %5033 = vmatmul.mubr.f32.gmra.mrb[0].mxu0 %v4961
        %v5034 = vpop.f32.mrb[0].mxu0
        %v5035 = vadd.f32 0.0, %v5034
        %v5036 = vpop.f32.mrb[0].mxu0
        %5037 = vdwg.mxu0
        %v5038 = vpack.c.bf16 %v5035, %v5030
        %v5039 = vld [vmem:[%s4328 + $0x14] sm:$0xf]
        %v5041 = vsel %vm783, %v5038, 0
        %v5044 = vsel %vm1308, %v5039, 0
        %5046 = vmatprep.subr.bf16.mxu0 0
        %5047 = vmatpush1.bf16.msra.mxu0 %v5044
        %5048 = vmatprep.subr.bf16.mxu0 0
        %5049 = vmatpush1.bf16.msra.mxu0 0
        %5050 = vmatprep.subr.bf16.mxu0 0
        %5051 = vmatpush1.bf16.msra.mxu0 0
        %5052 = vmatprep.subr.bf16.mxu0 0
        %5053 = vmatpush1.bf16.msra.mxu0 0
        %5054 = vmatprep.subr.bf16.mxu0 0
        %5055 = vmatpush1.bf16.msra.mxu0 0
        %5056 = vmatprep.subr.bf16.mxu0 0
        %5057 = vmatpush1.bf16.msra.mxu0 0
        %5058 = vmatprep.subr.bf16.mxu0 0
        %5059 = vmatpush1.bf16.msra.mxu0 0
        %5060 = vmatprep.subr.bf16.mxu0 0
        %5061 = vmatpush1.bf16.msra.mxu0 0
        %5062 = vmatprep.subr.bf16.mxu0 0
        %5063 = vmatpush1.bf16.msra.mxu0 0
        %5064 = vmatprep.subr.bf16.mxu0 0
        %5065 = vmatpush1.bf16.msra.mxu0 0
        %5066 = vmatprep.subr.bf16.mxu0 0
        %5067 = vmatpush1.bf16.msra.mxu0 0
        %5068 = vmatprep.subr.bf16.mxu0 0
        %5069 = vmatpush1.bf16.msra.mxu0 0
        %5070 = vmatprep.subr.bf16.mxu0 0
        %5071 = vmatpush1.bf16.msra.mxu0 0
        %5072 = vmatprep.subr.bf16.mxu0 0
        %5073 = vmatpush1.bf16.msra.mxu0 0
        %5074 = vmatprep.subr.bf16.mxu0 0
        %5075 = vmatpush1.bf16.msra.mxu0 0
        %5076 = vmatprep.subr.bf16.mxu0 0
        %5077 = vmatpush1.bf16.msra.mxu0 0
        %5078 = vmatprep.mubr.bf16.mxu0 0
        %5079 = vmatmul.mubr.bf16.gmra.mrb[0].mxu0 %v5041
        %v5080 = vpop.f32.mrb[0].mxu0
        %v5081 = vadd.f32 0.0, %v5080
        %v5082 = vpop.f32.mrb[0].mxu0
        %v5083 = vpop.f32.mrb[0].mxu0
        %v5084 = vadd.f32 0.0, %v5083
        %v5085 = vpop.f32.mrb[0].mxu0
        %5086 = vdwg.mxu0
        %v5088 = vsel %vm783, %v4714, 0
        %v5091 = vsel %vm1308, %v4715, 0
        %5093 = vmatprep.subr.bf16.mxu0 0
        %5094 = vmatpush1.bf16.msra.mxu0 %v5091
        %5095 = vmatprep.subr.bf16.mxu0 0
        %5096 = vmatpush1.bf16.msra.mxu0 0
        %5097 = vmatprep.subr.bf16.mxu0 0
        %5098 = vmatpush1.bf16.msra.mxu0 0
        %5099 = vmatprep.subr.bf16.mxu0 0
        %5100 = vmatpush1.bf16.msra.mxu0 0
        %5101 = vmatprep.subr.bf16.mxu0 0
        %5102 = vmatpush1.bf16.msra.mxu0 0
        %5103 = vmatprep.subr.bf16.mxu0 0
        %5104 = vmatpush1.bf16.msra.mxu0 0
        %5105 = vmatprep.subr.bf16.mxu0 0
        %5106 = vmatpush1.bf16.msra.mxu0 0
        %5107 = vmatprep.subr.bf16.mxu0 0
        %5108 = vmatpush1.bf16.msra.mxu0 0
        %5109 = vmatprep.subr.bf16.mxu0 0
        %5110 = vmatpush1.bf16.msra.mxu0 0
        %5111 = vmatprep.subr.bf16.mxu0 0
        %5112 = vmatpush1.bf16.msra.mxu0 0
        %5113 = vmatprep.subr.bf16.mxu0 0
        %5114 = vmatpush1.bf16.msra.mxu0 0
        %5115 = vmatprep.subr.bf16.mxu0 0
        %5116 = vmatpush1.bf16.msra.mxu0 0
        %5117 = vmatprep.subr.bf16.mxu0 0
        %5118 = vmatpush1.bf16.msra.mxu0 0
        %5119 = vmatprep.subr.bf16.mxu0 0
        %5120 = vmatpush1.bf16.msra.mxu0 0
        %5121 = vmatprep.subr.bf16.mxu0 0
        %5122 = vmatpush1.bf16.msra.mxu0 0
        %5123 = vmatprep.subr.bf16.mxu0 0
        %5124 = vmatpush1.bf16.msra.mxu0 0
        %5125 = vmatprep.mubr.bf16.mxu0 0
        %5126 = vmatmul.mubr.bf16.gmra.mrb[0].mxu0 %v5088
        %v5127 = vpop.f32.mrb[0].mxu0
        %v5128 = vadd.f32 %v5081, %v5127
        %v5129 = vpop.f32.mrb[0].mxu0
        %v5130 = vpop.f32.mrb[0].mxu0
        %v5131 = vadd.f32 %v5084, %v5130
        %v5132 = vpop.f32.mrb[0].mxu0
        %5133 = vdwg.mxu0
        %s5134 = scalar_lea.vmem %s2, 288
        %v5135 = vld [vmem:[%s5134] sm:$0xf]
        %v5136 = vld [vmem:[%s5134 + $0x4] sm:$0xf]
        %v5137 = vld [vmem:[%s5134 + $0x8] sm:$0xf]
        %v5138 = vld [vmem:[%s5134 + $0xc] sm:$0xf]
        %v5139 = vld [vmem:[%s4286 + $0xa] sm:$0x1]
        %v5140 = vlaneseq
        %v5141 = vshrl.u32 %v5140, 7
        %v5142 = vsub.s32 0, %v5141
        %v5143 = vrot.slane %v5139, %v5142
        %v5148 = vunpack.c.l.b16 %v5135
        %v5149 = vunpack.c.l.b16 %v5136
        %v5150 = vunpack.c.l.b16 %v5137
        %v5151 = vunpack.c.l.b16 %v5138
        %v5152 = vpack.c.b16 %v5149, %v5148
        %v5153 = vpack.c.b16 %v5151, %v5150
        %5156 = vmatprep.subr.bf16.mxu0 0
        %5157 = vmatpush1.bf16.msra.mxu0 %v5152
        %5158 = vmatprep.subr.bf16.mxu0 0
        %5159 = vmatpush1.bf16.msra.mxu0 %v5153
        %5160 = vmatprep.subr.bf16.mxu0 0
        %5161 = vmatpush1.bf16.msra.mxu0 0
        %5162 = vmatprep.subr.bf16.mxu0 0
        %5163 = vmatpush1.bf16.msra.mxu0 0
        %5164 = vmatprep.subr.bf16.mxu0 0
        %5165 = vmatpush1.bf16.msra.mxu0 0
        %5166 = vmatprep.subr.bf16.mxu0 0
        %5167 = vmatpush1.bf16.msra.mxu0 0
        %5168 = vmatprep.subr.bf16.mxu0 0
        %5169 = vmatpush1.bf16.msra.mxu0 0
        %5170 = vmatprep.subr.bf16.mxu0 0
        %5171 = vmatpush1.bf16.msra.mxu0 0
        %5172 = vmatprep.subr.bf16.mxu0 0
        %5173 = vmatpush1.bf16.msra.mxu0 0
        %5174 = vmatprep.subr.bf16.mxu0 0
        %5175 = vmatpush1.bf16.msra.mxu0 0
        %5176 = vmatprep.subr.bf16.mxu0 0
        %5177 = vmatpush1.bf16.msra.mxu0 0
        %5178 = vmatprep.subr.bf16.mxu0 0
        %5179 = vmatpush1.bf16.msra.mxu0 0
        %5180 = vmatprep.subr.bf16.mxu0 0
        %5181 = vmatpush1.bf16.msra.mxu0 0
        %5182 = vmatprep.subr.bf16.mxu0 0
        %5183 = vmatpush1.bf16.msra.mxu0 0
        %5184 = vmatprep.subr.bf16.mxu0 0
        %5185 = vmatpush1.bf16.msra.mxu0 0
        %5186 = vmatprep.subr.bf16.mxu0 0
        %5187 = vmatpush1.bf16.msra.mxu0 0
        %5188 = vmatprep.mubr.bf16.mxu0 0
        %5189 = vmatmul.mubr.bf16.gmra.mrb[0].mxu0 %v4351
        %v5190 = vpop.f32.mrb[0].mxu0
        %v5191 = vadd.f32 %v5143, %v5190
        %v5192 = vpop.f32.mrb[0].mxu0
        %v5193 = vpop.f32.mrb[0].mxu0
        %v5194 = vadd.f32 %v5143, %v5193
        %v5195 = vpop.f32.mrb[0].mxu0
        %5196 = vdwg.mxu0
        %s5197 = scalar_lea.vmem %s2, 352
        %v5198 = vld [vmem:[%s5197] sm:$0xf]
        %v5199 = vld [vmem:[%s5197 + $0x4] sm:$0xf]
        %v5200 = vld [vmem:[%s5197 + $0x8] sm:$0xf]
        %v5201 = vld [vmem:[%s5197 + $0xc] sm:$0xf]
        %v5202 = vld [vmem:[%s4286 + $0xe] sm:$0x1]
        %v5203 = vlaneseq
        %v5204 = vshrl.u32 %v5203, 7
        %v5205 = vsub.s32 0, %v5204
        %v5206 = vrot.slane %v5202, %v5205
        %v5211 = vunpack.c.l.b16 %v5198
        %v5212 = vunpack.c.l.b16 %v5199
        %v5213 = vunpack.c.l.b16 %v5200
        %v5214 = vunpack.c.l.b16 %v5201
        %v5215 = vpack.c.b16 %v5212, %v5211
        %v5216 = vpack.c.b16 %v5214, %v5213
        %5219 = vmatprep.subr.bf16.mxu0 0
        %5220 = vmatpush1.bf16.msra.mxu0 %v5215
        %5221 = vmatprep.subr.bf16.mxu0 0
        %5222 = vmatpush1.bf16.msra.mxu0 %v5216
        %5223 = vmatprep.subr.bf16.mxu0 0
        %5224 = vmatpush1.bf16.msra.mxu0 0
        %5225 = vmatprep.subr.bf16.mxu0 0
        %5226 = vmatpush1.bf16.msra.mxu0 0
        %5227 = vmatprep.subr.bf16.mxu0 0
        %5228 = vmatpush1.bf16.msra.mxu0 0
        %5229 = vmatprep.subr.bf16.mxu0 0
        %5230 = vmatpush1.bf16.msra.mxu0 0
        %5231 = vmatprep.subr.bf16.mxu0 0
        %5232 = vmatpush1.bf16.msra.mxu0 0
        %5233 = vmatprep.subr.bf16.mxu0 0
        %5234 = vmatpush1.bf16.msra.mxu0 0
        %5235 = vmatprep.subr.bf16.mxu0 0
        %5236 = vmatpush1.bf16.msra.mxu0 0
        %5237 = vmatprep.subr.bf16.mxu0 0
        %5238 = vmatpush1.bf16.msra.mxu0 0
        %5239 = vmatprep.subr.bf16.mxu0 0
        %5240 = vmatpush1.bf16.msra.mxu0 0
        %5241 = vmatprep.subr.bf16.mxu0 0
        %5242 = vmatpush1.bf16.msra.mxu0 0
        %5243 = vmatprep.subr.bf16.mxu0 0
        %5244 = vmatpush1.bf16.msra.mxu0 0
        %5245 = vmatprep.subr.bf16.mxu0 0
        %5246 = vmatpush1.bf16.msra.mxu0 0
        %5247 = vmatprep.subr.bf16.mxu0 0
        %5248 = vmatpush1.bf16.msra.mxu0 0
        %5249 = vmatprep.subr.bf16.mxu0 0
        %5250 = vmatpush1.bf16.msra.mxu0 0
        %5251 = vmatprep.mubr.bf16.mxu0 0
        %5252 = vmatmul.mubr.bf16.gmra.mrb[0].mxu0 %v4351
        %v5253 = vpop.f32.mrb[0].mxu0
        %v5254 = vadd.f32 %v5206, %v5253
        %v5255 = vpop.f32.mrb[0].mxu0
        %v5256 = vpop.f32.mrb[0].mxu0
        %v5257 = vadd.f32 %v5206, %v5256
        %v5258 = vpop.f32.mrb[0].mxu0
        %5259 = vdwg.mxu0
        %5260 = vrot.lane.b32.xlu0 %v4388, 112
        %v5261 = vpop.permute.xlu0 %5260
        %5262 = vrot.lane.b32.xlu0 %v4391, 112
        %v5263 = vpop.permute.xlu0 %5262
        %v5265 = vsel %vm783, %v5191, 0
        %v5268 = vsel %vm783, %v5194, 0
        %v5270 = vsel %vm783, %v5261, 0
        %v5272 = vsel %vm783, %v5263, 0
        %5274 = vmatprep.subr.mxu0 0.0
        %5275 = vmatpush1.xpose.msra.mxu0 %v5270
        %5276 = vmatprep.subr.mxu0 0.0
        %5277 = vmatpush1.xpose.msra.mxu0 %v5272
        %5278 = vmatprep.subr.mxu0 0.0
        %5279 = vmatpush1.xpose.msra.mxu0 0.0
        %5280 = vmatprep.subr.mxu0 0.0
        %5281 = vmatpush1.xpose.msra.mxu0 0.0
        %5282 = vmatprep.subr.mxu0 0.0
        %5283 = vmatpush1.xpose.msra.mxu0 0.0
        %5284 = vmatprep.subr.mxu0 0.0
        %5285 = vmatpush1.xpose.msra.mxu0 0.0
        %5286 = vmatprep.subr.mxu0 0.0
        %5287 = vmatpush1.xpose.msra.mxu0 0.0
        %5288 = vmatprep.subr.mxu0 0.0
        %5289 = vmatpush1.xpose.msra.mxu0 0.0
        %5290 = vmatprep.subr.mxu0 0.0
        %5291 = vmatpush1.xpose.msra.mxu0 0.0
        %5292 = vmatprep.subr.mxu0 0.0
        %5293 = vmatpush1.xpose.msra.mxu0 0.0
        %5294 = vmatprep.subr.mxu0 0.0
        %5295 = vmatpush1.xpose.msra.mxu0 0.0
        %5296 = vmatprep.subr.mxu0 0.0
        %5297 = vmatpush1.xpose.msra.mxu0 0.0
        %5298 = vmatprep.subr.mxu0 0.0
        %5299 = vmatpush1.xpose.msra.mxu0 0.0
        %5300 = vmatprep.subr.mxu0 0.0
        %5301 = vmatpush1.xpose.msra.mxu0 0.0
        %5302 = vmatprep.subr.mxu0 0.0
        %5303 = vmatpush1.xpose.msra.mxu0 0.0
        %5304 = vmatprep.subr.mxu0 0.0
        %5305 = vmatpush1.xpose.msra.mxu0 0.0
        %5306 = vmatprep.subr.mxu0 0.0
        %5307 = vmatpush1.xpose.msra.mxu0 0.0
        %5308 = vmatprep.subr.mxu0 0.0
        %5309 = vmatpush1.xpose.msra.mxu0 0.0
        %5310 = vmatprep.subr.mxu0 0.0
        %5311 = vmatpush1.xpose.msra.mxu0 0.0
        %5312 = vmatprep.subr.mxu0 0.0
        %5313 = vmatpush1.xpose.msra.mxu0 0.0
        %5314 = vmatprep.subr.mxu0 0.0
        %5315 = vmatpush1.xpose.msra.mxu0 0.0
        %5316 = vmatprep.subr.mxu0 0.0
        %5317 = vmatpush1.xpose.msra.mxu0 0.0
        %5318 = vmatprep.subr.mxu0 0.0
        %5319 = vmatpush1.xpose.msra.mxu0 0.0
        %5320 = vmatprep.subr.mxu0 0.0
        %5321 = vmatpush1.xpose.msra.mxu0 0.0
        %5322 = vmatprep.subr.mxu0 0.0
        %5323 = vmatpush1.xpose.msra.mxu0 0.0
        %5324 = vmatprep.subr.mxu0 0.0
        %5325 = vmatpush1.xpose.msra.mxu0 0.0
        %5326 = vmatprep.subr.mxu0 0.0
        %5327 = vmatpush1.xpose.msra.mxu0 0.0
        %5328 = vmatprep.subr.mxu0 0.0
        %5329 = vmatpush1.xpose.msra.mxu0 0.0
        %5330 = vmatprep.subr.mxu0 0.0
        %5331 = vmatpush1.xpose.msra.mxu0 0.0
        %5332 = vmatprep.subr.mxu0 0.0
        %5333 = vmatpush1.xpose.msra.mxu0 0.0
        %5334 = vmatprep.subr.mxu0 0.0
        %5335 = vmatpush1.xpose.msra.mxu0 0.0
        %5336 = vmatprep.subr.mxu0 0.0
        %5337 = vmatpush1.xpose.msra.mxu0 0.0
        %5338 = vmatprep.mubr.f32.mxu0 0.0
        %5339 = vmatmul.mubr.f32.gmra.mrb[0].mxu0 %v5265
        %v5340 = vpop.f32.mrb[0].mxu0
        %v5341 = vadd.f32 0.0, %v5340
        %v5342 = vpop.f32.mrb[0].mxu0
        %5343 = vmatprep.mubr.f32.mxu0 0.0
        %5344 = vmatmul.mubr.f32.gmra.mrb[0].mxu0 %v5268
        %v5345 = vpop.f32.mrb[0].mxu0
        %v5346 = vadd.f32 0.0, %v5345
        %v5347 = vpop.f32.mrb[0].mxu0
        %5348 = vdwg.mxu0
        %v5349 = vmul.f32 %v5341, 0.35355338
        %v5350 = vmul.f32 %v5346, 0.35355338
        %v5351 = vadd.f32 %v5349, %v4285
        %v5352 = vadd.f32 %v5350, %v4285
        %v5353 = vsel %vm875, %v5351, -inf
        %5354 = vmax.xlane.f32.xlu0 %v5353
        %v5355 = vpop.xlane.xlu0 %5354
        %v5356 = vsel %vm875, %v5352, -inf
        %5357 = vmax.xlane.f32.xlu0 %v5356
        %v5358 = vpop.xlane.xlu0 %5357
        %v5359 = vsub.f32 %v5351, %v5355
        %v5360 = vsub.f32 %v5352, %v5358
        %v5361 = vmul.f32 %v5359, 1.442695
        %v5362 = vpow.pop %v5361
        %v5363 = vmul.f32 %v5360, 1.442695
        %v5364 = vpow.pop %v5363
        %v5365 = vsel %vm875, %v5362, 0.0
        %5366 = vadd.xlane.f32.xlu0 %v5365
        %v5367 = vpop.xlane.xlu0 %5366
        %v5368 = vsel %vm875, %v5364, 0.0
        %5369 = vadd.xlane.f32.xlu0 %v5368
        %v5370 = vpop.xlane.xlu0 %5369
        %v5371 = vrcp.pop %v5367
        %v5372 = vrcp.pop %v5370
        %v5373 = vmul.f32 %v5362, %v5371
        %v5374 = vmul.f32 %v5364, %v5372
        %v5376 = vsel %vm875, %v5373, 0
        %v5379 = vsel %vm875, %v5374, 0
        %5381 = vmatprep.subr.mxu0 0.0
        %5382 = vmatpush1.msra.mxu0 %v5254
        %5383 = vmatprep.subr.mxu0 0.0
        %5384 = vmatpush1.msra.mxu0 %v5257
        %5385 = vmatprep.subr.mxu0 0.0
        %5386 = vmatpush1.msra.mxu0 0.0
        %5387 = vmatprep.subr.mxu0 0.0
        %5388 = vmatpush1.msra.mxu0 0.0
        %5389 = vmatprep.subr.mxu0 0.0
        %5390 = vmatpush1.msra.mxu0 0.0
        %5391 = vmatprep.subr.mxu0 0.0
        %5392 = vmatpush1.msra.mxu0 0.0
        %5393 = vmatprep.subr.mxu0 0.0
        %5394 = vmatpush1.msra.mxu0 0.0
        %5395 = vmatprep.subr.mxu0 0.0
        %5396 = vmatpush1.msra.mxu0 0.0
        %5397 = vmatprep.subr.mxu0 0.0
        %5398 = vmatpush1.msra.mxu0 0.0
        %5399 = vmatprep.subr.mxu0 0.0
        %5400 = vmatpush1.msra.mxu0 0.0
        %5401 = vmatprep.subr.mxu0 0.0
        %5402 = vmatpush1.msra.mxu0 0.0
        %5403 = vmatprep.subr.mxu0 0.0
        %5404 = vmatpush1.msra.mxu0 0.0
        %5405 = vmatprep.subr.mxu0 0.0
        %5406 = vmatpush1.msra.mxu0 0.0
        %5407 = vmatprep.subr.mxu0 0.0
        %5408 = vmatpush1.msra.mxu0 0.0
        %5409 = vmatprep.subr.mxu0 0.0
        %5410 = vmatpush1.msra.mxu0 0.0
        %5411 = vmatprep.subr.mxu0 0.0
        %5412 = vmatpush1.msra.mxu0 0.0
        %5413 = vmatprep.subr.mxu0 0.0
        %5414 = vmatpush1.msra.mxu0 0.0
        %5415 = vmatprep.subr.mxu0 0.0
        %5416 = vmatpush1.msra.mxu0 0.0
        %5417 = vmatprep.subr.mxu0 0.0
        %5418 = vmatpush1.msra.mxu0 0.0
        %5419 = vmatprep.subr.mxu0 0.0
        %5420 = vmatpush1.msra.mxu0 0.0
        %5421 = vmatprep.subr.mxu0 0.0
        %5422 = vmatpush1.msra.mxu0 0.0
        %5423 = vmatprep.subr.mxu0 0.0
        %5424 = vmatpush1.msra.mxu0 0.0
        %5425 = vmatprep.subr.mxu0 0.0
        %5426 = vmatpush1.msra.mxu0 0.0
        %5427 = vmatprep.subr.mxu0 0.0
        %5428 = vmatpush1.msra.mxu0 0.0
        %5429 = vmatprep.subr.mxu0 0.0
        %5430 = vmatpush1.msra.mxu0 0.0
        %5431 = vmatprep.subr.mxu0 0.0
        %5432 = vmatpush1.msra.mxu0 0.0
        %5433 = vmatprep.subr.mxu0 0.0
        %5434 = vmatpush1.msra.mxu0 0.0
        %5435 = vmatprep.subr.mxu0 0.0
        %5436 = vmatpush1.msra.mxu0 0.0
        %5437 = vmatprep.subr.mxu0 0.0
        %5438 = vmatpush1.msra.mxu0 0.0
        %5439 = vmatprep.subr.mxu0 0.0
        %5440 = vmatpush1.msra.mxu0 0.0
        %5441 = vmatprep.subr.mxu0 0.0
        %5442 = vmatpush1.msra.mxu0 0.0
        %5443 = vmatprep.subr.mxu0 0.0
        %5444 = vmatpush1.msra.mxu0 0.0
        %5445 = vmatprep.mubr.f32.mxu0 0.0
        %5446 = vmatmul.mubr.f32.gmra.mrb[0].mxu0 %v5376
        %v5447 = vpop.f32.mrb[0].mxu0
        %v5448 = vadd.f32 0.0, %v5447
        %v5449 = vpop.f32.mrb[0].mxu0
        %5450 = vmatprep.mubr.f32.mxu0 0.0
        %5451 = vmatmul.mubr.f32.gmra.mrb[0].mxu0 %v5379
        %v5452 = vpop.f32.mrb[0].mxu0
        %v5453 = vadd.f32 0.0, %v5452
        %v5454 = vpop.f32.mrb[0].mxu0
        %5455 = vdwg.mxu0
        %v5456 = vpack.c.bf16 %v5453, %v5448
        %v5457 = vld [vmem:[%s4328 + $0x18] sm:$0xf]
        %v5459 = vsel %vm783, %v5456, 0
        %v5462 = vsel %vm1308, %v5457, 0
        %5464 = vmatprep.subr.bf16.mxu0 0
        %5465 = vmatpush1.bf16.msra.mxu0 %v5462
        %5466 = vmatprep.subr.bf16.mxu0 0
        %5467 = vmatpush1.bf16.msra.mxu0 0
        %5468 = vmatprep.subr.bf16.mxu0 0
        %5469 = vmatpush1.bf16.msra.mxu0 0
        %5470 = vmatprep.subr.bf16.mxu0 0
        %5471 = vmatpush1.bf16.msra.mxu0 0
        %5472 = vmatprep.subr.bf16.mxu0 0
        %5473 = vmatpush1.bf16.msra.mxu0 0
        %5474 = vmatprep.subr.bf16.mxu0 0
        %5475 = vmatpush1.bf16.msra.mxu0 0
        %5476 = vmatprep.subr.bf16.mxu0 0
        %5477 = vmatpush1.bf16.msra.mxu0 0
        %5478 = vmatprep.subr.bf16.mxu0 0
        %5479 = vmatpush1.bf16.msra.mxu0 0
        %5480 = vmatprep.subr.bf16.mxu0 0
        %5481 = vmatpush1.bf16.msra.mxu0 0
        %5482 = vmatprep.subr.bf16.mxu0 0
        %5483 = vmatpush1.bf16.msra.mxu0 0
        %5484 = vmatprep.subr.bf16.mxu0 0
        %5485 = vmatpush1.bf16.msra.mxu0 0
        %5486 = vmatprep.subr.bf16.mxu0 0
        %5487 = vmatpush1.bf16.msra.mxu0 0
        %5488 = vmatprep.subr.bf16.mxu0 0
        %5489 = vmatpush1.bf16.msra.mxu0 0
        %5490 = vmatprep.subr.bf16.mxu0 0
        %5491 = vmatpush1.bf16.msra.mxu0 0
        %5492 = vmatprep.subr.bf16.mxu0 0
        %5493 = vmatpush1.bf16.msra.mxu0 0
        %5494 = vmatprep.subr.bf16.mxu0 0
        %5495 = vmatpush1.bf16.msra.mxu0 0
        %5496 = vmatprep.mubr.bf16.mxu0 0
        %5497 = vmatmul.mubr.bf16.gmra.mrb[0].mxu0 %v5459
        %v5498 = vpop.f32.mrb[0].mxu0
        %v5499 = vadd.f32 0.0, %v5498
        %v5500 = vpop.f32.mrb[0].mxu0
        %v5501 = vpop.f32.mrb[0].mxu0
        %v5502 = vadd.f32 0.0, %v5501
        %v5503 = vpop.f32.mrb[0].mxu0
        %5504 = vdwg.mxu0
        %v5505 = vadd.f32 %v5128, %v5499
        %v5506 = vadd.f32 %v5131, %v5502
        %s5507 = scalar_lea.vmem %s2, 304
        %v5508 = vld [vmem:[%s5507] sm:$0xf]
        %v5509 = vld [vmem:[%s5507 + $0x4] sm:$0xf]
        %v5510 = vld [vmem:[%s5507 + $0x8] sm:$0xf]
        %v5511 = vld [vmem:[%s5507 + $0xc] sm:$0xf]
        %v5512 = vld [vmem:[%s4286 + $0xb] sm:$0x1]
        %v5513 = vlaneseq
        %v5514 = vshrl.u32 %v5513, 7
        %v5515 = vsub.s32 0, %v5514
        %v5516 = vrot.slane %v5512, %v5515
        %v5521 = vunpack.c.l.b16 %v5508
        %v5522 = vunpack.c.l.b16 %v5509
        %v5523 = vunpack.c.l.b16 %v5510
        %v5524 = vunpack.c.l.b16 %v5511
        %v5525 = vpack.c.b16 %v5522, %v5521
        %v5526 = vpack.c.b16 %v5524, %v5523
        %5529 = vmatprep.subr.bf16.mxu0 0
        %5530 = vmatpush1.bf16.msra.mxu0 %v5525
        %5531 = vmatprep.subr.bf16.mxu0 0
        %5532 = vmatpush1.bf16.msra.mxu0 %v5526
        %5533 = vmatprep.subr.bf16.mxu0 0
        %5534 = vmatpush1.bf16.msra.mxu0 0
        %5535 = vmatprep.subr.bf16.mxu0 0
        %5536 = vmatpush1.bf16.msra.mxu0 0
        %5537 = vmatprep.subr.bf16.mxu0 0
        %5538 = vmatpush1.bf16.msra.mxu0 0
        %5539 = vmatprep.subr.bf16.mxu0 0
        %5540 = vmatpush1.bf16.msra.mxu0 0
        %5541 = vmatprep.subr.bf16.mxu0 0
        %5542 = vmatpush1.bf16.msra.mxu0 0
        %5543 = vmatprep.subr.bf16.mxu0 0
        %5544 = vmatpush1.bf16.msra.mxu0 0
        %5545 = vmatprep.subr.bf16.mxu0 0
        %5546 = vmatpush1.bf16.msra.mxu0 0
        %5547 = vmatprep.subr.bf16.mxu0 0
        %5548 = vmatpush1.bf16.msra.mxu0 0
        %5549 = vmatprep.subr.bf16.mxu0 0
        %5550 = vmatpush1.bf16.msra.mxu0 0
        %5551 = vmatprep.subr.bf16.mxu0 0
        %5552 = vmatpush1.bf16.msra.mxu0 0
        %5553 = vmatprep.subr.bf16.mxu0 0
        %5554 = vmatpush1.bf16.msra.mxu0 0
        %5555 = vmatprep.subr.bf16.mxu0 0
        %5556 = vmatpush1.bf16.msra.mxu0 0
        %5557 = vmatprep.subr.bf16.mxu0 0
        %5558 = vmatpush1.bf16.msra.mxu0 0
        %5559 = vmatprep.subr.bf16.mxu0 0
        %5560 = vmatpush1.bf16.msra.mxu0 0
        %5561 = vmatprep.mubr.bf16.mxu0 0
        %5562 = vmatmul.mubr.bf16.gmra.mrb[0].mxu0 %v4351
        %v5563 = vpop.f32.mrb[0].mxu0
        %v5564 = vadd.f32 %v5516, %v5563
        %v5565 = vpop.f32.mrb[0].mxu0
        %v5566 = vpop.f32.mrb[0].mxu0
        %v5567 = vadd.f32 %v5516, %v5566
        %v5568 = vpop.f32.mrb[0].mxu0
        %5569 = vdwg.mxu0
        %s5570 = scalar_lea.vmem %s2, 368
        %v5571 = vld [vmem:[%s5570] sm:$0xf]
        %v5572 = vld [vmem:[%s5570 + $0x4] sm:$0xf]
        %v5573 = vld [vmem:[%s5570 + $0x8] sm:$0xf]
        %v5574 = vld [vmem:[%s5570 + $0xc] sm:$0xf]
        %v5575 = vld [vmem:[%s4286 + $0xf] sm:$0x1]
        %v5576 = vlaneseq
        %v5577 = vshrl.u32 %v5576, 7
        %v5578 = vsub.s32 0, %v5577
        %v5579 = vrot.slane %v5575, %v5578
        %v5584 = vunpack.c.l.b16 %v5571
        %v5585 = vunpack.c.l.b16 %v5572
        %v5586 = vunpack.c.l.b16 %v5573
        %v5587 = vunpack.c.l.b16 %v5574
        %v5588 = vpack.c.b16 %v5585, %v5584
        %v5589 = vpack.c.b16 %v5587, %v5586
        %5592 = vmatprep.subr.bf16.mxu0 0
        %5593 = vmatpush1.bf16.msra.mxu0 %v5588
        %5594 = vmatprep.subr.bf16.mxu0 0
        %5595 = vmatpush1.bf16.msra.mxu0 %v5589
        %5596 = vmatprep.subr.bf16.mxu0 0
        %5597 = vmatpush1.bf16.msra.mxu0 0
        %5598 = vmatprep.subr.bf16.mxu0 0
        %5599 = vmatpush1.bf16.msra.mxu0 0
        %5600 = vmatprep.subr.bf16.mxu0 0
        %5601 = vmatpush1.bf16.msra.mxu0 0
        %5602 = vmatprep.subr.bf16.mxu0 0
        %5603 = vmatpush1.bf16.msra.mxu0 0
        %5604 = vmatprep.subr.bf16.mxu0 0
        %5605 = vmatpush1.bf16.msra.mxu0 0
        %5606 = vmatprep.subr.bf16.mxu0 0
        %5607 = vmatpush1.bf16.msra.mxu0 0
        %5608 = vmatprep.subr.bf16.mxu0 0
        %5609 = vmatpush1.bf16.msra.mxu0 0
        %5610 = vmatprep.subr.bf16.mxu0 0
        %5611 = vmatpush1.bf16.msra.mxu0 0
        %5612 = vmatprep.subr.bf16.mxu0 0
        %5613 = vmatpush1.bf16.msra.mxu0 0
        %5614 = vmatprep.subr.bf16.mxu0 0
        %5615 = vmatpush1.bf16.msra.mxu0 0
        %5616 = vmatprep.subr.bf16.mxu0 0
        %5617 = vmatpush1.bf16.msra.mxu0 0
        %5618 = vmatprep.subr.bf16.mxu0 0
        %5619 = vmatpush1.bf16.msra.mxu0 0
        %5620 = vmatprep.subr.bf16.mxu0 0
        %5621 = vmatpush1.bf16.msra.mxu0 0
        %5622 = vmatprep.subr.bf16.mxu0 0
        %5623 = vmatpush1.bf16.msra.mxu0 0
        %5624 = vmatprep.mubr.bf16.mxu0 0
        %5625 = vmatmul.mubr.bf16.gmra.mrb[0].mxu0 %v4351
        %v5626 = vpop.f32.mrb[0].mxu0
        %v5627 = vadd.f32 %v5579, %v5626
        %v5628 = vpop.f32.mrb[0].mxu0
        %v5629 = vpop.f32.mrb[0].mxu0
        %v5630 = vadd.f32 %v5579, %v5629
        %v5631 = vpop.f32.mrb[0].mxu0
        %5632 = vdwg.mxu0
        %5633 = vrot.lane.b32.xlu0 %v4388, 104
        %v5634 = vpop.permute.xlu0 %5633
        %5635 = vrot.lane.b32.xlu0 %v4391, 104
        %v5636 = vpop.permute.xlu0 %5635
        %v5638 = vsel %vm783, %v5564, 0
        %v5641 = vsel %vm783, %v5567, 0
        %v5643 = vsel %vm783, %v5634, 0
        %v5645 = vsel %vm783, %v5636, 0
        %5647 = vmatprep.subr.mxu0 0.0
        %5648 = vmatpush1.xpose.msra.mxu0 %v5643
        %5649 = vmatprep.subr.mxu0 0.0
        %5650 = vmatpush1.xpose.msra.mxu0 %v5645
        %5651 = vmatprep.subr.mxu0 0.0
        %5652 = vmatpush1.xpose.msra.mxu0 0.0
        %5653 = vmatprep.subr.mxu0 0.0
        %5654 = vmatpush1.xpose.msra.mxu0 0.0
        %5655 = vmatprep.subr.mxu0 0.0
        %5656 = vmatpush1.xpose.msra.mxu0 0.0
        %5657 = vmatprep.subr.mxu0 0.0
        %5658 = vmatpush1.xpose.msra.mxu0 0.0
        %5659 = vmatprep.subr.mxu0 0.0
        %5660 = vmatpush1.xpose.msra.mxu0 0.0
        %5661 = vmatprep.subr.mxu0 0.0
        %5662 = vmatpush1.xpose.msra.mxu0 0.0
        %5663 = vmatprep.subr.mxu0 0.0
        %5664 = vmatpush1.xpose.msra.mxu0 0.0
        %5665 = vmatprep.subr.mxu0 0.0
        %5666 = vmatpush1.xpose.msra.mxu0 0.0
        %5667 = vmatprep.subr.mxu0 0.0
        %5668 = vmatpush1.xpose.msra.mxu0 0.0
        %5669 = vmatprep.subr.mxu0 0.0
        %5670 = vmatpush1.xpose.msra.mxu0 0.0
        %5671 = vmatprep.subr.mxu0 0.0
        %5672 = vmatpush1.xpose.msra.mxu0 0.0
        %5673 = vmatprep.subr.mxu0 0.0
        %5674 = vmatpush1.xpose.msra.mxu0 0.0
        %5675 = vmatprep.subr.mxu0 0.0
        %5676 = vmatpush1.xpose.msra.mxu0 0.0
        %5677 = vmatprep.subr.mxu0 0.0
        %5678 = vmatpush1.xpose.msra.mxu0 0.0
        %5679 = vmatprep.subr.mxu0 0.0
        %5680 = vmatpush1.xpose.msra.mxu0 0.0
        %5681 = vmatprep.subr.mxu0 0.0
        %5682 = vmatpush1.xpose.msra.mxu0 0.0
        %5683 = vmatprep.subr.mxu0 0.0
        %5684 = vmatpush1.xpose.msra.mxu0 0.0
        %5685 = vmatprep.subr.mxu0 0.0
        %5686 = vmatpush1.xpose.msra.mxu0 0.0
        %5687 = vmatprep.subr.mxu0 0.0
        %5688 = vmatpush1.xpose.msra.mxu0 0.0
        %5689 = vmatprep.subr.mxu0 0.0
        %5690 = vmatpush1.xpose.msra.mxu0 0.0
        %5691 = vmatprep.subr.mxu0 0.0
        %5692 = vmatpush1.xpose.msra.mxu0 0.0
        %5693 = vmatprep.subr.mxu0 0.0
        %5694 = vmatpush1.xpose.msra.mxu0 0.0
        %5695 = vmatprep.subr.mxu0 0.0
        %5696 = vmatpush1.xpose.msra.mxu0 0.0
        %5697 = vmatprep.subr.mxu0 0.0
        %5698 = vmatpush1.xpose.msra.mxu0 0.0
        %5699 = vmatprep.subr.mxu0 0.0
        %5700 = vmatpush1.xpose.msra.mxu0 0.0
        %5701 = vmatprep.subr.mxu0 0.0
        %5702 = vmatpush1.xpose.msra.mxu0 0.0
        %5703 = vmatprep.subr.mxu0 0.0
        %5704 = vmatpush1.xpose.msra.mxu0 0.0
        %5705 = vmatprep.subr.mxu0 0.0
        %5706 = vmatpush1.xpose.msra.mxu0 0.0
        %5707 = vmatprep.subr.mxu0 0.0
        %5708 = vmatpush1.xpose.msra.mxu0 0.0
        %5709 = vmatprep.subr.mxu0 0.0
        %5710 = vmatpush1.xpose.msra.mxu0 0.0
        %5711 = vmatprep.mubr.f32.mxu0 0.0
        %5712 = vmatmul.mubr.f32.gmra.mrb[0].mxu0 %v5638
        %v5713 = vpop.f32.mrb[0].mxu0
        %v5714 = vadd.f32 0.0, %v5713
        %v5715 = vpop.f32.mrb[0].mxu0
        %5716 = vmatprep.mubr.f32.mxu0 0.0
        %5717 = vmatmul.mubr.f32.gmra.mrb[0].mxu0 %v5641
        %v5718 = vpop.f32.mrb[0].mxu0
        %v5719 = vadd.f32 0.0, %v5718
        %v5720 = vpop.f32.mrb[0].mxu0
        %5721 = vdwg.mxu0
        %v5722 = vmul.f32 %v5714, 0.35355338
        %v5723 = vmul.f32 %v5719, 0.35355338
        %v5724 = vadd.f32 %v5722, %v4285
        %v5725 = vadd.f32 %v5723, %v4285
        %v5726 = vsel %vm875, %v5724, -inf
        %5727 = vmax.xlane.f32.xlu0 %v5726
        %v5728 = vpop.xlane.xlu0 %5727
        %v5729 = vsel %vm875, %v5725, -inf
        %5730 = vmax.xlane.f32.xlu0 %v5729
        %v5731 = vpop.xlane.xlu0 %5730
        %v5732 = vsub.f32 %v5724, %v5728
        %v5733 = vsub.f32 %v5725, %v5731
        %v5734 = vmul.f32 %v5732, 1.442695
        %v5735 = vpow.pop %v5734
        %v5736 = vmul.f32 %v5733, 1.442695
        %v5737 = vpow.pop %v5736
        %v5738 = vsel %vm875, %v5735, 0.0
        %5739 = vadd.xlane.f32.xlu0 %v5738
        %v5740 = vpop.xlane.xlu0 %5739
        %v5741 = vsel %vm875, %v5737, 0.0
        %5742 = vadd.xlane.f32.xlu0 %v5741
        %v5743 = vpop.xlane.xlu0 %5742
        %v5744 = vrcp.pop %v5740
        %v5745 = vrcp.pop %v5743
        %v5746 = vmul.f32 %v5735, %v5744
        %v5747 = vmul.f32 %v5737, %v5745
        %v5749 = vsel %vm875, %v5746, 0
        %v5752 = vsel %vm875, %v5747, 0
        %5754 = vmatprep.subr.mxu0 0.0
        %5755 = vmatpush1.msra.mxu0 %v5627
        %5756 = vmatprep.subr.mxu0 0.0
        %5757 = vmatpush1.msra.mxu0 %v5630
        %5758 = vmatprep.subr.mxu0 0.0
        %5759 = vmatpush1.msra.mxu0 0.0
        %5760 = vmatprep.subr.mxu0 0.0
        %5761 = vmatpush1.msra.mxu0 0.0
        %5762 = vmatprep.subr.mxu0 0.0
        %5763 = vmatpush1.msra.mxu0 0.0
        %5764 = vmatprep.subr.mxu0 0.0
        %5765 = vmatpush1.msra.mxu0 0.0
        %5766 = vmatprep.subr.mxu0 0.0
        %5767 = vmatpush1.msra.mxu0 0.0
        %5768 = vmatprep.subr.mxu0 0.0
        %5769 = vmatpush1.msra.mxu0 0.0
        %5770 = vmatprep.subr.mxu0 0.0
        %5771 = vmatpush1.msra.mxu0 0.0
        %5772 = vmatprep.subr.mxu0 0.0
        %5773 = vmatpush1.msra.mxu0 0.0
        %5774 = vmatprep.subr.mxu0 0.0
        %5775 = vmatpush1.msra.mxu0 0.0
        %5776 = vmatprep.subr.mxu0 0.0
        %5777 = vmatpush1.msra.mxu0 0.0
        %5778 = vmatprep.subr.mxu0 0.0
        %5779 = vmatpush1.msra.mxu0 0.0
        %5780 = vmatprep.subr.mxu0 0.0
        %5781 = vmatpush1.msra.mxu0 0.0
        %5782 = vmatprep.subr.mxu0 0.0
        %5783 = vmatpush1.msra.mxu0 0.0
        %5784 = vmatprep.subr.mxu0 0.0
        %5785 = vmatpush1.msra.mxu0 0.0
        %5786 = vmatprep.subr.mxu0 0.0
        %5787 = vmatpush1.msra.mxu0 0.0
        %5788 = vmatprep.subr.mxu0 0.0
        %5789 = vmatpush1.msra.mxu0 0.0
        %5790 = vmatprep.subr.mxu0 0.0
        %5791 = vmatpush1.msra.mxu0 0.0
        %5792 = vmatprep.subr.mxu0 0.0
        %5793 = vmatpush1.msra.mxu0 0.0
        %5794 = vmatprep.subr.mxu0 0.0
        %5795 = vmatpush1.msra.mxu0 0.0
        %5796 = vmatprep.subr.mxu0 0.0
        %5797 = vmatpush1.msra.mxu0 0.0
        %5798 = vmatprep.subr.mxu0 0.0
        %5799 = vmatpush1.msra.mxu0 0.0
        %5800 = vmatprep.subr.mxu0 0.0
        %5801 = vmatpush1.msra.mxu0 0.0
        %5802 = vmatprep.subr.mxu0 0.0
        %5803 = vmatpush1.msra.mxu0 0.0
        %5804 = vmatprep.subr.mxu0 0.0
        %5805 = vmatpush1.msra.mxu0 0.0
        %5806 = vmatprep.subr.mxu0 0.0
        %5807 = vmatpush1.msra.mxu0 0.0
        %5808 = vmatprep.subr.mxu0 0.0
        %5809 = vmatpush1.msra.mxu0 0.0
        %5810 = vmatprep.subr.mxu0 0.0
        %5811 = vmatpush1.msra.mxu0 0.0
        %5812 = vmatprep.subr.mxu0 0.0
        %5813 = vmatpush1.msra.mxu0 0.0
        %5814 = vmatprep.subr.mxu0 0.0
        %5815 = vmatpush1.msra.mxu0 0.0
        %5816 = vmatprep.subr.mxu0 0.0
        %5817 = vmatpush1.msra.mxu0 0.0
        %5818 = vmatprep.mubr.f32.mxu0 0.0
        %5819 = vmatmul.mubr.f32.gmra.mrb[0].mxu0 %v5749
        %v5820 = vpop.f32.mrb[0].mxu0
        %v5821 = vadd.f32 0.0, %v5820
        %v5822 = vpop.f32.mrb[0].mxu0
        %5823 = vmatprep.mubr.f32.mxu0 0.0
        %5824 = vmatmul.mubr.f32.gmra.mrb[0].mxu0 %v5752
        %v5825 = vpop.f32.mrb[0].mxu0
        %v5826 = vadd.f32 0.0, %v5825
        %v5827 = vpop.f32.mrb[0].mxu0
        %5828 = vdwg.mxu0
        %v5829 = vpack.c.bf16 %v5826, %v5821
        %v5830 = vld [vmem:[%s4328 + $0x1c] sm:$0xf]
        %v5832 = vsel %vm783, %v5829, 0
        %v5835 = vsel %vm1308, %v5830, 0
        %5837 = vmatprep.subr.bf16.mxu0 0
        %5838 = vmatpush1.bf16.msra.mxu0 %v5835
        %5839 = vmatprep.subr.bf16.mxu0 0
        %5840 = vmatpush1.bf16.msra.mxu0 0
        %5841 = vmatprep.subr.bf16.mxu0 0
        %5842 = vmatpush1.bf16.msra.mxu0 0
        %5843 = vmatprep.subr.bf16.mxu0 0
        %5844 = vmatpush1.bf16.msra.mxu0 0
        %5845 = vmatprep.subr.bf16.mxu0 0
        %5846 = vmatpush1.bf16.msra.mxu0 0
        %5847 = vmatprep.subr.bf16.mxu0 0
        %5848 = vmatpush1.bf16.msra.mxu0 0
        %5849 = vmatprep.subr.bf16.mxu0 0
        %5850 = vmatpush1.bf16.msra.mxu0 0
        %5851 = vmatprep.subr.bf16.mxu0 0
        %5852 = vmatpush1.bf16.msra.mxu0 0
        %5853 = vmatprep.subr.bf16.mxu0 0
        %5854 = vmatpush1.bf16.msra.mxu0 0
        %5855 = vmatprep.subr.bf16.mxu0 0
        %5856 = vmatpush1.bf16.msra.mxu0 0
        %5857 = vmatprep.subr.bf16.mxu0 0
        %5858 = vmatpush1.bf16.msra.mxu0 0
        %5859 = vmatprep.subr.bf16.mxu0 0
        %5860 = vmatpush1.bf16.msra.mxu0 0
        %5861 = vmatprep.subr.bf16.mxu0 0
        %5862 = vmatpush1.bf16.msra.mxu0 0
        %5863 = vmatprep.subr.bf16.mxu0 0
        %5864 = vmatpush1.bf16.msra.mxu0 0
        %5865 = vmatprep.subr.bf16.mxu0 0
        %5866 = vmatpush1.bf16.msra.mxu0 0
        %5867 = vmatprep.subr.bf16.mxu0 0
        %5868 = vmatpush1.bf16.msra.mxu0 0
        %5869 = vmatprep.mubr.bf16.mxu0 0
        %5870 = vmatmul.mubr.bf16.gmra.mrb[0].mxu0 %v5832
        %v5871 = vpop.f32.mrb[0].mxu0
        %v5872 = vadd.f32 0.0, %v5871
        %v5873 = vpop.f32.mrb[0].mxu0
        %v5874 = vpop.f32.mrb[0].mxu0
        %v5875 = vadd.f32 0.0, %v5874
        %v5876 = vpop.f32.mrb[0].mxu0
        %5877 = vdwg.mxu0
        %v5878 = vadd.f32 %v5505, %v5872
        %v5879 = vadd.f32 %v5506, %v5875
        %v5880 = vadd.f32 %v4276, %v5878
        %v5881 = vadd.f32 %v4281, %v5879
        %v5882 = vld [vmem:[%s4286 + $0x3] sm:$0x1]
        %v5883 = vlaneseq
        %v5884 = vshrl.u32 %v5883, 7
        %v5885 = vsub.s32 0, %v5884
        %v5886 = vrot.slane %v5882, %v5885
        %v5887 = vadd.f32 %v5880, %v5886
        %v5888 = vadd.f32 %v5881, %v5886
        %v5889 = vld [vmem:[%s4286 + $0x4] sm:$0x1]
        %v5890 = vld [vmem:[%s4286 + $0x5] sm:$0x1]
        %v5891 = vsel %vm552, %v5887, 0.0
        %5892 = vadd.xlane.f32.xlu0 %v5891
        %v5893 = vpop.xlane.xlu0 %5892
        %v5894 = vsel %vm552, %v5888, 0.0
        %5895 = vadd.xlane.f32.xlu0 %v5894
        %v5896 = vpop.xlane.xlu0 %5895
        %v5897 = vmul.f32 %v5893, %v559
        %v5898 = vmul.f32 %v5896, %v559
        %v5899 = vsub.f32 %v5887, %v5897
        %v5900 = vsub.f32 %v5888, %v5898
        %v5901 = vmul.f32 %v5899, %v5899
        %v5902 = vmul.f32 %v5900, %v5900
        %v5903 = vsel %vm552, %v5901, 0.0
        %5904 = vadd.xlane.f32.xlu0 %v5903
        %v5905 = vpop.xlane.xlu0 %5904
        %v5906 = vsel %vm552, %v5902, 0.0
        %5907 = vadd.xlane.f32.xlu0 %v5906
        %v5908 = vpop.xlane.xlu0 %5907
        %v5909 = vmul.f32 %v5905, %v559
        %v5910 = vmul.f32 %v5908, %v559
        %v5911 = vadd.f32 %v5909, 1e-06
        %v5912 = vadd.f32 %v5910, 1e-06
        %v5913 = vrsqrt.pop %v5911
        %v5914 = vrsqrt.pop %v5912
        %v5915 = vmul.f32 %v5899, %v5913
        %v5916 = vmul.f32 %v5900, %v5914
        %v5917 = vlaneseq
        %v5918 = vshrl.u32 %v5917, 7
        %v5919 = vsub.s32 0, %v5918
        %v5920 = vrot.slane %v5889, %v5919
        %v5921 = vmul.f32 %v5915, %v5920
        %v5922 = vmul.f32 %v5916, %v5920
        %v5923 = vlaneseq
        %v5924 = vshrl.u32 %v5923, 7
        %v5925 = vsub.s32 0, %v5924
        %v5926 = vrot.slane %v5890, %v5925
        %v5927 = vadd.f32 %v5921, %v5926
        %v5928 = vadd.f32 %v5922, %v5926
        %v5929 = vpack.c.bf16 %v5928, %v5927
        %v5930 = vld [vmem:[%s4328 + $0x20] sm:$0xf]
        %v5931 = vld [vmem:[%s4328 + $0x24] sm:$0xf]
        %v5932 = vld [vmem:[%s4328 + $0x28] sm:$0xf]
        %v5933 = vld [vmem:[%s4328 + $0x2c] sm:$0xf]
        %v5934 = vld [vmem:[%s4286 + $0x6] sm:$0x1]
        %v5935 = vlaneseq
        %v5936 = vshrl.u32 %v5935, 7
        %v5937 = vsub.s32 0, %v5936
        %v5938 = vrot.slane %v5934, %v5937
        %v5943 = vunpack.c.l.b16 %v5930
        %v5944 = vunpack.c.l.b16 %v5931
        %v5945 = vunpack.c.l.b16 %v5932
        %v5946 = vunpack.c.l.b16 %v5933
        %v5947 = vpack.c.b16 %v5944, %v5943
        %v5948 = vpack.c.b16 %v5946, %v5945
        %v5952 = vsel %vm552, %v5929, 0
        %5954 = vmatprep.subr.bf16.mxu0 0
        %5955 = vmatpush1.bf16.msra.mxu0 %v5947
        %5956 = vmatprep.subr.bf16.mxu0 0
        %5957 = vmatpush1.bf16.msra.mxu0 %v5948
        %5958 = vmatprep.subr.bf16.mxu0 0
        %5959 = vmatpush1.bf16.msra.mxu0 0
        %5960 = vmatprep.subr.bf16.mxu0 0
        %5961 = vmatpush1.bf16.msra.mxu0 0
        %5962 = vmatprep.subr.bf16.mxu0 0
        %5963 = vmatpush1.bf16.msra.mxu0 0
        %5964 = vmatprep.subr.bf16.mxu0 0
        %5965 = vmatpush1.bf16.msra.mxu0 0
        %5966 = vmatprep.subr.bf16.mxu0 0
        %5967 = vmatpush1.bf16.msra.mxu0 0
        %5968 = vmatprep.subr.bf16.mxu0 0
        %5969 = vmatpush1.bf16.msra.mxu0 0
        %5970 = vmatprep.subr.bf16.mxu0 0
        %5971 = vmatpush1.bf16.msra.mxu0 0
        %5972 = vmatprep.subr.bf16.mxu0 0
        %5973 = vmatpush1.bf16.msra.mxu0 0
        %5974 = vmatprep.subr.bf16.mxu0 0
        %5975 = vmatpush1.bf16.msra.mxu0 0
        %5976 = vmatprep.subr.bf16.mxu0 0
        %5977 = vmatpush1.bf16.msra.mxu0 0
        %5978 = vmatprep.subr.bf16.mxu0 0
        %5979 = vmatpush1.bf16.msra.mxu0 0
        %5980 = vmatprep.subr.bf16.mxu0 0
        %5981 = vmatpush1.bf16.msra.mxu0 0
        %5982 = vmatprep.subr.bf16.mxu0 0
        %5983 = vmatpush1.bf16.msra.mxu0 0
        %5984 = vmatprep.subr.bf16.mxu0 0
        %5985 = vmatpush1.bf16.msra.mxu0 0
        %5986 = vmatprep.mubr.bf16.mxu0 0
        %5987 = vmatmul.mubr.bf16.gmra.mrb[0].mxu0 %v5952
        %v5988 = vpop.f32.mrb[0].mxu0
        %v5989 = vadd.f32 %v5938, %v5988
        %v5990 = vpop.f32.mrb[0].mxu0
        %v5991 = vpop.f32.mrb[0].mxu0
        %v5992 = vadd.f32 %v5938, %v5991
        %v5993 = vpop.f32.mrb[0].mxu0
        %5994 = vdwg.mxu0
        %v5995 = vmul.f32 %v5989, 0.5
        %v5996 = vmul.f32 %v5992, 0.5
        %v5997 = vmul.f32 %v5989, 0.70710677
        %v5998 = vmul.f32 %v5992, 0.70710677
        %v5999 = verf.f32.pop %v5997
        %v6000 = verf.f32.pop %v5998
        %v6001 = vadd.f32 %v5999, 1.0
        %v6002 = vadd.f32 %v6000, 1.0
        %v6003 = vmul.f32 %v5995, %v6001
        %v6004 = vmul.f32 %v5996, %v6002
        %v6005 = vpack.c.bf16 %v6004, %v6003
        %v6006 = vld [vmem:[%s4328 + $0x30] sm:$0xf]
        %v6007 = vld [vmem:[%s4328 + $0x34] sm:$0xf]
        %v6008 = vld [vmem:[%s4328 + $0x38] sm:$0xf]
        %v6009 = vld [vmem:[%s4328 + $0x3c] sm:$0xf]
        %v6010 = vld [vmem:[%s4328 + $0x40] sm:$0xf]
        %v6011 = vld [vmem:[%s4328 + $0x44] sm:$0xf]
        %v6012 = vld [vmem:[%s4328 + $0x48] sm:$0xf]
        %v6013 = vld [vmem:[%s4328 + $0x4c] sm:$0xf]
        %v6014 = vld [vmem:[%s4286 + $0x7] sm:$0x1]
        %v6015 = vlaneseq
        %v6016 = vshrl.u32 %v6015, 7
        %v6017 = vsub.s32 0, %v6016
        %v6018 = vrot.slane %v6014, %v6017
        %v6027 = vunpack.c.l.b16 %v6006
        %v6028 = vunpack.c.l.b16 %v6007
        %v6029 = vunpack.c.l.b16 %v6008
        %v6030 = vunpack.c.l.b16 %v6009
        %v6031 = vunpack.c.l.b16 %v6010
        %v6032 = vunpack.c.l.b16 %v6011
        %v6033 = vunpack.c.l.b16 %v6012
        %v6034 = vunpack.c.l.b16 %v6013
        %v6035 = vpack.c.b16 %v6028, %v6027
        %v6036 = vpack.c.b16 %v6030, %v6029
        %v6037 = vpack.c.b16 %v6032, %v6031
        %v6038 = vpack.c.b16 %v6034, %v6033
        %v6044 = vsel %vm2309, %v6005, 0
        %6046 = vmatprep.subr.bf16.mxu0 0
        %6047 = vmatpush1.bf16.msra.mxu0 %v6035
        %6048 = vmatprep.subr.bf16.mxu0 0
        %6049 = vmatpush1.bf16.msra.mxu0 %v6036
        %6050 = vmatprep.subr.bf16.mxu0 0
        %6051 = vmatpush1.bf16.msra.mxu0 %v6037
        %6052 = vmatprep.subr.bf16.mxu0 0
        %6053 = vmatpush1.bf16.msra.mxu0 %v6038
        %6054 = vmatprep.subr.bf16.mxu0 0
        %6055 = vmatpush1.bf16.msra.mxu0 0
        %6056 = vmatprep.subr.bf16.mxu0 0
        %6057 = vmatpush1.bf16.msra.mxu0 0
        %6058 = vmatprep.subr.bf16.mxu0 0
        %6059 = vmatpush1.bf16.msra.mxu0 0
        %6060 = vmatprep.subr.bf16.mxu0 0
        %6061 = vmatpush1.bf16.msra.mxu0 0
        %6062 = vmatprep.subr.bf16.mxu0 0
        %6063 = vmatpush1.bf16.msra.mxu0 0
        %6064 = vmatprep.subr.bf16.mxu0 0
        %6065 = vmatpush1.bf16.msra.mxu0 0
        %6066 = vmatprep.subr.bf16.mxu0 0
        %6067 = vmatpush1.bf16.msra.mxu0 0
        %6068 = vmatprep.subr.bf16.mxu0 0
        %6069 = vmatpush1.bf16.msra.mxu0 0
        %6070 = vmatprep.subr.bf16.mxu0 0
        %6071 = vmatpush1.bf16.msra.mxu0 0
        %6072 = vmatprep.subr.bf16.mxu0 0
        %6073 = vmatpush1.bf16.msra.mxu0 0
        %6074 = vmatprep.subr.bf16.mxu0 0
        %6075 = vmatpush1.bf16.msra.mxu0 0
        %6076 = vmatprep.subr.bf16.mxu0 0
        %6077 = vmatpush1.bf16.msra.mxu0 0
        %6078 = vmatprep.mubr.bf16.mxu0 0
        %6079 = vmatmul.mubr.bf16.gmra.mrb[0].mxu0 %v6044
        %v6080 = vpop.f32.mrb[0].mxu0
        %v6081 = vadd.f32 %v6018, %v6080
        %v6082 = vpop.f32.mrb[0].mxu0
        %v6083 = vpop.f32.mrb[0].mxu0
        %v6084 = vadd.f32 %v6018, %v6083
        %v6085 = vpop.f32.mrb[0].mxu0
        %6086 = vdwg.mxu0
        %v6087 = vadd.f32 %v5887, %v6081
        %v6088 = vadd.f32 %v5888, %v6084
        %s6089 = scalar_lea.vmem %s4, 48
        %v6090 = vld [vmem:[%s6089] sm:$0x1]
        %v6091 = vld [vmem:[%s6089 + $0x1] sm:$0x1]
        %v6092 = vsel %vm552, %v6087, 0.0
        %6093 = vadd.xlane.f32.xlu0 %v6092
        %v6094 = vpop.xlane.xlu0 %6093
        %v6095 = vsel %vm552, %v6088, 0.0
        %6096 = vadd.xlane.f32.xlu0 %v6095
        %v6097 = vpop.xlane.xlu0 %6096
        %v6098 = vmul.f32 %v6094, %v559
        %v6099 = vmul.f32 %v6097, %v559
        %v6100 = vsub.f32 %v6087, %v6098
        %v6101 = vsub.f32 %v6088, %v6099
        %v6102 = vmul.f32 %v6100, %v6100
        %v6103 = vmul.f32 %v6101, %v6101
        %v6104 = vsel %vm552, %v6102, 0.0
        %6105 = vadd.xlane.f32.xlu0 %v6104
        %v6106 = vpop.xlane.xlu0 %6105
        %v6107 = vsel %vm552, %v6103, 0.0
        %6108 = vadd.xlane.f32.xlu0 %v6107
        %v6109 = vpop.xlane.xlu0 %6108
        %v6110 = vmul.f32 %v6106, %v559
        %v6111 = vmul.f32 %v6109, %v559
        %v6112 = vadd.f32 %v6110, 1e-06
        %v6113 = vadd.f32 %v6111, 1e-06
        %v6114 = vrsqrt.pop %v6112
        %v6115 = vrsqrt.pop %v6113
        %v6116 = vmul.f32 %v6100, %v6114
        %v6117 = vmul.f32 %v6101, %v6115
        %v6118 = vlaneseq
        %v6119 = vshrl.u32 %v6118, 7
        %v6120 = vsub.s32 0, %v6119
        %v6121 = vrot.slane %v6090, %v6120
        %v6122 = vmul.f32 %v6116, %v6121
        %v6123 = vmul.f32 %v6117, %v6121
        %v6124 = vlaneseq
        %v6125 = vshrl.u32 %v6124, 7
        %v6126 = vsub.s32 0, %v6125
        %v6127 = vrot.slane %v6091, %v6126
        %v6128 = vadd.f32 %v6122, %v6127
        %v6129 = vadd.f32 %v6123, %v6127
        %v6130 = vpack.c.bf16 %v6129, %v6128
        %s6131 = scalar_lea.vmem %s3, 240
        %v6132 = vld [vmem:[%s6131] sm:$0xf]
        %v6133 = vld [vmem:[%s6131 + $0x4] sm:$0xf]
        %v6134 = vld [vmem:[%s6131 + $0x8] sm:$0xf]
        %v6135 = vld [vmem:[%s6131 + $0xc] sm:$0xf]
        %v6136 = vld [vmem:[%s6089 + $0x2] sm:$0x1]
        %v6137 = vlaneseq
        %v6138 = vshrl.u32 %v6137, 7
        %v6139 = vsub.s32 0, %v6138
        %v6140 = vrot.slane %v6136, %v6139
        %v6145 = vunpack.c.l.b16 %v6132
        %v6146 = vunpack.c.l.b16 %v6133
        %v6147 = vunpack.c.l.b16 %v6134
        %v6148 = vunpack.c.l.b16 %v6135
        %v6149 = vpack.c.b16 %v6146, %v6145
        %v6150 = vpack.c.b16 %v6148, %v6147
        %v6154 = vsel %vm552, %v6130, 0
        %6156 = vmatprep.subr.bf16.mxu0 0
        %6157 = vmatpush1.bf16.msra.mxu0 %v6149
        %6158 = vmatprep.subr.bf16.mxu0 0
        %6159 = vmatpush1.bf16.msra.mxu0 %v6150
        %6160 = vmatprep.subr.bf16.mxu0 0
        %6161 = vmatpush1.bf16.msra.mxu0 0
        %6162 = vmatprep.subr.bf16.mxu0 0
        %6163 = vmatpush1.bf16.msra.mxu0 0
        %6164 = vmatprep.subr.bf16.mxu0 0
        %6165 = vmatpush1.bf16.msra.mxu0 0
        %6166 = vmatprep.subr.bf16.mxu0 0
        %6167 = vmatpush1.bf16.msra.mxu0 0
        %6168 = vmatprep.subr.bf16.mxu0 0
        %6169 = vmatpush1.bf16.msra.mxu0 0
        %6170 = vmatprep.subr.bf16.mxu0 0
        %6171 = vmatpush1.bf16.msra.mxu0 0
        %6172 = vmatprep.subr.bf16.mxu0 0
        %6173 = vmatpush1.bf16.msra.mxu0 0
        %6174 = vmatprep.subr.bf16.mxu0 0
        %6175 = vmatpush1.bf16.msra.mxu0 0
        %6176 = vmatprep.subr.bf16.mxu0 0
        %6177 = vmatpush1.bf16.msra.mxu0 0
        %6178 = vmatprep.subr.bf16.mxu0 0
        %6179 = vmatpush1.bf16.msra.mxu0 0
        %6180 = vmatprep.subr.bf16.mxu0 0
        %6181 = vmatpush1.bf16.msra.mxu0 0
        %6182 = vmatprep.subr.bf16.mxu0 0
        %6183 = vmatpush1.bf16.msra.mxu0 0
        %6184 = vmatprep.subr.bf16.mxu0 0
        %6185 = vmatpush1.bf16.msra.mxu0 0
        %6186 = vmatprep.subr.bf16.mxu0 0
        %6187 = vmatpush1.bf16.msra.mxu0 0
        %6188 = vmatprep.mubr.bf16.mxu0 0
        %6189 = vmatmul.mubr.bf16.gmra.mrb[0].mxu0 %v6154
        %v6190 = vpop.f32.mrb[0].mxu0
        %v6191 = vadd.f32 %v6140, %v6190
        %v6192 = vpop.f32.mrb[0].mxu0
        %v6193 = vpop.f32.mrb[0].mxu0
        %v6194 = vadd.f32 %v6140, %v6193
        %v6195 = vpop.f32.mrb[0].mxu0
        %6196 = vdwg.mxu0
        %s6197 = scalar_lea.vmem %s2, 384
        %v6198 = vld [vmem:[%s6197] sm:$0xf]
        %v6199 = vld [vmem:[%s6197 + $0x4] sm:$0xf]
        %v6200 = vld [vmem:[%s6197 + $0x8] sm:$0xf]
        %v6201 = vld [vmem:[%s6197 + $0xc] sm:$0xf]
        %v6202 = vld [vmem:[%s6089 + $0x8] sm:$0x1]
        %v6203 = vlaneseq
        %v6204 = vshrl.u32 %v6203, 7
        %v6205 = vsub.s32 0, %v6204
        %v6206 = vrot.slane %v6202, %v6205
        %v6211 = vunpack.c.l.b16 %v6198
        %v6212 = vunpack.c.l.b16 %v6199
        %v6213 = vunpack.c.l.b16 %v6200
        %v6214 = vunpack.c.l.b16 %v6201
        %v6215 = vpack.c.b16 %v6212, %v6211
        %v6216 = vpack.c.b16 %v6214, %v6213
        %6219 = vmatprep.subr.bf16.mxu0 0
        %6220 = vmatpush1.bf16.msra.mxu0 %v6215
        %6221 = vmatprep.subr.bf16.mxu0 0
        %6222 = vmatpush1.bf16.msra.mxu0 %v6216
        %6223 = vmatprep.subr.bf16.mxu0 0
        %6224 = vmatpush1.bf16.msra.mxu0 0
        %6225 = vmatprep.subr.bf16.mxu0 0
        %6226 = vmatpush1.bf16.msra.mxu0 0
        %6227 = vmatprep.subr.bf16.mxu0 0
        %6228 = vmatpush1.bf16.msra.mxu0 0
        %6229 = vmatprep.subr.bf16.mxu0 0
        %6230 = vmatpush1.bf16.msra.mxu0 0
        %6231 = vmatprep.subr.bf16.mxu0 0
        %6232 = vmatpush1.bf16.msra.mxu0 0
        %6233 = vmatprep.subr.bf16.mxu0 0
        %6234 = vmatpush1.bf16.msra.mxu0 0
        %6235 = vmatprep.subr.bf16.mxu0 0
        %6236 = vmatpush1.bf16.msra.mxu0 0
        %6237 = vmatprep.subr.bf16.mxu0 0
        %6238 = vmatpush1.bf16.msra.mxu0 0
        %6239 = vmatprep.subr.bf16.mxu0 0
        %6240 = vmatpush1.bf16.msra.mxu0 0
        %6241 = vmatprep.subr.bf16.mxu0 0
        %6242 = vmatpush1.bf16.msra.mxu0 0
        %6243 = vmatprep.subr.bf16.mxu0 0
        %6244 = vmatpush1.bf16.msra.mxu0 0
        %6245 = vmatprep.subr.bf16.mxu0 0
        %6246 = vmatpush1.bf16.msra.mxu0 0
        %6247 = vmatprep.subr.bf16.mxu0 0
        %6248 = vmatpush1.bf16.msra.mxu0 0
        %6249 = vmatprep.subr.bf16.mxu0 0
        %6250 = vmatpush1.bf16.msra.mxu0 0
        %6251 = vmatprep.mubr.bf16.mxu0 0
        %6252 = vmatmul.mubr.bf16.gmra.mrb[0].mxu0 %v6154
        %v6253 = vpop.f32.mrb[0].mxu0
        %v6254 = vadd.f32 %v6206, %v6253
        %v6255 = vpop.f32.mrb[0].mxu0
        %v6256 = vpop.f32.mrb[0].mxu0
        %v6257 = vadd.f32 %v6206, %v6256
        %v6258 = vpop.f32.mrb[0].mxu0
        %6259 = vdwg.mxu0
        %s6260 = scalar_lea.vmem %s2, 448
        %v6261 = vld [vmem:[%s6260] sm:$0xf]
        %v6262 = vld [vmem:[%s6260 + $0x4] sm:$0xf]
        %v6263 = vld [vmem:[%s6260 + $0x8] sm:$0xf]
        %v6264 = vld [vmem:[%s6260 + $0xc] sm:$0xf]
        %v6265 = vld [vmem:[%s6089 + $0xc] sm:$0x1]
        %v6266 = vlaneseq
        %v6267 = vshrl.u32 %v6266, 7
        %v6268 = vsub.s32 0, %v6267
        %v6269 = vrot.slane %v6265, %v6268
        %v6274 = vunpack.c.l.b16 %v6261
        %v6275 = vunpack.c.l.b16 %v6262
        %v6276 = vunpack.c.l.b16 %v6263
        %v6277 = vunpack.c.l.b16 %v6264
        %v6278 = vpack.c.b16 %v6275, %v6274
        %v6279 = vpack.c.b16 %v6277, %v6276
        %6282 = vmatprep.subr.bf16.mxu0 0
        %6283 = vmatpush1.bf16.msra.mxu0 %v6278
        %6284 = vmatprep.subr.bf16.mxu0 0
        %6285 = vmatpush1.bf16.msra.mxu0 %v6279
        %6286 = vmatprep.subr.bf16.mxu0 0
        %6287 = vmatpush1.bf16.msra.mxu0 0
        %6288 = vmatprep.subr.bf16.mxu0 0
        %6289 = vmatpush1.bf16.msra.mxu0 0
        %6290 = vmatprep.subr.bf16.mxu0 0
        %6291 = vmatpush1.bf16.msra.mxu0 0
        %6292 = vmatprep.subr.bf16.mxu0 0
        %6293 = vmatpush1.bf16.msra.mxu0 0
        %6294 = vmatprep.subr.bf16.mxu0 0
        %6295 = vmatpush1.bf16.msra.mxu0 0
        %6296 = vmatprep.subr.bf16.mxu0 0
        %6297 = vmatpush1.bf16.msra.mxu0 0
        %6298 = vmatprep.subr.bf16.mxu0 0
        %6299 = vmatpush1.bf16.msra.mxu0 0
        %6300 = vmatprep.subr.bf16.mxu0 0
        %6301 = vmatpush1.bf16.msra.mxu0 0
        %6302 = vmatprep.subr.bf16.mxu0 0
        %6303 = vmatpush1.bf16.msra.mxu0 0
        %6304 = vmatprep.subr.bf16.mxu0 0
        %6305 = vmatpush1.bf16.msra.mxu0 0
        %6306 = vmatprep.subr.bf16.mxu0 0
        %6307 = vmatpush1.bf16.msra.mxu0 0
        %6308 = vmatprep.subr.bf16.mxu0 0
        %6309 = vmatpush1.bf16.msra.mxu0 0
        %6310 = vmatprep.subr.bf16.mxu0 0
        %6311 = vmatpush1.bf16.msra.mxu0 0
        %6312 = vmatprep.subr.bf16.mxu0 0
        %6313 = vmatpush1.bf16.msra.mxu0 0
        %6314 = vmatprep.mubr.bf16.mxu0 0
        %6315 = vmatmul.mubr.bf16.gmra.mrb[0].mxu0 %v6154
        %v6316 = vpop.f32.mrb[0].mxu0
        %v6317 = vadd.f32 %v6269, %v6316
        %v6318 = vpop.f32.mrb[0].mxu0
        %v6319 = vpop.f32.mrb[0].mxu0
        %v6320 = vadd.f32 %v6269, %v6319
        %v6321 = vpop.f32.mrb[0].mxu0
        %6322 = vdwg.mxu0
        %v6324 = vsel %vm783, %v6254, 0
        %v6327 = vsel %vm783, %v6257, 0
        %v6330 = vsel %vm783, %v6191, 0
        %v6333 = vsel %vm783, %v6194, 0
        %6335 = vmatprep.subr.mxu0 0.0
        %6336 = vmatpush1.xpose.msra.mxu0 %v6330
        %6337 = vmatprep.subr.mxu0 0.0
        %6338 = vmatpush1.xpose.msra.mxu0 %v6333
        %6339 = vmatprep.subr.mxu0 0.0
        %6340 = vmatpush1.xpose.msra.mxu0 0.0
        %6341 = vmatprep.subr.mxu0 0.0
        %6342 = vmatpush1.xpose.msra.mxu0 0.0
        %6343 = vmatprep.subr.mxu0 0.0
        %6344 = vmatpush1.xpose.msra.mxu0 0.0
        %6345 = vmatprep.subr.mxu0 0.0
        %6346 = vmatpush1.xpose.msra.mxu0 0.0
        %6347 = vmatprep.subr.mxu0 0.0
        %6348 = vmatpush1.xpose.msra.mxu0 0.0
        %6349 = vmatprep.subr.mxu0 0.0
        %6350 = vmatpush1.xpose.msra.mxu0 0.0
        %6351 = vmatprep.subr.mxu0 0.0
        %6352 = vmatpush1.xpose.msra.mxu0 0.0
        %6353 = vmatprep.subr.mxu0 0.0
        %6354 = vmatpush1.xpose.msra.mxu0 0.0
        %6355 = vmatprep.subr.mxu0 0.0
        %6356 = vmatpush1.xpose.msra.mxu0 0.0
        %6357 = vmatprep.subr.mxu0 0.0
        %6358 = vmatpush1.xpose.msra.mxu0 0.0
        %6359 = vmatprep.subr.mxu0 0.0
        %6360 = vmatpush1.xpose.msra.mxu0 0.0
        %6361 = vmatprep.subr.mxu0 0.0
        %6362 = vmatpush1.xpose.msra.mxu0 0.0
        %6363 = vmatprep.subr.mxu0 0.0
        %6364 = vmatpush1.xpose.msra.mxu0 0.0
        %6365 = vmatprep.subr.mxu0 0.0
        %6366 = vmatpush1.xpose.msra.mxu0 0.0
        %6367 = vmatprep.subr.mxu0 0.0
        %6368 = vmatpush1.xpose.msra.mxu0 0.0
        %6369 = vmatprep.subr.mxu0 0.0
        %6370 = vmatpush1.xpose.msra.mxu0 0.0
        %6371 = vmatprep.subr.mxu0 0.0
        %6372 = vmatpush1.xpose.msra.mxu0 0.0
        %6373 = vmatprep.subr.mxu0 0.0
        %6374 = vmatpush1.xpose.msra.mxu0 0.0
        %6375 = vmatprep.subr.mxu0 0.0
        %6376 = vmatpush1.xpose.msra.mxu0 0.0
        %6377 = vmatprep.subr.mxu0 0.0
        %6378 = vmatpush1.xpose.msra.mxu0 0.0
        %6379 = vmatprep.subr.mxu0 0.0
        %6380 = vmatpush1.xpose.msra.mxu0 0.0
        %6381 = vmatprep.subr.mxu0 0.0
        %6382 = vmatpush1.xpose.msra.mxu0 0.0
        %6383 = vmatprep.subr.mxu0 0.0
        %6384 = vmatpush1.xpose.msra.mxu0 0.0
        %6385 = vmatprep.subr.mxu0 0.0
        %6386 = vmatpush1.xpose.msra.mxu0 0.0
        %6387 = vmatprep.subr.mxu0 0.0
        %6388 = vmatpush1.xpose.msra.mxu0 0.0
        %6389 = vmatprep.subr.mxu0 0.0
        %6390 = vmatpush1.xpose.msra.mxu0 0.0
        %6391 = vmatprep.subr.mxu0 0.0
        %6392 = vmatpush1.xpose.msra.mxu0 0.0
        %6393 = vmatprep.subr.mxu0 0.0
        %6394 = vmatpush1.xpose.msra.mxu0 0.0
        %6395 = vmatprep.subr.mxu0 0.0
        %6396 = vmatpush1.xpose.msra.mxu0 0.0
        %6397 = vmatprep.subr.mxu0 0.0
        %6398 = vmatpush1.xpose.msra.mxu0 0.0
        %6399 = vmatprep.mubr.f32.mxu0 0.0
        %6400 = vmatmul.mubr.f32.gmra.mrb[0].mxu0 %v6324
        %v6401 = vpop.f32.mrb[0].mxu0
        %v6402 = vadd.f32 0.0, %v6401
        %v6403 = vpop.f32.mrb[0].mxu0
        %6404 = vmatprep.mubr.f32.mxu0 0.0
        %6405 = vmatmul.mubr.f32.gmra.mrb[0].mxu0 %v6327
        %v6406 = vpop.f32.mrb[0].mxu0
        %v6407 = vadd.f32 0.0, %v6406
        %v6408 = vpop.f32.mrb[0].mxu0
        %6409 = vdwg.mxu0
        %v6410 = vmul.f32 %v6402, 0.35355338
        %v6411 = vmul.f32 %v6407, 0.35355338
        %v6412 = vadd.f32 %v6410, %v4285
        %v6413 = vadd.f32 %v6411, %v4285
        %v6414 = vsel %vm875, %v6412, -inf
        %6415 = vmax.xlane.f32.xlu0 %v6414
        %v6416 = vpop.xlane.xlu0 %6415
        %v6417 = vsel %vm875, %v6413, -inf
        %6418 = vmax.xlane.f32.xlu0 %v6417
        %v6419 = vpop.xlane.xlu0 %6418
        %v6420 = vsub.f32 %v6412, %v6416
        %v6421 = vsub.f32 %v6413, %v6419
        %v6422 = vmul.f32 %v6420, 1.442695
        %v6423 = vpow.pop %v6422
        %v6424 = vmul.f32 %v6421, 1.442695
        %v6425 = vpow.pop %v6424
        %v6426 = vsel %vm875, %v6423, 0.0
        %6427 = vadd.xlane.f32.xlu0 %v6426
        %v6428 = vpop.xlane.xlu0 %6427
        %v6429 = vsel %vm875, %v6425, 0.0
        %6430 = vadd.xlane.f32.xlu0 %v6429
        %v6431 = vpop.xlane.xlu0 %6430
        %v6432 = vrcp.pop %v6428
        %v6433 = vrcp.pop %v6431
        %v6434 = vmul.f32 %v6423, %v6432
        %v6435 = vmul.f32 %v6425, %v6433
        %v6437 = vsel %vm875, %v6434, 0
        %v6440 = vsel %vm875, %v6435, 0
        %6442 = vmatprep.subr.mxu0 0.0
        %6443 = vmatpush1.msra.mxu0 %v6317
        %6444 = vmatprep.subr.mxu0 0.0
        %6445 = vmatpush1.msra.mxu0 %v6320
        %6446 = vmatprep.subr.mxu0 0.0
        %6447 = vmatpush1.msra.mxu0 0.0
        %6448 = vmatprep.subr.mxu0 0.0
        %6449 = vmatpush1.msra.mxu0 0.0
        %6450 = vmatprep.subr.mxu0 0.0
        %6451 = vmatpush1.msra.mxu0 0.0
        %6452 = vmatprep.subr.mxu0 0.0
        %6453 = vmatpush1.msra.mxu0 0.0
        %6454 = vmatprep.subr.mxu0 0.0
        %6455 = vmatpush1.msra.mxu0 0.0
        %6456 = vmatprep.subr.mxu0 0.0
        %6457 = vmatpush1.msra.mxu0 0.0
        %6458 = vmatprep.subr.mxu0 0.0
        %6459 = vmatpush1.msra.mxu0 0.0
        %6460 = vmatprep.subr.mxu0 0.0
        %6461 = vmatpush1.msra.mxu0 0.0
        %6462 = vmatprep.subr.mxu0 0.0
        %6463 = vmatpush1.msra.mxu0 0.0
        %6464 = vmatprep.subr.mxu0 0.0
        %6465 = vmatpush1.msra.mxu0 0.0
        %6466 = vmatprep.subr.mxu0 0.0
        %6467 = vmatpush1.msra.mxu0 0.0
        %6468 = vmatprep.subr.mxu0 0.0
        %6469 = vmatpush1.msra.mxu0 0.0
        %6470 = vmatprep.subr.mxu0 0.0
        %6471 = vmatpush1.msra.mxu0 0.0
        %6472 = vmatprep.subr.mxu0 0.0
        %6473 = vmatpush1.msra.mxu0 0.0
        %6474 = vmatprep.subr.mxu0 0.0
        %6475 = vmatpush1.msra.mxu0 0.0
        %6476 = vmatprep.subr.mxu0 0.0
        %6477 = vmatpush1.msra.mxu0 0.0
        %6478 = vmatprep.subr.mxu0 0.0
        %6479 = vmatpush1.msra.mxu0 0.0
        %6480 = vmatprep.subr.mxu0 0.0
        %6481 = vmatpush1.msra.mxu0 0.0
        %6482 = vmatprep.subr.mxu0 0.0
        %6483 = vmatpush1.msra.mxu0 0.0
        %6484 = vmatprep.subr.mxu0 0.0
        %6485 = vmatpush1.msra.mxu0 0.0
        %6486 = vmatprep.subr.mxu0 0.0
        %6487 = vmatpush1.msra.mxu0 0.0
        %6488 = vmatprep.subr.mxu0 0.0
        %6489 = vmatpush1.msra.mxu0 0.0
        %6490 = vmatprep.subr.mxu0 0.0
        %6491 = vmatpush1.msra.mxu0 0.0
        %6492 = vmatprep.subr.mxu0 0.0
        %6493 = vmatpush1.msra.mxu0 0.0
        %6494 = vmatprep.subr.mxu0 0.0
        %6495 = vmatpush1.msra.mxu0 0.0
        %6496 = vmatprep.subr.mxu0 0.0
        %6497 = vmatpush1.msra.mxu0 0.0
        %6498 = vmatprep.subr.mxu0 0.0
        %6499 = vmatpush1.msra.mxu0 0.0
        %6500 = vmatprep.subr.mxu0 0.0
        %6501 = vmatpush1.msra.mxu0 0.0
        %6502 = vmatprep.subr.mxu0 0.0
        %6503 = vmatpush1.msra.mxu0 0.0
        %6504 = vmatprep.subr.mxu0 0.0
        %6505 = vmatpush1.msra.mxu0 0.0
        %6506 = vmatprep.mubr.f32.mxu0 0.0
        %6507 = vmatmul.mubr.f32.gmra.mrb[0].mxu0 %v6437
        %v6508 = vpop.f32.mrb[0].mxu0
        %v6509 = vadd.f32 0.0, %v6508
        %v6510 = vpop.f32.mrb[0].mxu0
        %6511 = vmatprep.mubr.f32.mxu0 0.0
        %6512 = vmatmul.mubr.f32.gmra.mrb[0].mxu0 %v6440
        %v6513 = vpop.f32.mrb[0].mxu0
        %v6514 = vadd.f32 0.0, %v6513
        %v6515 = vpop.f32.mrb[0].mxu0
        %6516 = vdwg.mxu0
        %v6517 = vpack.c.bf16 %v6514, %v6509
        %v6518 = vld [vmem:[%s6131 + $0x10] sm:$0xf]
        %s6519 = scalar_lea.vmem %s2, 400
        %v6520 = vld [vmem:[%s6519] sm:$0xf]
        %v6521 = vld [vmem:[%s6519 + $0x4] sm:$0xf]
        %v6522 = vld [vmem:[%s6519 + $0x8] sm:$0xf]
        %v6523 = vld [vmem:[%s6519 + $0xc] sm:$0xf]
        %v6524 = vld [vmem:[%s6089 + $0x9] sm:$0x1]
        %v6525 = vlaneseq
        %v6526 = vshrl.u32 %v6525, 7
        %v6527 = vsub.s32 0, %v6526
        %v6528 = vrot.slane %v6524, %v6527
        %v6533 = vunpack.c.l.b16 %v6520
        %v6534 = vunpack.c.l.b16 %v6521
        %v6535 = vunpack.c.l.b16 %v6522
        %v6536 = vunpack.c.l.b16 %v6523
        %v6537 = vpack.c.b16 %v6534, %v6533
        %v6538 = vpack.c.b16 %v6536, %v6535
        %6541 = vmatprep.subr.bf16.mxu0 0
        %6542 = vmatpush1.bf16.msra.mxu0 %v6537
        %6543 = vmatprep.subr.bf16.mxu0 0
        %6544 = vmatpush1.bf16.msra.mxu0 %v6538
        %6545 = vmatprep.subr.bf16.mxu0 0
        %6546 = vmatpush1.bf16.msra.mxu0 0
        %6547 = vmatprep.subr.bf16.mxu0 0
        %6548 = vmatpush1.bf16.msra.mxu0 0
        %6549 = vmatprep.subr.bf16.mxu0 0
        %6550 = vmatpush1.bf16.msra.mxu0 0
        %6551 = vmatprep.subr.bf16.mxu0 0
        %6552 = vmatpush1.bf16.msra.mxu0 0
        %6553 = vmatprep.subr.bf16.mxu0 0
        %6554 = vmatpush1.bf16.msra.mxu0 0
        %6555 = vmatprep.subr.bf16.mxu0 0
        %6556 = vmatpush1.bf16.msra.mxu0 0
        %6557 = vmatprep.subr.bf16.mxu0 0
        %6558 = vmatpush1.bf16.msra.mxu0 0
        %6559 = vmatprep.subr.bf16.mxu0 0
        %6560 = vmatpush1.bf16.msra.mxu0 0
        %6561 = vmatprep.subr.bf16.mxu0 0
        %6562 = vmatpush1.bf16.msra.mxu0 0
        %6563 = vmatprep.subr.bf16.mxu0 0
        %6564 = vmatpush1.bf16.msra.mxu0 0
        %6565 = vmatprep.subr.bf16.mxu0 0
        %6566 = vmatpush1.bf16.msra.mxu0 0
        %6567 = vmatprep.subr.bf16.mxu0 0
        %6568 = vmatpush1.bf16.msra.mxu0 0
        %6569 = vmatprep.subr.bf16.mxu0 0
        %6570 = vmatpush1.bf16.msra.mxu0 0
        %6571 = vmatprep.subr.bf16.mxu0 0
        %6572 = vmatpush1.bf16.msra.mxu0 0
        %6573 = vmatprep.mubr.bf16.mxu0 0
        %6574 = vmatmul.mubr.bf16.gmra.mrb[0].mxu0 %v6154
        %v6575 = vpop.f32.mrb[0].mxu0
        %v6576 = vadd.f32 %v6528, %v6575
        %v6577 = vpop.f32.mrb[0].mxu0
        %v6578 = vpop.f32.mrb[0].mxu0
        %v6579 = vadd.f32 %v6528, %v6578
        %v6580 = vpop.f32.mrb[0].mxu0
        %6581 = vdwg.mxu0
        %s6582 = scalar_lea.vmem %s2, 464
        %v6583 = vld [vmem:[%s6582] sm:$0xf]
        %v6584 = vld [vmem:[%s6582 + $0x4] sm:$0xf]
        %v6585 = vld [vmem:[%s6582 + $0x8] sm:$0xf]
        %v6586 = vld [vmem:[%s6582 + $0xc] sm:$0xf]
        %v6587 = vld [vmem:[%s6089 + $0xd] sm:$0x1]
        %v6588 = vlaneseq
        %v6589 = vshrl.u32 %v6588, 7
        %v6590 = vsub.s32 0, %v6589
        %v6591 = vrot.slane %v6587, %v6590
        %v6596 = vunpack.c.l.b16 %v6583
        %v6597 = vunpack.c.l.b16 %v6584
        %v6598 = vunpack.c.l.b16 %v6585
        %v6599 = vunpack.c.l.b16 %v6586
        %v6600 = vpack.c.b16 %v6597, %v6596
        %v6601 = vpack.c.b16 %v6599, %v6598
        %6604 = vmatprep.subr.bf16.mxu0 0
        %6605 = vmatpush1.bf16.msra.mxu0 %v6600
        %6606 = vmatprep.subr.bf16.mxu0 0
        %6607 = vmatpush1.bf16.msra.mxu0 %v6601
        %6608 = vmatprep.subr.bf16.mxu0 0
        %6609 = vmatpush1.bf16.msra.mxu0 0
        %6610 = vmatprep.subr.bf16.mxu0 0
        %6611 = vmatpush1.bf16.msra.mxu0 0
        %6612 = vmatprep.subr.bf16.mxu0 0
        %6613 = vmatpush1.bf16.msra.mxu0 0
        %6614 = vmatprep.subr.bf16.mxu0 0
        %6615 = vmatpush1.bf16.msra.mxu0 0
        %6616 = vmatprep.subr.bf16.mxu0 0
        %6617 = vmatpush1.bf16.msra.mxu0 0
        %6618 = vmatprep.subr.bf16.mxu0 0
        %6619 = vmatpush1.bf16.msra.mxu0 0
        %6620 = vmatprep.subr.bf16.mxu0 0
        %6621 = vmatpush1.bf16.msra.mxu0 0
        %6622 = vmatprep.subr.bf16.mxu0 0
        %6623 = vmatpush1.bf16.msra.mxu0 0
        %6624 = vmatprep.subr.bf16.mxu0 0
        %6625 = vmatpush1.bf16.msra.mxu0 0
        %6626 = vmatprep.subr.bf16.mxu0 0
        %6627 = vmatpush1.bf16.msra.mxu0 0
        %6628 = vmatprep.subr.bf16.mxu0 0
        %6629 = vmatpush1.bf16.msra.mxu0 0
        %6630 = vmatprep.subr.bf16.mxu0 0
        %6631 = vmatpush1.bf16.msra.mxu0 0
        %6632 = vmatprep.subr.bf16.mxu0 0
        %6633 = vmatpush1.bf16.msra.mxu0 0
        %6634 = vmatprep.subr.bf16.mxu0 0
        %6635 = vmatpush1.bf16.msra.mxu0 0
        %6636 = vmatprep.mubr.bf16.mxu0 0
        %6637 = vmatmul.mubr.bf16.gmra.mrb[0].mxu0 %v6154
        %v6638 = vpop.f32.mrb[0].mxu0
        %v6639 = vadd.f32 %v6591, %v6638
        %v6640 = vpop.f32.mrb[0].mxu0
        %v6641 = vpop.f32.mrb[0].mxu0
        %v6642 = vadd.f32 %v6591, %v6641
        %v6643 = vpop.f32.mrb[0].mxu0
        %6644 = vdwg.mxu0
        %6645 = vrot.lane.b32.xlu0 %v6191, 120
        %v6646 = vpop.permute.xlu0 %6645
        %6647 = vrot.lane.b32.xlu0 %v6194, 120
        %v6648 = vpop.permute.xlu0 %6647
        %v6650 = vsel %vm783, %v6576, 0
        %v6653 = vsel %vm783, %v6579, 0
        %v6655 = vsel %vm783, %v6646, 0
        %v6657 = vsel %vm783, %v6648, 0
        %6659 = vmatprep.subr.mxu0 0.0
        %6660 = vmatpush1.xpose.msra.mxu0 %v6655
        %6661 = vmatprep.subr.mxu0 0.0
        %6662 = vmatpush1.xpose.msra.mxu0 %v6657
        %6663 = vmatprep.subr.mxu0 0.0
        %6664 = vmatpush1.xpose.msra.mxu0 0.0
        %6665 = vmatprep.subr.mxu0 0.0
        %6666 = vmatpush1.xpose.msra.mxu0 0.0
        %6667 = vmatprep.subr.mxu0 0.0
        %6668 = vmatpush1.xpose.msra.mxu0 0.0
        %6669 = vmatprep.subr.mxu0 0.0
        %6670 = vmatpush1.xpose.msra.mxu0 0.0
        %6671 = vmatprep.subr.mxu0 0.0
        %6672 = vmatpush1.xpose.msra.mxu0 0.0
        %6673 = vmatprep.subr.mxu0 0.0
        %6674 = vmatpush1.xpose.msra.mxu0 0.0
        %6675 = vmatprep.subr.mxu0 0.0
        %6676 = vmatpush1.xpose.msra.mxu0 0.0
        %6677 = vmatprep.subr.mxu0 0.0
        %6678 = vmatpush1.xpose.msra.mxu0 0.0
        %6679 = vmatprep.subr.mxu0 0.0
        %6680 = vmatpush1.xpose.msra.mxu0 0.0
        %6681 = vmatprep.subr.mxu0 0.0
        %6682 = vmatpush1.xpose.msra.mxu0 0.0
        %6683 = vmatprep.subr.mxu0 0.0
        %6684 = vmatpush1.xpose.msra.mxu0 0.0
        %6685 = vmatprep.subr.mxu0 0.0
        %6686 = vmatpush1.xpose.msra.mxu0 0.0
        %6687 = vmatprep.subr.mxu0 0.0
        %6688 = vmatpush1.xpose.msra.mxu0 0.0
        %6689 = vmatprep.subr.mxu0 0.0
        %6690 = vmatpush1.xpose.msra.mxu0 0.0
        %6691 = vmatprep.subr.mxu0 0.0
        %6692 = vmatpush1.xpose.msra.mxu0 0.0
        %6693 = vmatprep.subr.mxu0 0.0
        %6694 = vmatpush1.xpose.msra.mxu0 0.0
        %6695 = vmatprep.subr.mxu0 0.0
        %6696 = vmatpush1.xpose.msra.mxu0 0.0
        %6697 = vmatprep.subr.mxu0 0.0
        %6698 = vmatpush1.xpose.msra.mxu0 0.0
        %6699 = vmatprep.subr.mxu0 0.0
        %6700 = vmatpush1.xpose.msra.mxu0 0.0
        %6701 = vmatprep.subr.mxu0 0.0
        %6702 = vmatpush1.xpose.msra.mxu0 0.0
        %6703 = vmatprep.subr.mxu0 0.0
        %6704 = vmatpush1.xpose.msra.mxu0 0.0
        %6705 = vmatprep.subr.mxu0 0.0
        %6706 = vmatpush1.xpose.msra.mxu0 0.0
        %6707 = vmatprep.subr.mxu0 0.0
        %6708 = vmatpush1.xpose.msra.mxu0 0.0
        %6709 = vmatprep.subr.mxu0 0.0
        %6710 = vmatpush1.xpose.msra.mxu0 0.0
        %6711 = vmatprep.subr.mxu0 0.0
        %6712 = vmatpush1.xpose.msra.mxu0 0.0
        %6713 = vmatprep.subr.mxu0 0.0
        %6714 = vmatpush1.xpose.msra.mxu0 0.0
        %6715 = vmatprep.subr.mxu0 0.0
        %6716 = vmatpush1.xpose.msra.mxu0 0.0
        %6717 = vmatprep.subr.mxu0 0.0
        %6718 = vmatpush1.xpose.msra.mxu0 0.0
        %6719 = vmatprep.subr.mxu0 0.0
        %6720 = vmatpush1.xpose.msra.mxu0 0.0
        %6721 = vmatprep.subr.mxu0 0.0
        %6722 = vmatpush1.xpose.msra.mxu0 0.0
        %6723 = vmatprep.mubr.f32.mxu0 0.0
        %6724 = vmatmul.mubr.f32.gmra.mrb[0].mxu0 %v6650
        %v6725 = vpop.f32.mrb[0].mxu0
        %v6726 = vadd.f32 0.0, %v6725
        %v6727 = vpop.f32.mrb[0].mxu0
        %6728 = vmatprep.mubr.f32.mxu0 0.0
        %6729 = vmatmul.mubr.f32.gmra.mrb[0].mxu0 %v6653
        %v6730 = vpop.f32.mrb[0].mxu0
        %v6731 = vadd.f32 0.0, %v6730
        %v6732 = vpop.f32.mrb[0].mxu0
        %6733 = vdwg.mxu0
        %v6734 = vmul.f32 %v6726, 0.35355338
        %v6735 = vmul.f32 %v6731, 0.35355338
        %v6736 = vadd.f32 %v6734, %v4285
        %v6737 = vadd.f32 %v6735, %v4285
        %v6738 = vsel %vm875, %v6736, -inf
        %6739 = vmax.xlane.f32.xlu0 %v6738
        %v6740 = vpop.xlane.xlu0 %6739
        %v6741 = vsel %vm875, %v6737, -inf
        %6742 = vmax.xlane.f32.xlu0 %v6741
        %v6743 = vpop.xlane.xlu0 %6742
        %v6744 = vsub.f32 %v6736, %v6740
        %v6745 = vsub.f32 %v6737, %v6743
        %v6746 = vmul.f32 %v6744, 1.442695
        %v6747 = vpow.pop %v6746
        %v6748 = vmul.f32 %v6745, 1.442695
        %v6749 = vpow.pop %v6748
        %v6750 = vsel %vm875, %v6747, 0.0
        %6751 = vadd.xlane.f32.xlu0 %v6750
        %v6752 = vpop.xlane.xlu0 %6751
        %v6753 = vsel %vm875, %v6749, 0.0
        %6754 = vadd.xlane.f32.xlu0 %v6753
        %v6755 = vpop.xlane.xlu0 %6754
        %v6756 = vrcp.pop %v6752
        %v6757 = vrcp.pop %v6755
        %v6758 = vmul.f32 %v6747, %v6756
        %v6759 = vmul.f32 %v6749, %v6757
        %v6761 = vsel %vm875, %v6758, 0
        %v6764 = vsel %vm875, %v6759, 0
        %6766 = vmatprep.subr.mxu0 0.0
        %6767 = vmatpush1.msra.mxu0 %v6639
        %6768 = vmatprep.subr.mxu0 0.0
        %6769 = vmatpush1.msra.mxu0 %v6642
        %6770 = vmatprep.subr.mxu0 0.0
        %6771 = vmatpush1.msra.mxu0 0.0
        %6772 = vmatprep.subr.mxu0 0.0
        %6773 = vmatpush1.msra.mxu0 0.0
        %6774 = vmatprep.subr.mxu0 0.0
        %6775 = vmatpush1.msra.mxu0 0.0
        %6776 = vmatprep.subr.mxu0 0.0
        %6777 = vmatpush1.msra.mxu0 0.0
        %6778 = vmatprep.subr.mxu0 0.0
        %6779 = vmatpush1.msra.mxu0 0.0
        %6780 = vmatprep.subr.mxu0 0.0
        %6781 = vmatpush1.msra.mxu0 0.0
        %6782 = vmatprep.subr.mxu0 0.0
        %6783 = vmatpush1.msra.mxu0 0.0
        %6784 = vmatprep.subr.mxu0 0.0
        %6785 = vmatpush1.msra.mxu0 0.0
        %6786 = vmatprep.subr.mxu0 0.0
        %6787 = vmatpush1.msra.mxu0 0.0
        %6788 = vmatprep.subr.mxu0 0.0
        %6789 = vmatpush1.msra.mxu0 0.0
        %6790 = vmatprep.subr.mxu0 0.0
        %6791 = vmatpush1.msra.mxu0 0.0
        %6792 = vmatprep.subr.mxu0 0.0
        %6793 = vmatpush1.msra.mxu0 0.0
        %6794 = vmatprep.subr.mxu0 0.0
        %6795 = vmatpush1.msra.mxu0 0.0
        %6796 = vmatprep.subr.mxu0 0.0
        %6797 = vmatpush1.msra.mxu0 0.0
        %6798 = vmatprep.subr.mxu0 0.0
        %6799 = vmatpush1.msra.mxu0 0.0
        %6800 = vmatprep.subr.mxu0 0.0
        %6801 = vmatpush1.msra.mxu0 0.0
        %6802 = vmatprep.subr.mxu0 0.0
        %6803 = vmatpush1.msra.mxu0 0.0
        %6804 = vmatprep.subr.mxu0 0.0
        %6805 = vmatpush1.msra.mxu0 0.0
        %6806 = vmatprep.subr.mxu0 0.0
        %6807 = vmatpush1.msra.mxu0 0.0
        %6808 = vmatprep.subr.mxu0 0.0
        %6809 = vmatpush1.msra.mxu0 0.0
        %6810 = vmatprep.subr.mxu0 0.0
        %6811 = vmatpush1.msra.mxu0 0.0
        %6812 = vmatprep.subr.mxu0 0.0
        %6813 = vmatpush1.msra.mxu0 0.0
        %6814 = vmatprep.subr.mxu0 0.0
        %6815 = vmatpush1.msra.mxu0 0.0
        %6816 = vmatprep.subr.mxu0 0.0
        %6817 = vmatpush1.msra.mxu0 0.0
        %6818 = vmatprep.subr.mxu0 0.0
        %6819 = vmatpush1.msra.mxu0 0.0
        %6820 = vmatprep.subr.mxu0 0.0
        %6821 = vmatpush1.msra.mxu0 0.0
        %6822 = vmatprep.subr.mxu0 0.0
        %6823 = vmatpush1.msra.mxu0 0.0
        %6824 = vmatprep.subr.mxu0 0.0
        %6825 = vmatpush1.msra.mxu0 0.0
        %6826 = vmatprep.subr.mxu0 0.0
        %6827 = vmatpush1.msra.mxu0 0.0
        %6828 = vmatprep.subr.mxu0 0.0
        %6829 = vmatpush1.msra.mxu0 0.0
        %6830 = vmatprep.mubr.f32.mxu0 0.0
        %6831 = vmatmul.mubr.f32.gmra.mrb[0].mxu0 %v6761
        %v6832 = vpop.f32.mrb[0].mxu0
        %v6833 = vadd.f32 0.0, %v6832
        %v6834 = vpop.f32.mrb[0].mxu0
        %6835 = vmatprep.mubr.f32.mxu0 0.0
        %6836 = vmatmul.mubr.f32.gmra.mrb[0].mxu0 %v6764
        %v6837 = vpop.f32.mrb[0].mxu0
        %v6838 = vadd.f32 0.0, %v6837
        %v6839 = vpop.f32.mrb[0].mxu0
        %6840 = vdwg.mxu0
        %v6841 = vpack.c.bf16 %v6838, %v6833
        %v6842 = vld [vmem:[%s6131 + $0x14] sm:$0xf]
        %v6844 = vsel %vm783, %v6841, 0
        %v6847 = vsel %vm1308, %v6842, 0
        %6849 = vmatprep.subr.bf16.mxu0 0
        %6850 = vmatpush1.bf16.msra.mxu0 %v6847
        %6851 = vmatprep.subr.bf16.mxu0 0
        %6852 = vmatpush1.bf16.msra.mxu0 0
        %6853 = vmatprep.subr.bf16.mxu0 0
        %6854 = vmatpush1.bf16.msra.mxu0 0
        %6855 = vmatprep.subr.bf16.mxu0 0
        %6856 = vmatpush1.bf16.msra.mxu0 0
        %6857 = vmatprep.subr.bf16.mxu0 0
        %6858 = vmatpush1.bf16.msra.mxu0 0
        %6859 = vmatprep.subr.bf16.mxu0 0
        %6860 = vmatpush1.bf16.msra.mxu0 0
        %6861 = vmatprep.subr.bf16.mxu0 0
        %6862 = vmatpush1.bf16.msra.mxu0 0
        %6863 = vmatprep.subr.bf16.mxu0 0
        %6864 = vmatpush1.bf16.msra.mxu0 0
        %6865 = vmatprep.subr.bf16.mxu0 0
        %6866 = vmatpush1.bf16.msra.mxu0 0
        %6867 = vmatprep.subr.bf16.mxu0 0
        %6868 = vmatpush1.bf16.msra.mxu0 0
        %6869 = vmatprep.subr.bf16.mxu0 0
        %6870 = vmatpush1.bf16.msra.mxu0 0
        %6871 = vmatprep.subr.bf16.mxu0 0
        %6872 = vmatpush1.bf16.msra.mxu0 0
        %6873 = vmatprep.subr.bf16.mxu0 0
        %6874 = vmatpush1.bf16.msra.mxu0 0
        %6875 = vmatprep.subr.bf16.mxu0 0
        %6876 = vmatpush1.bf16.msra.mxu0 0
        %6877 = vmatprep.subr.bf16.mxu0 0
        %6878 = vmatpush1.bf16.msra.mxu0 0
        %6879 = vmatprep.subr.bf16.mxu0 0
        %6880 = vmatpush1.bf16.msra.mxu0 0
        %6881 = vmatprep.mubr.bf16.mxu0 0
        %6882 = vmatmul.mubr.bf16.gmra.mrb[0].mxu0 %v6844
        %v6883 = vpop.f32.mrb[0].mxu0
        %v6884 = vadd.f32 0.0, %v6883
        %v6885 = vpop.f32.mrb[0].mxu0
        %v6886 = vpop.f32.mrb[0].mxu0
        %v6887 = vadd.f32 0.0, %v6886
        %v6888 = vpop.f32.mrb[0].mxu0
        %6889 = vdwg.mxu0
        %v6891 = vsel %vm783, %v6517, 0
        %v6894 = vsel %vm1308, %v6518, 0
        %6896 = vmatprep.subr.bf16.mxu0 0
        %6897 = vmatpush1.bf16.msra.mxu0 %v6894
        %6898 = vmatprep.subr.bf16.mxu0 0
        %6899 = vmatpush1.bf16.msra.mxu0 0
        %6900 = vmatprep.subr.bf16.mxu0 0
        %6901 = vmatpush1.bf16.msra.mxu0 0
        %6902 = vmatprep.subr.bf16.mxu0 0
        %6903 = vmatpush1.bf16.msra.mxu0 0
        %6904 = vmatprep.subr.bf16.mxu0 0
        %6905 = vmatpush1.bf16.msra.mxu0 0
        %6906 = vmatprep.subr.bf16.mxu0 0
        %6907 = vmatpush1.bf16.msra.mxu0 0
        %6908 = vmatprep.subr.bf16.mxu0 0
        %6909 = vmatpush1.bf16.msra.mxu0 0
        %6910 = vmatprep.subr.bf16.mxu0 0
        %6911 = vmatpush1.bf16.msra.mxu0 0
        %6912 = vmatprep.subr.bf16.mxu0 0
        %6913 = vmatpush1.bf16.msra.mxu0 0
        %6914 = vmatprep.subr.bf16.mxu0 0
        %6915 = vmatpush1.bf16.msra.mxu0 0
        %6916 = vmatprep.subr.bf16.mxu0 0
        %6917 = vmatpush1.bf16.msra.mxu0 0
        %6918 = vmatprep.subr.bf16.mxu0 0
        %6919 = vmatpush1.bf16.msra.mxu0 0
        %6920 = vmatprep.subr.bf16.mxu0 0
        %6921 = vmatpush1.bf16.msra.mxu0 0
        %6922 = vmatprep.subr.bf16.mxu0 0
        %6923 = vmatpush1.bf16.msra.mxu0 0
        %6924 = vmatprep.subr.bf16.mxu0 0
        %6925 = vmatpush1.bf16.msra.mxu0 0
        %6926 = vmatprep.subr.bf16.mxu0 0
        %6927 = vmatpush1.bf16.msra.mxu0 0
        %6928 = vmatprep.mubr.bf16.mxu0 0
        %6929 = vmatmul.mubr.bf16.gmra.mrb[0].mxu0 %v6891
        %v6930 = vpop.f32.mrb[0].mxu0
        %v6931 = vadd.f32 %v6884, %v6930
        %v6932 = vpop.f32.mrb[0].mxu0
        %v6933 = vpop.f32.mrb[0].mxu0
        %v6934 = vadd.f32 %v6887, %v6933
        %v6935 = vpop.f32.mrb[0].mxu0
        %6936 = vdwg.mxu0
        %s6937 = scalar_lea.vmem %s2, 416
        %v6938 = vld [vmem:[%s6937] sm:$0xf]
        %v6939 = vld [vmem:[%s6937 + $0x4] sm:$0xf]
        %v6940 = vld [vmem:[%s6937 + $0x8] sm:$0xf]
        %v6941 = vld [vmem:[%s6937 + $0xc] sm:$0xf]
        %v6942 = vld [vmem:[%s6089 + $0xa] sm:$0x1]
        %v6943 = vlaneseq
        %v6944 = vshrl.u32 %v6943, 7
        %v6945 = vsub.s32 0, %v6944
        %v6946 = vrot.slane %v6942, %v6945
        %v6951 = vunpack.c.l.b16 %v6938
        %v6952 = vunpack.c.l.b16 %v6939
        %v6953 = vunpack.c.l.b16 %v6940
        %v6954 = vunpack.c.l.b16 %v6941
        %v6955 = vpack.c.b16 %v6952, %v6951
        %v6956 = vpack.c.b16 %v6954, %v6953
        %6959 = vmatprep.subr.bf16.mxu0 0
        %6960 = vmatpush1.bf16.msra.mxu0 %v6955
        %6961 = vmatprep.subr.bf16.mxu0 0
        %6962 = vmatpush1.bf16.msra.mxu0 %v6956
        %6963 = vmatprep.subr.bf16.mxu0 0
        %6964 = vmatpush1.bf16.msra.mxu0 0
        %6965 = vmatprep.subr.bf16.mxu0 0
        %6966 = vmatpush1.bf16.msra.mxu0 0
        %6967 = vmatprep.subr.bf16.mxu0 0
        %6968 = vmatpush1.bf16.msra.mxu0 0
        %6969 = vmatprep.subr.bf16.mxu0 0
        %6970 = vmatpush1.bf16.msra.mxu0 0
        %6971 = vmatprep.subr.bf16.mxu0 0
        %6972 = vmatpush1.bf16.msra.mxu0 0
        %6973 = vmatprep.subr.bf16.mxu0 0
        %6974 = vmatpush1.bf16.msra.mxu0 0
        %6975 = vmatprep.subr.bf16.mxu0 0
        %6976 = vmatpush1.bf16.msra.mxu0 0
        %6977 = vmatprep.subr.bf16.mxu0 0
        %6978 = vmatpush1.bf16.msra.mxu0 0
        %6979 = vmatprep.subr.bf16.mxu0 0
        %6980 = vmatpush1.bf16.msra.mxu0 0
        %6981 = vmatprep.subr.bf16.mxu0 0
        %6982 = vmatpush1.bf16.msra.mxu0 0
        %6983 = vmatprep.subr.bf16.mxu0 0
        %6984 = vmatpush1.bf16.msra.mxu0 0
        %6985 = vmatprep.subr.bf16.mxu0 0
        %6986 = vmatpush1.bf16.msra.mxu0 0
        %6987 = vmatprep.subr.bf16.mxu0 0
        %6988 = vmatpush1.bf16.msra.mxu0 0
        %6989 = vmatprep.subr.bf16.mxu0 0
        %6990 = vmatpush1.bf16.msra.mxu0 0
        %6991 = vmatprep.mubr.bf16.mxu0 0
        %6992 = vmatmul.mubr.bf16.gmra.mrb[0].mxu0 %v6154
        %v6993 = vpop.f32.mrb[0].mxu0
        %v6994 = vadd.f32 %v6946, %v6993
        %v6995 = vpop.f32.mrb[0].mxu0
        %v6996 = vpop.f32.mrb[0].mxu0
        %v6997 = vadd.f32 %v6946, %v6996
        %v6998 = vpop.f32.mrb[0].mxu0
        %6999 = vdwg.mxu0
        %s7000 = scalar_lea.vmem %s2, 480
        %v7001 = vld [vmem:[%s7000] sm:$0xf]
        %v7002 = vld [vmem:[%s7000 + $0x4] sm:$0xf]
        %v7003 = vld [vmem:[%s7000 + $0x8] sm:$0xf]
        %v7004 = vld [vmem:[%s7000 + $0xc] sm:$0xf]
        %v7005 = vld [vmem:[%s6089 + $0xe] sm:$0x1]
        %v7006 = vlaneseq
        %v7007 = vshrl.u32 %v7006, 7
        %v7008 = vsub.s32 0, %v7007
        %v7009 = vrot.slane %v7005, %v7008
        %v7014 = vunpack.c.l.b16 %v7001
        %v7015 = vunpack.c.l.b16 %v7002
        %v7016 = vunpack.c.l.b16 %v7003
        %v7017 = vunpack.c.l.b16 %v7004
        %v7018 = vpack.c.b16 %v7015, %v7014
        %v7019 = vpack.c.b16 %v7017, %v7016
        %7022 = vmatprep.subr.bf16.mxu0 0
        %7023 = vmatpush1.bf16.msra.mxu0 %v7018
        %7024 = vmatprep.subr.bf16.mxu0 0
        %7025 = vmatpush1.bf16.msra.mxu0 %v7019
        %7026 = vmatprep.subr.bf16.mxu0 0
        %7027 = vmatpush1.bf16.msra.mxu0 0
        %7028 = vmatprep.subr.bf16.mxu0 0
        %7029 = vmatpush1.bf16.msra.mxu0 0
        %7030 = vmatprep.subr.bf16.mxu0 0
        %7031 = vmatpush1.bf16.msra.mxu0 0
        %7032 = vmatprep.subr.bf16.mxu0 0
        %7033 = vmatpush1.bf16.msra.mxu0 0
        %7034 = vmatprep.subr.bf16.mxu0 0
        %7035 = vmatpush1.bf16.msra.mxu0 0
        %7036 = vmatprep.subr.bf16.mxu0 0
        %7037 = vmatpush1.bf16.msra.mxu0 0
        %7038 = vmatprep.subr.bf16.mxu0 0
        %7039 = vmatpush1.bf16.msra.mxu0 0
        %7040 = vmatprep.subr.bf16.mxu0 0
        %7041 = vmatpush1.bf16.msra.mxu0 0
        %7042 = vmatprep.subr.bf16.mxu0 0
        %7043 = vmatpush1.bf16.msra.mxu0 0
        %7044 = vmatprep.subr.bf16.mxu0 0
        %7045 = vmatpush1.bf16.msra.mxu0 0
        %7046 = vmatprep.subr.bf16.mxu0 0
        %7047 = vmatpush1.bf16.msra.mxu0 0
        %7048 = vmatprep.subr.bf16.mxu0 0
        %7049 = vmatpush1.bf16.msra.mxu0 0
        %7050 = vmatprep.subr.bf16.mxu0 0
        %7051 = vmatpush1.bf16.msra.mxu0 0
        %7052 = vmatprep.subr.bf16.mxu0 0
        %7053 = vmatpush1.bf16.msra.mxu0 0
        %7054 = vmatprep.mubr.bf16.mxu0 0
        %7055 = vmatmul.mubr.bf16.gmra.mrb[0].mxu0 %v6154
        %v7056 = vpop.f32.mrb[0].mxu0
        %v7057 = vadd.f32 %v7009, %v7056
        %v7058 = vpop.f32.mrb[0].mxu0
        %v7059 = vpop.f32.mrb[0].mxu0
        %v7060 = vadd.f32 %v7009, %v7059
        %v7061 = vpop.f32.mrb[0].mxu0
        %7062 = vdwg.mxu0
        %7063 = vrot.lane.b32.xlu0 %v6191, 112
        %v7064 = vpop.permute.xlu0 %7063
        %7065 = vrot.lane.b32.xlu0 %v6194, 112
        %v7066 = vpop.permute.xlu0 %7065
        %v7068 = vsel %vm783, %v6994, 0
        %v7071 = vsel %vm783, %v6997, 0
        %v7073 = vsel %vm783, %v7064, 0
        %v7075 = vsel %vm783, %v7066, 0
        %7077 = vmatprep.subr.mxu0 0.0
        %7078 = vmatpush1.xpose.msra.mxu0 %v7073
        %7079 = vmatprep.subr.mxu0 0.0
        %7080 = vmatpush1.xpose.msra.mxu0 %v7075
        %7081 = vmatprep.subr.mxu0 0.0
        %7082 = vmatpush1.xpose.msra.mxu0 0.0
        %7083 = vmatprep.subr.mxu0 0.0
        %7084 = vmatpush1.xpose.msra.mxu0 0.0
        %7085 = vmatprep.subr.mxu0 0.0
        %7086 = vmatpush1.xpose.msra.mxu0 0.0
        %7087 = vmatprep.subr.mxu0 0.0
        %7088 = vmatpush1.xpose.msra.mxu0 0.0
        %7089 = vmatprep.subr.mxu0 0.0
        %7090 = vmatpush1.xpose.msra.mxu0 0.0
        %7091 = vmatprep.subr.mxu0 0.0
        %7092 = vmatpush1.xpose.msra.mxu0 0.0
        %7093 = vmatprep.subr.mxu0 0.0
        %7094 = vmatpush1.xpose.msra.mxu0 0.0
        %7095 = vmatprep.subr.mxu0 0.0
        %7096 = vmatpush1.xpose.msra.mxu0 0.0
        %7097 = vmatprep.subr.mxu0 0.0
        %7098 = vmatpush1.xpose.msra.mxu0 0.0
        %7099 = vmatprep.subr.mxu0 0.0
        %7100 = vmatpush1.xpose.msra.mxu0 0.0
        %7101 = vmatprep.subr.mxu0 0.0
        %7102 = vmatpush1.xpose.msra.mxu0 0.0
        %7103 = vmatprep.subr.mxu0 0.0
        %7104 = vmatpush1.xpose.msra.mxu0 0.0
        %7105 = vmatprep.subr.mxu0 0.0
        %7106 = vmatpush1.xpose.msra.mxu0 0.0
        %7107 = vmatprep.subr.mxu0 0.0
        %7108 = vmatpush1.xpose.msra.mxu0 0.0
        %7109 = vmatprep.subr.mxu0 0.0
        %7110 = vmatpush1.xpose.msra.mxu0 0.0
        %7111 = vmatprep.subr.mxu0 0.0
        %7112 = vmatpush1.xpose.msra.mxu0 0.0
        %7113 = vmatprep.subr.mxu0 0.0
        %7114 = vmatpush1.xpose.msra.mxu0 0.0
        %7115 = vmatprep.subr.mxu0 0.0
        %7116 = vmatpush1.xpose.msra.mxu0 0.0
        %7117 = vmatprep.subr.mxu0 0.0
        %7118 = vmatpush1.xpose.msra.mxu0 0.0
        %7119 = vmatprep.subr.mxu0 0.0
        %7120 = vmatpush1.xpose.msra.mxu0 0.0
        %7121 = vmatprep.subr.mxu0 0.0
        %7122 = vmatpush1.xpose.msra.mxu0 0.0
        %7123 = vmatprep.subr.mxu0 0.0
        %7124 = vmatpush1.xpose.msra.mxu0 0.0
        %7125 = vmatprep.subr.mxu0 0.0
        %7126 = vmatpush1.xpose.msra.mxu0 0.0
        %7127 = vmatprep.subr.mxu0 0.0
        %7128 = vmatpush1.xpose.msra.mxu0 0.0
        %7129 = vmatprep.subr.mxu0 0.0
        %7130 = vmatpush1.xpose.msra.mxu0 0.0
        %7131 = vmatprep.subr.mxu0 0.0
        %7132 = vmatpush1.xpose.msra.mxu0 0.0
        %7133 = vmatprep.subr.mxu0 0.0
        %7134 = vmatpush1.xpose.msra.mxu0 0.0
        %7135 = vmatprep.subr.mxu0 0.0
        %7136 = vmatpush1.xpose.msra.mxu0 0.0
        %7137 = vmatprep.subr.mxu0 0.0
        %7138 = vmatpush1.xpose.msra.mxu0 0.0
        %7139 = vmatprep.subr.mxu0 0.0
        %7140 = vmatpush1.xpose.msra.mxu0 0.0
        %7141 = vmatprep.mubr.f32.mxu0 0.0
        %7142 = vmatmul.mubr.f32.gmra.mrb[0].mxu0 %v7068
        %v7143 = vpop.f32.mrb[0].mxu0
        %v7144 = vadd.f32 0.0, %v7143
        %v7145 = vpop.f32.mrb[0].mxu0
        %7146 = vmatprep.mubr.f32.mxu0 0.0
        %7147 = vmatmul.mubr.f32.gmra.mrb[0].mxu0 %v7071
        %v7148 = vpop.f32.mrb[0].mxu0
        %v7149 = vadd.f32 0.0, %v7148
        %v7150 = vpop.f32.mrb[0].mxu0
        %7151 = vdwg.mxu0
        %v7152 = vmul.f32 %v7144, 0.35355338
        %v7153 = vmul.f32 %v7149, 0.35355338
        %v7154 = vadd.f32 %v7152, %v4285
        %v7155 = vadd.f32 %v7153, %v4285
        %v7156 = vsel %vm875, %v7154, -inf
        %7157 = vmax.xlane.f32.xlu0 %v7156
        %v7158 = vpop.xlane.xlu0 %7157
        %v7159 = vsel %vm875, %v7155, -inf
        %7160 = vmax.xlane.f32.xlu0 %v7159
        %v7161 = vpop.xlane.xlu0 %7160
        %v7162 = vsub.f32 %v7154, %v7158
        %v7163 = vsub.f32 %v7155, %v7161
        %v7164 = vmul.f32 %v7162, 1.442695
        %v7165 = vpow.pop %v7164
        %v7166 = vmul.f32 %v7163, 1.442695
        %v7167 = vpow.pop %v7166
        %v7168 = vsel %vm875, %v7165, 0.0
        %7169 = vadd.xlane.f32.xlu0 %v7168
        %v7170 = vpop.xlane.xlu0 %7169
        %v7171 = vsel %vm875, %v7167, 0.0
        %7172 = vadd.xlane.f32.xlu0 %v7171
        %v7173 = vpop.xlane.xlu0 %7172
        %v7174 = vrcp.pop %v7170
        %v7175 = vrcp.pop %v7173
        %v7176 = vmul.f32 %v7165, %v7174
        %v7177 = vmul.f32 %v7167, %v7175
        %v7179 = vsel %vm875, %v7176, 0
        %v7182 = vsel %vm875, %v7177, 0
        %7184 = vmatprep.subr.mxu0 0.0
        %7185 = vmatpush1.msra.mxu0 %v7057
        %7186 = vmatprep.subr.mxu0 0.0
        %7187 = vmatpush1.msra.mxu0 %v7060
        %7188 = vmatprep.subr.mxu0 0.0
        %7189 = vmatpush1.msra.mxu0 0.0
        %7190 = vmatprep.subr.mxu0 0.0
        %7191 = vmatpush1.msra.mxu0 0.0
        %7192 = vmatprep.subr.mxu0 0.0
        %7193 = vmatpush1.msra.mxu0 0.0
        %7194 = vmatprep.subr.mxu0 0.0
        %7195 = vmatpush1.msra.mxu0 0.0
        %7196 = vmatprep.subr.mxu0 0.0
        %7197 = vmatpush1.msra.mxu0 0.0
        %7198 = vmatprep.subr.mxu0 0.0
        %7199 = vmatpush1.msra.mxu0 0.0
        %7200 = vmatprep.subr.mxu0 0.0
        %7201 = vmatpush1.msra.mxu0 0.0
        %7202 = vmatprep.subr.mxu0 0.0
        %7203 = vmatpush1.msra.mxu0 0.0
        %7204 = vmatprep.subr.mxu0 0.0
        %7205 = vmatpush1.msra.mxu0 0.0
        %7206 = vmatprep.subr.mxu0 0.0
        %7207 = vmatpush1.msra.mxu0 0.0
        %7208 = vmatprep.subr.mxu0 0.0
        %7209 = vmatpush1.msra.mxu0 0.0
        %7210 = vmatprep.subr.mxu0 0.0
        %7211 = vmatpush1.msra.mxu0 0.0
        %7212 = vmatprep.subr.mxu0 0.0
        %7213 = vmatpush1.msra.mxu0 0.0
        %7214 = vmatprep.subr.mxu0 0.0
        %7215 = vmatpush1.msra.mxu0 0.0
        %7216 = vmatprep.subr.mxu0 0.0
        %7217 = vmatpush1.msra.mxu0 0.0
        %7218 = vmatprep.subr.mxu0 0.0
        %7219 = vmatpush1.msra.mxu0 0.0
        %7220 = vmatprep.subr.mxu0 0.0
        %7221 = vmatpush1.msra.mxu0 0.0
        %7222 = vmatprep.subr.mxu0 0.0
        %7223 = vmatpush1.msra.mxu0 0.0
        %7224 = vmatprep.subr.mxu0 0.0
        %7225 = vmatpush1.msra.mxu0 0.0
        %7226 = vmatprep.subr.mxu0 0.0
        %7227 = vmatpush1.msra.mxu0 0.0
        %7228 = vmatprep.subr.mxu0 0.0
        %7229 = vmatpush1.msra.mxu0 0.0
        %7230 = vmatprep.subr.mxu0 0.0
        %7231 = vmatpush1.msra.mxu0 0.0
        %7232 = vmatprep.subr.mxu0 0.0
        %7233 = vmatpush1.msra.mxu0 0.0
        %7234 = vmatprep.subr.mxu0 0.0
        %7235 = vmatpush1.msra.mxu0 0.0
        %7236 = vmatprep.subr.mxu0 0.0
        %7237 = vmatpush1.msra.mxu0 0.0
        %7238 = vmatprep.subr.mxu0 0.0
        %7239 = vmatpush1.msra.mxu0 0.0
        %7240 = vmatprep.subr.mxu0 0.0
        %7241 = vmatpush1.msra.mxu0 0.0
        %7242 = vmatprep.subr.mxu0 0.0
        %7243 = vmatpush1.msra.mxu0 0.0
        %7244 = vmatprep.subr.mxu0 0.0
        %7245 = vmatpush1.msra.mxu0 0.0
        %7246 = vmatprep.subr.mxu0 0.0
        %7247 = vmatpush1.msra.mxu0 0.0
        %7248 = vmatprep.mubr.f32.mxu0 0.0
        %7249 = vmatmul.mubr.f32.gmra.mrb[0].mxu0 %v7179
        %v7250 = vpop.f32.mrb[0].mxu0
        %v7251 = vadd.f32 0.0, %v7250
        %v7252 = vpop.f32.mrb[0].mxu0
        %7253 = vmatprep.mubr.f32.mxu0 0.0
        %7254 = vmatmul.mubr.f32.gmra.mrb[0].mxu0 %v7182
        %v7255 = vpop.f32.mrb[0].mxu0
        %v7256 = vadd.f32 0.0, %v7255
        %v7257 = vpop.f32.mrb[0].mxu0
        %7258 = vdwg.mxu0
        %v7259 = vpack.c.bf16 %v7256, %v7251
        %v7260 = vld [vmem:[%s6131 + $0x18] sm:$0xf]
        %v7262 = vsel %vm783, %v7259, 0
        %v7265 = vsel %vm1308, %v7260, 0
        %7267 = vmatprep.subr.bf16.mxu0 0
        %7268 = vmatpush1.bf16.msra.mxu0 %v7265
        %7269 = vmatprep.subr.bf16.mxu0 0
        %7270 = vmatpush1.bf16.msra.mxu0 0
        %7271 = vmatprep.subr.bf16.mxu0 0
        %7272 = vmatpush1.bf16.msra.mxu0 0
        %7273 = vmatprep.subr.bf16.mxu0 0
        %7274 = vmatpush1.bf16.msra.mxu0 0
        %7275 = vmatprep.subr.bf16.mxu0 0
        %7276 = vmatpush1.bf16.msra.mxu0 0
        %7277 = vmatprep.subr.bf16.mxu0 0
        %7278 = vmatpush1.bf16.msra.mxu0 0
        %7279 = vmatprep.subr.bf16.mxu0 0
        %7280 = vmatpush1.bf16.msra.mxu0 0
        %7281 = vmatprep.subr.bf16.mxu0 0
        %7282 = vmatpush1.bf16.msra.mxu0 0
        %7283 = vmatprep.subr.bf16.mxu0 0
        %7284 = vmatpush1.bf16.msra.mxu0 0
        %7285 = vmatprep.subr.bf16.mxu0 0
        %7286 = vmatpush1.bf16.msra.mxu0 0
        %7287 = vmatprep.subr.bf16.mxu0 0
        %7288 = vmatpush1.bf16.msra.mxu0 0
        %7289 = vmatprep.subr.bf16.mxu0 0
        %7290 = vmatpush1.bf16.msra.mxu0 0
        %7291 = vmatprep.subr.bf16.mxu0 0
        %7292 = vmatpush1.bf16.msra.mxu0 0
        %7293 = vmatprep.subr.bf16.mxu0 0
        %7294 = vmatpush1.bf16.msra.mxu0 0
        %7295 = vmatprep.subr.bf16.mxu0 0
        %7296 = vmatpush1.bf16.msra.mxu0 0
        %7297 = vmatprep.subr.bf16.mxu0 0
        %7298 = vmatpush1.bf16.msra.mxu0 0
        %7299 = vmatprep.mubr.bf16.mxu0 0
        %7300 = vmatmul.mubr.bf16.gmra.mrb[0].mxu0 %v7262
        %v7301 = vpop.f32.mrb[0].mxu0
        %v7302 = vadd.f32 0.0, %v7301
        %v7303 = vpop.f32.mrb[0].mxu0
        %v7304 = vpop.f32.mrb[0].mxu0
        %v7305 = vadd.f32 0.0, %v7304
        %v7306 = vpop.f32.mrb[0].mxu0
        %7307 = vdwg.mxu0
        %v7308 = vadd.f32 %v6931, %v7302
        %v7309 = vadd.f32 %v6934, %v7305
        %s7310 = scalar_lea.vmem %s2, 432
        %v7311 = vld [vmem:[%s7310] sm:$0xf]
        %v7312 = vld [vmem:[%s7310 + $0x4] sm:$0xf]
        %v7313 = vld [vmem:[%s7310 + $0x8] sm:$0xf]
        %v7314 = vld [vmem:[%s7310 + $0xc] sm:$0xf]
        %v7315 = vld [vmem:[%s6089 + $0xb] sm:$0x1]
        %v7316 = vlaneseq
        %v7317 = vshrl.u32 %v7316, 7
        %v7318 = vsub.s32 0, %v7317
        %v7319 = vrot.slane %v7315, %v7318
        %v7324 = vunpack.c.l.b16 %v7311
        %v7325 = vunpack.c.l.b16 %v7312
        %v7326 = vunpack.c.l.b16 %v7313
        %v7327 = vunpack.c.l.b16 %v7314
        %v7328 = vpack.c.b16 %v7325, %v7324
        %v7329 = vpack.c.b16 %v7327, %v7326
        %7332 = vmatprep.subr.bf16.mxu0 0
        %7333 = vmatpush1.bf16.msra.mxu0 %v7328
        %7334 = vmatprep.subr.bf16.mxu0 0
        %7335 = vmatpush1.bf16.msra.mxu0 %v7329
        %7336 = vmatprep.subr.bf16.mxu0 0
        %7337 = vmatpush1.bf16.msra.mxu0 0
        %7338 = vmatprep.subr.bf16.mxu0 0
        %7339 = vmatpush1.bf16.msra.mxu0 0
        %7340 = vmatprep.subr.bf16.mxu0 0
        %7341 = vmatpush1.bf16.msra.mxu0 0
        %7342 = vmatprep.subr.bf16.mxu0 0
        %7343 = vmatpush1.bf16.msra.mxu0 0
        %7344 = vmatprep.subr.bf16.mxu0 0
        %7345 = vmatpush1.bf16.msra.mxu0 0
        %7346 = vmatprep.subr.bf16.mxu0 0
        %7347 = vmatpush1.bf16.msra.mxu0 0
        %7348 = vmatprep.subr.bf16.mxu0 0
        %7349 = vmatpush1.bf16.msra.mxu0 0
        %7350 = vmatprep.subr.bf16.mxu0 0
        %7351 = vmatpush1.bf16.msra.mxu0 0
        %7352 = vmatprep.subr.bf16.mxu0 0
        %7353 = vmatpush1.bf16.msra.mxu0 0
        %7354 = vmatprep.subr.bf16.mxu0 0
        %7355 = vmatpush1.bf16.msra.mxu0 0
        %7356 = vmatprep.subr.bf16.mxu0 0
        %7357 = vmatpush1.bf16.msra.mxu0 0
        %7358 = vmatprep.subr.bf16.mxu0 0
        %7359 = vmatpush1.bf16.msra.mxu0 0
        %7360 = vmatprep.subr.bf16.mxu0 0
        %7361 = vmatpush1.bf16.msra.mxu0 0
        %7362 = vmatprep.subr.bf16.mxu0 0
        %7363 = vmatpush1.bf16.msra.mxu0 0
        %7364 = vmatprep.mubr.bf16.mxu0 0
        %7365 = vmatmul.mubr.bf16.gmra.mrb[0].mxu0 %v6154
        %v7366 = vpop.f32.mrb[0].mxu0
        %v7367 = vadd.f32 %v7319, %v7366
        %v7368 = vpop.f32.mrb[0].mxu0
        %v7369 = vpop.f32.mrb[0].mxu0
        %v7370 = vadd.f32 %v7319, %v7369
        %v7371 = vpop.f32.mrb[0].mxu0
        %7372 = vdwg.mxu0
        %s7373 = scalar_lea.vmem %s2, 496
        %v7374 = vld [vmem:[%s7373] sm:$0xf]
        %v7375 = vld [vmem:[%s7373 + $0x4] sm:$0xf]
        %v7376 = vld [vmem:[%s7373 + $0x8] sm:$0xf]
        %v7377 = vld [vmem:[%s7373 + $0xc] sm:$0xf]
        %v7378 = vld [vmem:[%s6089 + $0xf] sm:$0x1]
        %v7379 = vlaneseq
        %v7380 = vshrl.u32 %v7379, 7
        %v7381 = vsub.s32 0, %v7380
        %v7382 = vrot.slane %v7378, %v7381
        %v7387 = vunpack.c.l.b16 %v7374
        %v7388 = vunpack.c.l.b16 %v7375
        %v7389 = vunpack.c.l.b16 %v7376
        %v7390 = vunpack.c.l.b16 %v7377
        %v7391 = vpack.c.b16 %v7388, %v7387
        %v7392 = vpack.c.b16 %v7390, %v7389
        %7395 = vmatprep.subr.bf16.mxu0 0
        %7396 = vmatpush1.bf16.msra.mxu0 %v7391
        %7397 = vmatprep.subr.bf16.mxu0 0
        %7398 = vmatpush1.bf16.msra.mxu0 %v7392
        %7399 = vmatprep.subr.bf16.mxu0 0
        %7400 = vmatpush1.bf16.msra.mxu0 0
        %7401 = vmatprep.subr.bf16.mxu0 0
        %7402 = vmatpush1.bf16.msra.mxu0 0
        %7403 = vmatprep.subr.bf16.mxu0 0
        %7404 = vmatpush1.bf16.msra.mxu0 0
        %7405 = vmatprep.subr.bf16.mxu0 0
        %7406 = vmatpush1.bf16.msra.mxu0 0
        %7407 = vmatprep.subr.bf16.mxu0 0
        %7408 = vmatpush1.bf16.msra.mxu0 0
        %7409 = vmatprep.subr.bf16.mxu0 0
        %7410 = vmatpush1.bf16.msra.mxu0 0
        %7411 = vmatprep.subr.bf16.mxu0 0
        %7412 = vmatpush1.bf16.msra.mxu0 0
        %7413 = vmatprep.subr.bf16.mxu0 0
        %7414 = vmatpush1.bf16.msra.mxu0 0
        %7415 = vmatprep.subr.bf16.mxu0 0
        %7416 = vmatpush1.bf16.msra.mxu0 0
        %7417 = vmatprep.subr.bf16.mxu0 0
        %7418 = vmatpush1.bf16.msra.mxu0 0
        %7419 = vmatprep.subr.bf16.mxu0 0
        %7420 = vmatpush1.bf16.msra.mxu0 0
        %7421 = vmatprep.subr.bf16.mxu0 0
        %7422 = vmatpush1.bf16.msra.mxu0 0
        %7423 = vmatprep.subr.bf16.mxu0 0
        %7424 = vmatpush1.bf16.msra.mxu0 0
        %7425 = vmatprep.subr.bf16.mxu0 0
        %7426 = vmatpush1.bf16.msra.mxu0 0
        %7427 = vmatprep.mubr.bf16.mxu0 0
        %7428 = vmatmul.mubr.bf16.gmra.mrb[0].mxu0 %v6154
        %v7429 = vpop.f32.mrb[0].mxu0
        %v7430 = vadd.f32 %v7382, %v7429
        %v7431 = vpop.f32.mrb[0].mxu0
        %v7432 = vpop.f32.mrb[0].mxu0
        %v7433 = vadd.f32 %v7382, %v7432
        %v7434 = vpop.f32.mrb[0].mxu0
        %7435 = vdwg.mxu0
        %7436 = vrot.lane.b32.xlu0 %v6191, 104
        %v7437 = vpop.permute.xlu0 %7436
        %7438 = vrot.lane.b32.xlu0 %v6194, 104
        %v7439 = vpop.permute.xlu0 %7438
        %v7441 = vsel %vm783, %v7367, 0
        %v7444 = vsel %vm783, %v7370, 0
        %v7446 = vsel %vm783, %v7437, 0
        %v7448 = vsel %vm783, %v7439, 0
        %7450 = vmatprep.subr.mxu0 0.0
        %7451 = vmatpush1.xpose.msra.mxu0 %v7446
        %7452 = vmatprep.subr.mxu0 0.0
        %7453 = vmatpush1.xpose.msra.mxu0 %v7448
        %7454 = vmatprep.subr.mxu0 0.0
        %7455 = vmatpush1.xpose.msra.mxu0 0.0
        %7456 = vmatprep.subr.mxu0 0.0
        %7457 = vmatpush1.xpose.msra.mxu0 0.0
        %7458 = vmatprep.subr.mxu0 0.0
        %7459 = vmatpush1.xpose.msra.mxu0 0.0
        %7460 = vmatprep.subr.mxu0 0.0
        %7461 = vmatpush1.xpose.msra.mxu0 0.0
        %7462 = vmatprep.subr.mxu0 0.0
        %7463 = vmatpush1.xpose.msra.mxu0 0.0
        %7464 = vmatprep.subr.mxu0 0.0
        %7465 = vmatpush1.xpose.msra.mxu0 0.0
        %7466 = vmatprep.subr.mxu0 0.0
        %7467 = vmatpush1.xpose.msra.mxu0 0.0
        %7468 = vmatprep.subr.mxu0 0.0
        %7469 = vmatpush1.xpose.msra.mxu0 0.0
        %7470 = vmatprep.subr.mxu0 0.0
        %7471 = vmatpush1.xpose.msra.mxu0 0.0
        %7472 = vmatprep.subr.mxu0 0.0
        %7473 = vmatpush1.xpose.msra.mxu0 0.0
        %7474 = vmatprep.subr.mxu0 0.0
        %7475 = vmatpush1.xpose.msra.mxu0 0.0
        %7476 = vmatprep.subr.mxu0 0.0
        %7477 = vmatpush1.xpose.msra.mxu0 0.0
        %7478 = vmatprep.subr.mxu0 0.0
        %7479 = vmatpush1.xpose.msra.mxu0 0.0
        %7480 = vmatprep.subr.mxu0 0.0
        %7481 = vmatpush1.xpose.msra.mxu0 0.0
        %7482 = vmatprep.subr.mxu0 0.0
        %7483 = vmatpush1.xpose.msra.mxu0 0.0
        %7484 = vmatprep.subr.mxu0 0.0
        %7485 = vmatpush1.xpose.msra.mxu0 0.0
        %7486 = vmatprep.subr.mxu0 0.0
        %7487 = vmatpush1.xpose.msra.mxu0 0.0
        %7488 = vmatprep.subr.mxu0 0.0
        %7489 = vmatpush1.xpose.msra.mxu0 0.0
        %7490 = vmatprep.subr.mxu0 0.0
        %7491 = vmatpush1.xpose.msra.mxu0 0.0
        %7492 = vmatprep.subr.mxu0 0.0
        %7493 = vmatpush1.xpose.msra.mxu0 0.0
        %7494 = vmatprep.subr.mxu0 0.0
        %7495 = vmatpush1.xpose.msra.mxu0 0.0
        %7496 = vmatprep.subr.mxu0 0.0
        %7497 = vmatpush1.xpose.msra.mxu0 0.0
        %7498 = vmatprep.subr.mxu0 0.0
        %7499 = vmatpush1.xpose.msra.mxu0 0.0
        %7500 = vmatprep.subr.mxu0 0.0
        %7501 = vmatpush1.xpose.msra.mxu0 0.0
        %7502 = vmatprep.subr.mxu0 0.0
        %7503 = vmatpush1.xpose.msra.mxu0 0.0
        %7504 = vmatprep.subr.mxu0 0.0
        %7505 = vmatpush1.xpose.msra.mxu0 0.0
        %7506 = vmatprep.subr.mxu0 0.0
        %7507 = vmatpush1.xpose.msra.mxu0 0.0
        %7508 = vmatprep.subr.mxu0 0.0
        %7509 = vmatpush1.xpose.msra.mxu0 0.0
        %7510 = vmatprep.subr.mxu0 0.0
        %7511 = vmatpush1.xpose.msra.mxu0 0.0
        %7512 = vmatprep.subr.mxu0 0.0
        %7513 = vmatpush1.xpose.msra.mxu0 0.0
        %7514 = vmatprep.mubr.f32.mxu0 0.0
        %7515 = vmatmul.mubr.f32.gmra.mrb[0].mxu0 %v7441
        %v7516 = vpop.f32.mrb[0].mxu0
        %v7517 = vadd.f32 0.0, %v7516
        %v7518 = vpop.f32.mrb[0].mxu0
        %7519 = vmatprep.mubr.f32.mxu0 0.0
        %7520 = vmatmul.mubr.f32.gmra.mrb[0].mxu0 %v7444
        %v7521 = vpop.f32.mrb[0].mxu0
        %v7522 = vadd.f32 0.0, %v7521
        %v7523 = vpop.f32.mrb[0].mxu0
        %7524 = vdwg.mxu0
        %v7525 = vmul.f32 %v7517, 0.35355338
        %v7526 = vmul.f32 %v7522, 0.35355338
        %v7527 = vadd.f32 %v7525, %v4285
        %v7528 = vadd.f32 %v7526, %v4285
        %v7529 = vsel %vm875, %v7527, -inf
        %7530 = vmax.xlane.f32.xlu0 %v7529
        %v7531 = vpop.xlane.xlu0 %7530
        %v7532 = vsel %vm875, %v7528, -inf
        %7533 = vmax.xlane.f32.xlu0 %v7532
        %v7534 = vpop.xlane.xlu0 %7533
        %v7535 = vsub.f32 %v7527, %v7531
        %v7536 = vsub.f32 %v7528, %v7534
        %v7537 = vmul.f32 %v7535, 1.442695
        %v7538 = vpow.pop %v7537
        %v7539 = vmul.f32 %v7536, 1.442695
        %v7540 = vpow.pop %v7539
        %v7541 = vsel %vm875, %v7538, 0.0
        %7542 = vadd.xlane.f32.xlu0 %v7541
        %v7543 = vpop.xlane.xlu0 %7542
        %v7544 = vsel %vm875, %v7540, 0.0
        %7545 = vadd.xlane.f32.xlu0 %v7544
        %v7546 = vpop.xlane.xlu0 %7545
        %v7547 = vrcp.pop %v7543
        %v7548 = vrcp.pop %v7546
        %v7549 = vmul.f32 %v7538, %v7547
        %v7550 = vmul.f32 %v7540, %v7548
        %v7552 = vsel %vm875, %v7549, 0
        %v7555 = vsel %vm875, %v7550, 0
        %7557 = vmatprep.subr.mxu0 0.0
        %7558 = vmatpush1.msra.mxu0 %v7430
        %7559 = vmatprep.subr.mxu0 0.0
        %7560 = vmatpush1.msra.mxu0 %v7433
        %7561 = vmatprep.subr.mxu0 0.0
        %7562 = vmatpush1.msra.mxu0 0.0
        %7563 = vmatprep.subr.mxu0 0.0
        %7564 = vmatpush1.msra.mxu0 0.0
        %7565 = vmatprep.subr.mxu0 0.0
        %7566 = vmatpush1.msra.mxu0 0.0
        %7567 = vmatprep.subr.mxu0 0.0
        %7568 = vmatpush1.msra.mxu0 0.0
        %7569 = vmatprep.subr.mxu0 0.0
        %7570 = vmatpush1.msra.mxu0 0.0
        %7571 = vmatprep.subr.mxu0 0.0
        %7572 = vmatpush1.msra.mxu0 0.0
        %7573 = vmatprep.subr.mxu0 0.0
        %7574 = vmatpush1.msra.mxu0 0.0
        %7575 = vmatprep.subr.mxu0 0.0
        %7576 = vmatpush1.msra.mxu0 0.0
        %7577 = vmatprep.subr.mxu0 0.0
        %7578 = vmatpush1.msra.mxu0 0.0
        %7579 = vmatprep.subr.mxu0 0.0
        %7580 = vmatpush1.msra.mxu0 0.0
        %7581 = vmatprep.subr.mxu0 0.0
        %7582 = vmatpush1.msra.mxu0 0.0
        %7583 = vmatprep.subr.mxu0 0.0
        %7584 = vmatpush1.msra.mxu0 0.0
        %7585 = vmatprep.subr.mxu0 0.0
        %7586 = vmatpush1.msra.mxu0 0.0
        %7587 = vmatprep.subr.mxu0 0.0
        %7588 = vmatpush1.msra.mxu0 0.0
        %7589 = vmatprep.subr.mxu0 0.0
        %7590 = vmatpush1.msra.mxu0 0.0
        %7591 = vmatprep.subr.mxu0 0.0
        %7592 = vmatpush1.msra.mxu0 0.0
        %7593 = vmatprep.subr.mxu0 0.0
        %7594 = vmatpush1.msra.mxu0 0.0
        %7595 = vmatprep.subr.mxu0 0.0
        %7596 = vmatpush1.msra.mxu0 0.0
        %7597 = vmatprep.subr.mxu0 0.0
        %7598 = vmatpush1.msra.mxu0 0.0
        %7599 = vmatprep.subr.mxu0 0.0
        %7600 = vmatpush1.msra.mxu0 0.0
        %7601 = vmatprep.subr.mxu0 0.0
        %7602 = vmatpush1.msra.mxu0 0.0
        %7603 = vmatprep.subr.mxu0 0.0
        %7604 = vmatpush1.msra.mxu0 0.0
        %7605 = vmatprep.subr.mxu0 0.0
        %7606 = vmatpush1.msra.mxu0 0.0
        %7607 = vmatprep.subr.mxu0 0.0
        %7608 = vmatpush1.msra.mxu0 0.0
        %7609 = vmatprep.subr.mxu0 0.0
        %7610 = vmatpush1.msra.mxu0 0.0
        %7611 = vmatprep.subr.mxu0 0.0
        %7612 = vmatpush1.msra.mxu0 0.0
        %7613 = vmatprep.subr.mxu0 0.0
        %7614 = vmatpush1.msra.mxu0 0.0
        %7615 = vmatprep.subr.mxu0 0.0
        %7616 = vmatpush1.msra.mxu0 0.0
        %7617 = vmatprep.subr.mxu0 0.0
        %7618 = vmatpush1.msra.mxu0 0.0
        %7619 = vmatprep.subr.mxu0 0.0
        %7620 = vmatpush1.msra.mxu0 0.0
        %7621 = vmatprep.mubr.f32.mxu0 0.0
        %7622 = vmatmul.mubr.f32.gmra.mrb[0].mxu0 %v7552
        %v7623 = vpop.f32.mrb[0].mxu0
        %v7624 = vadd.f32 0.0, %v7623
        %v7625 = vpop.f32.mrb[0].mxu0
        %7626 = vmatprep.mubr.f32.mxu0 0.0
        %7627 = vmatmul.mubr.f32.gmra.mrb[0].mxu0 %v7555
        %v7628 = vpop.f32.mrb[0].mxu0
        %v7629 = vadd.f32 0.0, %v7628
        %v7630 = vpop.f32.mrb[0].mxu0
        %7631 = vdwg.mxu0
        %v7632 = vpack.c.bf16 %v7629, %v7624
        %v7633 = vld [vmem:[%s6131 + $0x1c] sm:$0xf]
        %v7635 = vsel %vm783, %v7632, 0
        %v7638 = vsel %vm1308, %v7633, 0
        %7640 = vmatprep.subr.bf16.mxu0 0
        %7641 = vmatpush1.bf16.msra.mxu0 %v7638
        %7642 = vmatprep.subr.bf16.mxu0 0
        %7643 = vmatpush1.bf16.msra.mxu0 0
        %7644 = vmatprep.subr.bf16.mxu0 0
        %7645 = vmatpush1.bf16.msra.mxu0 0
        %7646 = vmatprep.subr.bf16.mxu0 0
        %7647 = vmatpush1.bf16.msra.mxu0 0
        %7648 = vmatprep.subr.bf16.mxu0 0
        %7649 = vmatpush1.bf16.msra.mxu0 0
        %7650 = vmatprep.subr.bf16.mxu0 0
        %7651 = vmatpush1.bf16.msra.mxu0 0
        %7652 = vmatprep.subr.bf16.mxu0 0
        %7653 = vmatpush1.bf16.msra.mxu0 0
        %7654 = vmatprep.subr.bf16.mxu0 0
        %7655 = vmatpush1.bf16.msra.mxu0 0
        %7656 = vmatprep.subr.bf16.mxu0 0
        %7657 = vmatpush1.bf16.msra.mxu0 0
        %7658 = vmatprep.subr.bf16.mxu0 0
        %7659 = vmatpush1.bf16.msra.mxu0 0
        %7660 = vmatprep.subr.bf16.mxu0 0
        %7661 = vmatpush1.bf16.msra.mxu0 0
        %7662 = vmatprep.subr.bf16.mxu0 0
        %7663 = vmatpush1.bf16.msra.mxu0 0
        %7664 = vmatprep.subr.bf16.mxu0 0
        %7665 = vmatpush1.bf16.msra.mxu0 0
        %7666 = vmatprep.subr.bf16.mxu0 0
        %7667 = vmatpush1.bf16.msra.mxu0 0
        %7668 = vmatprep.subr.bf16.mxu0 0
        %7669 = vmatpush1.bf16.msra.mxu0 0
        %7670 = vmatprep.subr.bf16.mxu0 0
        %7671 = vmatpush1.bf16.msra.mxu0 0
        %7672 = vmatprep.mubr.bf16.mxu0 0
        %7673 = vmatmul.mubr.bf16.gmra.mrb[0].mxu0 %v7635
        %v7674 = vpop.f32.mrb[0].mxu0
        %v7675 = vadd.f32 0.0, %v7674
        %v7676 = vpop.f32.mrb[0].mxu0
        %v7677 = vpop.f32.mrb[0].mxu0
        %v7678 = vadd.f32 0.0, %v7677
        %v7679 = vpop.f32.mrb[0].mxu0
        %7680 = vdwg.mxu0
        %v7681 = vadd.f32 %v7308, %v7675
        %v7682 = vadd.f32 %v7309, %v7678
        %v7683 = vadd.f32 %v6087, %v7681
        %v7684 = vadd.f32 %v6088, %v7682
        %v7685 = vld [vmem:[%s6089 + $0x3] sm:$0x1]
        %v7686 = vlaneseq
        %v7687 = vshrl.u32 %v7686, 7
        %v7688 = vsub.s32 0, %v7687
        %v7689 = vrot.slane %v7685, %v7688
        %v7690 = vadd.f32 %v7683, %v7689
        %v7691 = vadd.f32 %v7684, %v7689
        %v7692 = vld [vmem:[%s6089 + $0x4] sm:$0x1]
        %v7693 = vld [vmem:[%s6089 + $0x5] sm:$0x1]
        %v7694 = vsel %vm552, %v7690, 0.0
        %7695 = vadd.xlane.f32.xlu0 %v7694
        %v7696 = vpop.xlane.xlu0 %7695
        %v7697 = vsel %vm552, %v7691, 0.0
        %7698 = vadd.xlane.f32.xlu0 %v7697
        %v7699 = vpop.xlane.xlu0 %7698
        %v7700 = vmul.f32 %v7696, %v559
        %v7701 = vmul.f32 %v7699, %v559
        %v7702 = vsub.f32 %v7690, %v7700
        %v7703 = vsub.f32 %v7691, %v7701
        %v7704 = vmul.f32 %v7702, %v7702
        %v7705 = vmul.f32 %v7703, %v7703
        %v7706 = vsel %vm552, %v7704, 0.0
        %7707 = vadd.xlane.f32.xlu0 %v7706
        %v7708 = vpop.xlane.xlu0 %7707
        %v7709 = vsel %vm552, %v7705, 0.0
        %7710 = vadd.xlane.f32.xlu0 %v7709
        %v7711 = vpop.xlane.xlu0 %7710
        %v7712 = vmul.f32 %v7708, %v559
        %v7713 = vmul.f32 %v7711, %v559
        %v7714 = vadd.f32 %v7712, 1e-06
        %v7715 = vadd.f32 %v7713, 1e-06
        %v7716 = vrsqrt.pop %v7714
        %v7717 = vrsqrt.pop %v7715
        %v7718 = vmul.f32 %v7702, %v7716
        %v7719 = vmul.f32 %v7703, %v7717
        %v7720 = vlaneseq
        %v7721 = vshrl.u32 %v7720, 7
        %v7722 = vsub.s32 0, %v7721
        %v7723 = vrot.slane %v7692, %v7722
        %v7724 = vmul.f32 %v7718, %v7723
        %v7725 = vmul.f32 %v7719, %v7723
        %v7726 = vlaneseq
        %v7727 = vshrl.u32 %v7726, 7
        %v7728 = vsub.s32 0, %v7727
        %v7729 = vrot.slane %v7693, %v7728
        %v7730 = vadd.f32 %v7724, %v7729
        %v7731 = vadd.f32 %v7725, %v7729
        %v7732 = vpack.c.bf16 %v7731, %v7730
        %v7733 = vld [vmem:[%s6131 + $0x20] sm:$0xf]
        %v7734 = vld [vmem:[%s6131 + $0x24] sm:$0xf]
        %v7735 = vld [vmem:[%s6131 + $0x28] sm:$0xf]
        %v7736 = vld [vmem:[%s6131 + $0x2c] sm:$0xf]
        %v7737 = vld [vmem:[%s6089 + $0x6] sm:$0x1]
        %v7738 = vlaneseq
        %v7739 = vshrl.u32 %v7738, 7
        %v7740 = vsub.s32 0, %v7739
        %v7741 = vrot.slane %v7737, %v7740
        %v7746 = vunpack.c.l.b16 %v7733
        %v7747 = vunpack.c.l.b16 %v7734
        %v7748 = vunpack.c.l.b16 %v7735
        %v7749 = vunpack.c.l.b16 %v7736
        %v7750 = vpack.c.b16 %v7747, %v7746
        %v7751 = vpack.c.b16 %v7749, %v7748
        %v7755 = vsel %vm552, %v7732, 0
        %7757 = vmatprep.subr.bf16.mxu0 0
        %7758 = vmatpush1.bf16.msra.mxu0 %v7750
        %7759 = vmatprep.subr.bf16.mxu0 0
        %7760 = vmatpush1.bf16.msra.mxu0 %v7751
        %7761 = vmatprep.subr.bf16.mxu0 0
        %7762 = vmatpush1.bf16.msra.mxu0 0
        %7763 = vmatprep.subr.bf16.mxu0 0
        %7764 = vmatpush1.bf16.msra.mxu0 0
        %7765 = vmatprep.subr.bf16.mxu0 0
        %7766 = vmatpush1.bf16.msra.mxu0 0
        %7767 = vmatprep.subr.bf16.mxu0 0
        %7768 = vmatpush1.bf16.msra.mxu0 0
        %7769 = vmatprep.subr.bf16.mxu0 0
        %7770 = vmatpush1.bf16.msra.mxu0 0
        %7771 = vmatprep.subr.bf16.mxu0 0
        %7772 = vmatpush1.bf16.msra.mxu0 0
        %7773 = vmatprep.subr.bf16.mxu0 0
        %7774 = vmatpush1.bf16.msra.mxu0 0
        %7775 = vmatprep.subr.bf16.mxu0 0
        %7776 = vmatpush1.bf16.msra.mxu0 0
        %7777 = vmatprep.subr.bf16.mxu0 0
        %7778 = vmatpush1.bf16.msra.mxu0 0
        %7779 = vmatprep.subr.bf16.mxu0 0
        %7780 = vmatpush1.bf16.msra.mxu0 0
        %7781 = vmatprep.subr.bf16.mxu0 0
        %7782 = vmatpush1.bf16.msra.mxu0 0
        %7783 = vmatprep.subr.bf16.mxu0 0
        %7784 = vmatpush1.bf16.msra.mxu0 0
        %7785 = vmatprep.subr.bf16.mxu0 0
        %7786 = vmatpush1.bf16.msra.mxu0 0
        %7787 = vmatprep.subr.bf16.mxu0 0
        %7788 = vmatpush1.bf16.msra.mxu0 0
        %7789 = vmatprep.mubr.bf16.mxu0 0
        %7790 = vmatmul.mubr.bf16.gmra.mrb[0].mxu0 %v7755
        %v7791 = vpop.f32.mrb[0].mxu0
        %v7792 = vadd.f32 %v7741, %v7791
        %v7793 = vpop.f32.mrb[0].mxu0
        %v7794 = vpop.f32.mrb[0].mxu0
        %v7795 = vadd.f32 %v7741, %v7794
        %v7796 = vpop.f32.mrb[0].mxu0
        %7797 = vdwg.mxu0
        %v7798 = vmul.f32 %v7792, 0.5
        %v7799 = vmul.f32 %v7795, 0.5
        %v7800 = vmul.f32 %v7792, 0.70710677
        %v7801 = vmul.f32 %v7795, 0.70710677
        %v7802 = verf.f32.pop %v7800
        %v7803 = verf.f32.pop %v7801
        %v7804 = vadd.f32 %v7802, 1.0
        %v7805 = vadd.f32 %v7803, 1.0
        %v7806 = vmul.f32 %v7798, %v7804
        %v7807 = vmul.f32 %v7799, %v7805
        %v7808 = vpack.c.bf16 %v7807, %v7806
        %v7809 = vld [vmem:[%s6131 + $0x30] sm:$0xf]
        %v7810 = vld [vmem:[%s6131 + $0x34] sm:$0xf]
        %v7811 = vld [vmem:[%s6131 + $0x38] sm:$0xf]
        %v7812 = vld [vmem:[%s6131 + $0x3c] sm:$0xf]
        %v7813 = vld [vmem:[%s6131 + $0x40] sm:$0xf]
        %v7814 = vld [vmem:[%s6131 + $0x44] sm:$0xf]
        %v7815 = vld [vmem:[%s6131 + $0x48] sm:$0xf]
        %v7816 = vld [vmem:[%s6131 + $0x4c] sm:$0xf]
        %v7817 = vld [vmem:[%s6089 + $0x7] sm:$0x1]
        %v7818 = vlaneseq
        %v7819 = vshrl.u32 %v7818, 7
        %v7820 = vsub.s32 0, %v7819
        %v7821 = vrot.slane %v7817, %v7820
        %v7830 = vunpack.c.l.b16 %v7809
        %v7831 = vunpack.c.l.b16 %v7810
        %v7832 = vunpack.c.l.b16 %v7811
        %v7833 = vunpack.c.l.b16 %v7812
        %v7834 = vunpack.c.l.b16 %v7813
        %v7835 = vunpack.c.l.b16 %v7814
        %v7836 = vunpack.c.l.b16 %v7815
        %v7837 = vunpack.c.l.b16 %v7816
        %v7838 = vpack.c.b16 %v7831, %v7830
        %v7839 = vpack.c.b16 %v7833, %v7832
        %v7840 = vpack.c.b16 %v7835, %v7834
        %v7841 = vpack.c.b16 %v7837, %v7836
        %v7847 = vsel %vm2309, %v7808, 0
        %7849 = vmatprep.subr.bf16.mxu0 0
        %7850 = vmatpush1.bf16.msra.mxu0 %v7838
        %7851 = vmatprep.subr.bf16.mxu0 0
        %7852 = vmatpush1.bf16.msra.mxu0 %v7839
        %7853 = vmatprep.subr.bf16.mxu0 0
        %7854 = vmatpush1.bf16.msra.mxu0 %v7840
        %7855 = vmatprep.subr.bf16.mxu0 0
        %7856 = vmatpush1.bf16.msra.mxu0 %v7841
        %7857 = vmatprep.subr.bf16.mxu0 0
        %7858 = vmatpush1.bf16.msra.mxu0 0
        %7859 = vmatprep.subr.bf16.mxu0 0
        %7860 = vmatpush1.bf16.msra.mxu0 0
        %7861 = vmatprep.subr.bf16.mxu0 0
        %7862 = vmatpush1.bf16.msra.mxu0 0
        %7863 = vmatprep.subr.bf16.mxu0 0
        %7864 = vmatpush1.bf16.msra.mxu0 0
        %7865 = vmatprep.subr.bf16.mxu0 0
        %7866 = vmatpush1.bf16.msra.mxu0 0
        %7867 = vmatprep.subr.bf16.mxu0 0
        %7868 = vmatpush1.bf16.msra.mxu0 0
        %7869 = vmatprep.subr.bf16.mxu0 0
        %7870 = vmatpush1.bf16.msra.mxu0 0
        %7871 = vmatprep.subr.bf16.mxu0 0
        %7872 = vmatpush1.bf16.msra.mxu0 0
        %7873 = vmatprep.subr.bf16.mxu0 0
        %7874 = vmatpush1.bf16.msra.mxu0 0
        %7875 = vmatprep.subr.bf16.mxu0 0
        %7876 = vmatpush1.bf16.msra.mxu0 0
        %7877 = vmatprep.subr.bf16.mxu0 0
        %7878 = vmatpush1.bf16.msra.mxu0 0
        %7879 = vmatprep.subr.bf16.mxu0 0
        %7880 = vmatpush1.bf16.msra.mxu0 0
        %7881 = vmatprep.mubr.bf16.mxu0 0
        %7882 = vmatmul.mubr.bf16.gmra.mrb[0].mxu0 %v7847
        %v7883 = vpop.f32.mrb[0].mxu0
        %v7884 = vadd.f32 %v7821, %v7883
        %v7885 = vpop.f32.mrb[0].mxu0
        %v7886 = vpop.f32.mrb[0].mxu0
        %v7887 = vpop.f32.mrb[0].mxu0
        %7888 = vdwg.mxu0
        %v7889 = vadd.f32 %v7690, %v7884
        %v7890 = vld [vmem:[%s5 + $0x32] sm:$0x1]
        %v7891 = vld [vmem:[%s5 + $0x33] sm:$0x1]
        %v7892 = vsel %vm552, %v7889, 0.0
        %7893 = vadd.xlane.f32.xlu0 %v7892
        %v7894 = vpop.xlane.xlu0 %7893
        %v7895 = vmul.f32 %v7894, %v559
        %v7896 = vsub.f32 %v7889, %v7895
        %v7897 = vmul.f32 %v7896, %v7896
        %v7898 = vsel %vm552, %v7897, 0.0
        %7899 = vadd.xlane.f32.xlu0 %v7898
        %v7900 = vpop.xlane.xlu0 %7899
        %v7901 = vmul.f32 %v7900, %v559
        %v7902 = vadd.f32 %v7901, 1e-06
        %v7903 = vrsqrt.pop %v7902
        %v7904 = vmul.f32 %v7896, %v7903
        %v7905 = vlaneseq
        %v7906 = vshrl.u32 %v7905, 7
        %v7907 = vsub.s32 0, %v7906
        %v7908 = vrot.slane %v7890, %v7907
        %v7909 = vmul.f32 %v7904, %v7908
        %v7910 = vlaneseq
        %v7911 = vshrl.u32 %v7910, 7
        %v7912 = vsub.s32 0, %v7911
        %v7913 = vrot.slane %v7891, %v7912
        %v7914 = vadd.f32 %v7909, %v7913
        %v7915 = vld [vmem:[%s5 + $0x34] sm:$0x1]
        %v7916 = vld [vmem:[%s5 + $0x35] sm:$0x1]
        %vm7917 = vcmask 253952
        %v7918 = vsel %vm7917, %v7914, 0.0
        %7919 = vadd.xlane.f32.xlu0 %v7918
        %v7920 = vpop.xlane.xlu0 %7919
        %v7921 = vmul.f32 %v7920, %v559
        %v7922 = vsub.f32 %v7914, %v7921
        %v7923 = vmul.f32 %v7922, %v7922
        %v7924 = vsel %vm7917, %v7923, 0.0
        %7925 = vadd.xlane.f32.xlu0 %v7924
        %v7926 = vpop.xlane.xlu0 %7925
        %v7927 = vmul.f32 %v7926, %v559
        %v7928 = vadd.f32 %v7927, 1e-05
        %v7929 = vrsqrt.pop %v7928
        %v7930 = vmul.f32 %v7922, %v7929
        %v7931 = vmul.f32 %v7930, %v7915
        %v7932 = vadd.f32 %v7931, %v7916
        %v7933 = vld [vmem:[%s5 + $0x38] sm:$0xff]
        %v7934 = vld [vmem:[%s5 + $0x40] sm:$0xff]
        %v7935 = vld [vmem:[%s5 + $0x48] sm:$0xff]
        %v7936 = vld [vmem:[%s5 + $0x50] sm:$0xff]
        %v7937 = vld [vmem:[%s5 + $0x36] sm:$0x1]
        %v7939 = vsel %vm552, %v7932, 0
        %7941 = vmatprep.subr.mxu0 0.0
        %7942 = vmatpush1.msra.mxu0 %v7933
        %7943 = vmatprep.subr.mxu0 0.0
        %7944 = vmatpush1.msra.mxu0 %v7934
        %7945 = vmatprep.subr.mxu0 0.0
        %7946 = vmatpush1.msra.mxu0 %v7935
        %7947 = vmatprep.subr.mxu0 0.0
        %7948 = vmatpush1.msra.mxu0 %v7936
        %7949 = vmatprep.subr.mxu0 0.0
        %7950 = vmatpush1.msra.mxu0 0.0
        %7951 = vmatprep.subr.mxu0 0.0
        %7952 = vmatpush1.msra.mxu0 0.0
        %7953 = vmatprep.subr.mxu0 0.0
        %7954 = vmatpush1.msra.mxu0 0.0
        %7955 = vmatprep.subr.mxu0 0.0
        %7956 = vmatpush1.msra.mxu0 0.0
        %7957 = vmatprep.subr.mxu0 0.0
        %7958 = vmatpush1.msra.mxu0 0.0
        %7959 = vmatprep.subr.mxu0 0.0
        %7960 = vmatpush1.msra.mxu0 0.0
        %7961 = vmatprep.subr.mxu0 0.0
        %7962 = vmatpush1.msra.mxu0 0.0
        %7963 = vmatprep.subr.mxu0 0.0
        %7964 = vmatpush1.msra.mxu0 0.0
        %7965 = vmatprep.subr.mxu0 0.0
        %7966 = vmatpush1.msra.mxu0 0.0
        %7967 = vmatprep.subr.mxu0 0.0
        %7968 = vmatpush1.msra.mxu0 0.0
        %7969 = vmatprep.subr.mxu0 0.0
        %7970 = vmatpush1.msra.mxu0 0.0
        %7971 = vmatprep.subr.mxu0 0.0
        %7972 = vmatpush1.msra.mxu0 0.0
        %7973 = vmatprep.subr.mxu0 0.0
        %7974 = vmatpush1.msra.mxu0 0.0
        %7975 = vmatprep.subr.mxu0 0.0
        %7976 = vmatpush1.msra.mxu0 0.0
        %7977 = vmatprep.subr.mxu0 0.0
        %7978 = vmatpush1.msra.mxu0 0.0
        %7979 = vmatprep.subr.mxu0 0.0
        %7980 = vmatpush1.msra.mxu0 0.0
        %7981 = vmatprep.subr.mxu0 0.0
        %7982 = vmatpush1.msra.mxu0 0.0
        %7983 = vmatprep.subr.mxu0 0.0
        %7984 = vmatpush1.msra.mxu0 0.0
        %7985 = vmatprep.subr.mxu0 0.0
        %7986 = vmatpush1.msra.mxu0 0.0
        %7987 = vmatprep.subr.mxu0 0.0
        %7988 = vmatpush1.msra.mxu0 0.0
        %7989 = vmatprep.subr.mxu0 0.0
        %7990 = vmatpush1.msra.mxu0 0.0
        %7991 = vmatprep.subr.mxu0 0.0
        %7992 = vmatpush1.msra.mxu0 0.0
        %7993 = vmatprep.subr.mxu0 0.0
        %7994 = vmatpush1.msra.mxu0 0.0
        %7995 = vmatprep.subr.mxu0 0.0
        %7996 = vmatpush1.msra.mxu0 0.0
        %7997 = vmatprep.subr.mxu0 0.0
        %7998 = vmatpush1.msra.mxu0 0.0
        %7999 = vmatprep.subr.mxu0 0.0
        %8000 = vmatpush1.msra.mxu0 0.0
        %8001 = vmatprep.subr.mxu0 0.0
        %8002 = vmatpush1.msra.mxu0 0.0
        %8003 = vmatprep.subr.mxu0 0.0
        %8004 = vmatpush1.msra.mxu0 0.0
        %8005 = vmatprep.mubr.f32.mxu0 0.0
        %8006 = vmatmul.mubr.f32.gmra.mrb[0].mxu0 %v7939
        %v8007 = vpop.f32.mrb[0].mxu0
        %v8008 = vadd.f32 %v7937, %v8007
        %v8009 = vpop.f32.mrb[0].mxu0
        %8010 = vdwg.mxu0
        %vm8011 = vcmask 73728
        %8012 = vst.msk [vmem:[%s243] sm:$0x1] %vm8011, %v8008
        %s8013 = sand.u32 %s159, 1
        %s8014 = scalar_lea.sflag [#allocation3], %s8013
        %s8015 = sand.u32 %s159, 1
        %s8016 = scalar_lea.vmem [#allocation2], %s8015
        // Predicated region
        $region45: #{vivit_forward.1} parent=43 // pred_check
          %p8017 = pneg %p169
        $region46: #{vivit_forward.1} parent=43 // pred_check_branch
          %8019 = sbr.rel (%p8017) target = $region48
        $region47: #{vivit_forward.1} parent=43 // pred_region
          %s8021 = ssub.s32 16, 16
          %8022 = vsyncadd %s8014, %s8021
          %s8023 = smul.addr %s20, 16
          %s8024 = scalar_lea.hbm %s6, %s8023
          %s8026 = sshll.u32 %s8016, 4
          %s8027 = int_to_ptr.vmem [resolvable:$true] %s8026
          %8029 = dma.vmem_to_hbm [thread:$0]  %s8027, 16, %s8024, %s8014
        $region48: #{vivit_forward.1} parent=43 // pred_fallthru
          _
      $region44: #{vivit_forward.1} parent=5 // pred_fallthru
        _
      %p8030 = scmp.le.s32.totalorder 2, %s15
      // Predicated region
      $region49: #{vivit_forward.1} parent=5 // pred_check
        %p8031 = pneg %p8030
      $region50: #{vivit_forward.1} parent=5 // pred_check_branch
        %8033 = sbr.rel (%p8031) target = $region52
      $region51: #{vivit_forward.1} parent=5 // pred_region
        %s8034 = ssub.s32 %s15, 2
        // Predicated region
        $region53: #{vivit_forward.1} parent=51 // pred_check
          %p8035 = pneg %p175
        $region54: #{vivit_forward.1} parent=51 // pred_check_branch
          %8037 = sbr.rel (%p8035) target = $region56
        $region55: #{vivit_forward.1} parent=51 // pred_region
          %s8038 = sand.u32 %s160, 1
          %s8039 = scalar_lea.sflag [#allocation3], %s8038
          %s8040 = sand.u32 %s160, 1
          %s8041 = scalar_lea.vmem [#allocation2], %s8040
          %8042 = dma.done %s8039, 16
        $region56: #{vivit_forward.1} parent=51 // pred_fallthru
          _
      $region52: #{vivit_forward.1} parent=5 // pred_fallthru
        _
    $region6: #{vivit_forward.1} parent=1 // loop_footer
      %s19 = sadd.s32 1, %s15
    $region7: #{vivit_forward.1} parent=1 // loop_footer_branch
      %14 = sbr.rel target = $region3
    $region8: #{vivit_forward.1} parent=1 // loop_exit
      _
    %8043 = vsyncpa [#allocation3], 1
    %s8044 = scalar_lea.sflag [#allocation3], 1
    %8045 = vsyncpa %s8044, 1

</llo_original>
